<compile_context>
chip_gen: v6e
topology: v6e:2x2x1
jax: 0.10.0
libtpu: 0.0.40
codegen_flags: <defaults>
</compile_context>

<pallas_src>
import functools

import jax
import jax.numpy as jnp
from jax.experimental import pallas as pl
from jax.experimental.pallas import tpu as pltpu


# ----------------------------------------------------------------------------- pdist

def _pdist_kernel(cr_ref, cct_ref, d_ref, *, ndim):
    """Pairwise Euclidean distances (torch.cdist) via VPU broadcast subtract-square-sum."""
    ci = cr_ref[...]                                   # [TR, 8]  row block of coords
    cjt = cct_ref[...]                                 # [8, TC]  col block of coords^T
    acc = jnp.zeros(d_ref.shape, jnp.float32)
    for d in range(ndim):                              # ndim = 3, fully unrolled
        diff = ci[:, d:d + 1] - cjt[d:d + 1, :]        # [TR,1] - [1,TC] -> [TR,TC]
        acc = acc + diff * diff
    d_ref[...] = jnp.sqrt(acc)


def _pdist(coords, ndim):
    n = coords.shape[0]
    dp = 8
    n_pad = -(-n // 128) * 128                         # pad to lane/tile granularity
    tile = 512 if n_pad % 512 == 0 else (256 if n_pad % 256 == 0 else 128)
    cpad = jnp.pad(coords.astype(jnp.float32), ((0, n_pad - n), (0, dp - ndim)))
    cpad_t = cpad.T                                    # tiny [8, Npad]; no in-kernel transpose
    kern = functools.partial(_pdist_kernel, ndim=ndim)
    d = pl.pallas_call(
        kern,
        out_shape=jax.ShapeDtypeStruct((n_pad, n_pad), jnp.float32),
        grid=(n_pad // tile, n_pad // tile),
        in_specs=[pl.BlockSpec((tile, dp), lambda i, j: (i, 0)),
                  pl.BlockSpec((dp, tile), lambda i, j: (0, j))],
        out_specs=pl.BlockSpec((tile, tile), lambda i, j: (i, j)),
        compiler_params=pltpu.CompilerParams(
            dimension_semantics=("parallel", "parallel")),
    )(cpad, cpad_t)
    return d[:n, :n]


# ----------------------------------------------------------------------------- fused stack

def _layer_norm(x, g, b, eps=1e-5):
    m = jnp.mean(x, axis=-1, keepdims=True)
    v = jnp.mean(jnp.square(x - m), axis=-1, keepdims=True)
    return (x - m) * jax.lax.rsqrt(v + eps) * g + b


def _mm(x, w_bf16):
    """bf16 MXU matmul with f32 accumulation (weights are stored in bf16)."""
    return jnp.dot(x.astype(jnp.bfloat16), w_bf16, preferred_element_type=jnp.float32)


def _stack_kernel(idx_ref,                              # SMEM [N*knn] int32 (scalar prefetch)
                  kd_ref, sig_ref, dec_w_ref, dec_b_ref,
                  tri_ln_g_ref, tri_ln_b_ref, tri_w_in_ref, tri_b_in_ref,
                  tri_lno_g_ref, tri_lno_b_ref, tri_w_o_ref, tri_b_o_ref,
                  ffn_ln_g_ref, ffn_ln_b_ref, ffn_w1_ref, ffn_b1_ref,
                  ffn_w2_ref, ffn_b2_ref,
                  out_ref, h_scr, an_scr, bn_scr, k_scr,
                  *, knn, n_nodes, n_layers, channel_dim, predict):
    """One grid step == one SparseDistLayer.  Edge features stay resident in h_scr.

    Edge rows are SLOT-MAJOR: row m * n_nodes + i  <->  (node i, neighbour slot m).
    an_scr / bn_scr hold node-major wide layouts [N, knn*C] so a neighbour gather is a
    single contiguous dynamic row read.
    """
    layer = pl.program_id(0)
    n = n_nodes
    c = channel_dim

    # -- layer 0: SparseEdgeEmbeddingV4 (Gaussian RBF over the sigma range), fused in. --
    @pl.when(layer == 0)
    def _():
        s = sig_ref[...]                                # [1, E]
        inv = 1.0 / (2.0 * s * s)                       # [1, E]
        for m in range(knn):                            # knn = 8, layer-0 only
            d = kd_ref[:, m:m + 1]                      # [N, 1] lane slice (kd is [N, knn])
            g = jnp.exp(-(d * d) * inv)                 # [N, E]
            g = jnp.where(g > 0.1, g, 0.0)
            g = jnp.where(jnp.isnan(g), 0.0, g)
            h_scr[m * n:(m + 1) * n, :] = g

    def tri_update(slot, swap):
        """Sparse triangular multiplicative update (row: slot=0, col: slot=1)."""
        # TODO(synk): exact tardis_em SparseTriangularUpdate neighbour contraction is not
        # public here; standard sparse analog of the dense triangular update is used.
        h = h_scr[...]                                                      # [NK, E]
        x = _layer_norm(h, tri_ln_g_ref[slot], tri_ln_b_ref[slot])          # [NK, E]
        # fused projection: [linear_a | gate_a | linear_b | gate_b | gate_o]
        p = _mm(x, tri_w_in_ref[slot]) + tri_b_in_ref[slot]                 # [NK, 4C+E]
        a = jax.nn.sigmoid(p[:, c:2 * c]) * p[:, 0:c]                       # [NK, C]
        b = jax.nn.sigmoid(p[:, 3 * c:4 * c]) * p[:, 2 * c:3 * c]           # [NK, C]
        gate = jax.nn.sigmoid(p[:, 4 * c:])                                 # [NK, E]
        if swap:                                   # col update: self/neighbour roles swap
            a, b = b, a

        # repack slot-major [NK, C] -> node-major wide [N, knn*C] (static slice copies)
        for s_ in range(knn):
            an_scr[:, s_ * c:(s_ + 1) * c] = a[s_ * n:(s_ + 1) * n, :]
            bn_scr[:, s_ * c:(s_ + 1) * c] = b[s_ * n:(s_ + 1) * n, :]

        # k[(i,m),:] = sum_s a[(i,s),:] * b[(idx[i,m],s),:]
        # gather via SMEM indices + dynamic row slices (no one-hot matmul, no concatenate)
        def node_body(i, carry):
            a_i = an_scr[pl.ds(i, 1), :]                                    # [1, knn*C]
            for m in range(knn):
                j = idx_ref[i * knn + m]                                    # SMEM scalar
                b_j = bn_scr[pl.ds(j, 1), :]                                # [1, knn*C]
                prod = a_i * b_j
                acc = prod[:, 0:c]
                for s_ in range(1, knn):
                    acc = acc + prod[:, s_ * c:(s_ + 1) * c]                # [1, C]
                k_scr[pl.ds(m * n + i, 1), :] = acc
            return carry

        jax.lax.fori_loop(0, n, node_body, 0)

        ko = _layer_norm(k_scr[...], tri_lno_g_ref[slot], tri_lno_b_ref[slot])
        h_scr[...] = h + gate * (_mm(ko, tri_w_o_ref[slot]) + tri_b_o_ref[slot])

    tri_update(0, swap=False)                          # row-wise triangular update
    tri_update(1, swap=True)                           # col-wise triangular update

    # GeLU feed-forward.
    x = _layer_norm(h_scr[...], ffn_ln_g_ref[...], ffn_ln_b_ref[...])
    x = _mm(x, ffn_w1_ref[...]) + ffn_b1_ref[...]
    # TODO(synk): tardis GeluFeedForward uses exact erf-GELU; tanh approximation used here.
    x = jax.nn.gelu(x, approximate=True)
    h_scr[...] = h_scr[...] + _mm(x, ffn_w2_ref[...]) + ffn_b2_ref[...]

    # -- last layer: fused nn.Linear decoder (+ optional sigmoid), lane-dense output. --
    @pl.when(layer == n_layers - 1)
    def _():
        y = _mm(h_scr[...], dec_w_ref[...]) + dec_b_ref[...]               # [NK, n_out_pad]
        if predict:
            y = jax.nn.sigmoid(y)
        out_ref[...] = y


def _const_spec(a):
    ndim = a.ndim
    return pl.BlockSpec(tuple(a.shape), lambda l, idx, _n=ndim: (0,) * _n)


def _layer_spec(a):
    ndim = a.ndim
    return pl.BlockSpec((None,) + tuple(a.shape[1:]),
                        lambda l, idx, _n=ndim: (l,) + (0,) * (_n - 1))


def _padded_elems(shape):
    """Element count after (8,128) tile padding of the last two dims."""
    s = list(shape)
    if s:
        s[-1] = -(-s[-1] // 128) * 128
    if len(s) >= 2:
        s[-2] = -(-s[-2] // 8) * 8
    tot = 1
    for d in s:
        tot *= d
    return tot


def _stack_call(idx_flat, k_dist, params, *, knn, n_nodes, predict):
    n = n_nodes
    nk = n * knn
    e = params["sigma_range"].shape[1]
    c = params["tri_w_o"].shape[2]
    n_layers = params["tri_w_in"].shape[0]
    n_out = params["dec_w"].shape[1]
    n_out_pad = -(-n_out // 128) * 128                 # lane-dense decoder output

    dec_w = jnp.pad(params["dec_w"], ((0, 0), (0, n_out_pad - n_out)))
    dec_b = jnp.pad(params["dec_b"], ((0, 0), (0, n_out_pad - n_out)))

    const_args = [k_dist, params["sigma_range"], dec_w, dec_b]
    layer_args = [params[k] for k in (
        "tri_ln_g", "tri_ln_b", "tri_w_in", "tri_b_in",
        "tri_lno_g", "tri_lno_b", "tri_w_o", "tri_b_o",
        "ffn_ln_g", "ffn_ln_b", "ffn_w1", "ffn_b1", "ffn_w2", "ffn_b2")]

    # VMEM budget from (8,128)-padded buffer sizes: double-buffered pipelined operands,
    # output block, persistent scratches, plus an estimate of in-flight values.  Capped
    # at 48 MiB so we never request all of v7x's 64 MiB physical VMEM.
    const_bytes = sum(_padded_elems(a.shape) * a.dtype.itemsize for a in const_args)
    layer_bytes = sum(_padded_elems(a.shape[1:]) * a.dtype.itemsize for a in layer_args)
    out_bytes = _padded_elems((nk, n_out_pad)) * 4
    scratch_bytes = (_padded_elems((nk, e)) + 2 * _padded_elems((n, knn * c))
                     + _padded_elems((nk, c))) * 4
    work_bytes = (_padded_elems((nk, 4 * c + e)) + 4 * _padded_elems((nk, e))) * 4
    total = 2 * (const_bytes + layer_bytes + out_bytes) + scratch_bytes + work_bytes
    vmem_limit = int(min(48 * 2**20, max(16 * 2**20, int(1.3 * total))))

    kern = functools.partial(_stack_kernel, knn=knn, n_nodes=n,
                             n_layers=n_layers, channel_dim=c, predict=predict)
    return pl.pallas_call(
        kern,
        out_shape=jax.ShapeDtypeStruct((nk, n_out_pad), jnp.float32),
        grid_spec=pltpu.PrefetchScalarGridSpec(
            num_scalar_prefetch=1,                     # idx -> SMEM, read in-kernel
            grid=(n_layers,),
            in_specs=[_const_spec(a) for a in const_args]
                     + [_layer_spec(a) for a in layer_args],
            out_specs=pl.BlockSpec((nk, n_out_pad), lambda l, idx: (0, 0)),
            scratch_shapes=[pltpu.VMEM((nk, e), jnp.float32),       # resident edge features
                            pltpu.VMEM((n, knn * c), jnp.float32),  # node-major a
                            pltpu.VMEM((n, knn * c), jnp.float32),  # node-major b (gather src)
                            pltpu.VMEM((nk, c), jnp.float32)]),     # triangular contraction
        compiler_params=pltpu.CompilerParams(
            dimension_semantics=("arbitrary",),        # layers are sequential (carried h)
            vmem_limit_bytes=vmem_limit),
    )(idx_flat, *const_args, *layer_args)


# ----------------------------------------------------------------------------- parameters

def init_params(key, *, num_layers, edge_dim, channel_dim, ff_dim, n_out, sigma):
    e, c, f, nl = edge_dim, channel_dim, ff_dim, num_layers
    k_iter = key

    def nk():
        nonlocal k_iter
        k_iter, sub = jax.random.split(k_iter)
        return sub

    def w(fi, fo, scale=0.1):
        return scale * jax.random.normal(nk(), (fi, fo), jnp.float32)

    tri_ln_g, tri_ln_b, tri_w_in, tri_b_in = [], [], [], []
    tri_lno_g, tri_lno_b, tri_w_o, tri_b_o = [], [], [], []
    ffn_ln_g, ffn_ln_b, ffn_w1, ffn_b1, ffn_w2, ffn_b2 = [], [], [], [], [], []

    for _ in range(nl):
        w_in_2, w_o_2 = [], []
        for _ in range(2):                             # row update, col update
            wla, wga = w(e, c), w(e, c)
            wlb, wgb = w(e, c), w(e, c)
            wgo, wlo = w(e, e), w(c, e)
            # fused input projection: [linear_a | gate_a | linear_b | gate_b | gate_o]
            w_in_2.append(jnp.concatenate([wla, wga, wlb, wgb, wgo], axis=1))
            w_o_2.append(wlo)
        tri_w_in.append(jnp.stack(w_in_2))             # [2, E, 4C+E]
        tri_w_o.append(jnp.stack(w_o_2))               # [2, C, E]
        tri_ln_g.append(jnp.ones((2, 1, e), jnp.float32))
        tri_ln_b.append(jnp.zeros((2, 1, e), jnp.float32))
        tri_b_in.append(jnp.zeros((2, 1, 4 * c + e), jnp.float32))
        tri_lno_g.append(jnp.ones((2, 1, c), jnp.float32))
        tri_lno_b.append(jnp.zeros((2, 1, c), jnp.float32))
        tri_b_o.append(jnp.zeros((2, 1, e), jnp.float32))
        ffn_ln_g.append(jnp.ones((1, e), jnp.float32))
        ffn_ln_b.append(jnp.zeros((1, e), jnp.float32))
        ffn_w1.append(w(e, f))
        ffn_b1.append(jnp.zeros((1, f), jnp.float32))
        ffn_w2.append(w(f, e))
        ffn_b2.append(jnp.zeros((1, e), jnp.float32))

    if isinstance(sigma, (tuple, list)):
        srange = jnp.linspace(sigma[0], sigma[1], e)
    else:                                              # scalar coord_embed_sigma
        srange = jnp.full((e,), sigma, jnp.float32)

    bf = jnp.bfloat16
    return {
        "sigma_range": srange.reshape(1, e).astype(jnp.float32),
        "tri_ln_g": jnp.stack(tri_ln_g), "tri_ln_b": jnp.stack(tri_ln_b),
        "tri_w_in": jnp.stack(tri_w_in).astype(bf), "tri_b_in": jnp.stack(tri_b_in),
        "tri_lno_g": jnp.stack(tri_lno_g), "tri_lno_b": jnp.stack(tri_lno_b),
        "tri_w_o": jnp.stack(tri_w_o).astype(bf), "tri_b_o": jnp.stack(tri_b_o),
        "ffn_ln_g": jnp.stack(ffn_ln_g), "ffn_ln_b": jnp.stack(ffn_ln_b),
        "ffn_w1": jnp.stack(ffn_w1).astype(bf), "ffn_b1": jnp.stack(ffn_b1),
        "ffn_w2": jnp.stack(ffn_w2).astype(bf), "ffn_b2": jnp.stack(ffn_b2),
        "dec_w": w(e, n_out).astype(bf),
        "dec_b": jnp.zeros((1, n_out), jnp.float32),
    }


# ----------------------------------------------------------------------------- forward

def sparse_dist_forward(coords, params, *, knn, predict=False):
    n, ndim = coords.shape
    nkk = n * knn
    n_out = params["dec_w"].shape[1]

    # 1) pairwise distances (torch.cdist) — Pallas kernel.
    dist = _pdist(coords, ndim)

    # 2) knn selection (torch.topk, largest=False) — JAX glue, no clean Pallas top-k.
    # TODO(synk): torch.topk has no clean Pallas equivalent; jax.lax.top_k used instead.
    neg_d, idx = jax.lax.top_k(-dist, knn)
    k_dist = -neg_d                                    # [N, knn] ascending distances
    idx = idx.astype(jnp.int32)                        # [N, knn]
    idx_flat = idx.reshape(-1)                         # node-major flat: idx_flat[i*knn + m]

    # 3-5) embedding + SparseDistStack + decoder, fused in one pipelined pallas_call.
    out_full = _stack_call(idx_flat, k_dist, params,
                           knn=knn, n_nodes=n, predict=predict)   # [NK, n_out_pad]
    out_slot = out_full[:, :n_out]                                 # [NK, n_out] slot-major

    # back to torch's node-major flat ordering, then edge[1:, :] on the flat edge list.
    out = out_slot.reshape(knn, n, n_out).transpose(1, 0, 2).reshape(nkk, n_out)
    return out[1:, :], idx


# ----------------------------------------------------------------------------- main

if __name__ == "__main__":
    # Small shapes (module defaults are edge_dim=128, channel_dim=128, num_layers=6, knn=8).
    N, KNN, NDIM = 32, 8, 3
    EDGE_DIM, CHANNEL_DIM, FF_FACTOR = 32, 32, 4
    NUM_LAYERS, N_OUT = 2, 1

    key = jax.random.PRNGKey(0)
    k_coord, k_param = jax.random.split(key)
    coords = (10.0 * jax.random.uniform(k_coord, (N, NDIM))).astype(jnp.float32)

    params = init_params(
        k_param,
        num_layers=NUM_LAYERS,
        edge_dim=EDGE_DIM,
        channel_dim=CHANNEL_DIM,
        ff_dim=FF_FACTOR * EDGE_DIM,
        n_out=N_OUT,
        sigma=(1.0, 5.0),
    )

    fwd = jax.jit(functools.partial(sparse_dist_forward, knn=KNN, predict=False))
    out, idx = fwd(coords, params)
    jax.block_until_ready((out, idx))

    assert out.shape == (N * KNN - 1, N_OUT), out.shape   # torch edge[1:, :] on flat edges
    assert idx.shape == (N, KNN), idx.shape
    assert bool(jnp.all(jnp.isfinite(out)))
    print("KERNEL_OK")
</pallas_src>

<mosaic_0001>
module attributes {stable_mosaic.version = 11 : i64} {
  func.func @_pdist_kernel(%arg0: i32, %arg1: i32, %arg2: memref<128x8xf32, #tpu.memory_space<vmem>>, %arg3: memref<8x128xf32, #tpu.memory_space<vmem>>, %arg4: memref<128x128xf32, #tpu.memory_space<vmem>>) attributes {dimension_semantics = [#tpu.dimension_semantics<parallel>, #tpu.dimension_semantics<parallel>], iteration_bounds = array<i64: 1, 1>, scalar_prefetch = 0 : i64, scratch_operands = 0 : i64, tpu.core_type = #tpu.core_type<tc>, window_params = [{transform_indices = @transform_0, window_bounds = array<i64: 128, 8>}, {transform_indices = @transform_1, window_bounds = array<i64: 8, 128>}, {transform_indices = @transform_2, window_bounds = array<i64: 128, 128>}]} {
    %c0 = arith.constant 0 : index
    %c0_0 = arith.constant 0 : index
    %0 = vector.load %arg2[%c0, %c0_0] : memref<128x8xf32, #tpu.memory_space<vmem>>, vector<128x8xf32>
    %c0_1 = arith.constant 0 : index
    %c0_2 = arith.constant 0 : index
    %1 = vector.load %arg3[%c0_1, %c0_2] : memref<8x128xf32, #tpu.memory_space<vmem>>, vector<8x128xf32>
    %cst = arith.constant 0.000000e+00 : f32
    %2 = vector.broadcast %cst : f32 to vector<128x128xf32>
    %3 = vector.extract_strided_slice %0 {offsets = [0, 0], sizes = [128, 1], strides = [1, 1]} : vector<128x8xf32> to vector<128x1xf32>
    %4 = vector.extract_strided_slice %1 {offsets = [0, 0], sizes = [1, 128], strides = [1, 1]} : vector<8x128xf32> to vector<1x128xf32>
    %5 = vector.broadcast %3 : vector<128x1xf32> to vector<128x128xf32>
    %6 = vector.broadcast %4 : vector<1x128xf32> to vector<128x128xf32>
    %7 = arith.subf %5, %6 : vector<128x128xf32>
    %8 = arith.mulf %7, %7 : vector<128x128xf32>
    %9 = arith.addf %2, %8 : vector<128x128xf32>
    %10 = vector.extract_strided_slice %0 {offsets = [0, 1], sizes = [128, 1], strides = [1, 1]} : vector<128x8xf32> to vector<128x1xf32>
    %11 = vector.extract_strided_slice %1 {offsets = [1, 0], sizes = [1, 128], strides = [1, 1]} : vector<8x128xf32> to vector<1x128xf32>
    %12 = vector.broadcast %10 : vector<128x1xf32> to vector<128x128xf32>
    %13 = vector.broadcast %11 : vector<1x128xf32> to vector<128x128xf32>
    %14 = arith.subf %12, %13 : vector<128x128xf32>
    %15 = arith.mulf %14, %14 : vector<128x128xf32>
    %16 = arith.addf %9, %15 : vector<128x128xf32>
    %17 = vector.extract_strided_slice %0 {offsets = [0, 2], sizes = [128, 1], strides = [1, 1]} : vector<128x8xf32> to vector<128x1xf32>
    %18 = vector.extract_strided_slice %1 {offsets = [2, 0], sizes = [1, 128], strides = [1, 1]} : vector<8x128xf32> to vector<1x128xf32>
    %19 = vector.broadcast %17 : vector<128x1xf32> to vector<128x128xf32>
    %20 = vector.broadcast %18 : vector<1x128xf32> to vector<128x128xf32>
    %21 = arith.subf %19, %20 : vector<128x128xf32>
    %22 = arith.mulf %21, %21 : vector<128x128xf32>
    %23 = arith.addf %16, %22 : vector<128x128xf32>
    %24 = math.sqrt %23 : vector<128x128xf32>
    %c0_3 = arith.constant 0 : index
    %c0_4 = arith.constant 0 : index
    %25 = vector.load %arg4[%c0_3, %c0_4] : memref<128x128xf32, #tpu.memory_space<vmem>>, vector<128x128xf32>
    tpu.vector_store %arg4[%c0_3, %c0_4], %24 {strides = array<i32>} : memref<128x128xf32, #tpu.memory_space<vmem>>, vector<128x128xf32>,
    return
  }
  func.func @transform_0(%arg0: i32, %arg1: i32) -> (i32, i32) {
    %c0_i32 = arith.constant 0 : i32
    %c0_i32_0 = arith.constant 0 : i32
    return %arg0, %c0_i32 : i32, i32
  }
  func.func @transform_1(%arg0: i32, %arg1: i32) -> (i32, i32) {
    %c0_i32 = arith.constant 0 : i32
    %c0_i32_0 = arith.constant 0 : i32
    return %c0_i32, %arg1 : i32, i32
  }
  func.func @transform_2(%arg0: i32, %arg1: i32) -> (i32, i32) {
    %c0_i32 = arith.constant 0 : i32
    return %arg0, %arg1 : i32, i32
  }
}

module attributes {stable_mosaic.version = 11 : i64} {
  func.func @_stack_kernel(%arg0: i32, %arg1: memref<256xi32, #tpu.memory_space<smem>>, %arg2: memref<32x8xf32, #tpu.memory_space<vmem>>, %arg3: memref<1x32xf32, #tpu.memory_space<vmem>>, %arg4: memref<32x128xbf16, #tpu.memory_space<vmem>>, %arg5: memref<1x128xf32, #tpu.memory_space<vmem>>, %arg6: memref<1x2x1x32xf32, #tpu.memory_space<vmem>>, %arg7: memref<1x2x1x32xf32, #tpu.memory_space<vmem>>, %arg8: memref<1x2x32x160xbf16, #tpu.memory_space<vmem>>, %arg9: memref<1x2x1x160xf32, #tpu.memory_space<vmem>>, %arg10: memref<1x2x1x32xf32, #tpu.memory_space<vmem>>, %arg11: memref<1x2x1x32xf32, #tpu.memory_space<vmem>>, %arg12: memref<1x2x32x32xbf16, #tpu.memory_space<vmem>>, %arg13: memref<1x2x1x32xf32, #tpu.memory_space<vmem>>, %arg14: memref<1x1x32xf32, #tpu.memory_space<vmem>>, %arg15: memref<1x1x32xf32, #tpu.memory_space<vmem>>, %arg16: memref<1x32x128xbf16, #tpu.memory_space<vmem>>, %arg17: memref<1x1x128xf32, #tpu.memory_space<vmem>>, %arg18: memref<1x128x32xbf16, #tpu.memory_space<vmem>>, %arg19: memref<1x1x32xf32, #tpu.memory_space<vmem>>, %arg20: memref<256x128xf32, #tpu.memory_space<vmem>>, %arg21: memref<256x32xf32, #tpu.memory_space<vmem>>, %arg22: memref<32x256xf32, #tpu.memory_space<vmem>>, %arg23: memref<32x256xf32, #tpu.memory_space<vmem>>, %arg24: memref<256x32xf32, #tpu.memory_space<vmem>>) attributes {dimension_semantics = [#tpu.dimension_semantics<arbitrary>], iteration_bounds = array<i64: 2>, scalar_prefetch = 1 : i64, scratch_operands = 4 : i64, tpu.core_type = #tpu.core_type<tc>, window_params = [{pipeline_mode = #tpu.pipeline_mode<synchronous>, transform_indices = @transform_0, window_bounds = array<i64: 32, 8>}, {pipeline_mode = #tpu.pipeline_mode<synchronous>, transform_indices = @transform_1, window_bounds = array<i64: 1, 32>}, {pipeline_mode = #tpu.pipeline_mode<synchronous>, transform_indices = @transform_2, window_bounds = array<i64: 32, 128>}, {pipeline_mode = #tpu.pipeline_mode<synchronous>, transform_indices = @transform_3, window_bounds = array<i64: 1, 128>}, {transform_indices = @transform_4, window_bounds = array<i64: 1, 2, 1, 32>}, {transform_indices = @transform_5, window_bounds = array<i64: 1, 2, 1, 32>}, {transform_indices = @transform_6, window_bounds = array<i64: 1, 2, 32, 160>}, {transform_indices = @transform_7, window_bounds = array<i64: 1, 2, 1, 160>}, {transform_indices = @transform_8, window_bounds = array<i64: 1, 2, 1, 32>}, {transform_indices = @transform_9, window_bounds = array<i64: 1, 2, 1, 32>}, {transform_indices = @transform_10, window_bounds = array<i64: 1, 2, 32, 32>}, {transform_indices = @transform_11, window_bounds = array<i64: 1, 2, 1, 32>}, {transform_indices = @transform_12, window_bounds = array<i64: 1, 1, 32>}, {transform_indices = @transform_13, window_bounds = array<i64: 1, 1, 32>}, {transform_indices = @transform_14, window_bounds = array<i64: 1, 32, 128>}, {transform_indices = @transform_15, window_bounds = array<i64: 1, 1, 128>}, {transform_indices = @transform_16, window_bounds = array<i64: 1, 128, 32>}, {transform_indices = @transform_17, window_bounds = array<i64: 1, 1, 32>}, {pipeline_mode = #tpu.pipeline_mode<synchronous>, transform_indices = @transform_18, window_bounds = array<i64: 256, 128>}]} {
    %c0_i32 = arith.constant 0 : i32
    %0 = arith.cmpi eq, %arg0, %c0_i32 : i32
    %1 = arith.extui %0 : i1 to i32
    %c0_i32_0 = arith.constant 0 : i32
    %2 = arith.cmpi ne, %1, %c0_i32_0 : i32
    scf.if %2 {
      %c0_204 = arith.constant 0 : index
      %c0_205 = arith.constant 0 : index
      %321 = vector.load %arg3[%c0_204, %c0_205] : memref<1x32xf32, #tpu.memory_space<vmem>>, vector<1x32xf32>
      %cst_206 = arith.constant 2.000000e+00 : f32
      %322 = vector.broadcast %cst_206 : f32 to vector<1x32xf32>
      %323 = arith.mulf %322, %321 : vector<1x32xf32>
      %324 = arith.mulf %323, %321 : vector<1x32xf32>
      %cst_207 = arith.constant 1.000000e+00 : f32
      %325 = vector.broadcast %cst_207 : f32 to vector<1x32xf32>
      %326 = arith.divf %325, %324 : vector<1x32xf32>
      %c0_208 = arith.constant 0 : index
      %c0_209 = arith.constant 0 : index
      %327 = vector.load %arg2[%c0_208, %c0_209] : memref<32x8xf32, #tpu.memory_space<vmem>>, vector<32x1xf32>
      %328 = arith.mulf %327, %327 : vector<32x1xf32>
      %cst_210 = arith.constant 0.000000e+00 : f32
      %329 = vector.broadcast %cst_210 : f32 to vector<32x1xf32>
      %330 = arith.subf %329, %328 : vector<32x1xf32>
      %331 = vector.broadcast %330 : vector<32x1xf32> to vector<32x32xf32>
      %332 = vector.broadcast %326 : vector<1x32xf32> to vector<32x32xf32>
      %333 = arith.mulf %331, %332 : vector<32x32xf32>
      %334 = math.exp %333 : vector<32x32xf32>
      %cst_211 = arith.constant 1.000000e-01 : f32
      %335 = vector.broadcast %cst_211 : f32 to vector<32x32xf32>
      %336 = arith.cmpf ogt, %334, %335 : vector<32x32xf32>
      %cst_212 = arith.constant 0.000000e+00 : f32
      %337 = vector.broadcast %cst_212 : f32 to vector<32x32xf32>
      %338 = arith.select %336, %334, %337 : vector<32x32xi1>, vector<32x32xf32>
      %339 = arith.cmpf one, %338, %338 : vector<32x32xf32>
      %cst_213 = arith.constant 0.000000e+00 : f32
      %340 = vector.broadcast %cst_213 : f32 to vector<32x32xf32>
      %341 = arith.select %339, %340, %338 : vector<32x32xi1>, vector<32x32xf32>
      %c0_214 = arith.constant 0 : index
      %c0_215 = arith.constant 0 : index
      %342 = vector.load %arg21[%c0_214, %c0_215] : memref<256x32xf32, #tpu.memory_space<vmem>>, vector<32x32xf32>
      tpu.vector_store %arg21[%c0_214, %c0_215], %341 {strides = array<i32>} : memref<256x32xf32, #tpu.memory_space<vmem>>, vector<32x32xf32>,
      %c0_216 = arith.constant 0 : index
      %c1_217 = arith.constant 1 : index
      %343 = vector.load %arg2[%c0_216, %c1_217] : memref<32x8xf32, #tpu.memory_space<vmem>>, vector<32x1xf32>
      %344 = arith.mulf %343, %343 : vector<32x1xf32>
      %cst_218 = arith.constant 0.000000e+00 : f32
      %345 = vector.broadcast %cst_218 : f32 to vector<32x1xf32>
      %346 = arith.subf %345, %344 : vector<32x1xf32>
      %347 = vector.broadcast %346 : vector<32x1xf32> to vector<32x32xf32>
      %348 = vector.broadcast %326 : vector<1x32xf32> to vector<32x32xf32>
      %349 = arith.mulf %347, %348 : vector<32x32xf32>
      %350 = math.exp %349 : vector<32x32xf32>
      %cst_219 = arith.constant 1.000000e-01 : f32
      %351 = vector.broadcast %cst_219 : f32 to vector<32x32xf32>
      %352 = arith.cmpf ogt, %350, %351 : vector<32x32xf32>
      %cst_220 = arith.constant 0.000000e+00 : f32
      %353 = vector.broadcast %cst_220 : f32 to vector<32x32xf32>
      %354 = arith.select %352, %350, %353 : vector<32x32xi1>, vector<32x32xf32>
      %355 = arith.cmpf one, %354, %354 : vector<32x32xf32>
      %cst_221 = arith.constant 0.000000e+00 : f32
      %356 = vector.broadcast %cst_221 : f32 to vector<32x32xf32>
      %357 = arith.select %355, %356, %354 : vector<32x32xi1>, vector<32x32xf32>
      %c32_222 = arith.constant 32 : index
      %c0_223 = arith.constant 0 : index
      %358 = vector.load %arg21[%c32_222, %c0_223] : memref<256x32xf32, #tpu.memory_space<vmem>>, vector<32x32xf32>
      tpu.vector_store %arg21[%c32_222, %c0_223], %357 {strides = array<i32>} : memref<256x32xf32, #tpu.memory_space<vmem>>, vector<32x32xf32>,
      %c0_224 = arith.constant 0 : index
      %c2 = arith.constant 2 : index
      %359 = vector.load %arg2[%c0_224, %c2] : memref<32x8xf32, #tpu.memory_space<vmem>>, vector<32x1xf32>
      %360 = arith.mulf %359, %359 : vector<32x1xf32>
      %cst_225 = arith.constant 0.000000e+00 : f32
      %361 = vector.broadcast %cst_225 : f32 to vector<32x1xf32>
      %362 = arith.subf %361, %360 : vector<32x1xf32>
      %363 = vector.broadcast %362 : vector<32x1xf32> to vector<32x32xf32>
      %364 = vector.broadcast %326 : vector<1x32xf32> to vector<32x32xf32>
      %365 = arith.mulf %363, %364 : vector<32x32xf32>
      %366 = math.exp %365 : vector<32x32xf32>
      %cst_226 = arith.constant 1.000000e-01 : f32
      %367 = vector.broadcast %cst_226 : f32 to vector<32x32xf32>
      %368 = arith.cmpf ogt, %366, %367 : vector<32x32xf32>
      %cst_227 = arith.constant 0.000000e+00 : f32
      %369 = vector.broadcast %cst_227 : f32 to vector<32x32xf32>
      %370 = arith.select %368, %366, %369 : vector<32x32xi1>, vector<32x32xf32>
      %371 = arith.cmpf one, %370, %370 : vector<32x32xf32>
      %cst_228 = arith.constant 0.000000e+00 : f32
      %372 = vector.broadcast %cst_228 : f32 to vector<32x32xf32>
      %373 = arith.select %371, %372, %370 : vector<32x32xi1>, vector<32x32xf32>
      %c64_229 = arith.constant 64 : index
      %c0_230 = arith.constant 0 : index
      %374 = vector.load %arg21[%c64_229, %c0_230] : memref<256x32xf32, #tpu.memory_space<vmem>>, vector<32x32xf32>
      tpu.vector_store %arg21[%c64_229, %c0_230], %373 {strides = array<i32>} : memref<256x32xf32, #tpu.memory_space<vmem>>, vector<32x32xf32>,
      %c0_231 = arith.constant 0 : index
      %c3 = arith.constant 3 : index
      %375 = vector.load %arg2[%c0_231, %c3] : memref<32x8xf32, #tpu.memory_space<vmem>>, vector<32x1xf32>
      %376 = arith.mulf %375, %375 : vector<32x1xf32>
      %cst_232 = arith.constant 0.000000e+00 : f32
      %377 = vector.broadcast %cst_232 : f32 to vector<32x1xf32>
      %378 = arith.subf %377, %376 : vector<32x1xf32>
      %379 = vector.broadcast %378 : vector<32x1xf32> to vector<32x32xf32>
      %380 = vector.broadcast %326 : vector<1x32xf32> to vector<32x32xf32>
      %381 = arith.mulf %379, %380 : vector<32x32xf32>
      %382 = math.exp %381 : vector<32x32xf32>
      %cst_233 = arith.constant 1.000000e-01 : f32
      %383 = vector.broadcast %cst_233 : f32 to vector<32x32xf32>
      %384 = arith.cmpf ogt, %382, %383 : vector<32x32xf32>
      %cst_234 = arith.constant 0.000000e+00 : f32
      %385 = vector.broadcast %cst_234 : f32 to vector<32x32xf32>
      %386 = arith.select %384, %382, %385 : vector<32x32xi1>, vector<32x32xf32>
      %387 = arith.cmpf one, %386, %386 : vector<32x32xf32>
      %cst_235 = arith.constant 0.000000e+00 : f32
      %388 = vector.broadcast %cst_235 : f32 to vector<32x32xf32>
      %389 = arith.select %387, %388, %386 : vector<32x32xi1>, vector<32x32xf32>
      %c96_236 = arith.constant 96 : index
      %c0_237 = arith.constant 0 : index
      %390 = vector.load %arg21[%c96_236, %c0_237] : memref<256x32xf32, #tpu.memory_space<vmem>>, vector<32x32xf32>
      tpu.vector_store %arg21[%c96_236, %c0_237], %389 {strides = array<i32>} : memref<256x32xf32, #tpu.memory_space<vmem>>, vector<32x32xf32>,
      %c0_238 = arith.constant 0 : index
      %c4 = arith.constant 4 : index
      %391 = vector.load %arg2[%c0_238, %c4] : memref<32x8xf32, #tpu.memory_space<vmem>>, vector<32x1xf32>
      %392 = arith.mulf %391, %391 : vector<32x1xf32>
      %cst_239 = arith.constant 0.000000e+00 : f32
      %393 = vector.broadcast %cst_239 : f32 to vector<32x1xf32>
      %394 = arith.subf %393, %392 : vector<32x1xf32>
      %395 = vector.broadcast %394 : vector<32x1xf32> to vector<32x32xf32>
      %396 = vector.broadcast %326 : vector<1x32xf32> to vector<32x32xf32>
      %397 = arith.mulf %395, %396 : vector<32x32xf32>
      %398 = math.exp %397 : vector<32x32xf32>
      %cst_240 = arith.constant 1.000000e-01 : f32
      %399 = vector.broadcast %cst_240 : f32 to vector<32x32xf32>
      %400 = arith.cmpf ogt, %398, %399 : vector<32x32xf32>
      %cst_241 = arith.constant 0.000000e+00 : f32
      %401 = vector.broadcast %cst_241 : f32 to vector<32x32xf32>
      %402 = arith.select %400, %398, %401 : vector<32x32xi1>, vector<32x32xf32>
      %403 = arith.cmpf one, %402, %402 : vector<32x32xf32>
      %cst_242 = arith.constant 0.000000e+00 : f32
      %404 = vector.broadcast %cst_242 : f32 to vector<32x32xf32>
      %405 = arith.select %403, %404, %402 : vector<32x32xi1>, vector<32x32xf32>
      %c128_243 = arith.constant 128 : index
      %c0_244 = arith.constant 0 : index
      %406 = vector.load %arg21[%c128_243, %c0_244] : memref<256x32xf32, #tpu.memory_space<vmem>>, vector<32x32xf32>
      tpu.vector_store %arg21[%c128_243, %c0_244], %405 {strides = array<i32>} : memref<256x32xf32, #tpu.memory_space<vmem>>, vector<32x32xf32>,
      %c0_245 = arith.constant 0 : index
      %c5 = arith.constant 5 : index
      %407 = vector.load %arg2[%c0_245, %c5] : memref<32x8xf32, #tpu.memory_space<vmem>>, vector<32x1xf32>
      %408 = arith.mulf %407, %407 : vector<32x1xf32>
      %cst_246 = arith.constant 0.000000e+00 : f32
      %409 = vector.broadcast %cst_246 : f32 to vector<32x1xf32>
      %410 = arith.subf %409, %408 : vector<32x1xf32>
      %411 = vector.broadcast %410 : vector<32x1xf32> to vector<32x32xf32>
      %412 = vector.broadcast %326 : vector<1x32xf32> to vector<32x32xf32>
      %413 = arith.mulf %411, %412 : vector<32x32xf32>
      %414 = math.exp %413 : vector<32x32xf32>
      %cst_247 = arith.constant 1.000000e-01 : f32
      %415 = vector.broadcast %cst_247 : f32 to vector<32x32xf32>
      %416 = arith.cmpf ogt, %414, %415 : vector<32x32xf32>
      %cst_248 = arith.constant 0.000000e+00 : f32
      %417 = vector.broadcast %cst_248 : f32 to vector<32x32xf32>
      %418 = arith.select %416, %414, %417 : vector<32x32xi1>, vector<32x32xf32>
      %419 = arith.cmpf one, %418, %418 : vector<32x32xf32>
      %cst_249 = arith.constant 0.000000e+00 : f32
      %420 = vector.broadcast %cst_249 : f32 to vector<32x32xf32>
      %421 = arith.select %419, %420, %418 : vector<32x32xi1>, vector<32x32xf32>
      %c160_250 = arith.constant 160 : index
      %c0_251 = arith.constant 0 : index
      %422 = vector.load %arg21[%c160_250, %c0_251] : memref<256x32xf32, #tpu.memory_space<vmem>>, vector<32x32xf32>
      tpu.vector_store %arg21[%c160_250, %c0_251], %421 {strides = array<i32>} : memref<256x32xf32, #tpu.memory_space<vmem>>, vector<32x32xf32>,
      %c0_252 = arith.constant 0 : index
      %c6 = arith.constant 6 : index
      %423 = vector.load %arg2[%c0_252, %c6] : memref<32x8xf32, #tpu.memory_space<vmem>>, vector<32x1xf32>
      %424 = arith.mulf %423, %423 : vector<32x1xf32>
      %cst_253 = arith.constant 0.000000e+00 : f32
      %425 = vector.broadcast %cst_253 : f32 to vector<32x1xf32>
      %426 = arith.subf %425, %424 : vector<32x1xf32>
      %427 = vector.broadcast %426 : vector<32x1xf32> to vector<32x32xf32>
      %428 = vector.broadcast %326 : vector<1x32xf32> to vector<32x32xf32>
      %429 = arith.mulf %427, %428 : vector<32x32xf32>
      %430 = math.exp %429 : vector<32x32xf32>
      %cst_254 = arith.constant 1.000000e-01 : f32
      %431 = vector.broadcast %cst_254 : f32 to vector<32x32xf32>
      %432 = arith.cmpf ogt, %430, %431 : vector<32x32xf32>
      %cst_255 = arith.constant 0.000000e+00 : f32
      %433 = vector.broadcast %cst_255 : f32 to vector<32x32xf32>
      %434 = arith.select %432, %430, %433 : vector<32x32xi1>, vector<32x32xf32>
      %435 = arith.cmpf one, %434, %434 : vector<32x32xf32>
      %cst_256 = arith.constant 0.000000e+00 : f32
      %436 = vector.broadcast %cst_256 : f32 to vector<32x32xf32>
      %437 = arith.select %435, %436, %434 : vector<32x32xi1>, vector<32x32xf32>
      %c192_257 = arith.constant 192 : index
      %c0_258 = arith.constant 0 : index
      %438 = vector.load %arg21[%c192_257, %c0_258] : memref<256x32xf32, #tpu.memory_space<vmem>>, vector<32x32xf32>
      tpu.vector_store %arg21[%c192_257, %c0_258], %437 {strides = array<i32>} : memref<256x32xf32, #tpu.memory_space<vmem>>, vector<32x32xf32>,
      %c0_259 = arith.constant 0 : index
      %c7 = arith.constant 7 : index
      %439 = vector.load %arg2[%c0_259, %c7] : memref<32x8xf32, #tpu.memory_space<vmem>>, vector<32x1xf32>
      %440 = arith.mulf %439, %439 : vector<32x1xf32>
      %cst_260 = arith.constant 0.000000e+00 : f32
      %441 = vector.broadcast %cst_260 : f32 to vector<32x1xf32>
      %442 = arith.subf %441, %440 : vector<32x1xf32>
      %443 = vector.broadcast %442 : vector<32x1xf32> to vector<32x32xf32>
      %444 = vector.broadcast %326 : vector<1x32xf32> to vector<32x32xf32>
      %445 = arith.mulf %443, %444 : vector<32x32xf32>
      %446 = math.exp %445 : vector<32x32xf32>
      %cst_261 = arith.constant 1.000000e-01 : f32
      %447 = vector.broadcast %cst_261 : f32 to vector<32x32xf32>
      %448 = arith.cmpf ogt, %446, %447 : vector<32x32xf32>
      %cst_262 = arith.constant 0.000000e+00 : f32
      %449 = vector.broadcast %cst_262 : f32 to vector<32x32xf32>
      %450 = arith.select %448, %446, %449 : vector<32x32xi1>, vector<32x32xf32>
      %451 = arith.cmpf one, %450, %450 : vector<32x32xf32>
      %cst_263 = arith.constant 0.000000e+00 : f32
      %452 = vector.broadcast %cst_263 : f32 to vector<32x32xf32>
      %453 = arith.select %451, %452, %450 : vector<32x32xi1>, vector<32x32xf32>
      %c224_264 = arith.constant 224 : index
      %c0_265 = arith.constant 0 : index
      %454 = vector.load %arg21[%c224_264, %c0_265] : memref<256x32xf32, #tpu.memory_space<vmem>>, vector<32x32xf32>
      tpu.vector_store %arg21[%c224_264, %c0_265], %453 {strides = array<i32>} : memref<256x32xf32, #tpu.memory_space<vmem>>, vector<32x32xf32>,
    } else {
    }
    %c0 = arith.constant 0 : index
    %c0_1 = arith.constant 0 : index
    %3 = vector.load %arg21[%c0, %c0_1] : memref<256x32xf32, #tpu.memory_space<vmem>>, vector<256x32xf32>
    %c0_2 = arith.constant 0 : index
    %c0_3 = arith.constant 0 : index
    %c0_4 = arith.constant 0 : index
    %c0_5 = arith.constant 0 : index
    %4 = vector.load %arg6[%c0_2, %c0_3, %c0_4, %c0_5] : memref<1x2x1x32xf32, #tpu.memory_space<vmem>>, vector<1x1x1x32xf32>
    %5 = vector.shape_cast %4 : vector<1x1x1x32xf32> to vector<1x32xf32>
    %c0_6 = arith.constant 0 : index
    %c0_7 = arith.constant 0 : index
    %c0_8 = arith.constant 0 : index
    %c0_9 = arith.constant 0 : index
    %6 = vector.load %arg7[%c0_6, %c0_7, %c0_8, %c0_9] : memref<1x2x1x32xf32, #tpu.memory_space<vmem>>, vector<1x1x1x32xf32>
    %7 = vector.shape_cast %6 : vector<1x1x1x32xf32> to vector<1x32xf32>
    %cst = arith.constant dense<0.000000e+00> : vector<256xf32>
    %8 = vector.multi_reduction <add>, %3, %cst [1] : vector<256x32xf32> to vector<256xf32>
    %9 = vector.shape_cast %8 : vector<256xf32> to vector<256x1xf32>
    %cst_10 = arith.constant 3.200000e+01 : f32
    %10 = vector.broadcast %cst_10 : f32 to vector<256x1xf32>
    %11 = arith.divf %9, %10 : vector<256x1xf32>
    %12 = vector.broadcast %11 : vector<256x1xf32> to vector<256x32xf32>
    %13 = arith.subf %3, %12 : vector<256x32xf32>
    %14 = arith.mulf %13, %13 : vector<256x32xf32>
    %cst_11 = arith.constant dense<0.000000e+00> : vector<256xf32>
    %15 = vector.multi_reduction <add>, %14, %cst_11 [1] : vector<256x32xf32> to vector<256xf32>
    %16 = vector.shape_cast %15 : vector<256xf32> to vector<256x1xf32>
    %cst_12 = arith.constant 3.200000e+01 : f32
    %17 = vector.broadcast %cst_12 : f32 to vector<256x1xf32>
    %18 = arith.divf %16, %17 : vector<256x1xf32>
    %19 = vector.broadcast %11 : vector<256x1xf32> to vector<256x32xf32>
    %20 = arith.subf %3, %19 : vector<256x32xf32>
    %cst_13 = arith.constant 9.99999974E-6 : f32
    %21 = vector.broadcast %cst_13 : f32 to vector<256x1xf32>
    %22 = arith.addf %18, %21 : vector<256x1xf32>
    %23 = math.rsqrt %22 : vector<256x1xf32>
    %24 = vector.broadcast %23 : vector<256x1xf32> to vector<256x32xf32>
    %25 = arith.mulf %20, %24 : vector<256x32xf32>
    %26 = vector.broadcast %5 : vector<1x32xf32> to vector<256x32xf32>
    %27 = arith.mulf %25, %26 : vector<256x32xf32>
    %28 = vector.broadcast %7 : vector<1x32xf32> to vector<256x32xf32>
    %29 = arith.addf %27, %28 : vector<256x32xf32>
    %c0_14 = arith.constant 0 : index
    %c0_15 = arith.constant 0 : index
    %c0_16 = arith.constant 0 : index
    %c0_17 = arith.constant 0 : index
    %30 = vector.load %arg8[%c0_14, %c0_15, %c0_16, %c0_17] : memref<1x2x32x160xbf16, #tpu.memory_space<vmem>>, vector<1x1x32x160xbf16>
    %31 = vector.shape_cast %30 : vector<1x1x32x160xbf16> to vector<32x160xbf16>
    %32 = arith.truncf %29 : vector<256x32xf32> to vector<256x32xbf16>
    %cst_18 = arith.constant dense<0.000000e+00> : vector<256x160xf32>
    %33 = tpu.matmul %32, %31, %cst_18 {dimension_numbers = #tpu.dot_dimension_numbers<[1], [0], [0], [1], [0, 0, 1, 1], [], []>} : vector<256x32xbf16>, vector<32x160xbf16>, vector<256x160xf32> -> vector<256x160xf32>
    %c0_19 = arith.constant 0 : index
    %c0_20 = arith.constant 0 : index
    %c0_21 = arith.constant 0 : index
    %c0_22 = arith.constant 0 : index
    %34 = vector.load %arg9[%c0_19, %c0_20, %c0_21, %c0_22] : memref<1x2x1x160xf32, #tpu.memory_space<vmem>>, vector<1x1x1x160xf32>
    %35 = vector.shape_cast %34 : vector<1x1x1x160xf32> to vector<1x160xf32>
    %36 = vector.broadcast %35 : vector<1x160xf32> to vector<256x160xf32>
    %37 = arith.addf %33, %36 : vector<256x160xf32>
    %38 = vector.extract_strided_slice %37 {offsets = [0, 32], sizes = [256, 32], strides = [1, 1]} : vector<256x160xf32> to vector<256x32xf32>
    %39 = arith.negf %38 : vector<256x32xf32>
    %40 = math.exp %39 : vector<256x32xf32>
    %cst_23 = arith.constant 1.000000e+00 : f32
    %41 = vector.broadcast %cst_23 : f32 to vector<256x32xf32>
    %42 = arith.addf %41, %40 : vector<256x32xf32>
    %43 = arith.divf %41, %42 : vector<256x32xf32>
    %44 = vector.extract_strided_slice %37 {offsets = [0, 0], sizes = [256, 32], strides = [1, 1]} : vector<256x160xf32> to vector<256x32xf32>
    %45 = arith.mulf %43, %44 : vector<256x32xf32>
    %46 = vector.extract_strided_slice %37 {offsets = [0, 96], sizes = [256, 32], strides = [1, 1]} : vector<256x160xf32> to vector<256x32xf32>
    %47 = arith.negf %46 : vector<256x32xf32>
    %48 = math.exp %47 : vector<256x32xf32>
    %cst_24 = arith.constant 1.000000e+00 : f32
    %49 = vector.broadcast %cst_24 : f32 to vector<256x32xf32>
    %50 = arith.addf %49, %48 : vector<256x32xf32>
    %51 = arith.divf %49, %50 : vector<256x32xf32>
    %52 = vector.extract_strided_slice %37 {offsets = [0, 64], sizes = [256, 32], strides = [1, 1]} : vector<256x160xf32> to vector<256x32xf32>
    %53 = arith.mulf %51, %52 : vector<256x32xf32>
    %54 = vector.extract_strided_slice %37 {offsets = [0, 128], sizes = [256, 32], strides = [1, 1]} : vector<256x160xf32> to vector<256x32xf32>
    %55 = arith.negf %54 : vector<256x32xf32>
    %56 = math.exp %55 : vector<256x32xf32>
    %cst_25 = arith.constant 1.000000e+00 : f32
    %57 = vector.broadcast %cst_25 : f32 to vector<256x32xf32>
    %58 = arith.addf %57, %56 : vector<256x32xf32>
    %59 = arith.divf %57, %58 : vector<256x32xf32>
    %60 = vector.extract_strided_slice %45 {offsets = [0, 0], sizes = [32, 32], strides = [1, 1]} : vector<256x32xf32> to vector<32x32xf32>
    %c0_26 = arith.constant 0 : index
    %c0_27 = arith.constant 0 : index
    %61 = vector.load %arg22[%c0_26, %c0_27] : memref<32x256xf32, #tpu.memory_space<vmem>>, vector<32x32xf32>
    tpu.vector_store %arg22[%c0_26, %c0_27], %60 {strides = array<i32>} : memref<32x256xf32, #tpu.memory_space<vmem>>, vector<32x32xf32>,
    %62 = vector.extract_strided_slice %53 {offsets = [0, 0], sizes = [32, 32], strides = [1, 1]} : vector<256x32xf32> to vector<32x32xf32>
    %c0_28 = arith.constant 0 : index
    %c0_29 = arith.constant 0 : index
    %63 = vector.load %arg23[%c0_28, %c0_29] : memref<32x256xf32, #tpu.memory_space<vmem>>, vector<32x32xf32>
    tpu.vector_store %arg23[%c0_28, %c0_29], %62 {strides = array<i32>} : memref<32x256xf32, #tpu.memory_space<vmem>>, vector<32x32xf32>,
    %64 = vector.extract_strided_slice %45 {offsets = [32, 0], sizes = [32, 32], strides = [1, 1]} : vector<256x32xf32> to vector<32x32xf32>
    %c0_30 = arith.constant 0 : index
    %c32 = arith.constant 32 : index
    %65 = vector.load %arg22[%c0_30, %c32] : memref<32x256xf32, #tpu.memory_space<vmem>>, vector<32x32xf32>
    tpu.vector_store %arg22[%c0_30, %c32], %64 {strides = array<i32>} : memref<32x256xf32, #tpu.memory_space<vmem>>, vector<32x32xf32>,
    %66 = vector.extract_strided_slice %53 {offsets = [32, 0], sizes = [32, 32], strides = [1, 1]} : vector<256x32xf32> to vector<32x32xf32>
    %c0_31 = arith.constant 0 : index
    %c32_32 = arith.constant 32 : index
    %67 = vector.load %arg23[%c0_31, %c32_32] : memref<32x256xf32, #tpu.memory_space<vmem>>, vector<32x32xf32>
    tpu.vector_store %arg23[%c0_31, %c32_32], %66 {strides = array<i32>} : memref<32x256xf32, #tpu.memory_space<vmem>>, vector<32x32xf32>,
    %68 = vector.extract_strided_slice %45 {offsets = [64, 0], sizes = [32, 32], strides = [1, 1]} : vector<256x32xf32> to vector<32x32xf32>
    %c0_33 = arith.constant 0 : index
    %c64 = arith.constant 64 : index
    %69 = vector.load %arg22[%c0_33, %c64] : memref<32x256xf32, #tpu.memory_space<vmem>>, vector<32x32xf32>
    tpu.vector_store %arg22[%c0_33, %c64], %68 {strides = array<i32>} : memref<32x256xf32, #tpu.memory_space<vmem>>, vector<32x32xf32>,
    %70 = vector.extract_strided_slice %53 {offsets = [64, 0], sizes = [32, 32], strides = [1, 1]} : vector<256x32xf32> to vector<32x32xf32>
    %c0_34 = arith.constant 0 : index
    %c64_35 = arith.constant 64 : index
    %71 = vector.load %arg23[%c0_34, %c64_35] : memref<32x256xf32, #tpu.memory_space<vmem>>, vector<32x32xf32>
    tpu.vector_store %arg23[%c0_34, %c64_35], %70 {strides = array<i32>} : memref<32x256xf32, #tpu.memory_space<vmem>>, vector<32x32xf32>,
    %72 = vector.extract_strided_slice %45 {offsets = [96, 0], sizes = [32, 32], strides = [1, 1]} : vector<256x32xf32> to vector<32x32xf32>
    %c0_36 = arith.constant 0 : index
    %c96 = arith.constant 96 : index
    %73 = vector.load %arg22[%c0_36, %c96] : memref<32x256xf32, #tpu.memory_space<vmem>>, vector<32x32xf32>
    tpu.vector_store %arg22[%c0_36, %c96], %72 {strides = array<i32>} : memref<32x256xf32, #tpu.memory_space<vmem>>, vector<32x32xf32>,
    %74 = vector.extract_strided_slice %53 {offsets = [96, 0], sizes = [32, 32], strides = [1, 1]} : vector<256x32xf32> to vector<32x32xf32>
    %c0_37 = arith.constant 0 : index
    %c96_38 = arith.constant 96 : index
    %75 = vector.load %arg23[%c0_37, %c96_38] : memref<32x256xf32, #tpu.memory_space<vmem>>, vector<32x32xf32>
    tpu.vector_store %arg23[%c0_37, %c96_38], %74 {strides = array<i32>} : memref<32x256xf32, #tpu.memory_space<vmem>>, vector<32x32xf32>,
    %76 = vector.extract_strided_slice %45 {offsets = [128, 0], sizes = [32, 32], strides = [1, 1]} : vector<256x32xf32> to vector<32x32xf32>
    %c0_39 = arith.constant 0 : index
    %c128 = arith.constant 128 : index
    %77 = vector.load %arg22[%c0_39, %c128] : memref<32x256xf32, #tpu.memory_space<vmem>>, vector<32x32xf32>
    tpu.vector_store %arg22[%c0_39, %c128], %76 {strides = array<i32>} : memref<32x256xf32, #tpu.memory_space<vmem>>, vector<32x32xf32>,
    %78 = vector.extract_strided_slice %53 {offsets = [128, 0], sizes = [32, 32], strides = [1, 1]} : vector<256x32xf32> to vector<32x32xf32>
    %c0_40 = arith.constant 0 : index
    %c128_41 = arith.constant 128 : index
    %79 = vector.load %arg23[%c0_40, %c128_41] : memref<32x256xf32, #tpu.memory_space<vmem>>, vector<32x32xf32>
    tpu.vector_store %arg23[%c0_40, %c128_41], %78 {strides = array<i32>} : memref<32x256xf32, #tpu.memory_space<vmem>>, vector<32x32xf32>,
    %80 = vector.extract_strided_slice %45 {offsets = [160, 0], sizes = [32, 32], strides = [1, 1]} : vector<256x32xf32> to vector<32x32xf32>
    %c0_42 = arith.constant 0 : index
    %c160 = arith.constant 160 : index
    %81 = vector.load %arg22[%c0_42, %c160] : memref<32x256xf32, #tpu.memory_space<vmem>>, vector<32x32xf32>
    tpu.vector_store %arg22[%c0_42, %c160], %80 {strides = array<i32>} : memref<32x256xf32, #tpu.memory_space<vmem>>, vector<32x32xf32>,
    %82 = vector.extract_strided_slice %53 {offsets = [160, 0], sizes = [32, 32], strides = [1, 1]} : vector<256x32xf32> to vector<32x32xf32>
    %c0_43 = arith.constant 0 : index
    %c160_44 = arith.constant 160 : index
    %83 = vector.load %arg23[%c0_43, %c160_44] : memref<32x256xf32, #tpu.memory_space<vmem>>, vector<32x32xf32>
    tpu.vector_store %arg23[%c0_43, %c160_44], %82 {strides = array<i32>} : memref<32x256xf32, #tpu.memory_space<vmem>>, vector<32x32xf32>,
    %84 = vector.extract_strided_slice %45 {offsets = [192, 0], sizes = [32, 32], strides = [1, 1]} : vector<256x32xf32> to vector<32x32xf32>
    %c0_45 = arith.constant 0 : index
    %c192 = arith.constant 192 : index
    %85 = vector.load %arg22[%c0_45, %c192] : memref<32x256xf32, #tpu.memory_space<vmem>>, vector<32x32xf32>
    tpu.vector_store %arg22[%c0_45, %c192], %84 {strides = array<i32>} : memref<32x256xf32, #tpu.memory_space<vmem>>, vector<32x32xf32>,
    %86 = vector.extract_strided_slice %53 {offsets = [192, 0], sizes = [32, 32], strides = [1, 1]} : vector<256x32xf32> to vector<32x32xf32>
    %c0_46 = arith.constant 0 : index
    %c192_47 = arith.constant 192 : index
    %87 = vector.load %arg23[%c0_46, %c192_47] : memref<32x256xf32, #tpu.memory_space<vmem>>, vector<32x32xf32>
    tpu.vector_store %arg23[%c0_46, %c192_47], %86 {strides = array<i32>} : memref<32x256xf32, #tpu.memory_space<vmem>>, vector<32x32xf32>,
    %88 = vector.extract_strided_slice %45 {offsets = [224, 0], sizes = [32, 32], strides = [1, 1]} : vector<256x32xf32> to vector<32x32xf32>
    %c0_48 = arith.constant 0 : index
    %c224 = arith.constant 224 : index
    %89 = vector.load %arg22[%c0_48, %c224] : memref<32x256xf32, #tpu.memory_space<vmem>>, vector<32x32xf32>
    tpu.vector_store %arg22[%c0_48, %c224], %88 {strides = array<i32>} : memref<32x256xf32, #tpu.memory_space<vmem>>, vector<32x32xf32>,
    %90 = vector.extract_strided_slice %53 {offsets = [224, 0], sizes = [32, 32], strides = [1, 1]} : vector<256x32xf32> to vector<32x32xf32>
    %c0_49 = arith.constant 0 : index
    %c224_50 = arith.constant 224 : index
    %91 = vector.load %arg23[%c0_49, %c224_50] : memref<32x256xf32, #tpu.memory_space<vmem>>, vector<32x32xf32>
    tpu.vector_store %arg23[%c0_49, %c224_50], %90 {strides = array<i32>} : memref<32x256xf32, #tpu.memory_space<vmem>>, vector<32x32xf32>,
    %c0_i32_51 = arith.constant 0 : i32
    %c32_i32 = arith.constant 32 : i32
    %92 = arith.addi %c0_i32_51, %c32_i32 : i32
    %c1_i32 = arith.constant 1 : i32
    scf.for %arg25 = %c0_i32_51 to %92 step %c1_i32  : i32 {
      %321 = arith.index_cast %arg25 : i32 to index
      %c0_204 = arith.constant 0 : index
      %322 = vector.load %arg22[%321, %c0_204] : memref<32x256xf32, #tpu.memory_space<vmem>>, vector<1x256xf32>
      %c8_i32 = arith.constant 8 : i32
      %323 = arith.muli %arg25, %c8_i32 : i32
      %c0_i32_205 = arith.constant 0 : i32
      %324 = arith.addi %323, %c0_i32_205 : i32
      %325 = arith.index_cast %324 : i32 to index
      %326 = memref.load %arg1[%325] : memref<256xi32, #tpu.memory_space<smem>>
      %327 = arith.index_cast %326 : i32 to index
      %c0_206 = arith.constant 0 : index
      %328 = vector.load %arg23[%327, %c0_206] : memref<32x256xf32, #tpu.memory_space<vmem>>, vector<1x256xf32>
      %329 = arith.mulf %322, %328 : vector<1x256xf32>
      %330 = vector.extract_strided_slice %329 {offsets = [0, 0], sizes = [1, 32], strides = [1, 1]} : vector<1x256xf32> to vector<1x32xf32>
      %331 = vector.extract_strided_slice %329 {offsets = [0, 32], sizes = [1, 32], strides = [1, 1]} : vector<1x256xf32> to vector<1x32xf32>
      %332 = arith.addf %330, %331 : vector<1x32xf32>
      %333 = vector.extract_strided_slice %329 {offsets = [0, 64], sizes = [1, 32], strides = [1, 1]} : vector<1x256xf32> to vector<1x32xf32>
      %334 = arith.addf %332, %333 : vector<1x32xf32>
      %335 = vector.extract_strided_slice %329 {offsets = [0, 96], sizes = [1, 32], strides = [1, 1]} : vector<1x256xf32> to vector<1x32xf32>
      %336 = arith.addf %334, %335 : vector<1x32xf32>
      %337 = vector.extract_strided_slice %329 {offsets = [0, 128], sizes = [1, 32], strides = [1, 1]} : vector<1x256xf32> to vector<1x32xf32>
      %338 = arith.addf %336, %337 : vector<1x32xf32>
      %339 = vector.extract_strided_slice %329 {offsets = [0, 160], sizes = [1, 32], strides = [1, 1]} : vector<1x256xf32> to vector<1x32xf32>
      %340 = arith.addf %338, %339 : vector<1x32xf32>
      %341 = vector.extract_strided_slice %329 {offsets = [0, 192], sizes = [1, 32], strides = [1, 1]} : vector<1x256xf32> to vector<1x32xf32>
      %342 = arith.addf %340, %341 : vector<1x32xf32>
      %343 = vector.extract_strided_slice %329 {offsets = [0, 224], sizes = [1, 32], strides = [1, 1]} : vector<1x256xf32> to vector<1x32xf32>
      %344 = arith.addf %342, %343 : vector<1x32xf32>
      %c0_i32_207 = arith.constant 0 : i32
      %345 = arith.addi %c0_i32_207, %arg25 : i32
      %346 = arith.index_cast %345 : i32 to index
      %c0_208 = arith.constant 0 : index
      %347 = vector.load %arg24[%346, %c0_208] : memref<256x32xf32, #tpu.memory_space<vmem>>, vector<1x32xf32>
      tpu.vector_store %arg24[%346, %c0_208], %344 {strides = array<i32>} : memref<256x32xf32, #tpu.memory_space<vmem>>, vector<1x32xf32>,
      %c8_i32_209 = arith.constant 8 : i32
      %348 = arith.muli %arg25, %c8_i32_209 : i32
      %c1_i32_210 = arith.constant 1 : i32
      %349 = arith.addi %348, %c1_i32_210 : i32
      %350 = arith.index_cast %349 : i32 to index
      %351 = memref.load %arg1[%350] : memref<256xi32, #tpu.memory_space<smem>>
      %352 = arith.index_cast %351 : i32 to index
      %c0_211 = arith.constant 0 : index
      %353 = vector.load %arg23[%352, %c0_211] : memref<32x256xf32, #tpu.memory_space<vmem>>, vector<1x256xf32>
      %354 = arith.mulf %322, %353 : vector<1x256xf32>
      %355 = vector.extract_strided_slice %354 {offsets = [0, 0], sizes = [1, 32], strides = [1, 1]} : vector<1x256xf32> to vector<1x32xf32>
      %356 = vector.extract_strided_slice %354 {offsets = [0, 32], sizes = [1, 32], strides = [1, 1]} : vector<1x256xf32> to vector<1x32xf32>
      %357 = arith.addf %355, %356 : vector<1x32xf32>
      %358 = vector.extract_strided_slice %354 {offsets = [0, 64], sizes = [1, 32], strides = [1, 1]} : vector<1x256xf32> to vector<1x32xf32>
      %359 = arith.addf %357, %358 : vector<1x32xf32>
      %360 = vector.extract_strided_slice %354 {offsets = [0, 96], sizes = [1, 32], strides = [1, 1]} : vector<1x256xf32> to vector<1x32xf32>
      %361 = arith.addf %359, %360 : vector<1x32xf32>
      %362 = vector.extract_strided_slice %354 {offsets = [0, 128], sizes = [1, 32], strides = [1, 1]} : vector<1x256xf32> to vector<1x32xf32>
      %363 = arith.addf %361, %362 : vector<1x32xf32>
      %364 = vector.extract_strided_slice %354 {offsets = [0, 160], sizes = [1, 32], strides = [1, 1]} : vector<1x256xf32> to vector<1x32xf32>
      %365 = arith.addf %363, %364 : vector<1x32xf32>
      %366 = vector.extract_strided_slice %354 {offsets = [0, 192], sizes = [1, 32], strides = [1, 1]} : vector<1x256xf32> to vector<1x32xf32>
      %367 = arith.addf %365, %366 : vector<1x32xf32>
      %368 = vector.extract_strided_slice %354 {offsets = [0, 224], sizes = [1, 32], strides = [1, 1]} : vector<1x256xf32> to vector<1x32xf32>
      %369 = arith.addf %367, %368 : vector<1x32xf32>
      %c32_i32_212 = arith.constant 32 : i32
      %370 = arith.addi %c32_i32_212, %arg25 : i32
      %371 = arith.index_cast %370 : i32 to index
      %c0_213 = arith.constant 0 : index
      %372 = vector.load %arg24[%371, %c0_213] : memref<256x32xf32, #tpu.memory_space<vmem>>, vector<1x32xf32>
      tpu.vector_store %arg24[%371, %c0_213], %369 {strides = array<i32>} : memref<256x32xf32, #tpu.memory_space<vmem>>, vector<1x32xf32>,
      %c8_i32_214 = arith.constant 8 : i32
      %373 = arith.muli %arg25, %c8_i32_214 : i32
      %c2_i32 = arith.constant 2 : i32
      %374 = arith.addi %373, %c2_i32 : i32
      %375 = arith.index_cast %374 : i32 to index
      %376 = memref.load %arg1[%375] : memref<256xi32, #tpu.memory_space<smem>>
      %377 = arith.index_cast %376 : i32 to index
      %c0_215 = arith.constant 0 : index
      %378 = vector.load %arg23[%377, %c0_215] : memref<32x256xf32, #tpu.memory_space<vmem>>, vector<1x256xf32>
      %379 = arith.mulf %322, %378 : vector<1x256xf32>
      %380 = vector.extract_strided_slice %379 {offsets = [0, 0], sizes = [1, 32], strides = [1, 1]} : vector<1x256xf32> to vector<1x32xf32>
      %381 = vector.extract_strided_slice %379 {offsets = [0, 32], sizes = [1, 32], strides = [1, 1]} : vector<1x256xf32> to vector<1x32xf32>
      %382 = arith.addf %380, %381 : vector<1x32xf32>
      %383 = vector.extract_strided_slice %379 {offsets = [0, 64], sizes = [1, 32], strides = [1, 1]} : vector<1x256xf32> to vector<1x32xf32>
      %384 = arith.addf %382, %383 : vector<1x32xf32>
      %385 = vector.extract_strided_slice %379 {offsets = [0, 96], sizes = [1, 32], strides = [1, 1]} : vector<1x256xf32> to vector<1x32xf32>
      %386 = arith.addf %384, %385 : vector<1x32xf32>
      %387 = vector.extract_strided_slice %379 {offsets = [0, 128], sizes = [1, 32], strides = [1, 1]} : vector<1x256xf32> to vector<1x32xf32>
      %388 = arith.addf %386, %387 : vector<1x32xf32>
      %389 = vector.extract_strided_slice %379 {offsets = [0, 160], sizes = [1, 32], strides = [1, 1]} : vector<1x256xf32> to vector<1x32xf32>
      %390 = arith.addf %388, %389 : vector<1x32xf32>
      %391 = vector.extract_strided_slice %379 {offsets = [0, 192], sizes = [1, 32], strides = [1, 1]} : vector<1x256xf32> to vector<1x32xf32>
      %392 = arith.addf %390, %391 : vector<1x32xf32>
      %393 = vector.extract_strided_slice %379 {offsets = [0, 224], sizes = [1, 32], strides = [1, 1]} : vector<1x256xf32> to vector<1x32xf32>
      %394 = arith.addf %392, %393 : vector<1x32xf32>
      %c64_i32 = arith.constant 64 : i32
      %395 = arith.addi %c64_i32, %arg25 : i32
      %396 = arith.index_cast %395 : i32 to index
      %c0_216 = arith.constant 0 : index
      %397 = vector.load %arg24[%396, %c0_216] : memref<256x32xf32, #tpu.memory_space<vmem>>, vector<1x32xf32>
      tpu.vector_store %arg24[%396, %c0_216], %394 {strides = array<i32>} : memref<256x32xf32, #tpu.memory_space<vmem>>, vector<1x32xf32>,
      %c8_i32_217 = arith.constant 8 : i32
      %398 = arith.muli %arg25, %c8_i32_217 : i32
      %c3_i32 = arith.constant 3 : i32
      %399 = arith.addi %398, %c3_i32 : i32
      %400 = arith.index_cast %399 : i32 to index
      %401 = memref.load %arg1[%400] : memref<256xi32, #tpu.memory_space<smem>>
      %402 = arith.index_cast %401 : i32 to index
      %c0_218 = arith.constant 0 : index
      %403 = vector.load %arg23[%402, %c0_218] : memref<32x256xf32, #tpu.memory_space<vmem>>, vector<1x256xf32>
      %404 = arith.mulf %322, %403 : vector<1x256xf32>
      %405 = vector.extract_strided_slice %404 {offsets = [0, 0], sizes = [1, 32], strides = [1, 1]} : vector<1x256xf32> to vector<1x32xf32>
      %406 = vector.extract_strided_slice %404 {offsets = [0, 32], sizes = [1, 32], strides = [1, 1]} : vector<1x256xf32> to vector<1x32xf32>
      %407 = arith.addf %405, %406 : vector<1x32xf32>
      %408 = vector.extract_strided_slice %404 {offsets = [0, 64], sizes = [1, 32], strides = [1, 1]} : vector<1x256xf32> to vector<1x32xf32>
      %409 = arith.addf %407, %408 : vector<1x32xf32>
      %410 = vector.extract_strided_slice %404 {offsets = [0, 96], sizes = [1, 32], strides = [1, 1]} : vector<1x256xf32> to vector<1x32xf32>
      %411 = arith.addf %409, %410 : vector<1x32xf32>
      %412 = vector.extract_strided_slice %404 {offsets = [0, 128], sizes = [1, 32], strides = [1, 1]} : vector<1x256xf32> to vector<1x32xf32>
      %413 = arith.addf %411, %412 : vector<1x32xf32>
      %414 = vector.extract_strided_slice %404 {offsets = [0, 160], sizes = [1, 32], strides = [1, 1]} : vector<1x256xf32> to vector<1x32xf32>
      %415 = arith.addf %413, %414 : vector<1x32xf32>
      %416 = vector.extract_strided_slice %404 {offsets = [0, 192], sizes = [1, 32], strides = [1, 1]} : vector<1x256xf32> to vector<1x32xf32>
      %417 = arith.addf %415, %416 : vector<1x32xf32>
      %418 = vector.extract_strided_slice %404 {offsets = [0, 224], sizes = [1, 32], strides = [1, 1]} : vector<1x256xf32> to vector<1x32xf32>
      %419 = arith.addf %417, %418 : vector<1x32xf32>
      %c96_i32 = arith.constant 96 : i32
      %420 = arith.addi %c96_i32, %arg25 : i32
      %421 = arith.index_cast %420 : i32 to index
      %c0_219 = arith.constant 0 : index
      %422 = vector.load %arg24[%421, %c0_219] : memref<256x32xf32, #tpu.memory_space<vmem>>, vector<1x32xf32>
      tpu.vector_store %arg24[%421, %c0_219], %419 {strides = array<i32>} : memref<256x32xf32, #tpu.memory_space<vmem>>, vector<1x32xf32>,
      %c8_i32_220 = arith.constant 8 : i32
      %423 = arith.muli %arg25, %c8_i32_220 : i32
      %c4_i32 = arith.constant 4 : i32
      %424 = arith.addi %423, %c4_i32 : i32
      %425 = arith.index_cast %424 : i32 to index
      %426 = memref.load %arg1[%425] : memref<256xi32, #tpu.memory_space<smem>>
      %427 = arith.index_cast %426 : i32 to index
      %c0_221 = arith.constant 0 : index
      %428 = vector.load %arg23[%427, %c0_221] : memref<32x256xf32, #tpu.memory_space<vmem>>, vector<1x256xf32>
      %429 = arith.mulf %322, %428 : vector<1x256xf32>
      %430 = vector.extract_strided_slice %429 {offsets = [0, 0], sizes = [1, 32], strides = [1, 1]} : vector<1x256xf32> to vector<1x32xf32>
      %431 = vector.extract_strided_slice %429 {offsets = [0, 32], sizes = [1, 32], strides = [1, 1]} : vector<1x256xf32> to vector<1x32xf32>
      %432 = arith.addf %430, %431 : vector<1x32xf32>
      %433 = vector.extract_strided_slice %429 {offsets = [0, 64], sizes = [1, 32], strides = [1, 1]} : vector<1x256xf32> to vector<1x32xf32>
      %434 = arith.addf %432, %433 : vector<1x32xf32>
      %435 = vector.extract_strided_slice %429 {offsets = [0, 96], sizes = [1, 32], strides = [1, 1]} : vector<1x256xf32> to vector<1x32xf32>
      %436 = arith.addf %434, %435 : vector<1x32xf32>
      %437 = vector.extract_strided_slice %429 {offsets = [0, 128], sizes = [1, 32], strides = [1, 1]} : vector<1x256xf32> to vector<1x32xf32>
      %438 = arith.addf %436, %437 : vector<1x32xf32>
      %439 = vector.extract_strided_slice %429 {offsets = [0, 160], sizes = [1, 32], strides = [1, 1]} : vector<1x256xf32> to vector<1x32xf32>
      %440 = arith.addf %438, %439 : vector<1x32xf32>
      %441 = vector.extract_strided_slice %429 {offsets = [0, 192], sizes = [1, 32], strides = [1, 1]} : vector<1x256xf32> to vector<1x32xf32>
      %442 = arith.addf %440, %441 : vector<1x32xf32>
      %443 = vector.extract_strided_slice %429 {offsets = [0, 224], sizes = [1, 32], strides = [1, 1]} : vector<1x256xf32> to vector<1x32xf32>
      %444 = arith.addf %442, %443 : vector<1x32xf32>
      %c128_i32 = arith.constant 128 : i32
      %445 = arith.addi %c128_i32, %arg25 : i32
      %446 = arith.index_cast %445 : i32 to index
      %c0_222 = arith.constant 0 : index
      %447 = vector.load %arg24[%446, %c0_222] : memref<256x32xf32, #tpu.memory_space<vmem>>, vector<1x32xf32>
      tpu.vector_store %arg24[%446, %c0_222], %444 {strides = array<i32>} : memref<256x32xf32, #tpu.memory_space<vmem>>, vector<1x32xf32>,
      %c8_i32_223 = arith.constant 8 : i32
      %448 = arith.muli %arg25, %c8_i32_223 : i32
      %c5_i32 = arith.constant 5 : i32
      %449 = arith.addi %448, %c5_i32 : i32
      %450 = arith.index_cast %449 : i32 to index
      %451 = memref.load %arg1[%450] : memref<256xi32, #tpu.memory_space<smem>>
      %452 = arith.index_cast %451 : i32 to index
      %c0_224 = arith.constant 0 : index
      %453 = vector.load %arg23[%452, %c0_224] : memref<32x256xf32, #tpu.memory_space<vmem>>, vector<1x256xf32>
      %454 = arith.mulf %322, %453 : vector<1x256xf32>
      %455 = vector.extract_strided_slice %454 {offsets = [0, 0], sizes = [1, 32], strides = [1, 1]} : vector<1x256xf32> to vector<1x32xf32>
      %456 = vector.extract_strided_slice %454 {offsets = [0, 32], sizes = [1, 32], strides = [1, 1]} : vector<1x256xf32> to vector<1x32xf32>
      %457 = arith.addf %455, %456 : vector<1x32xf32>
      %458 = vector.extract_strided_slice %454 {offsets = [0, 64], sizes = [1, 32], strides = [1, 1]} : vector<1x256xf32> to vector<1x32xf32>
      %459 = arith.addf %457, %458 : vector<1x32xf32>
      %460 = vector.extract_strided_slice %454 {offsets = [0, 96], sizes = [1, 32], strides = [1, 1]} : vector<1x256xf32> to vector<1x32xf32>
      %461 = arith.addf %459, %460 : vector<1x32xf32>
      %462 = vector.extract_strided_slice %454 {offsets = [0, 128], sizes = [1, 32], strides = [1, 1]} : vector<1x256xf32> to vector<1x32xf32>
      %463 = arith.addf %461, %462 : vector<1x32xf32>
      %464 = vector.extract_strided_slice %454 {offsets = [0, 160], sizes = [1, 32], strides = [1, 1]} : vector<1x256xf32> to vector<1x32xf32>
      %465 = arith.addf %463, %464 : vector<1x32xf32>
      %466 = vector.extract_strided_slice %454 {offsets = [0, 192], sizes = [1, 32], strides = [1, 1]} : vector<1x256xf32> to vector<1x32xf32>
      %467 = arith.addf %465, %466 : vector<1x32xf32>
      %468 = vector.extract_strided_slice %454 {offsets = [0, 224], sizes = [1, 32], strides = [1, 1]} : vector<1x256xf32> to vector<1x32xf32>
      %469 = arith.addf %467, %468 : vector<1x32xf32>
      %c160_i32 = arith.constant 160 : i32
      %470 = arith.addi %c160_i32, %arg25 : i32
      %471 = arith.index_cast %470 : i32 to index
      %c0_225 = arith.constant 0 : index
      %472 = vector.load %arg24[%471, %c0_225] : memref<256x32xf32, #tpu.memory_space<vmem>>, vector<1x32xf32>
      tpu.vector_store %arg24[%471, %c0_225], %469 {strides = array<i32>} : memref<256x32xf32, #tpu.memory_space<vmem>>, vector<1x32xf32>,
      %c8_i32_226 = arith.constant 8 : i32
      %473 = arith.muli %arg25, %c8_i32_226 : i32
      %c6_i32 = arith.constant 6 : i32
      %474 = arith.addi %473, %c6_i32 : i32
      %475 = arith.index_cast %474 : i32 to index
      %476 = memref.load %arg1[%475] : memref<256xi32, #tpu.memory_space<smem>>
      %477 = arith.index_cast %476 : i32 to index
      %c0_227 = arith.constant 0 : index
      %478 = vector.load %arg23[%477, %c0_227] : memref<32x256xf32, #tpu.memory_space<vmem>>, vector<1x256xf32>
      %479 = arith.mulf %322, %478 : vector<1x256xf32>
      %480 = vector.extract_strided_slice %479 {offsets = [0, 0], sizes = [1, 32], strides = [1, 1]} : vector<1x256xf32> to vector<1x32xf32>
      %481 = vector.extract_strided_slice %479 {offsets = [0, 32], sizes = [1, 32], strides = [1, 1]} : vector<1x256xf32> to vector<1x32xf32>
      %482 = arith.addf %480, %481 : vector<1x32xf32>
      %483 = vector.extract_strided_slice %479 {offsets = [0, 64], sizes = [1, 32], strides = [1, 1]} : vector<1x256xf32> to vector<1x32xf32>
      %484 = arith.addf %482, %483 : vector<1x32xf32>
      %485 = vector.extract_strided_slice %479 {offsets = [0, 96], sizes = [1, 32], strides = [1, 1]} : vector<1x256xf32> to vector<1x32xf32>
      %486 = arith.addf %484, %485 : vector<1x32xf32>
      %487 = vector.extract_strided_slice %479 {offsets = [0, 128], sizes = [1, 32], strides = [1, 1]} : vector<1x256xf32> to vector<1x32xf32>
      %488 = arith.addf %486, %487 : vector<1x32xf32>
      %489 = vector.extract_strided_slice %479 {offsets = [0, 160], sizes = [1, 32], strides = [1, 1]} : vector<1x256xf32> to vector<1x32xf32>
      %490 = arith.addf %488, %489 : vector<1x32xf32>
      %491 = vector.extract_strided_slice %479 {offsets = [0, 192], sizes = [1, 32], strides = [1, 1]} : vector<1x256xf32> to vector<1x32xf32>
      %492 = arith.addf %490, %491 : vector<1x32xf32>
      %493 = vector.extract_strided_slice %479 {offsets = [0, 224], sizes = [1, 32], strides = [1, 1]} : vector<1x256xf32> to vector<1x32xf32>
      %494 = arith.addf %492, %493 : vector<1x32xf32>
      %c192_i32 = arith.constant 192 : i32
      %495 = arith.addi %c192_i32, %arg25 : i32
      %496 = arith.index_cast %495 : i32 to index
      %c0_228 = arith.constant 0 : index
      %497 = vector.load %arg24[%496, %c0_228] : memref<256x32xf32, #tpu.memory_space<vmem>>, vector<1x32xf32>
      tpu.vector_store %arg24[%496, %c0_228], %494 {strides = array<i32>} : memref<256x32xf32, #tpu.memory_space<vmem>>, vector<1x32xf32>,
      %c8_i32_229 = arith.constant 8 : i32
      %498 = arith.muli %arg25, %c8_i32_229 : i32
      %c7_i32 = arith.constant 7 : i32
      %499 = arith.addi %498, %c7_i32 : i32
      %500 = arith.index_cast %499 : i32 to index
      %501 = memref.load %arg1[%500] : memref<256xi32, #tpu.memory_space<smem>>
      %502 = arith.index_cast %501 : i32 to index
      %c0_230 = arith.constant 0 : index
      %503 = vector.load %arg23[%502, %c0_230] : memref<32x256xf32, #tpu.memory_space<vmem>>, vector<1x256xf32>
      %504 = arith.mulf %322, %503 : vector<1x256xf32>
      %505 = vector.extract_strided_slice %504 {offsets = [0, 0], sizes = [1, 32], strides = [1, 1]} : vector<1x256xf32> to vector<1x32xf32>
      %506 = vector.extract_strided_slice %504 {offsets = [0, 32], sizes = [1, 32], strides = [1, 1]} : vector<1x256xf32> to vector<1x32xf32>
      %507 = arith.addf %505, %506 : vector<1x32xf32>
      %508 = vector.extract_strided_slice %504 {offsets = [0, 64], sizes = [1, 32], strides = [1, 1]} : vector<1x256xf32> to vector<1x32xf32>
      %509 = arith.addf %507, %508 : vector<1x32xf32>
      %510 = vector.extract_strided_slice %504 {offsets = [0, 96], sizes = [1, 32], strides = [1, 1]} : vector<1x256xf32> to vector<1x32xf32>
      %511 = arith.addf %509, %510 : vector<1x32xf32>
      %512 = vector.extract_strided_slice %504 {offsets = [0, 128], sizes = [1, 32], strides = [1, 1]} : vector<1x256xf32> to vector<1x32xf32>
      %513 = arith.addf %511, %512 : vector<1x32xf32>
      %514 = vector.extract_strided_slice %504 {offsets = [0, 160], sizes = [1, 32], strides = [1, 1]} : vector<1x256xf32> to vector<1x32xf32>
      %515 = arith.addf %513, %514 : vector<1x32xf32>
      %516 = vector.extract_strided_slice %504 {offsets = [0, 192], sizes = [1, 32], strides = [1, 1]} : vector<1x256xf32> to vector<1x32xf32>
      %517 = arith.addf %515, %516 : vector<1x32xf32>
      %518 = vector.extract_strided_slice %504 {offsets = [0, 224], sizes = [1, 32], strides = [1, 1]} : vector<1x256xf32> to vector<1x32xf32>
      %519 = arith.addf %517, %518 : vector<1x32xf32>
      %c224_i32 = arith.constant 224 : i32
      %520 = arith.addi %c224_i32, %arg25 : i32
      %521 = arith.index_cast %520 : i32 to index
      %c0_231 = arith.constant 0 : index
      %522 = vector.load %arg24[%521, %c0_231] : memref<256x32xf32, #tpu.memory_space<vmem>>, vector<1x32xf32>
      tpu.vector_store %arg24[%521, %c0_231], %519 {strides = array<i32>} : memref<256x32xf32, #tpu.memory_space<vmem>>, vector<1x32xf32>,
    }
    %c32_i32_52 = arith.constant 32 : i32
    %c0_53 = arith.constant 0 : index
    %c0_54 = arith.constant 0 : index
    %93 = vector.load %arg24[%c0_53, %c0_54] : memref<256x32xf32, #tpu.memory_space<vmem>>, vector<256x32xf32>
    %c0_55 = arith.constant 0 : index
    %c0_56 = arith.constant 0 : index
    %c0_57 = arith.constant 0 : index
    %c0_58 = arith.constant 0 : index
    %94 = vector.load %arg10[%c0_55, %c0_56, %c0_57, %c0_58] : memref<1x2x1x32xf32, #tpu.memory_space<vmem>>, vector<1x1x1x32xf32>
    %95 = vector.shape_cast %94 : vector<1x1x1x32xf32> to vector<1x32xf32>
    %c0_59 = arith.constant 0 : index
    %c0_60 = arith.constant 0 : index
    %c0_61 = arith.constant 0 : index
    %c0_62 = arith.constant 0 : index
    %96 = vector.load %arg11[%c0_59, %c0_60, %c0_61, %c0_62] : memref<1x2x1x32xf32, #tpu.memory_space<vmem>>, vector<1x1x1x32xf32>
    %97 = vector.shape_cast %96 : vector<1x1x1x32xf32> to vector<1x32xf32>
    %cst_63 = arith.constant dense<0.000000e+00> : vector<256xf32>
    %98 = vector.multi_reduction <add>, %93, %cst_63 [1] : vector<256x32xf32> to vector<256xf32>
    %99 = vector.shape_cast %98 : vector<256xf32> to vector<256x1xf32>
    %cst_64 = arith.constant 3.200000e+01 : f32
    %100 = vector.broadcast %cst_64 : f32 to vector<256x1xf32>
    %101 = arith.divf %99, %100 : vector<256x1xf32>
    %102 = vector.broadcast %101 : vector<256x1xf32> to vector<256x32xf32>
    %103 = arith.subf %93, %102 : vector<256x32xf32>
    %104 = arith.mulf %103, %103 : vector<256x32xf32>
    %cst_65 = arith.constant dense<0.000000e+00> : vector<256xf32>
    %105 = vector.multi_reduction <add>, %104, %cst_65 [1] : vector<256x32xf32> to vector<256xf32>
    %106 = vector.shape_cast %105 : vector<256xf32> to vector<256x1xf32>
    %cst_66 = arith.constant 3.200000e+01 : f32
    %107 = vector.broadcast %cst_66 : f32 to vector<256x1xf32>
    %108 = arith.divf %106, %107 : vector<256x1xf32>
    %109 = vector.broadcast %101 : vector<256x1xf32> to vector<256x32xf32>
    %110 = arith.subf %93, %109 : vector<256x32xf32>
    %cst_67 = arith.constant 9.99999974E-6 : f32
    %111 = vector.broadcast %cst_67 : f32 to vector<256x1xf32>
    %112 = arith.addf %108, %111 : vector<256x1xf32>
    %113 = math.rsqrt %112 : vector<256x1xf32>
    %114 = vector.broadcast %113 : vector<256x1xf32> to vector<256x32xf32>
    %115 = arith.mulf %110, %114 : vector<256x32xf32>
    %116 = vector.broadcast %95 : vector<1x32xf32> to vector<256x32xf32>
    %117 = arith.mulf %115, %116 : vector<256x32xf32>
    %118 = vector.broadcast %97 : vector<1x32xf32> to vector<256x32xf32>
    %119 = arith.addf %117, %118 : vector<256x32xf32>
    %c0_68 = arith.constant 0 : index
    %c0_69 = arith.constant 0 : index
    %c0_70 = arith.constant 0 : index
    %c0_71 = arith.constant 0 : index
    %120 = vector.load %arg12[%c0_68, %c0_69, %c0_70, %c0_71] : memref<1x2x32x32xbf16, #tpu.memory_space<vmem>>, vector<1x1x32x32xbf16>
    %121 = vector.shape_cast %120 : vector<1x1x32x32xbf16> to vector<32x32xbf16>
    %122 = arith.truncf %119 : vector<256x32xf32> to vector<256x32xbf16>
    %cst_72 = arith.constant dense<0.000000e+00> : vector<256x32xf32>
    %123 = tpu.matmul %122, %121, %cst_72 {dimension_numbers = #tpu.dot_dimension_numbers<[1], [0], [0], [1], [0, 0, 1, 1], [], []>} : vector<256x32xbf16>, vector<32x32xbf16>, vector<256x32xf32> -> vector<256x32xf32>
    %c0_73 = arith.constant 0 : index
    %c0_74 = arith.constant 0 : index
    %c0_75 = arith.constant 0 : index
    %c0_76 = arith.constant 0 : index
    %124 = vector.load %arg13[%c0_73, %c0_74, %c0_75, %c0_76] : memref<1x2x1x32xf32, #tpu.memory_space<vmem>>, vector<1x1x1x32xf32>
    %125 = vector.shape_cast %124 : vector<1x1x1x32xf32> to vector<1x32xf32>
    %126 = vector.broadcast %125 : vector<1x32xf32> to vector<256x32xf32>
    %127 = arith.addf %123, %126 : vector<256x32xf32>
    %128 = arith.mulf %59, %127 : vector<256x32xf32>
    %129 = arith.addf %3, %128 : vector<256x32xf32>
    %c0_77 = arith.constant 0 : index
    %c0_78 = arith.constant 0 : index
    %130 = vector.load %arg21[%c0_77, %c0_78] : memref<256x32xf32, #tpu.memory_space<vmem>>, vector<256x32xf32>
    tpu.vector_store %arg21[%c0_77, %c0_78], %129 {strides = array<i32>} : memref<256x32xf32, #tpu.memory_space<vmem>>, vector<256x32xf32>,
    %c0_79 = arith.constant 0 : index
    %c0_80 = arith.constant 0 : index
    %131 = vector.load %arg21[%c0_79, %c0_80] : memref<256x32xf32, #tpu.memory_space<vmem>>, vector<256x32xf32>
    %c0_81 = arith.constant 0 : index
    %c1 = arith.constant 1 : index
    %c0_82 = arith.constant 0 : index
    %c0_83 = arith.constant 0 : index
    %132 = vector.load %arg6[%c0_81, %c1, %c0_82, %c0_83] : memref<1x2x1x32xf32, #tpu.memory_space<vmem>>, vector<1x1x1x32xf32>
    %133 = vector.shape_cast %132 : vector<1x1x1x32xf32> to vector<1x32xf32>
    %c0_84 = arith.constant 0 : index
    %c1_85 = arith.constant 1 : index
    %c0_86 = arith.constant 0 : index
    %c0_87 = arith.constant 0 : index
    %134 = vector.load %arg7[%c0_84, %c1_85, %c0_86, %c0_87] : memref<1x2x1x32xf32, #tpu.memory_space<vmem>>, vector<1x1x1x32xf32>
    %135 = vector.shape_cast %134 : vector<1x1x1x32xf32> to vector<1x32xf32>
    %cst_88 = arith.constant dense<0.000000e+00> : vector<256xf32>
    %136 = vector.multi_reduction <add>, %131, %cst_88 [1] : vector<256x32xf32> to vector<256xf32>
    %137 = vector.shape_cast %136 : vector<256xf32> to vector<256x1xf32>
    %cst_89 = arith.constant 3.200000e+01 : f32
    %138 = vector.broadcast %cst_89 : f32 to vector<256x1xf32>
    %139 = arith.divf %137, %138 : vector<256x1xf32>
    %140 = vector.broadcast %139 : vector<256x1xf32> to vector<256x32xf32>
    %141 = arith.subf %131, %140 : vector<256x32xf32>
    %142 = arith.mulf %141, %141 : vector<256x32xf32>
    %cst_90 = arith.constant dense<0.000000e+00> : vector<256xf32>
    %143 = vector.multi_reduction <add>, %142, %cst_90 [1] : vector<256x32xf32> to vector<256xf32>
    %144 = vector.shape_cast %143 : vector<256xf32> to vector<256x1xf32>
    %cst_91 = arith.constant 3.200000e+01 : f32
    %145 = vector.broadcast %cst_91 : f32 to vector<256x1xf32>
    %146 = arith.divf %144, %145 : vector<256x1xf32>
    %147 = vector.broadcast %139 : vector<256x1xf32> to vector<256x32xf32>
    %148 = arith.subf %131, %147 : vector<256x32xf32>
    %cst_92 = arith.constant 9.99999974E-6 : f32
    %149 = vector.broadcast %cst_92 : f32 to vector<256x1xf32>
    %150 = arith.addf %146, %149 : vector<256x1xf32>
    %151 = math.rsqrt %150 : vector<256x1xf32>
    %152 = vector.broadcast %151 : vector<256x1xf32> to vector<256x32xf32>
    %153 = arith.mulf %148, %152 : vector<256x32xf32>
    %154 = vector.broadcast %133 : vector<1x32xf32> to vector<256x32xf32>
    %155 = arith.mulf %153, %154 : vector<256x32xf32>
    %156 = vector.broadcast %135 : vector<1x32xf32> to vector<256x32xf32>
    %157 = arith.addf %155, %156 : vector<256x32xf32>
    %c0_93 = arith.constant 0 : index
    %c1_94 = arith.constant 1 : index
    %c0_95 = arith.constant 0 : index
    %c0_96 = arith.constant 0 : index
    %158 = vector.load %arg8[%c0_93, %c1_94, %c0_95, %c0_96] : memref<1x2x32x160xbf16, #tpu.memory_space<vmem>>, vector<1x1x32x160xbf16>
    %159 = vector.shape_cast %158 : vector<1x1x32x160xbf16> to vector<32x160xbf16>
    %160 = arith.truncf %157 : vector<256x32xf32> to vector<256x32xbf16>
    %cst_97 = arith.constant dense<0.000000e+00> : vector<256x160xf32>
    %161 = tpu.matmul %160, %159, %cst_97 {dimension_numbers = #tpu.dot_dimension_numbers<[1], [0], [0], [1], [0, 0, 1, 1], [], []>} : vector<256x32xbf16>, vector<32x160xbf16>, vector<256x160xf32> -> vector<256x160xf32>
    %c0_98 = arith.constant 0 : index
    %c1_99 = arith.constant 1 : index
    %c0_100 = arith.constant 0 : index
    %c0_101 = arith.constant 0 : index
    %162 = vector.load %arg9[%c0_98, %c1_99, %c0_100, %c0_101] : memref<1x2x1x160xf32, #tpu.memory_space<vmem>>, vector<1x1x1x160xf32>
    %163 = vector.shape_cast %162 : vector<1x1x1x160xf32> to vector<1x160xf32>
    %164 = vector.broadcast %163 : vector<1x160xf32> to vector<256x160xf32>
    %165 = arith.addf %161, %164 : vector<256x160xf32>
    %166 = vector.extract_strided_slice %165 {offsets = [0, 32], sizes = [256, 32], strides = [1, 1]} : vector<256x160xf32> to vector<256x32xf32>
    %167 = arith.negf %166 : vector<256x32xf32>
    %168 = math.exp %167 : vector<256x32xf32>
    %cst_102 = arith.constant 1.000000e+00 : f32
    %169 = vector.broadcast %cst_102 : f32 to vector<256x32xf32>
    %170 = arith.addf %169, %168 : vector<256x32xf32>
    %171 = arith.divf %169, %170 : vector<256x32xf32>
    %172 = vector.extract_strided_slice %165 {offsets = [0, 0], sizes = [256, 32], strides = [1, 1]} : vector<256x160xf32> to vector<256x32xf32>
    %173 = arith.mulf %171, %172 : vector<256x32xf32>
    %174 = vector.extract_strided_slice %165 {offsets = [0, 96], sizes = [256, 32], strides = [1, 1]} : vector<256x160xf32> to vector<256x32xf32>
    %175 = arith.negf %174 : vector<256x32xf32>
    %176 = math.exp %175 : vector<256x32xf32>
    %cst_103 = arith.constant 1.000000e+00 : f32
    %177 = vector.broadcast %cst_103 : f32 to vector<256x32xf32>
    %178 = arith.addf %177, %176 : vector<256x32xf32>
    %179 = arith.divf %177, %178 : vector<256x32xf32>
    %180 = vector.extract_strided_slice %165 {offsets = [0, 64], sizes = [256, 32], strides = [1, 1]} : vector<256x160xf32> to vector<256x32xf32>
    %181 = arith.mulf %179, %180 : vector<256x32xf32>
    %182 = vector.extract_strided_slice %165 {offsets = [0, 128], sizes = [256, 32], strides = [1, 1]} : vector<256x160xf32> to vector<256x32xf32>
    %183 = arith.negf %182 : vector<256x32xf32>
    %184 = math.exp %183 : vector<256x32xf32>
    %cst_104 = arith.constant 1.000000e+00 : f32
    %185 = vector.broadcast %cst_104 : f32 to vector<256x32xf32>
    %186 = arith.addf %185, %184 : vector<256x32xf32>
    %187 = arith.divf %185, %186 : vector<256x32xf32>
    %188 = vector.extract_strided_slice %181 {offsets = [0, 0], sizes = [32, 32], strides = [1, 1]} : vector<256x32xf32> to vector<32x32xf32>
    %c0_105 = arith.constant 0 : index
    %c0_106 = arith.constant 0 : index
    %189 = vector.load %arg22[%c0_105, %c0_106] : memref<32x256xf32, #tpu.memory_space<vmem>>, vector<32x32xf32>
    tpu.vector_store %arg22[%c0_105, %c0_106], %188 {strides = array<i32>} : memref<32x256xf32, #tpu.memory_space<vmem>>, vector<32x32xf32>,
    %190 = vector.extract_strided_slice %173 {offsets = [0, 0], sizes = [32, 32], strides = [1, 1]} : vector<256x32xf32> to vector<32x32xf32>
    %c0_107 = arith.constant 0 : index
    %c0_108 = arith.constant 0 : index
    %191 = vector.load %arg23[%c0_107, %c0_108] : memref<32x256xf32, #tpu.memory_space<vmem>>, vector<32x32xf32>
    tpu.vector_store %arg23[%c0_107, %c0_108], %190 {strides = array<i32>} : memref<32x256xf32, #tpu.memory_space<vmem>>, vector<32x32xf32>,
    %192 = vector.extract_strided_slice %181 {offsets = [32, 0], sizes = [32, 32], strides = [1, 1]} : vector<256x32xf32> to vector<32x32xf32>
    %c0_109 = arith.constant 0 : index
    %c32_110 = arith.constant 32 : index
    %193 = vector.load %arg22[%c0_109, %c32_110] : memref<32x256xf32, #tpu.memory_space<vmem>>, vector<32x32xf32>
    tpu.vector_store %arg22[%c0_109, %c32_110], %192 {strides = array<i32>} : memref<32x256xf32, #tpu.memory_space<vmem>>, vector<32x32xf32>,
    %194 = vector.extract_strided_slice %173 {offsets = [32, 0], sizes = [32, 32], strides = [1, 1]} : vector<256x32xf32> to vector<32x32xf32>
    %c0_111 = arith.constant 0 : index
    %c32_112 = arith.constant 32 : index
    %195 = vector.load %arg23[%c0_111, %c32_112] : memref<32x256xf32, #tpu.memory_space<vmem>>, vector<32x32xf32>
    tpu.vector_store %arg23[%c0_111, %c32_112], %194 {strides = array<i32>} : memref<32x256xf32, #tpu.memory_space<vmem>>, vector<32x32xf32>,
    %196 = vector.extract_strided_slice %181 {offsets = [64, 0], sizes = [32, 32], strides = [1, 1]} : vector<256x32xf32> to vector<32x32xf32>
    %c0_113 = arith.constant 0 : index
    %c64_114 = arith.constant 64 : index
    %197 = vector.load %arg22[%c0_113, %c64_114] : memref<32x256xf32, #tpu.memory_space<vmem>>, vector<32x32xf32>
    tpu.vector_store %arg22[%c0_113, %c64_114], %196 {strides = array<i32>} : memref<32x256xf32, #tpu.memory_space<vmem>>, vector<32x32xf32>,
    %198 = vector.extract_strided_slice %173 {offsets = [64, 0], sizes = [32, 32], strides = [1, 1]} : vector<256x32xf32> to vector<32x32xf32>
    %c0_115 = arith.constant 0 : index
    %c64_116 = arith.constant 64 : index
    %199 = vector.load %arg23[%c0_115, %c64_116] : memref<32x256xf32, #tpu.memory_space<vmem>>, vector<32x32xf32>
    tpu.vector_store %arg23[%c0_115, %c64_116], %198 {strides = array<i32>} : memref<32x256xf32, #tpu.memory_space<vmem>>, vector<32x32xf32>,
    %200 = vector.extract_strided_slice %181 {offsets = [96, 0], sizes = [32, 32], strides = [1, 1]} : vector<256x32xf32> to vector<32x32xf32>
    %c0_117 = arith.constant 0 : index
    %c96_118 = arith.constant 96 : index
    %201 = vector.load %arg22[%c0_117, %c96_118] : memref<32x256xf32, #tpu.memory_space<vmem>>, vector<32x32xf32>
    tpu.vector_store %arg22[%c0_117, %c96_118], %200 {strides = array<i32>} : memref<32x256xf32, #tpu.memory_space<vmem>>, vector<32x32xf32>,
    %202 = vector.extract_strided_slice %173 {offsets = [96, 0], sizes = [32, 32], strides = [1, 1]} : vector<256x32xf32> to vector<32x32xf32>
    %c0_119 = arith.constant 0 : index
    %c96_120 = arith.constant 96 : index
    %203 = vector.load %arg23[%c0_119, %c96_120] : memref<32x256xf32, #tpu.memory_space<vmem>>, vector<32x32xf32>
    tpu.vector_store %arg23[%c0_119, %c96_120], %202 {strides = array<i32>} : memref<32x256xf32, #tpu.memory_space<vmem>>, vector<32x32xf32>,
    %204 = vector.extract_strided_slice %181 {offsets = [128, 0], sizes = [32, 32], strides = [1, 1]} : vector<256x32xf32> to vector<32x32xf32>
    %c0_121 = arith.constant 0 : index
    %c128_122 = arith.constant 128 : index
    %205 = vector.load %arg22[%c0_121, %c128_122] : memref<32x256xf32, #tpu.memory_space<vmem>>, vector<32x32xf32>
    tpu.vector_store %arg22[%c0_121, %c128_122], %204 {strides = array<i32>} : memref<32x256xf32, #tpu.memory_space<vmem>>, vector<32x32xf32>,
    %206 = vector.extract_strided_slice %173 {offsets = [128, 0], sizes = [32, 32], strides = [1, 1]} : vector<256x32xf32> to vector<32x32xf32>
    %c0_123 = arith.constant 0 : index
    %c128_124 = arith.constant 128 : index
    %207 = vector.load %arg23[%c0_123, %c128_124] : memref<32x256xf32, #tpu.memory_space<vmem>>, vector<32x32xf32>
    tpu.vector_store %arg23[%c0_123, %c128_124], %206 {strides = array<i32>} : memref<32x256xf32, #tpu.memory_space<vmem>>, vector<32x32xf32>,
    %208 = vector.extract_strided_slice %181 {offsets = [160, 0], sizes = [32, 32], strides = [1, 1]} : vector<256x32xf32> to vector<32x32xf32>
    %c0_125 = arith.constant 0 : index
    %c160_126 = arith.constant 160 : index
    %209 = vector.load %arg22[%c0_125, %c160_126] : memref<32x256xf32, #tpu.memory_space<vmem>>, vector<32x32xf32>
    tpu.vector_store %arg22[%c0_125, %c160_126], %208 {strides = array<i32>} : memref<32x256xf32, #tpu.memory_space<vmem>>, vector<32x32xf32>,
    %210 = vector.extract_strided_slice %173 {offsets = [160, 0], sizes = [32, 32], strides = [1, 1]} : vector<256x32xf32> to vector<32x32xf32>
    %c0_127 = arith.constant 0 : index
    %c160_128 = arith.constant 160 : index
    %211 = vector.load %arg23[%c0_127, %c160_128] : memref<32x256xf32, #tpu.memory_space<vmem>>, vector<32x32xf32>
    tpu.vector_store %arg23[%c0_127, %c160_128], %210 {strides = array<i32>} : memref<32x256xf32, #tpu.memory_space<vmem>>, vector<32x32xf32>,
    %212 = vector.extract_strided_slice %181 {offsets = [192, 0], sizes = [32, 32], strides = [1, 1]} : vector<256x32xf32> to vector<32x32xf32>
    %c0_129 = arith.constant 0 : index
    %c192_130 = arith.constant 192 : index
    %213 = vector.load %arg22[%c0_129, %c192_130] : memref<32x256xf32, #tpu.memory_space<vmem>>, vector<32x32xf32>
    tpu.vector_store %arg22[%c0_129, %c192_130], %212 {strides = array<i32>} : memref<32x256xf32, #tpu.memory_space<vmem>>, vector<32x32xf32>,
    %214 = vector.extract_strided_slice %173 {offsets = [192, 0], sizes = [32, 32], strides = [1, 1]} : vector<256x32xf32> to vector<32x32xf32>
    %c0_131 = arith.constant 0 : index
    %c192_132 = arith.constant 192 : index
    %215 = vector.load %arg23[%c0_131, %c192_132] : memref<32x256xf32, #tpu.memory_space<vmem>>, vector<32x32xf32>
    tpu.vector_store %arg23[%c0_131, %c192_132], %214 {strides = array<i32>} : memref<32x256xf32, #tpu.memory_space<vmem>>, vector<32x32xf32>,
    %216 = vector.extract_strided_slice %181 {offsets = [224, 0], sizes = [32, 32], strides = [1, 1]} : vector<256x32xf32> to vector<32x32xf32>
    %c0_133 = arith.constant 0 : index
    %c224_134 = arith.constant 224 : index
    %217 = vector.load %arg22[%c0_133, %c224_134] : memref<32x256xf32, #tpu.memory_space<vmem>>, vector<32x32xf32>
    tpu.vector_store %arg22[%c0_133, %c224_134], %216 {strides = array<i32>} : memref<32x256xf32, #tpu.memory_space<vmem>>, vector<32x32xf32>,
    %218 = vector.extract_strided_slice %173 {offsets = [224, 0], sizes = [32, 32], strides = [1, 1]} : vector<256x32xf32> to vector<32x32xf32>
    %c0_135 = arith.constant 0 : index
    %c224_136 = arith.constant 224 : index
    %219 = vector.load %arg23[%c0_135, %c224_136] : memref<32x256xf32, #tpu.memory_space<vmem>>, vector<32x32xf32>
    tpu.vector_store %arg23[%c0_135, %c224_136], %218 {strides = array<i32>} : memref<32x256xf32, #tpu.memory_space<vmem>>, vector<32x32xf32>,
    %c0_i32_137 = arith.constant 0 : i32
    %c32_i32_138 = arith.constant 32 : i32
    %220 = arith.addi %c0_i32_137, %c32_i32_138 : i32
    %c1_i32_139 = arith.constant 1 : i32
    scf.for %arg25 = %c0_i32_137 to %220 step %c1_i32_139  : i32 {
      %321 = arith.index_cast %arg25 : i32 to index
      %c0_204 = arith.constant 0 : index
      %322 = vector.load %arg22[%321, %c0_204] : memref<32x256xf32, #tpu.memory_space<vmem>>, vector<1x256xf32>
      %c8_i32 = arith.constant 8 : i32
      %323 = arith.muli %arg25, %c8_i32 : i32
      %c0_i32_205 = arith.constant 0 : i32
      %324 = arith.addi %323, %c0_i32_205 : i32
      %325 = arith.index_cast %324 : i32 to index
      %326 = memref.load %arg1[%325] : memref<256xi32, #tpu.memory_space<smem>>
      %327 = arith.index_cast %326 : i32 to index
      %c0_206 = arith.constant 0 : index
      %328 = vector.load %arg23[%327, %c0_206] : memref<32x256xf32, #tpu.memory_space<vmem>>, vector<1x256xf32>
      %329 = arith.mulf %322, %328 : vector<1x256xf32>
      %330 = vector.extract_strided_slice %329 {offsets = [0, 0], sizes = [1, 32], strides = [1, 1]} : vector<1x256xf32> to vector<1x32xf32>
      %331 = vector.extract_strided_slice %329 {offsets = [0, 32], sizes = [1, 32], strides = [1, 1]} : vector<1x256xf32> to vector<1x32xf32>
      %332 = arith.addf %330, %331 : vector<1x32xf32>
      %333 = vector.extract_strided_slice %329 {offsets = [0, 64], sizes = [1, 32], strides = [1, 1]} : vector<1x256xf32> to vector<1x32xf32>
      %334 = arith.addf %332, %333 : vector<1x32xf32>
      %335 = vector.extract_strided_slice %329 {offsets = [0, 96], sizes = [1, 32], strides = [1, 1]} : vector<1x256xf32> to vector<1x32xf32>
      %336 = arith.addf %334, %335 : vector<1x32xf32>
      %337 = vector.extract_strided_slice %329 {offsets = [0, 128], sizes = [1, 32], strides = [1, 1]} : vector<1x256xf32> to vector<1x32xf32>
      %338 = arith.addf %336, %337 : vector<1x32xf32>
      %339 = vector.extract_strided_slice %329 {offsets = [0, 160], sizes = [1, 32], strides = [1, 1]} : vector<1x256xf32> to vector<1x32xf32>
      %340 = arith.addf %338, %339 : vector<1x32xf32>
      %341 = vector.extract_strided_slice %329 {offsets = [0, 192], sizes = [1, 32], strides = [1, 1]} : vector<1x256xf32> to vector<1x32xf32>
      %342 = arith.addf %340, %341 : vector<1x32xf32>
      %343 = vector.extract_strided_slice %329 {offsets = [0, 224], sizes = [1, 32], strides = [1, 1]} : vector<1x256xf32> to vector<1x32xf32>
      %344 = arith.addf %342, %343 : vector<1x32xf32>
      %c0_i32_207 = arith.constant 0 : i32
      %345 = arith.addi %c0_i32_207, %arg25 : i32
      %346 = arith.index_cast %345 : i32 to index
      %c0_208 = arith.constant 0 : index
      %347 = vector.load %arg24[%346, %c0_208] : memref<256x32xf32, #tpu.memory_space<vmem>>, vector<1x32xf32>
      tpu.vector_store %arg24[%346, %c0_208], %344 {strides = array<i32>} : memref<256x32xf32, #tpu.memory_space<vmem>>, vector<1x32xf32>,
      %c8_i32_209 = arith.constant 8 : i32
      %348 = arith.muli %arg25, %c8_i32_209 : i32
      %c1_i32_210 = arith.constant 1 : i32
      %349 = arith.addi %348, %c1_i32_210 : i32
      %350 = arith.index_cast %349 : i32 to index
      %351 = memref.load %arg1[%350] : memref<256xi32, #tpu.memory_space<smem>>
      %352 = arith.index_cast %351 : i32 to index
      %c0_211 = arith.constant 0 : index
      %353 = vector.load %arg23[%352, %c0_211] : memref<32x256xf32, #tpu.memory_space<vmem>>, vector<1x256xf32>
      %354 = arith.mulf %322, %353 : vector<1x256xf32>
      %355 = vector.extract_strided_slice %354 {offsets = [0, 0], sizes = [1, 32], strides = [1, 1]} : vector<1x256xf32> to vector<1x32xf32>
      %356 = vector.extract_strided_slice %354 {offsets = [0, 32], sizes = [1, 32], strides = [1, 1]} : vector<1x256xf32> to vector<1x32xf32>
      %357 = arith.addf %355, %356 : vector<1x32xf32>
      %358 = vector.extract_strided_slice %354 {offsets = [0, 64], sizes = [1, 32], strides = [1, 1]} : vector<1x256xf32> to vector<1x32xf32>
      %359 = arith.addf %357, %358 : vector<1x32xf32>
      %360 = vector.extract_strided_slice %354 {offsets = [0, 96], sizes = [1, 32], strides = [1, 1]} : vector<1x256xf32> to vector<1x32xf32>
      %361 = arith.addf %359, %360 : vector<1x32xf32>
      %362 = vector.extract_strided_slice %354 {offsets = [0, 128], sizes = [1, 32], strides = [1, 1]} : vector<1x256xf32> to vector<1x32xf32>
      %363 = arith.addf %361, %362 : vector<1x32xf32>
      %364 = vector.extract_strided_slice %354 {offsets = [0, 160], sizes = [1, 32], strides = [1, 1]} : vector<1x256xf32> to vector<1x32xf32>
      %365 = arith.addf %363, %364 : vector<1x32xf32>
      %366 = vector.extract_strided_slice %354 {offsets = [0, 192], sizes = [1, 32], strides = [1, 1]} : vector<1x256xf32> to vector<1x32xf32>
      %367 = arith.addf %365, %366 : vector<1x32xf32>
      %368 = vector.extract_strided_slice %354 {offsets = [0, 224], sizes = [1, 32], strides = [1, 1]} : vector<1x256xf32> to vector<1x32xf32>
      %369 = arith.addf %367, %368 : vector<1x32xf32>
      %c32_i32_212 = arith.constant 32 : i32
      %370 = arith.addi %c32_i32_212, %arg25 : i32
      %371 = arith.index_cast %370 : i32 to index
      %c0_213 = arith.constant 0 : index
      %372 = vector.load %arg24[%371, %c0_213] : memref<256x32xf32, #tpu.memory_space<vmem>>, vector<1x32xf32>
      tpu.vector_store %arg24[%371, %c0_213], %369 {strides = array<i32>} : memref<256x32xf32, #tpu.memory_space<vmem>>, vector<1x32xf32>,
      %c8_i32_214 = arith.constant 8 : i32
      %373 = arith.muli %arg25, %c8_i32_214 : i32
      %c2_i32 = arith.constant 2 : i32
      %374 = arith.addi %373, %c2_i32 : i32
      %375 = arith.index_cast %374 : i32 to index
      %376 = memref.load %arg1[%375] : memref<256xi32, #tpu.memory_space<smem>>
      %377 = arith.index_cast %376 : i32 to index
      %c0_215 = arith.constant 0 : index
      %378 = vector.load %arg23[%377, %c0_215] : memref<32x256xf32, #tpu.memory_space<vmem>>, vector<1x256xf32>
      %379 = arith.mulf %322, %378 : vector<1x256xf32>
      %380 = vector.extract_strided_slice %379 {offsets = [0, 0], sizes = [1, 32], strides = [1, 1]} : vector<1x256xf32> to vector<1x32xf32>
      %381 = vector.extract_strided_slice %379 {offsets = [0, 32], sizes = [1, 32], strides = [1, 1]} : vector<1x256xf32> to vector<1x32xf32>
      %382 = arith.addf %380, %381 : vector<1x32xf32>
      %383 = vector.extract_strided_slice %379 {offsets = [0, 64], sizes = [1, 32], strides = [1, 1]} : vector<1x256xf32> to vector<1x32xf32>
      %384 = arith.addf %382, %383 : vector<1x32xf32>
      %385 = vector.extract_strided_slice %379 {offsets = [0, 96], sizes = [1, 32], strides = [1, 1]} : vector<1x256xf32> to vector<1x32xf32>
      %386 = arith.addf %384, %385 : vector<1x32xf32>
      %387 = vector.extract_strided_slice %379 {offsets = [0, 128], sizes = [1, 32], strides = [1, 1]} : vector<1x256xf32> to vector<1x32xf32>
      %388 = arith.addf %386, %387 : vector<1x32xf32>
      %389 = vector.extract_strided_slice %379 {offsets = [0, 160], sizes = [1, 32], strides = [1, 1]} : vector<1x256xf32> to vector<1x32xf32>
      %390 = arith.addf %388, %389 : vector<1x32xf32>
      %391 = vector.extract_strided_slice %379 {offsets = [0, 192], sizes = [1, 32], strides = [1, 1]} : vector<1x256xf32> to vector<1x32xf32>
      %392 = arith.addf %390, %391 : vector<1x32xf32>
      %393 = vector.extract_strided_slice %379 {offsets = [0, 224], sizes = [1, 32], strides = [1, 1]} : vector<1x256xf32> to vector<1x32xf32>
      %394 = arith.addf %392, %393 : vector<1x32xf32>
      %c64_i32 = arith.constant 64 : i32
      %395 = arith.addi %c64_i32, %arg25 : i32
      %396 = arith.index_cast %395 : i32 to index
      %c0_216 = arith.constant 0 : index
      %397 = vector.load %arg24[%396, %c0_216] : memref<256x32xf32, #tpu.memory_space<vmem>>, vector<1x32xf32>
      tpu.vector_store %arg24[%396, %c0_216], %394 {strides = array<i32>} : memref<256x32xf32, #tpu.memory_space<vmem>>, vector<1x32xf32>,
      %c8_i32_217 = arith.constant 8 : i32
      %398 = arith.muli %arg25, %c8_i32_217 : i32
      %c3_i32 = arith.constant 3 : i32
      %399 = arith.addi %398, %c3_i32 : i32
      %400 = arith.index_cast %399 : i32 to index
      %401 = memref.load %arg1[%400] : memref<256xi32, #tpu.memory_space<smem>>
      %402 = arith.index_cast %401 : i32 to index
      %c0_218 = arith.constant 0 : index
      %403 = vector.load %arg23[%402, %c0_218] : memref<32x256xf32, #tpu.memory_space<vmem>>, vector<1x256xf32>
      %404 = arith.mulf %322, %403 : vector<1x256xf32>
      %405 = vector.extract_strided_slice %404 {offsets = [0, 0], sizes = [1, 32], strides = [1, 1]} : vector<1x256xf32> to vector<1x32xf32>
      %406 = vector.extract_strided_slice %404 {offsets = [0, 32], sizes = [1, 32], strides = [1, 1]} : vector<1x256xf32> to vector<1x32xf32>
      %407 = arith.addf %405, %406 : vector<1x32xf32>
      %408 = vector.extract_strided_slice %404 {offsets = [0, 64], sizes = [1, 32], strides = [1, 1]} : vector<1x256xf32> to vector<1x32xf32>
      %409 = arith.addf %407, %408 : vector<1x32xf32>
      %410 = vector.extract_strided_slice %404 {offsets = [0, 96], sizes = [1, 32], strides = [1, 1]} : vector<1x256xf32> to vector<1x32xf32>
      %411 = arith.addf %409, %410 : vector<1x32xf32>
      %412 = vector.extract_strided_slice %404 {offsets = [0, 128], sizes = [1, 32], strides = [1, 1]} : vector<1x256xf32> to vector<1x32xf32>
      %413 = arith.addf %411, %412 : vector<1x32xf32>
      %414 = vector.extract_strided_slice %404 {offsets = [0, 160], sizes = [1, 32], strides = [1, 1]} : vector<1x256xf32> to vector<1x32xf32>
      %415 = arith.addf %413, %414 : vector<1x32xf32>
      %416 = vector.extract_strided_slice %404 {offsets = [0, 192], sizes = [1, 32], strides = [1, 1]} : vector<1x256xf32> to vector<1x32xf32>
      %417 = arith.addf %415, %416 : vector<1x32xf32>
      %418 = vector.extract_strided_slice %404 {offsets = [0, 224], sizes = [1, 32], strides = [1, 1]} : vector<1x256xf32> to vector<1x32xf32>
      %419 = arith.addf %417, %418 : vector<1x32xf32>
      %c96_i32 = arith.constant 96 : i32
      %420 = arith.addi %c96_i32, %arg25 : i32
      %421 = arith.index_cast %420 : i32 to index
      %c0_219 = arith.constant 0 : index
      %422 = vector.load %arg24[%421, %c0_219] : memref<256x32xf32, #tpu.memory_space<vmem>>, vector<1x32xf32>
      tpu.vector_store %arg24[%421, %c0_219], %419 {strides = array<i32>} : memref<256x32xf32, #tpu.memory_space<vmem>>, vector<1x32xf32>,
      %c8_i32_220 = arith.constant 8 : i32
      %423 = arith.muli %arg25, %c8_i32_220 : i32
      %c4_i32 = arith.constant 4 : i32
      %424 = arith.addi %423, %c4_i32 : i32
      %425 = arith.index_cast %424 : i32 to index
      %426 = memref.load %arg1[%425] : memref<256xi32, #tpu.memory_space<smem>>
      %427 = arith.index_cast %426 : i32 to index
      %c0_221 = arith.constant 0 : index
      %428 = vector.load %arg23[%427, %c0_221] : memref<32x256xf32, #tpu.memory_space<vmem>>, vector<1x256xf32>
      %429 = arith.mulf %322, %428 : vector<1x256xf32>
      %430 = vector.extract_strided_slice %429 {offsets = [0, 0], sizes = [1, 32], strides = [1, 1]} : vector<1x256xf32> to vector<1x32xf32>
      %431 = vector.extract_strided_slice %429 {offsets = [0, 32], sizes = [1, 32], strides = [1, 1]} : vector<1x256xf32> to vector<1x32xf32>
      %432 = arith.addf %430, %431 : vector<1x32xf32>
      %433 = vector.extract_strided_slice %429 {offsets = [0, 64], sizes = [1, 32], strides = [1, 1]} : vector<1x256xf32> to vector<1x32xf32>
      %434 = arith.addf %432, %433 : vector<1x32xf32>
      %435 = vector.extract_strided_slice %429 {offsets = [0, 96], sizes = [1, 32], strides = [1, 1]} : vector<1x256xf32> to vector<1x32xf32>
      %436 = arith.addf %434, %435 : vector<1x32xf32>
      %437 = vector.extract_strided_slice %429 {offsets = [0, 128], sizes = [1, 32], strides = [1, 1]} : vector<1x256xf32> to vector<1x32xf32>
      %438 = arith.addf %436, %437 : vector<1x32xf32>
      %439 = vector.extract_strided_slice %429 {offsets = [0, 160], sizes = [1, 32], strides = [1, 1]} : vector<1x256xf32> to vector<1x32xf32>
      %440 = arith.addf %438, %439 : vector<1x32xf32>
      %441 = vector.extract_strided_slice %429 {offsets = [0, 192], sizes = [1, 32], strides = [1, 1]} : vector<1x256xf32> to vector<1x32xf32>
      %442 = arith.addf %440, %441 : vector<1x32xf32>
      %443 = vector.extract_strided_slice %429 {offsets = [0, 224], sizes = [1, 32], strides = [1, 1]} : vector<1x256xf32> to vector<1x32xf32>
      %444 = arith.addf %442, %443 : vector<1x32xf32>
      %c128_i32 = arith.constant 128 : i32
      %445 = arith.addi %c128_i32, %arg25 : i32
      %446 = arith.index_cast %445 : i32 to index
      %c0_222 = arith.constant 0 : index
      %447 = vector.load %arg24[%446, %c0_222] : memref<256x32xf32, #tpu.memory_space<vmem>>, vector<1x32xf32>
      tpu.vector_store %arg24[%446, %c0_222], %444 {strides = array<i32>} : memref<256x32xf32, #tpu.memory_space<vmem>>, vector<1x32xf32>,
      %c8_i32_223 = arith.constant 8 : i32
      %448 = arith.muli %arg25, %c8_i32_223 : i32
      %c5_i32 = arith.constant 5 : i32
      %449 = arith.addi %448, %c5_i32 : i32
      %450 = arith.index_cast %449 : i32 to index
      %451 = memref.load %arg1[%450] : memref<256xi32, #tpu.memory_space<smem>>
      %452 = arith.index_cast %451 : i32 to index
      %c0_224 = arith.constant 0 : index
      %453 = vector.load %arg23[%452, %c0_224] : memref<32x256xf32, #tpu.memory_space<vmem>>, vector<1x256xf32>
      %454 = arith.mulf %322, %453 : vector<1x256xf32>
      %455 = vector.extract_strided_slice %454 {offsets = [0, 0], sizes = [1, 32], strides = [1, 1]} : vector<1x256xf32> to vector<1x32xf32>
      %456 = vector.extract_strided_slice %454 {offsets = [0, 32], sizes = [1, 32], strides = [1, 1]} : vector<1x256xf32> to vector<1x32xf32>
      %457 = arith.addf %455, %456 : vector<1x32xf32>
      %458 = vector.extract_strided_slice %454 {offsets = [0, 64], sizes = [1, 32], strides = [1, 1]} : vector<1x256xf32> to vector<1x32xf32>
      %459 = arith.addf %457, %458 : vector<1x32xf32>
      %460 = vector.extract_strided_slice %454 {offsets = [0, 96], sizes = [1, 32], strides = [1, 1]} : vector<1x256xf32> to vector<1x32xf32>
      %461 = arith.addf %459, %460 : vector<1x32xf32>
      %462 = vector.extract_strided_slice %454 {offsets = [0, 128], sizes = [1, 32], strides = [1, 1]} : vector<1x256xf32> to vector<1x32xf32>
      %463 = arith.addf %461, %462 : vector<1x32xf32>
      %464 = vector.extract_strided_slice %454 {offsets = [0, 160], sizes = [1, 32], strides = [1, 1]} : vector<1x256xf32> to vector<1x32xf32>
      %465 = arith.addf %463, %464 : vector<1x32xf32>
      %466 = vector.extract_strided_slice %454 {offsets = [0, 192], sizes = [1, 32], strides = [1, 1]} : vector<1x256xf32> to vector<1x32xf32>
      %467 = arith.addf %465, %466 : vector<1x32xf32>
      %468 = vector.extract_strided_slice %454 {offsets = [0, 224], sizes = [1, 32], strides = [1, 1]} : vector<1x256xf32> to vector<1x32xf32>
      %469 = arith.addf %467, %468 : vector<1x32xf32>
      %c160_i32 = arith.constant 160 : i32
      %470 = arith.addi %c160_i32, %arg25 : i32
      %471 = arith.index_cast %470 : i32 to index
      %c0_225 = arith.constant 0 : index
      %472 = vector.load %arg24[%471, %c0_225] : memref<256x32xf32, #tpu.memory_space<vmem>>, vector<1x32xf32>
      tpu.vector_store %arg24[%471, %c0_225], %469 {strides = array<i32>} : memref<256x32xf32, #tpu.memory_space<vmem>>, vector<1x32xf32>,
      %c8_i32_226 = arith.constant 8 : i32
      %473 = arith.muli %arg25, %c8_i32_226 : i32
      %c6_i32 = arith.constant 6 : i32
      %474 = arith.addi %473, %c6_i32 : i32
      %475 = arith.index_cast %474 : i32 to index
      %476 = memref.load %arg1[%475] : memref<256xi32, #tpu.memory_space<smem>>
      %477 = arith.index_cast %476 : i32 to index
      %c0_227 = arith.constant 0 : index
      %478 = vector.load %arg23[%477, %c0_227] : memref<32x256xf32, #tpu.memory_space<vmem>>, vector<1x256xf32>
      %479 = arith.mulf %322, %478 : vector<1x256xf32>
      %480 = vector.extract_strided_slice %479 {offsets = [0, 0], sizes = [1, 32], strides = [1, 1]} : vector<1x256xf32> to vector<1x32xf32>
      %481 = vector.extract_strided_slice %479 {offsets = [0, 32], sizes = [1, 32], strides = [1, 1]} : vector<1x256xf32> to vector<1x32xf32>
      %482 = arith.addf %480, %481 : vector<1x32xf32>
      %483 = vector.extract_strided_slice %479 {offsets = [0, 64], sizes = [1, 32], strides = [1, 1]} : vector<1x256xf32> to vector<1x32xf32>
      %484 = arith.addf %482, %483 : vector<1x32xf32>
      %485 = vector.extract_strided_slice %479 {offsets = [0, 96], sizes = [1, 32], strides = [1, 1]} : vector<1x256xf32> to vector<1x32xf32>
      %486 = arith.addf %484, %485 : vector<1x32xf32>
      %487 = vector.extract_strided_slice %479 {offsets = [0, 128], sizes = [1, 32], strides = [1, 1]} : vector<1x256xf32> to vector<1x32xf32>
      %488 = arith.addf %486, %487 : vector<1x32xf32>
      %489 = vector.extract_strided_slice %479 {offsets = [0, 160], sizes = [1, 32], strides = [1, 1]} : vector<1x256xf32> to vector<1x32xf32>
      %490 = arith.addf %488, %489 : vector<1x32xf32>
      %491 = vector.extract_strided_slice %479 {offsets = [0, 192], sizes = [1, 32], strides = [1, 1]} : vector<1x256xf32> to vector<1x32xf32>
      %492 = arith.addf %490, %491 : vector<1x32xf32>
      %493 = vector.extract_strided_slice %479 {offsets = [0, 224], sizes = [1, 32], strides = [1, 1]} : vector<1x256xf32> to vector<1x32xf32>
      %494 = arith.addf %492, %493 : vector<1x32xf32>
      %c192_i32 = arith.constant 192 : i32
      %495 = arith.addi %c192_i32, %arg25 : i32
      %496 = arith.index_cast %495 : i32 to index
      %c0_228 = arith.constant 0 : index
      %497 = vector.load %arg24[%496, %c0_228] : memref<256x32xf32, #tpu.memory_space<vmem>>, vector<1x32xf32>
      tpu.vector_store %arg24[%496, %c0_228], %494 {strides = array<i32>} : memref<256x32xf32, #tpu.memory_space<vmem>>, vector<1x32xf32>,
      %c8_i32_229 = arith.constant 8 : i32
      %498 = arith.muli %arg25, %c8_i32_229 : i32
      %c7_i32 = arith.constant 7 : i32
      %499 = arith.addi %498, %c7_i32 : i32
      %500 = arith.index_cast %499 : i32 to index
      %501 = memref.load %arg1[%500] : memref<256xi32, #tpu.memory_space<smem>>
      %502 = arith.index_cast %501 : i32 to index
      %c0_230 = arith.constant 0 : index
      %503 = vector.load %arg23[%502, %c0_230] : memref<32x256xf32, #tpu.memory_space<vmem>>, vector<1x256xf32>
      %504 = arith.mulf %322, %503 : vector<1x256xf32>
      %505 = vector.extract_strided_slice %504 {offsets = [0, 0], sizes = [1, 32], strides = [1, 1]} : vector<1x256xf32> to vector<1x32xf32>
      %506 = vector.extract_strided_slice %504 {offsets = [0, 32], sizes = [1, 32], strides = [1, 1]} : vector<1x256xf32> to vector<1x32xf32>
      %507 = arith.addf %505, %506 : vector<1x32xf32>
      %508 = vector.extract_strided_slice %504 {offsets = [0, 64], sizes = [1, 32], strides = [1, 1]} : vector<1x256xf32> to vector<1x32xf32>
      %509 = arith.addf %507, %508 : vector<1x32xf32>
      %510 = vector.extract_strided_slice %504 {offsets = [0, 96], sizes = [1, 32], strides = [1, 1]} : vector<1x256xf32> to vector<1x32xf32>
      %511 = arith.addf %509, %510 : vector<1x32xf32>
      %512 = vector.extract_strided_slice %504 {offsets = [0, 128], sizes = [1, 32], strides = [1, 1]} : vector<1x256xf32> to vector<1x32xf32>
      %513 = arith.addf %511, %512 : vector<1x32xf32>
      %514 = vector.extract_strided_slice %504 {offsets = [0, 160], sizes = [1, 32], strides = [1, 1]} : vector<1x256xf32> to vector<1x32xf32>
      %515 = arith.addf %513, %514 : vector<1x32xf32>
      %516 = vector.extract_strided_slice %504 {offsets = [0, 192], sizes = [1, 32], strides = [1, 1]} : vector<1x256xf32> to vector<1x32xf32>
      %517 = arith.addf %515, %516 : vector<1x32xf32>
      %518 = vector.extract_strided_slice %504 {offsets = [0, 224], sizes = [1, 32], strides = [1, 1]} : vector<1x256xf32> to vector<1x32xf32>
      %519 = arith.addf %517, %518 : vector<1x32xf32>
      %c224_i32 = arith.constant 224 : i32
      %520 = arith.addi %c224_i32, %arg25 : i32
      %521 = arith.index_cast %520 : i32 to index
      %c0_231 = arith.constant 0 : index
      %522 = vector.load %arg24[%521, %c0_231] : memref<256x32xf32, #tpu.memory_space<vmem>>, vector<1x32xf32>
      tpu.vector_store %arg24[%521, %c0_231], %519 {strides = array<i32>} : memref<256x32xf32, #tpu.memory_space<vmem>>, vector<1x32xf32>,
    }
    %c32_i32_140 = arith.constant 32 : i32
    %c0_141 = arith.constant 0 : index
    %c0_142 = arith.constant 0 : index
    %221 = vector.load %arg24[%c0_141, %c0_142] : memref<256x32xf32, #tpu.memory_space<vmem>>, vector<256x32xf32>
    %c0_143 = arith.constant 0 : index
    %c1_144 = arith.constant 1 : index
    %c0_145 = arith.constant 0 : index
    %c0_146 = arith.constant 0 : index
    %222 = vector.load %arg10[%c0_143, %c1_144, %c0_145, %c0_146] : memref<1x2x1x32xf32, #tpu.memory_space<vmem>>, vector<1x1x1x32xf32>
    %223 = vector.shape_cast %222 : vector<1x1x1x32xf32> to vector<1x32xf32>
    %c0_147 = arith.constant 0 : index
    %c1_148 = arith.constant 1 : index
    %c0_149 = arith.constant 0 : index
    %c0_150 = arith.constant 0 : index
    %224 = vector.load %arg11[%c0_147, %c1_148, %c0_149, %c0_150] : memref<1x2x1x32xf32, #tpu.memory_space<vmem>>, vector<1x1x1x32xf32>
    %225 = vector.shape_cast %224 : vector<1x1x1x32xf32> to vector<1x32xf32>
    %cst_151 = arith.constant dense<0.000000e+00> : vector<256xf32>
    %226 = vector.multi_reduction <add>, %221, %cst_151 [1] : vector<256x32xf32> to vector<256xf32>
    %227 = vector.shape_cast %226 : vector<256xf32> to vector<256x1xf32>
    %cst_152 = arith.constant 3.200000e+01 : f32
    %228 = vector.broadcast %cst_152 : f32 to vector<256x1xf32>
    %229 = arith.divf %227, %228 : vector<256x1xf32>
    %230 = vector.broadcast %229 : vector<256x1xf32> to vector<256x32xf32>
    %231 = arith.subf %221, %230 : vector<256x32xf32>
    %232 = arith.mulf %231, %231 : vector<256x32xf32>
    %cst_153 = arith.constant dense<0.000000e+00> : vector<256xf32>
    %233 = vector.multi_reduction <add>, %232, %cst_153 [1] : vector<256x32xf32> to vector<256xf32>
    %234 = vector.shape_cast %233 : vector<256xf32> to vector<256x1xf32>
    %cst_154 = arith.constant 3.200000e+01 : f32
    %235 = vector.broadcast %cst_154 : f32 to vector<256x1xf32>
    %236 = arith.divf %234, %235 : vector<256x1xf32>
    %237 = vector.broadcast %229 : vector<256x1xf32> to vector<256x32xf32>
    %238 = arith.subf %221, %237 : vector<256x32xf32>
    %cst_155 = arith.constant 9.99999974E-6 : f32
    %239 = vector.broadcast %cst_155 : f32 to vector<256x1xf32>
    %240 = arith.addf %236, %239 : vector<256x1xf32>
    %241 = math.rsqrt %240 : vector<256x1xf32>
    %242 = vector.broadcast %241 : vector<256x1xf32> to vector<256x32xf32>
    %243 = arith.mulf %238, %242 : vector<256x32xf32>
    %244 = vector.broadcast %223 : vector<1x32xf32> to vector<256x32xf32>
    %245 = arith.mulf %243, %244 : vector<256x32xf32>
    %246 = vector.broadcast %225 : vector<1x32xf32> to vector<256x32xf32>
    %247 = arith.addf %245, %246 : vector<256x32xf32>
    %c0_156 = arith.constant 0 : index
    %c1_157 = arith.constant 1 : index
    %c0_158 = arith.constant 0 : index
    %c0_159 = arith.constant 0 : index
    %248 = vector.load %arg12[%c0_156, %c1_157, %c0_158, %c0_159] : memref<1x2x32x32xbf16, #tpu.memory_space<vmem>>, vector<1x1x32x32xbf16>
    %249 = vector.shape_cast %248 : vector<1x1x32x32xbf16> to vector<32x32xbf16>
    %250 = arith.truncf %247 : vector<256x32xf32> to vector<256x32xbf16>
    %cst_160 = arith.constant dense<0.000000e+00> : vector<256x32xf32>
    %251 = tpu.matmul %250, %249, %cst_160 {dimension_numbers = #tpu.dot_dimension_numbers<[1], [0], [0], [1], [0, 0, 1, 1], [], []>} : vector<256x32xbf16>, vector<32x32xbf16>, vector<256x32xf32> -> vector<256x32xf32>
    %c0_161 = arith.constant 0 : index
    %c1_162 = arith.constant 1 : index
    %c0_163 = arith.constant 0 : index
    %c0_164 = arith.constant 0 : index
    %252 = vector.load %arg13[%c0_161, %c1_162, %c0_163, %c0_164] : memref<1x2x1x32xf32, #tpu.memory_space<vmem>>, vector<1x1x1x32xf32>
    %253 = vector.shape_cast %252 : vector<1x1x1x32xf32> to vector<1x32xf32>
    %254 = vector.broadcast %253 : vector<1x32xf32> to vector<256x32xf32>
    %255 = arith.addf %251, %254 : vector<256x32xf32>
    %256 = arith.mulf %187, %255 : vector<256x32xf32>
    %257 = arith.addf %131, %256 : vector<256x32xf32>
    %c0_165 = arith.constant 0 : index
    %c0_166 = arith.constant 0 : index
    %258 = vector.load %arg21[%c0_165, %c0_166] : memref<256x32xf32, #tpu.memory_space<vmem>>, vector<256x32xf32>
    tpu.vector_store %arg21[%c0_165, %c0_166], %257 {strides = array<i32>} : memref<256x32xf32, #tpu.memory_space<vmem>>, vector<256x32xf32>,
    %c0_167 = arith.constant 0 : index
    %c0_168 = arith.constant 0 : index
    %259 = vector.load %arg21[%c0_167, %c0_168] : memref<256x32xf32, #tpu.memory_space<vmem>>, vector<256x32xf32>
    %c0_169 = arith.constant 0 : index
    %c0_170 = arith.constant 0 : index
    %c0_171 = arith.constant 0 : index
    %260 = vector.load %arg14[%c0_169, %c0_170, %c0_171] : memref<1x1x32xf32, #tpu.memory_space<vmem>>, vector<1x1x32xf32>
    %261 = vector.shape_cast %260 : vector<1x1x32xf32> to vector<1x32xf32>
    %c0_172 = arith.constant 0 : index
    %c0_173 = arith.constant 0 : index
    %c0_174 = arith.constant 0 : index
    %262 = vector.load %arg15[%c0_172, %c0_173, %c0_174] : memref<1x1x32xf32, #tpu.memory_space<vmem>>, vector<1x1x32xf32>
    %263 = vector.shape_cast %262 : vector<1x1x32xf32> to vector<1x32xf32>
    %cst_175 = arith.constant dense<0.000000e+00> : vector<256xf32>
    %264 = vector.multi_reduction <add>, %259, %cst_175 [1] : vector<256x32xf32> to vector<256xf32>
    %265 = vector.shape_cast %264 : vector<256xf32> to vector<256x1xf32>
    %cst_176 = arith.constant 3.200000e+01 : f32
    %266 = vector.broadcast %cst_176 : f32 to vector<256x1xf32>
    %267 = arith.divf %265, %266 : vector<256x1xf32>
    %268 = vector.broadcast %267 : vector<256x1xf32> to vector<256x32xf32>
    %269 = arith.subf %259, %268 : vector<256x32xf32>
    %270 = arith.mulf %269, %269 : vector<256x32xf32>
    %cst_177 = arith.constant dense<0.000000e+00> : vector<256xf32>
    %271 = vector.multi_reduction <add>, %270, %cst_177 [1] : vector<256x32xf32> to vector<256xf32>
    %272 = vector.shape_cast %271 : vector<256xf32> to vector<256x1xf32>
    %cst_178 = arith.constant 3.200000e+01 : f32
    %273 = vector.broadcast %cst_178 : f32 to vector<256x1xf32>
    %274 = arith.divf %272, %273 : vector<256x1xf32>
    %275 = vector.broadcast %267 : vector<256x1xf32> to vector<256x32xf32>
    %276 = arith.subf %259, %275 : vector<256x32xf32>
    %cst_179 = arith.constant 9.99999974E-6 : f32
    %277 = vector.broadcast %cst_179 : f32 to vector<256x1xf32>
    %278 = arith.addf %274, %277 : vector<256x1xf32>
    %279 = math.rsqrt %278 : vector<256x1xf32>
    %280 = vector.broadcast %279 : vector<256x1xf32> to vector<256x32xf32>
    %281 = arith.mulf %276, %280 : vector<256x32xf32>
    %282 = vector.broadcast %261 : vector<1x32xf32> to vector<256x32xf32>
    %283 = arith.mulf %281, %282 : vector<256x32xf32>
    %284 = vector.broadcast %263 : vector<1x32xf32> to vector<256x32xf32>
    %285 = arith.addf %283, %284 : vector<256x32xf32>
    %c0_180 = arith.constant 0 : index
    %c0_181 = arith.constant 0 : index
    %c0_182 = arith.constant 0 : index
    %286 = vector.load %arg16[%c0_180, %c0_181, %c0_182] : memref<1x32x128xbf16, #tpu.memory_space<vmem>>, vector<1x32x128xbf16>
    %287 = vector.shape_cast %286 : vector<1x32x128xbf16> to vector<32x128xbf16>
    %288 = arith.truncf %285 : vector<256x32xf32> to vector<256x32xbf16>
    %cst_183 = arith.constant dense<0.000000e+00> : vector<256x128xf32>
    %289 = tpu.matmul %288, %287, %cst_183 {dimension_numbers = #tpu.dot_dimension_numbers<[1], [0], [0], [1], [0, 0, 1, 1], [], []>} : vector<256x32xbf16>, vector<32x128xbf16>, vector<256x128xf32> -> vector<256x128xf32>
    %c0_184 = arith.constant 0 : index
    %c0_185 = arith.constant 0 : index
    %c0_186 = arith.constant 0 : index
    %290 = vector.load %arg17[%c0_184, %c0_185, %c0_186] : memref<1x1x128xf32, #tpu.memory_space<vmem>>, vector<1x1x128xf32>
    %291 = vector.shape_cast %290 : vector<1x1x128xf32> to vector<1x128xf32>
    %292 = vector.broadcast %291 : vector<1x128xf32> to vector<256x128xf32>
    %293 = arith.addf %289, %292 : vector<256x128xf32>
    %294 = arith.mulf %293, %293 : vector<256x128xf32>
    %295 = arith.mulf %293, %294 : vector<256x128xf32>
    %cst_187 = arith.constant 4.471500e-02 : f32
    %296 = vector.broadcast %cst_187 : f32 to vector<256x128xf32>
    %297 = arith.mulf %296, %295 : vector<256x128xf32>
    %298 = arith.addf %293, %297 : vector<256x128xf32>
    %cst_188 = arith.constant 0.797884583 : f32
    %299 = vector.broadcast %cst_188 : f32 to vector<256x128xf32>
    %300 = arith.mulf %299, %298 : vector<256x128xf32>
    %301 = math.tanh %300 : vector<256x128xf32>
    %cst_189 = arith.constant 1.000000e+00 : f32
    %302 = vector.broadcast %cst_189 : f32 to vector<256x128xf32>
    %303 = arith.addf %302, %301 : vector<256x128xf32>
    %cst_190 = arith.constant 5.000000e-01 : f32
    %304 = vector.broadcast %cst_190 : f32 to vector<256x128xf32>
    %305 = arith.mulf %304, %303 : vector<256x128xf32>
    %306 = arith.mulf %293, %305 : vector<256x128xf32>
    %c0_191 = arith.constant 0 : index
    %c0_192 = arith.constant 0 : index
    %307 = vector.load %arg21[%c0_191, %c0_192] : memref<256x32xf32, #tpu.memory_space<vmem>>, vector<256x32xf32>
    %c0_193 = arith.constant 0 : index
    %c0_194 = arith.constant 0 : index
    %c0_195 = arith.constant 0 : index
    %308 = vector.load %arg18[%c0_193, %c0_194, %c0_195] : memref<1x128x32xbf16, #tpu.memory_space<vmem>>, vector<1x128x32xbf16>
    %309 = vector.shape_cast %308 : vector<1x128x32xbf16> to vector<128x32xbf16>
    %310 = arith.truncf %306 : vector<256x128xf32> to vector<256x128xbf16>
    %cst_196 = arith.constant dense<0.000000e+00> : vector<256x32xf32>
    %311 = tpu.matmul %310, %309, %cst_196 {dimension_numbers = #tpu.dot_dimension_numbers<[1], [0], [0], [1], [0, 0, 1, 1], [], []>} : vector<256x128xbf16>, vector<128x32xbf16>, vector<256x32xf32> -> vector<256x32xf32>
    %312 = arith.addf %307, %311 : vector<256x32xf32>
    %c0_197 = arith.constant 0 : index
    %c0_198 = arith.constant 0 : index
    %c0_199 = arith.constant 0 : index
    %313 = vector.load %arg19[%c0_197, %c0_198, %c0_199] : memref<1x1x32xf32, #tpu.memory_space<vmem>>, vector<1x1x32xf32>
    %314 = vector.shape_cast %313 : vector<1x1x32xf32> to vector<1x32xf32>
    %315 = vector.broadcast %314 : vector<1x32xf32> to vector<256x32xf32>
    %316 = arith.addf %312, %315 : vector<256x32xf32>
    %c0_200 = arith.constant 0 : index
    %c0_201 = arith.constant 0 : index
    %317 = vector.load %arg21[%c0_200, %c0_201] : memref<256x32xf32, #tpu.memory_space<vmem>>, vector<256x32xf32>
    tpu.vector_store %arg21[%c0_200, %c0_201], %316 {strides = array<i32>} : memref<256x32xf32, #tpu.memory_space<vmem>>, vector<256x32xf32>,
    %c1_i32_202 = arith.constant 1 : i32
    %318 = arith.cmpi eq, %arg0, %c1_i32_202 : i32
    %319 = arith.extui %318 : i1 to i32
    %c0_i32_203 = arith.constant 0 : i32
    %320 = arith.cmpi ne, %319, %c0_i32_203 : i32
    scf.if %320 {
      %c0_204 = arith.constant 0 : index
      %c0_205 = arith.constant 0 : index
      %321 = vector.load %arg21[%c0_204, %c0_205] : memref<256x32xf32, #tpu.memory_space<vmem>>, vector<256x32xf32>
      %c0_206 = arith.constant 0 : index
      %c0_207 = arith.constant 0 : index
      %322 = vector.load %arg4[%c0_206, %c0_207] : memref<32x128xbf16, #tpu.memory_space<vmem>>, vector<32x128xbf16>
      %323 = arith.truncf %321 : vector<256x32xf32> to vector<256x32xbf16>
      %cst_208 = arith.constant dense<0.000000e+00> : vector<256x128xf32>
      %324 = tpu.matmul %323, %322, %cst_208 {dimension_numbers = #tpu.dot_dimension_numbers<[1], [0], [0], [1], [0, 0, 1, 1], [], []>} : vector<256x32xbf16>, vector<32x128xbf16>, vector<256x128xf32> -> vector<256x128xf32>
      %c0_209 = arith.constant 0 : index
      %c0_210 = arith.constant 0 : index
      %325 = vector.load %arg5[%c0_209, %c0_210] : memref<1x128xf32, #tpu.memory_space<vmem>>, vector<1x128xf32>
      %326 = vector.broadcast %325 : vector<1x128xf32> to vector<256x128xf32>
      %327 = arith.addf %324, %326 : vector<256x128xf32>
      %c0_211 = arith.constant 0 : index
      %c0_212 = arith.constant 0 : index
      %328 = vector.load %arg20[%c0_211, %c0_212] : memref<256x128xf32, #tpu.memory_space<vmem>>, vector<256x128xf32>
      tpu.vector_store %arg20[%c0_211, %c0_212], %327 {strides = array<i32>} : memref<256x128xf32, #tpu.memory_space<vmem>>, vector<256x128xf32>,
    } else {
    }
    return
  }
  func.func @transform_0(%arg0: i32, %arg1: memref<256xi32, #tpu.memory_space<smem>>) -> (i32, i32) {
    %c0_i32 = arith.constant 0 : i32
    %c0_i32_0 = arith.constant 0 : i32
    %c0_i32_1 = arith.constant 0 : i32
    return %c0_i32, %c0_i32_0 : i32, i32
  }
  func.func @transform_1(%arg0: i32, %arg1: memref<256xi32, #tpu.memory_space<smem>>) -> (i32, i32) {
    %c0_i32 = arith.constant 0 : i32
    %c0_i32_0 = arith.constant 0 : i32
    %c0_i32_1 = arith.constant 0 : i32
    return %c0_i32, %c0_i32_0 : i32, i32
  }
  func.func @transform_2(%arg0: i32, %arg1: memref<256xi32, #tpu.memory_space<smem>>) -> (i32, i32) {
    %c0_i32 = arith.constant 0 : i32
    %c0_i32_0 = arith.constant 0 : i32
    %c0_i32_1 = arith.constant 0 : i32
    return %c0_i32, %c0_i32_0 : i32, i32
  }
  func.func @transform_3(%arg0: i32, %arg1: memref<256xi32, #tpu.memory_space<smem>>) -> (i32, i32) {
    %c0_i32 = arith.constant 0 : i32
    %c0_i32_0 = arith.constant 0 : i32
    %c0_i32_1 = arith.constant 0 : i32
    return %c0_i32, %c0_i32_0 : i32, i32
  }
  func.func @transform_4(%arg0: i32, %arg1: memref<256xi32, #tpu.memory_space<smem>>) -> (i32, i32, i32, i32) {
    %c0_i32 = arith.constant 0 : i32
    %c0_i32_0 = arith.constant 0 : i32
    %c0_i32_1 = arith.constant 0 : i32
    %c0_i32_2 = arith.constant 0 : i32
    return %arg0, %c0_i32, %c0_i32_0, %c0_i32_1 : i32, i32, i32, i32
  }
  func.func @transform_5(%arg0: i32, %arg1: memref<256xi32, #tpu.memory_space<smem>>) -> (i32, i32, i32, i32) {
    %c0_i32 = arith.constant 0 : i32
    %c0_i32_0 = arith.constant 0 : i32
    %c0_i32_1 = arith.constant 0 : i32
    %c0_i32_2 = arith.constant 0 : i32
    return %arg0, %c0_i32, %c0_i32_0, %c0_i32_1 : i32, i32, i32, i32
  }
  func.func @transform_6(%arg0: i32, %arg1: memref<256xi32, #tpu.memory_space<smem>>) -> (i32, i32, i32, i32) {
    %c0_i32 = arith.constant 0 : i32
    %c0_i32_0 = arith.constant 0 : i32
    %c0_i32_1 = arith.constant 0 : i32
    %c0_i32_2 = arith.constant 0 : i32
    return %arg0, %c0_i32, %c0_i32_0, %c0_i32_1 : i32, i32, i32, i32
  }
  func.func @transform_7(%arg0: i32, %arg1: memref<256xi32, #tpu.memory_space<smem>>) -> (i32, i32, i32, i32) {
    %c0_i32 = arith.constant 0 : i32
    %c0_i32_0 = arith.constant 0 : i32
    %c0_i32_1 = arith.constant 0 : i32
    %c0_i32_2 = arith.constant 0 : i32
    return %arg0, %c0_i32, %c0_i32_0, %c0_i32_1 : i32, i32, i32, i32
  }
  func.func @transform_8(%arg0: i32, %arg1: memref<256xi32, #tpu.memory_space<smem>>) -> (i32, i32, i32, i32) {
    %c0_i32 = arith.constant 0 : i32
    %c0_i32_0 = arith.constant 0 : i32
    %c0_i32_1 = arith.constant 0 : i32
    %c0_i32_2 = arith.constant 0 : i32
    return %arg0, %c0_i32, %c0_i32_0, %c0_i32_1 : i32, i32, i32, i32
  }
  func.func @transform_9(%arg0: i32, %arg1: memref<256xi32, #tpu.memory_space<smem>>) -> (i32, i32, i32, i32) {
    %c0_i32 = arith.constant 0 : i32
    %c0_i32_0 = arith.constant 0 : i32
    %c0_i32_1 = arith.constant 0 : i32
    %c0_i32_2 = arith.constant 0 : i32
    return %arg0, %c0_i32, %c0_i32_0, %c0_i32_1 : i32, i32, i32, i32
  }
  func.func @transform_10(%arg0: i32, %arg1: memref<256xi32, #tpu.memory_space<smem>>) -> (i32, i32, i32, i32) {
    %c0_i32 = arith.constant 0 : i32
    %c0_i32_0 = arith.constant 0 : i32
    %c0_i32_1 = arith.constant 0 : i32
    %c0_i32_2 = arith.constant 0 : i32
    return %arg0, %c0_i32, %c0_i32_0, %c0_i32_1 : i32, i32, i32, i32
  }
  func.func @transform_11(%arg0: i32, %arg1: memref<256xi32, #tpu.memory_space<smem>>) -> (i32, i32, i32, i32) {
    %c0_i32 = arith.constant 0 : i32
    %c0_i32_0 = arith.constant 0 : i32
    %c0_i32_1 = arith.constant 0 : i32
    %c0_i32_2 = arith.constant 0 : i32
    return %arg0, %c0_i32, %c0_i32_0, %c0_i32_1 : i32, i32, i32, i32
  }
  func.func @transform_12(%arg0: i32, %arg1: memref<256xi32, #tpu.memory_space<smem>>) -> (i32, i32, i32) {
    %c0_i32 = arith.constant 0 : i32
    %c0_i32_0 = arith.constant 0 : i32
    %c0_i32_1 = arith.constant 0 : i32
    return %arg0, %c0_i32, %c0_i32_0 : i32, i32, i32
  }
  func.func @transform_13(%arg0: i32, %arg1: memref<256xi32, #tpu.memory_space<smem>>) -> (i32, i32, i32) {
    %c0_i32 = arith.constant 0 : i32
    %c0_i32_0 = arith.constant 0 : i32
    %c0_i32_1 = arith.constant 0 : i32
    return %arg0, %c0_i32, %c0_i32_0 : i32, i32, i32
  }
  func.func @transform_14(%arg0: i32, %arg1: memref<256xi32, #tpu.memory_space<smem>>) -> (i32, i32, i32) {
    %c0_i32 = arith.constant 0 : i32
    %c0_i32_0 = arith.constant 0 : i32
    %c0_i32_1 = arith.constant 0 : i32
    return %arg0, %c0_i32, %c0_i32_0 : i32, i32, i32
  }
  func.func @transform_15(%arg0: i32, %arg1: memref<256xi32, #tpu.memory_space<smem>>) -> (i32, i32, i32) {
    %c0_i32 = arith.constant 0 : i32
    %c0_i32_0 = arith.constant 0 : i32
    %c0_i32_1 = arith.constant 0 : i32
    return %arg0, %c0_i32, %c0_i32_0 : i32, i32, i32
  }
  func.func @transform_16(%arg0: i32, %arg1: memref<256xi32, #tpu.memory_space<smem>>) -> (i32, i32, i32) {
    %c0_i32 = arith.constant 0 : i32
    %c0_i32_0 = arith.constant 0 : i32
    %c0_i32_1 = arith.constant 0 : i32
    return %arg0, %c0_i32, %c0_i32_0 : i32, i32, i32
  }
  func.func @transform_17(%arg0: i32, %arg1: memref<256xi32, #tpu.memory_space<smem>>) -> (i32, i32, i32) {
    %c0_i32 = arith.constant 0 : i32
    %c0_i32_0 = arith.constant 0 : i32
    %c0_i32_1 = arith.constant 0 : i32
    return %arg0, %c0_i32, %c0_i32_0 : i32, i32, i32
  }
  func.func @transform_18(%arg0: i32, %arg1: memref<256xi32, #tpu.memory_space<smem>>) -> (i32, i32) {
    %c0_i32 = arith.constant 0 : i32
    %c0_i32_0 = arith.constant 0 : i32
    %c0_i32_1 = arith.constant 0 : i32
    return %c0_i32, %c0_i32_0 : i32, i32
  }
}

</mosaic_0001>

<llo_original>
// kernel: sparse_dist_forward.2
$region0: #{sparse_dist_forward.2}
  #allocation0 [shape = 'u32[]', space=smem, size = 0x4, offset = 0x4, fixed_abs, tag = 'smem constant byte address 0x4 - core index']
  #allocation1 [shape = 'u32[144,128]{1,0:T(1,128)}', space=vmem, size = 0x12000, scoped, tag = 'internal scratch']
  %s0 = inlined_call_operand.vmem [shape: f32[128,8], index: 0, kind: input, shape index: {}]
  %s1 = inlined_call_operand.vmem [shape: f32[8,128], index: 1, kind: input, shape index: {}]
  %s2 = inlined_call_operand.vmem [shape: f32[128,128], index: 2, kind: output, shape index: {}]
  %s3 = sld [smem:[#allocation0]]
  $region18: #{sparse_dist_forward.2} parent=0
    _
  %s5 = ssub.s32 1, %s3
  %s6 = scalar_select 0, %s5, %s3
  // Predicated region
  $region2: #{sparse_dist_forward.2} parent=0 // pred_check
    _
  $region3: #{sparse_dist_forward.2} parent=0 // pred_check_branch
    %8 = sbr.rel (0) target = $region5
  $region4: #{sparse_dist_forward.2} parent=0 // pred_region
    _
  $region5: #{sparse_dist_forward.2} parent=0 // pred_fallthru
    _
  // Predicated region
  $region6: #{sparse_dist_forward.2} parent=0 // pred_check
    _
  $region7: #{sparse_dist_forward.2} parent=0 // pred_check_branch
    %10 = sbr.rel (0) target = $region9
  $region8: #{sparse_dist_forward.2} parent=0 // pred_region
    _
  $region9: #{sparse_dist_forward.2} parent=0 // pred_fallthru
    _
  %v11 = vld [vmem:[%s0] sm:$0xff]
  %v12 = vld [vmem:[%s0 + $0x8] sm:$0xff]
  %v13 = vld [vmem:[%s0 + $0x10] sm:$0xff]
  %v14 = vld [vmem:[%s0 + $0x18] sm:$0xff]
  %v15 = vld [vmem:[%s0 + $0x20] sm:$0xff]
  %v16 = vld [vmem:[%s0 + $0x28] sm:$0xff]
  %v17 = vld [vmem:[%s0 + $0x30] sm:$0xff]
  %v18 = vld [vmem:[%s0 + $0x38] sm:$0xff]
  %v19 = vld [vmem:[%s0 + $0x40] sm:$0xff]
  %v20 = vld [vmem:[%s0 + $0x48] sm:$0xff]
  %v21 = vld [vmem:[%s0 + $0x50] sm:$0xff]
  %v22 = vld [vmem:[%s0 + $0x58] sm:$0xff]
  %v23 = vld [vmem:[%s0 + $0x60] sm:$0xff]
  %v24 = vld [vmem:[%s0 + $0x68] sm:$0xff]
  %v25 = vld [vmem:[%s0 + $0x70] sm:$0xff]
  %v26 = vld [vmem:[%s0 + $0x78] sm:$0xff]
  %v27 = vld [vmem:[%s1] sm:$0xff]
  %29 = vset.pattern.permute.xlu0 0
  %30 = vperm.xlu0 %29, %v11
  %v31 = vpop.permute.xlu0 %30
  %34 = vset.pattern.permute.xlu0 0
  %35 = vperm.xlu0 %34, %v12
  %v36 = vpop.permute.xlu0 %35
  %39 = vset.pattern.permute.xlu0 0
  %40 = vperm.xlu0 %39, %v13
  %v41 = vpop.permute.xlu0 %40
  %44 = vset.pattern.permute.xlu0 0
  %45 = vperm.xlu0 %44, %v14
  %v46 = vpop.permute.xlu0 %45
  %49 = vset.pattern.permute.xlu0 0
  %50 = vperm.xlu0 %49, %v15
  %v51 = vpop.permute.xlu0 %50
  %54 = vset.pattern.permute.xlu0 0
  %55 = vperm.xlu0 %54, %v16
  %v56 = vpop.permute.xlu0 %55
  %59 = vset.pattern.permute.xlu0 0
  %60 = vperm.xlu0 %59, %v17
  %v61 = vpop.permute.xlu0 %60
  %64 = vset.pattern.permute.xlu0 0
  %65 = vperm.xlu0 %64, %v18
  %v66 = vpop.permute.xlu0 %65
  %69 = vset.pattern.permute.xlu0 0
  %70 = vperm.xlu0 %69, %v19
  %v71 = vpop.permute.xlu0 %70
  %74 = vset.pattern.permute.xlu0 0
  %75 = vperm.xlu0 %74, %v20
  %v76 = vpop.permute.xlu0 %75
  %79 = vset.pattern.permute.xlu0 0
  %80 = vperm.xlu0 %79, %v21
  %v81 = vpop.permute.xlu0 %80
  %84 = vset.pattern.permute.xlu0 0
  %85 = vperm.xlu0 %84, %v22
  %v86 = vpop.permute.xlu0 %85
  %89 = vset.pattern.permute.xlu0 0
  %90 = vperm.xlu0 %89, %v23
  %v91 = vpop.permute.xlu0 %90
  %94 = vset.pattern.permute.xlu0 0
  %95 = vperm.xlu0 %94, %v24
  %v96 = vpop.permute.xlu0 %95
  %99 = vset.pattern.permute.xlu0 0
  %100 = vperm.xlu0 %99, %v25
  %v101 = vpop.permute.xlu0 %100
  %104 = vset.pattern.permute.xlu0 0
  %105 = vperm.xlu0 %104, %v26
  %v106 = vpop.permute.xlu0 %105
  %v108 = vlaneseq
  %v109 = vshrl.u32 %v108, 7
  %v110 = vsub.s32 0, %v109
  %v111 = vrot.slane %v27, %v110
  %v112 = vsub.f32 %v31, %v111
  %v113 = vsub.f32 %v36, %v111
  %v114 = vsub.f32 %v41, %v111
  %v115 = vsub.f32 %v46, %v111
  %v116 = vsub.f32 %v51, %v111
  %v117 = vsub.f32 %v56, %v111
  %v118 = vsub.f32 %v61, %v111
  %v119 = vsub.f32 %v66, %v111
  %v120 = vsub.f32 %v71, %v111
  %v121 = vsub.f32 %v76, %v111
  %v122 = vsub.f32 %v81, %v111
  %v123 = vsub.f32 %v86, %v111
  %v124 = vsub.f32 %v91, %v111
  %v125 = vsub.f32 %v96, %v111
  %v126 = vsub.f32 %v101, %v111
  %v127 = vsub.f32 %v106, %v111
  %v128 = vmul.f32 %v112, %v112
  %v129 = vmul.f32 %v113, %v113
  %v130 = vmul.f32 %v114, %v114
  %v131 = vmul.f32 %v115, %v115
  %v132 = vmul.f32 %v116, %v116
  %v133 = vmul.f32 %v117, %v117
  %v134 = vmul.f32 %v118, %v118
  %v135 = vmul.f32 %v119, %v119
  %v136 = vmul.f32 %v120, %v120
  %v137 = vmul.f32 %v121, %v121
  %v138 = vmul.f32 %v122, %v122
  %v139 = vmul.f32 %v123, %v123
  %v140 = vmul.f32 %v124, %v124
  %v141 = vmul.f32 %v125, %v125
  %v142 = vmul.f32 %v126, %v126
  %v143 = vmul.f32 %v127, %v127
  %v144 = vadd.f32 %v128, 0.0
  %v145 = vadd.f32 %v129, 0.0
  %v146 = vadd.f32 %v130, 0.0
  %v147 = vadd.f32 %v131, 0.0
  %v148 = vadd.f32 %v132, 0.0
  %v149 = vadd.f32 %v133, 0.0
  %v150 = vadd.f32 %v134, 0.0
  %v151 = vadd.f32 %v135, 0.0
  %v152 = vadd.f32 %v136, 0.0
  %v153 = vadd.f32 %v137, 0.0
  %v154 = vadd.f32 %v138, 0.0
  %v155 = vadd.f32 %v139, 0.0
  %v156 = vadd.f32 %v140, 0.0
  %v157 = vadd.f32 %v141, 0.0
  %v158 = vadd.f32 %v142, 0.0
  %v159 = vadd.f32 %v143, 0.0
  %160 = vset.pattern.permute.xlu0 1
  %161 = vperm.xlu0 %160, %v11
  %v162 = vpop.permute.xlu0 %161
  %164 = vset.pattern.permute.xlu0 1
  %165 = vperm.xlu0 %164, %v12
  %v166 = vpop.permute.xlu0 %165
  %168 = vset.pattern.permute.xlu0 1
  %169 = vperm.xlu0 %168, %v13
  %v170 = vpop.permute.xlu0 %169
  %172 = vset.pattern.permute.xlu0 1
  %173 = vperm.xlu0 %172, %v14
  %v174 = vpop.permute.xlu0 %173
  %176 = vset.pattern.permute.xlu0 1
  %177 = vperm.xlu0 %176, %v15
  %v178 = vpop.permute.xlu0 %177
  %180 = vset.pattern.permute.xlu0 1
  %181 = vperm.xlu0 %180, %v16
  %v182 = vpop.permute.xlu0 %181
  %184 = vset.pattern.permute.xlu0 1
  %185 = vperm.xlu0 %184, %v17
  %v186 = vpop.permute.xlu0 %185
  %188 = vset.pattern.permute.xlu0 1
  %189 = vperm.xlu0 %188, %v18
  %v190 = vpop.permute.xlu0 %189
  %192 = vset.pattern.permute.xlu0 1
  %193 = vperm.xlu0 %192, %v19
  %v194 = vpop.permute.xlu0 %193
  %196 = vset.pattern.permute.xlu0 1
  %197 = vperm.xlu0 %196, %v20
  %v198 = vpop.permute.xlu0 %197
  %200 = vset.pattern.permute.xlu0 1
  %201 = vperm.xlu0 %200, %v21
  %v202 = vpop.permute.xlu0 %201
  %204 = vset.pattern.permute.xlu0 1
  %205 = vperm.xlu0 %204, %v22
  %v206 = vpop.permute.xlu0 %205
  %208 = vset.pattern.permute.xlu0 1
  %209 = vperm.xlu0 %208, %v23
  %v210 = vpop.permute.xlu0 %209
  %212 = vset.pattern.permute.xlu0 1
  %213 = vperm.xlu0 %212, %v24
  %v214 = vpop.permute.xlu0 %213
  %216 = vset.pattern.permute.xlu0 1
  %217 = vperm.xlu0 %216, %v25
  %v218 = vpop.permute.xlu0 %217
  %220 = vset.pattern.permute.xlu0 1
  %221 = vperm.xlu0 %220, %v26
  %v222 = vpop.permute.xlu0 %221
  %v224 = vlaneseq
  %v225 = vshrl.u32 %v224, 7
  %v226 = vsub.s32 1, %v225
  %v227 = vrot.slane %v27, %v226
  %v228 = vsub.f32 %v162, %v227
  %v229 = vsub.f32 %v166, %v227
  %v230 = vsub.f32 %v170, %v227
  %v231 = vsub.f32 %v174, %v227
  %v232 = vsub.f32 %v178, %v227
  %v233 = vsub.f32 %v182, %v227
  %v234 = vsub.f32 %v186, %v227
  %v235 = vsub.f32 %v190, %v227
  %v236 = vsub.f32 %v194, %v227
  %v237 = vsub.f32 %v198, %v227
  %v238 = vsub.f32 %v202, %v227
  %v239 = vsub.f32 %v206, %v227
  %v240 = vsub.f32 %v210, %v227
  %v241 = vsub.f32 %v214, %v227
  %v242 = vsub.f32 %v218, %v227
  %v243 = vsub.f32 %v222, %v227
  %v244 = vmul.f32 %v228, %v228
  %v245 = vmul.f32 %v229, %v229
  %v246 = vmul.f32 %v230, %v230
  %v247 = vmul.f32 %v231, %v231
  %v248 = vmul.f32 %v232, %v232
  %v249 = vmul.f32 %v233, %v233
  %v250 = vmul.f32 %v234, %v234
  %v251 = vmul.f32 %v235, %v235
  %v252 = vmul.f32 %v236, %v236
  %v253 = vmul.f32 %v237, %v237
  %v254 = vmul.f32 %v238, %v238
  %v255 = vmul.f32 %v239, %v239
  %v256 = vmul.f32 %v240, %v240
  %v257 = vmul.f32 %v241, %v241
  %v258 = vmul.f32 %v242, %v242
  %v259 = vmul.f32 %v243, %v243
  %v260 = vadd.f32 %v144, %v244
  %v261 = vadd.f32 %v145, %v245
  %v262 = vadd.f32 %v146, %v246
  %v263 = vadd.f32 %v147, %v247
  %v264 = vadd.f32 %v148, %v248
  %v265 = vadd.f32 %v149, %v249
  %v266 = vadd.f32 %v150, %v250
  %v267 = vadd.f32 %v151, %v251
  %v268 = vadd.f32 %v152, %v252
  %v269 = vadd.f32 %v153, %v253
  %v270 = vadd.f32 %v154, %v254
  %v271 = vadd.f32 %v155, %v255
  %v272 = vadd.f32 %v156, %v256
  %v273 = vadd.f32 %v157, %v257
  %v274 = vadd.f32 %v158, %v258
  %v275 = vadd.f32 %v159, %v259
  %276 = vset.pattern.permute.xlu0 2
  %277 = vperm.xlu0 %276, %v11
  %v278 = vpop.permute.xlu0 %277
  %280 = vset.pattern.permute.xlu0 2
  %281 = vperm.xlu0 %280, %v12
  %v282 = vpop.permute.xlu0 %281
  %284 = vset.pattern.permute.xlu0 2
  %285 = vperm.xlu0 %284, %v13
  %v286 = vpop.permute.xlu0 %285
  %288 = vset.pattern.permute.xlu0 2
  %289 = vperm.xlu0 %288, %v14
  %v290 = vpop.permute.xlu0 %289
  %292 = vset.pattern.permute.xlu0 2
  %293 = vperm.xlu0 %292, %v15
  %v294 = vpop.permute.xlu0 %293
  %296 = vset.pattern.permute.xlu0 2
  %297 = vperm.xlu0 %296, %v16
  %v298 = vpop.permute.xlu0 %297
  %300 = vset.pattern.permute.xlu0 2
  %301 = vperm.xlu0 %300, %v17
  %v302 = vpop.permute.xlu0 %301
  %304 = vset.pattern.permute.xlu0 2
  %305 = vperm.xlu0 %304, %v18
  %v306 = vpop.permute.xlu0 %305
  %308 = vset.pattern.permute.xlu0 2
  %309 = vperm.xlu0 %308, %v19
  %v310 = vpop.permute.xlu0 %309
  %312 = vset.pattern.permute.xlu0 2
  %313 = vperm.xlu0 %312, %v20
  %v314 = vpop.permute.xlu0 %313
  %316 = vset.pattern.permute.xlu0 2
  %317 = vperm.xlu0 %316, %v21
  %v318 = vpop.permute.xlu0 %317
  %320 = vset.pattern.permute.xlu0 2
  %321 = vperm.xlu0 %320, %v22
  %v322 = vpop.permute.xlu0 %321
  %324 = vset.pattern.permute.xlu0 2
  %325 = vperm.xlu0 %324, %v23
  %v326 = vpop.permute.xlu0 %325
  %328 = vset.pattern.permute.xlu0 2
  %329 = vperm.xlu0 %328, %v24
  %v330 = vpop.permute.xlu0 %329
  %332 = vset.pattern.permute.xlu0 2
  %333 = vperm.xlu0 %332, %v25
  %v334 = vpop.permute.xlu0 %333
  %336 = vset.pattern.permute.xlu0 2
  %337 = vperm.xlu0 %336, %v26
  %v338 = vpop.permute.xlu0 %337
  %v340 = vlaneseq
  %v341 = vshrl.u32 %v340, 7
  %v342 = vsub.s32 2, %v341
  %v343 = vrot.slane %v27, %v342
  %v344 = vsub.f32 %v278, %v343
  %v345 = vsub.f32 %v282, %v343
  %v346 = vsub.f32 %v286, %v343
  %v347 = vsub.f32 %v290, %v343
  %v348 = vsub.f32 %v294, %v343
  %v349 = vsub.f32 %v298, %v343
  %v350 = vsub.f32 %v302, %v343
  %v351 = vsub.f32 %v306, %v343
  %v352 = vsub.f32 %v310, %v343
  %v353 = vsub.f32 %v314, %v343
  %v354 = vsub.f32 %v318, %v343
  %v355 = vsub.f32 %v322, %v343
  %v356 = vsub.f32 %v326, %v343
  %v357 = vsub.f32 %v330, %v343
  %v358 = vsub.f32 %v334, %v343
  %v359 = vsub.f32 %v338, %v343
  %v360 = vmul.f32 %v344, %v344
  %v361 = vmul.f32 %v345, %v345
  %v362 = vmul.f32 %v346, %v346
  %v363 = vmul.f32 %v347, %v347
  %v364 = vmul.f32 %v348, %v348
  %v365 = vmul.f32 %v349, %v349
  %v366 = vmul.f32 %v350, %v350
  %v367 = vmul.f32 %v351, %v351
  %v368 = vmul.f32 %v352, %v352
  %v369 = vmul.f32 %v353, %v353
  %v370 = vmul.f32 %v354, %v354
  %v371 = vmul.f32 %v355, %v355
  %v372 = vmul.f32 %v356, %v356
  %v373 = vmul.f32 %v357, %v357
  %v374 = vmul.f32 %v358, %v358
  %v375 = vmul.f32 %v359, %v359
  %v376 = vadd.f32 %v260, %v360
  %v377 = vadd.f32 %v261, %v361
  %v378 = vadd.f32 %v262, %v362
  %v379 = vadd.f32 %v263, %v363
  %v380 = vadd.f32 %v264, %v364
  %v381 = vadd.f32 %v265, %v365
  %v382 = vadd.f32 %v266, %v366
  %v383 = vadd.f32 %v267, %v367
  %v384 = vadd.f32 %v268, %v368
  %v385 = vadd.f32 %v269, %v369
  %v386 = vadd.f32 %v270, %v370
  %v387 = vadd.f32 %v271, %v371
  %v388 = vadd.f32 %v272, %v372
  %v389 = vadd.f32 %v273, %v373
  %v390 = vadd.f32 %v274, %v374
  %v391 = vadd.f32 %v275, %v375
  %v392 = vrsqrt.pop %v376
  %v393 = vmul.f32 %v376, %v392
  %vm394 = vcmp.eq.f32.partialorder %v376, inf
  %v395 = vsel %vm394, %v376, %v393
  %vm396 = vcmp.eq.f32.partialorder %v376, 0.0
  %v397 = vand.u32 %v376, 2147483648
  %v398 = vsel %vm396, %v397, %v395
  %v399 = vrsqrt.pop %v377
  %v400 = vmul.f32 %v377, %v399
  %vm401 = vcmp.eq.f32.partialorder %v377, inf
  %v402 = vsel %vm401, %v377, %v400
  %vm403 = vcmp.eq.f32.partialorder %v377, 0.0
  %v404 = vand.u32 %v377, 2147483648
  %v405 = vsel %vm403, %v404, %v402
  %v406 = vrsqrt.pop %v378
  %v407 = vmul.f32 %v378, %v406
  %vm408 = vcmp.eq.f32.partialorder %v378, inf
  %v409 = vsel %vm408, %v378, %v407
  %vm410 = vcmp.eq.f32.partialorder %v378, 0.0
  %v411 = vand.u32 %v378, 2147483648
  %v412 = vsel %vm410, %v411, %v409
  %v413 = vrsqrt.pop %v379
  %v414 = vmul.f32 %v379, %v413
  %vm415 = vcmp.eq.f32.partialorder %v379, inf
  %v416 = vsel %vm415, %v379, %v414
  %vm417 = vcmp.eq.f32.partialorder %v379, 0.0
  %v418 = vand.u32 %v379, 2147483648
  %v419 = vsel %vm417, %v418, %v416
  %v420 = vrsqrt.pop %v380
  %v421 = vmul.f32 %v380, %v420
  %vm422 = vcmp.eq.f32.partialorder %v380, inf
  %v423 = vsel %vm422, %v380, %v421
  %vm424 = vcmp.eq.f32.partialorder %v380, 0.0
  %v425 = vand.u32 %v380, 2147483648
  %v426 = vsel %vm424, %v425, %v423
  %v427 = vrsqrt.pop %v381
  %v428 = vmul.f32 %v381, %v427
  %vm429 = vcmp.eq.f32.partialorder %v381, inf
  %v430 = vsel %vm429, %v381, %v428
  %vm431 = vcmp.eq.f32.partialorder %v381, 0.0
  %v432 = vand.u32 %v381, 2147483648
  %v433 = vsel %vm431, %v432, %v430
  %v434 = vrsqrt.pop %v382
  %v435 = vmul.f32 %v382, %v434
  %vm436 = vcmp.eq.f32.partialorder %v382, inf
  %v437 = vsel %vm436, %v382, %v435
  %vm438 = vcmp.eq.f32.partialorder %v382, 0.0
  %v439 = vand.u32 %v382, 2147483648
  %v440 = vsel %vm438, %v439, %v437
  %v441 = vrsqrt.pop %v383
  %v442 = vmul.f32 %v383, %v441
  %vm443 = vcmp.eq.f32.partialorder %v383, inf
  %v444 = vsel %vm443, %v383, %v442
  %vm445 = vcmp.eq.f32.partialorder %v383, 0.0
  %v446 = vand.u32 %v383, 2147483648
  %v447 = vsel %vm445, %v446, %v444
  %v448 = vrsqrt.pop %v384
  %v449 = vmul.f32 %v384, %v448
  %vm450 = vcmp.eq.f32.partialorder %v384, inf
  %v451 = vsel %vm450, %v384, %v449
  %vm452 = vcmp.eq.f32.partialorder %v384, 0.0
  %v453 = vand.u32 %v384, 2147483648
  %v454 = vsel %vm452, %v453, %v451
  %v455 = vrsqrt.pop %v385
  %v456 = vmul.f32 %v385, %v455
  %vm457 = vcmp.eq.f32.partialorder %v385, inf
  %v458 = vsel %vm457, %v385, %v456
  %vm459 = vcmp.eq.f32.partialorder %v385, 0.0
  %v460 = vand.u32 %v385, 2147483648
  %v461 = vsel %vm459, %v460, %v458
  %v462 = vrsqrt.pop %v386
  %v463 = vmul.f32 %v386, %v462
  %vm464 = vcmp.eq.f32.partialorder %v386, inf
  %v465 = vsel %vm464, %v386, %v463
  %vm466 = vcmp.eq.f32.partialorder %v386, 0.0
  %v467 = vand.u32 %v386, 2147483648
  %v468 = vsel %vm466, %v467, %v465
  %v469 = vrsqrt.pop %v387
  %v470 = vmul.f32 %v387, %v469
  %vm471 = vcmp.eq.f32.partialorder %v387, inf
  %v472 = vsel %vm471, %v387, %v470
  %vm473 = vcmp.eq.f32.partialorder %v387, 0.0
  %v474 = vand.u32 %v387, 2147483648
  %v475 = vsel %vm473, %v474, %v472
  %v476 = vrsqrt.pop %v388
  %v477 = vmul.f32 %v388, %v476
  %vm478 = vcmp.eq.f32.partialorder %v388, inf
  %v479 = vsel %vm478, %v388, %v477
  %vm480 = vcmp.eq.f32.partialorder %v388, 0.0
  %v481 = vand.u32 %v388, 2147483648
  %v482 = vsel %vm480, %v481, %v479
  %v483 = vrsqrt.pop %v389
  %v484 = vmul.f32 %v389, %v483
  %vm485 = vcmp.eq.f32.partialorder %v389, inf
  %v486 = vsel %vm485, %v389, %v484
  %vm487 = vcmp.eq.f32.partialorder %v389, 0.0
  %v488 = vand.u32 %v389, 2147483648
  %v489 = vsel %vm487, %v488, %v486
  %v490 = vrsqrt.pop %v390
  %v491 = vmul.f32 %v390, %v490
  %vm492 = vcmp.eq.f32.partialorder %v390, inf
  %v493 = vsel %vm492, %v390, %v491
  %vm494 = vcmp.eq.f32.partialorder %v390, 0.0
  %v495 = vand.u32 %v390, 2147483648
  %v496 = vsel %vm494, %v495, %v493
  %v497 = vrsqrt.pop %v391
  %v498 = vmul.f32 %v391, %v497
  %vm499 = vcmp.eq.f32.partialorder %v391, inf
  %v500 = vsel %vm499, %v391, %v498
  %vm501 = vcmp.eq.f32.partialorder %v391, 0.0
  %v502 = vand.u32 %v391, 2147483648
  %v503 = vsel %vm501, %v502, %v500
  %504 = vst [vmem:[%s2] sm:$0xff] %v398
  %505 = vst [vmem:[%s2 + $0x8] sm:$0xff] %v405
  %506 = vst [vmem:[%s2 + $0x10] sm:$0xff] %v412
  %507 = vst [vmem:[%s2 + $0x18] sm:$0xff] %v419
  %508 = vst [vmem:[%s2 + $0x20] sm:$0xff] %v426
  %509 = vst [vmem:[%s2 + $0x28] sm:$0xff] %v433
  %510 = vst [vmem:[%s2 + $0x30] sm:$0xff] %v440
  %511 = vst [vmem:[%s2 + $0x38] sm:$0xff] %v447
  %512 = vst [vmem:[%s2 + $0x40] sm:$0xff] %v454
  %513 = vst [vmem:[%s2 + $0x48] sm:$0xff] %v461
  %514 = vst [vmem:[%s2 + $0x50] sm:$0xff] %v468
  %515 = vst [vmem:[%s2 + $0x58] sm:$0xff] %v475
  %516 = vst [vmem:[%s2 + $0x60] sm:$0xff] %v482
  %517 = vst [vmem:[%s2 + $0x68] sm:$0xff] %v489
  %518 = vst [vmem:[%s2 + $0x70] sm:$0xff] %v496
  %519 = vst [vmem:[%s2 + $0x78] sm:$0xff] %v503
  // Predicated region
  $region10: #{sparse_dist_forward.2} parent=0 // pred_check
    _
  $region11: #{sparse_dist_forward.2} parent=0 // pred_check_branch
    %521 = sbr.rel (0) target = $region13
  $region12: #{sparse_dist_forward.2} parent=0 // pred_region
    _
  $region13: #{sparse_dist_forward.2} parent=0 // pred_fallthru
    _
  // Predicated region
  $region14: #{sparse_dist_forward.2} parent=0 // pred_check
    _
  $region15: #{sparse_dist_forward.2} parent=0 // pred_check_branch
    %523 = sbr.rel (0) target = $region17
  $region16: #{sparse_dist_forward.2} parent=0 // pred_region
    _
  $region17: #{sparse_dist_forward.2} parent=0 // pred_fallthru
    _

// kernel: sparse_dist_forward.3
$region0: #{sparse_dist_forward.3}
  #allocation0 [shape = 'u32[]', space=smem, size = 0x4, offset = 0x4, fixed_abs, tag = 'smem constant byte address 0x4 - core index']
  #allocation1 [shape = 'u32[144,128]{1,0:T(1,128)}', space=vmem, size = 0x12000, scoped, tag = 'internal scratch']
  #allocation2 [shape = 'f32[256,32]{1,0:T(8,128)}', space=vmem, size = 0x20000, scoped, tag = 'scratch operand']
  #allocation3 [shape = 'f32[32,256]{1,0:T(8,128)}', space=vmem, size = 0x8000, scoped, tag = 'scratch operand']
  #allocation4 [shape = 'f32[32,256]{1,0:T(8,128)}', space=vmem, size = 0x8000, scoped, tag = 'scratch operand']
  #allocation5 [shape = 'f32[256,32]{1,0:T(8,128)}', space=vmem, size = 0x20000, scoped, tag = 'scratch operand']
  #allocation6 [shape = 's32[1]{0}', space=sflag, size = 0x4, scoped, tag = 'scoped memory for sparse_dist_forward.3']
  #allocation7 [shape = 'u8[1024]{0}', space=smem, size = 0x400, scoped, tag = 'prefetched SMEM operand 0']
  %s0 = inlined_call_operand.vmem [shape: s32[256], index: 0, kind: input, shape index: {}]
  %s1 = inlined_call_operand.vmem [shape: f32[32,8], index: 1, kind: input, shape index: {}]
  %s2 = inlined_call_operand.vmem [shape: f32[1,32], index: 2, kind: input, shape index: {}]
  %s3 = inlined_call_operand.vmem [shape: bf16[32,128], index: 3, kind: input, shape index: {}]
  %s4 = inlined_call_operand.vmem [shape: f32[1,128], index: 4, kind: input, shape index: {}]
  %s5 = inlined_call_operand.vmem [shape: f32[2,2,1,32], index: 5, kind: input, shape index: {}]
  %s6 = inlined_call_operand.vmem [shape: f32[2,2,1,32], index: 6, kind: input, shape index: {}]
  %s7 = inlined_call_operand.vmem [shape: bf16[2,2,32,160], index: 7, kind: input, shape index: {}]
  %s8 = inlined_call_operand.vmem [shape: f32[2,2,1,160], index: 8, kind: input, shape index: {}]
  %s9 = inlined_call_operand.vmem [shape: f32[2,2,1,32], index: 9, kind: input, shape index: {}]
  %s10 = inlined_call_operand.vmem [shape: f32[2,2,1,32], index: 10, kind: input, shape index: {}]
  %s11 = inlined_call_operand.vmem [shape: bf16[2,2,32,32], index: 11, kind: input, shape index: {}]
  %s12 = inlined_call_operand.vmem [shape: f32[2,2,1,32], index: 12, kind: input, shape index: {}]
  %s13 = inlined_call_operand.vmem [shape: f32[2,1,32], index: 13, kind: input, shape index: {}]
  %s14 = inlined_call_operand.vmem [shape: f32[2,1,32], index: 14, kind: input, shape index: {}]
  %s15 = inlined_call_operand.vmem [shape: bf16[2,32,128], index: 15, kind: input, shape index: {}]
  %s16 = inlined_call_operand.vmem [shape: f32[2,1,128], index: 16, kind: input, shape index: {}]
  %s17 = inlined_call_operand.vmem [shape: bf16[2,128,32], index: 17, kind: input, shape index: {}]
  %s18 = inlined_call_operand.vmem [shape: f32[2,1,32], index: 18, kind: input, shape index: {}]
  %s19 = inlined_call_operand.vmem [shape: f32[256,128], index: 19, kind: output, shape index: {}]
  %s20 = sld [smem:[#allocation0]]
  $region127: #{sparse_dist_forward.3} parent=0
    _
  %s22 = ssub.s32 1, %s20
  %s23 = scalar_select 0, %s22, %s20
  %s24 = sshll.u32 %s0, 4
  %s25 = int_to_ptr.vmem [resolvable:$true] %s24
  %27 = dma.vmem_to_smem %s25, 32, [#allocation7], [#allocation6]
  %28 = dma.done [#allocation6], 32
  %29 = sfence
  loop: start=0, step=1, limit=4
  $region2: #{sparse_dist_forward.3} parent=0 // loop_pre_header
    _
  $region3: #{sparse_dist_forward.3} parent=0 // loop_header
    %s31 = sphi 0, %s35
    %p32 = scmp.ge.s32.totalorder %s31, 4
    %s39 = sphi 0, %s39
    %s41 = sphi 0, %s39
    %s42 = sphi 0, %s41
    %s56 = sphi 0, %s42
    %s60 = sphi 0, %s60
    %s62 = sphi 0, %s60
    %s63 = sphi 0, %s62
    %s77 = sphi 0, %s63
    %s81 = sphi 0, %s81
    %s83 = sphi 0, %s81
    %s84 = sphi 0, %s83
    %s98 = sphi 0, %s84
    %s102 = sphi 0, %s102
    %s104 = sphi 0, %s102
    %s105 = sphi 0, %s104
    %s119 = sphi 0, %s105
    %s125 = sphi 0, %s127
    %s128 = sphi 0, %s125
    %s129 = sphi 0, %s128
    %s145 = sphi 0, %s129
    %s151 = sphi 0, %s153
    %s154 = sphi 0, %s151
    %s155 = sphi 0, %s154
    %s171 = sphi 0, %s155
    %s177 = sphi 0, %s179
    %s180 = sphi 0, %s177
    %s181 = sphi 0, %s180
    %s197 = sphi 0, %s181
    %s203 = sphi 0, %s205
    %s206 = sphi 0, %s203
    %s207 = sphi 0, %s206
    %s223 = sphi 0, %s207
    %s229 = sphi 0, %s231
    %s232 = sphi 0, %s229
    %s233 = sphi 0, %s232
    %s249 = sphi 0, %s233
    %s255 = sphi 0, %s257
    %s258 = sphi 0, %s255
    %s259 = sphi 0, %s258
    %s275 = sphi 0, %s259
    %s281 = sphi 0, %s283
    %s284 = sphi 0, %s281
    %s285 = sphi 0, %s284
    %s301 = sphi 0, %s285
    %s307 = sphi 0, %s309
    %s310 = sphi 0, %s307
    %s311 = sphi 0, %s310
    %s327 = sphi 0, %s311
    %s333 = sphi 0, %s335
    %s336 = sphi 0, %s333
    %s337 = sphi 0, %s336
    %s353 = sphi 0, %s337
    %s359 = sphi 0, %s361
    %s362 = sphi 0, %s359
    %s363 = sphi 0, %s362
    %s379 = sphi 0, %s363
    %s385 = sphi 0, %s387
    %s388 = sphi 0, %s385
    %s389 = sphi 0, %s388
    %s405 = sphi 0, %s389
    %s411 = sphi 0, %s413
    %s414 = sphi 0, %s411
    %s415 = sphi 0, %s414
    %s431 = sphi 0, %s415
    %s437 = sphi 0, %s439
    %s440 = sphi 0, %s437
    %s441 = sphi 0, %s440
    %s457 = sphi 0, %s441
    %s463 = sphi 0, %s465
    %s466 = sphi 0, %s463
    %s467 = sphi 0, %s466
    %s483 = sphi 0, %s467
    %s487 = sphi 0, %s487
    %s489 = sphi 0, %s487
    %s490 = sphi 0, %s489
    %s504 = sphi 0, %s490
  $region4: #{sparse_dist_forward.3} parent=0 // loop_header_branch
    %34 = sbr.rel (%p32) target = $region8
  $region5: #{sparse_dist_forward.3} parent=0 // loop_body
    %s36 = ssub.s32 %s31, 1
    %s37 = ssub.s32 %s31, 2
    %s38 = sadd.s32 %s31, 1
    %s40 = sadd.s32 %s39, 1
    %p43 = scmp.eq.s32.totalorder %s31, 1
    %p44 = scmp.ne.s32.totalorder %s39, %s41
    %p45 = scmp.eq.s32.totalorder %s31, 0
    %p46 = por %p44, %p45
    %p47 = scmp.ne.s32.totalorder %s39, %s41
    %p48 = scmp.eq.s32.totalorder %s36, 1
    %p49 = por %p47, %p48
    %p50 = scmp.ne.s32.totalorder %s41, %s42
    %p51 = scmp.eq.s32.totalorder %s36, 0
    %p52 = por %p50, %p51
    %p53 = scmp.ne.s32.totalorder %s41, %s42
    %p54 = scmp.eq.s32.totalorder %s37, 1
    %p55 = por %p53, %p54
    %p57 = scmp.ne.s32.totalorder %s42, %s56
    %p58 = scmp.eq.s32.totalorder %s37, 0
    %p59 = por %p57, %p58
    %s61 = sadd.s32 %s60, 1
    %p64 = scmp.eq.s32.totalorder %s31, 1
    %p65 = scmp.ne.s32.totalorder %s60, %s62
    %p66 = scmp.eq.s32.totalorder %s31, 0
    %p67 = por %p65, %p66
    %p68 = scmp.ne.s32.totalorder %s60, %s62
    %p69 = scmp.eq.s32.totalorder %s36, 1
    %p70 = por %p68, %p69
    %p71 = scmp.ne.s32.totalorder %s62, %s63
    %p72 = scmp.eq.s32.totalorder %s36, 0
    %p73 = por %p71, %p72
    %p74 = scmp.ne.s32.totalorder %s62, %s63
    %p75 = scmp.eq.s32.totalorder %s37, 1
    %p76 = por %p74, %p75
    %p78 = scmp.ne.s32.totalorder %s63, %s77
    %p79 = scmp.eq.s32.totalorder %s37, 0
    %p80 = por %p78, %p79
    %s82 = sadd.s32 %s81, 1
    %p85 = scmp.eq.s32.totalorder %s31, 1
    %p86 = scmp.ne.s32.totalorder %s81, %s83
    %p87 = scmp.eq.s32.totalorder %s31, 0
    %p88 = por %p86, %p87
    %p89 = scmp.ne.s32.totalorder %s81, %s83
    %p90 = scmp.eq.s32.totalorder %s36, 1
    %p91 = por %p89, %p90
    %p92 = scmp.ne.s32.totalorder %s83, %s84
    %p93 = scmp.eq.s32.totalorder %s36, 0
    %p94 = por %p92, %p93
    %p95 = scmp.ne.s32.totalorder %s83, %s84
    %p96 = scmp.eq.s32.totalorder %s37, 1
    %p97 = por %p95, %p96
    %p99 = scmp.ne.s32.totalorder %s84, %s98
    %p100 = scmp.eq.s32.totalorder %s37, 0
    %p101 = por %p99, %p100
    %s103 = sadd.s32 %s102, 1
    %p106 = scmp.eq.s32.totalorder %s31, 1
    %p107 = scmp.ne.s32.totalorder %s102, %s104
    %p108 = scmp.eq.s32.totalorder %s31, 0
    %p109 = por %p107, %p108
    %p110 = scmp.ne.s32.totalorder %s102, %s104
    %p111 = scmp.eq.s32.totalorder %s36, 1
    %p112 = por %p110, %p111
    %p113 = scmp.ne.s32.totalorder %s104, %s105
    %p114 = scmp.eq.s32.totalorder %s36, 0
    %p115 = por %p113, %p114
    %p116 = scmp.ne.s32.totalorder %s104, %s105
    %p117 = scmp.eq.s32.totalorder %s37, 1
    %p118 = por %p116, %p117
    %p120 = scmp.ne.s32.totalorder %s105, %s119
    %p121 = scmp.eq.s32.totalorder %s37, 0
    %p122 = por %p120, %p121
    %s123 = ssub.s32 %s31, %s38
    %p124 = scmp.eq.s32.totalorder %s123, 0
    %s126 = sadd.s32 %s125, 1
    %s127 = scalar_select %p124, %s125, %s126
    %p130 = pneg %p124
    %p131 = scmp.eq.s32.totalorder %s31, 1
    %p132 = por %p130, %p131
    %p133 = scmp.ne.s32.totalorder %s125, %s128
    %p134 = scmp.eq.s32.totalorder %s31, 0
    %p135 = por %p133, %p134
    %p136 = scmp.ne.s32.totalorder %s125, %s128
    %p137 = scmp.eq.s32.totalorder %s36, 1
    %p138 = por %p136, %p137
    %p139 = scmp.ne.s32.totalorder %s128, %s129
    %p140 = scmp.eq.s32.totalorder %s36, 0
    %p141 = por %p139, %p140
    %p142 = scmp.ne.s32.totalorder %s128, %s129
    %p143 = scmp.eq.s32.totalorder %s37, 1
    %p144 = por %p142, %p143
    %p146 = scmp.ne.s32.totalorder %s129, %s145
    %p147 = scmp.eq.s32.totalorder %s37, 0
    %p148 = por %p146, %p147
    %s149 = ssub.s32 %s31, %s38
    %p150 = scmp.eq.s32.totalorder %s149, 0
    %s152 = sadd.s32 %s151, 1
    %s153 = scalar_select %p150, %s151, %s152
    %p156 = pneg %p150
    %p157 = scmp.eq.s32.totalorder %s31, 1
    %p158 = por %p156, %p157
    %p159 = scmp.ne.s32.totalorder %s151, %s154
    %p160 = scmp.eq.s32.totalorder %s31, 0
    %p161 = por %p159, %p160
    %p162 = scmp.ne.s32.totalorder %s151, %s154
    %p163 = scmp.eq.s32.totalorder %s36, 1
    %p164 = por %p162, %p163
    %p165 = scmp.ne.s32.totalorder %s154, %s155
    %p166 = scmp.eq.s32.totalorder %s36, 0
    %p167 = por %p165, %p166
    %p168 = scmp.ne.s32.totalorder %s154, %s155
    %p169 = scmp.eq.s32.totalorder %s37, 1
    %p170 = por %p168, %p169
    %p172 = scmp.ne.s32.totalorder %s155, %s171
    %p173 = scmp.eq.s32.totalorder %s37, 0
    %p174 = por %p172, %p173
    %s175 = ssub.s32 %s31, %s38
    %p176 = scmp.eq.s32.totalorder %s175, 0
    %s178 = sadd.s32 %s177, 1
    %s179 = scalar_select %p176, %s177, %s178
    %p182 = pneg %p176
    %p183 = scmp.eq.s32.totalorder %s31, 1
    %p184 = por %p182, %p183
    %p185 = scmp.ne.s32.totalorder %s177, %s180
    %p186 = scmp.eq.s32.totalorder %s31, 0
    %p187 = por %p185, %p186
    %p188 = scmp.ne.s32.totalorder %s177, %s180
    %p189 = scmp.eq.s32.totalorder %s36, 1
    %p190 = por %p188, %p189
    %p191 = scmp.ne.s32.totalorder %s180, %s181
    %p192 = scmp.eq.s32.totalorder %s36, 0
    %p193 = por %p191, %p192
    %p194 = scmp.ne.s32.totalorder %s180, %s181
    %p195 = scmp.eq.s32.totalorder %s37, 1
    %p196 = por %p194, %p195
    %p198 = scmp.ne.s32.totalorder %s181, %s197
    %p199 = scmp.eq.s32.totalorder %s37, 0
    %p200 = por %p198, %p199
    %s201 = ssub.s32 %s31, %s38
    %p202 = scmp.eq.s32.totalorder %s201, 0
    %s204 = sadd.s32 %s203, 1
    %s205 = scalar_select %p202, %s203, %s204
    %p208 = pneg %p202
    %p209 = scmp.eq.s32.totalorder %s31, 1
    %p210 = por %p208, %p209
    %p211 = scmp.ne.s32.totalorder %s203, %s206
    %p212 = scmp.eq.s32.totalorder %s31, 0
    %p213 = por %p211, %p212
    %p214 = scmp.ne.s32.totalorder %s203, %s206
    %p215 = scmp.eq.s32.totalorder %s36, 1
    %p216 = por %p214, %p215
    %p217 = scmp.ne.s32.totalorder %s206, %s207
    %p218 = scmp.eq.s32.totalorder %s36, 0
    %p219 = por %p217, %p218
    %p220 = scmp.ne.s32.totalorder %s206, %s207
    %p221 = scmp.eq.s32.totalorder %s37, 1
    %p222 = por %p220, %p221
    %p224 = scmp.ne.s32.totalorder %s207, %s223
    %p225 = scmp.eq.s32.totalorder %s37, 0
    %p226 = por %p224, %p225
    %s227 = ssub.s32 %s31, %s38
    %p228 = scmp.eq.s32.totalorder %s227, 0
    %s230 = sadd.s32 %s229, 1
    %s231 = scalar_select %p228, %s229, %s230
    %p234 = pneg %p228
    %p235 = scmp.eq.s32.totalorder %s31, 1
    %p236 = por %p234, %p235
    %p237 = scmp.ne.s32.totalorder %s229, %s232
    %p238 = scmp.eq.s32.totalorder %s31, 0
    %p239 = por %p237, %p238
    %p240 = scmp.ne.s32.totalorder %s229, %s232
    %p241 = scmp.eq.s32.totalorder %s36, 1
    %p242 = por %p240, %p241
    %p243 = scmp.ne.s32.totalorder %s232, %s233
    %p244 = scmp.eq.s32.totalorder %s36, 0
    %p245 = por %p243, %p244
    %p246 = scmp.ne.s32.totalorder %s232, %s233
    %p247 = scmp.eq.s32.totalorder %s37, 1
    %p248 = por %p246, %p247
    %p250 = scmp.ne.s32.totalorder %s233, %s249
    %p251 = scmp.eq.s32.totalorder %s37, 0
    %p252 = por %p250, %p251
    %s253 = ssub.s32 %s31, %s38
    %p254 = scmp.eq.s32.totalorder %s253, 0
    %s256 = sadd.s32 %s255, 1
    %s257 = scalar_select %p254, %s255, %s256
    %p260 = pneg %p254
    %p261 = scmp.eq.s32.totalorder %s31, 1
    %p262 = por %p260, %p261
    %p263 = scmp.ne.s32.totalorder %s255, %s258
    %p264 = scmp.eq.s32.totalorder %s31, 0
    %p265 = por %p263, %p264
    %p266 = scmp.ne.s32.totalorder %s255, %s258
    %p267 = scmp.eq.s32.totalorder %s36, 1
    %p268 = por %p266, %p267
    %p269 = scmp.ne.s32.totalorder %s258, %s259
    %p270 = scmp.eq.s32.totalorder %s36, 0
    %p271 = por %p269, %p270
    %p272 = scmp.ne.s32.totalorder %s258, %s259
    %p273 = scmp.eq.s32.totalorder %s37, 1
    %p274 = por %p272, %p273
    %p276 = scmp.ne.s32.totalorder %s259, %s275
    %p277 = scmp.eq.s32.totalorder %s37, 0
    %p278 = por %p276, %p277
    %s279 = ssub.s32 %s31, %s38
    %p280 = scmp.eq.s32.totalorder %s279, 0
    %s282 = sadd.s32 %s281, 1
    %s283 = scalar_select %p280, %s281, %s282
    %p286 = pneg %p280
    %p287 = scmp.eq.s32.totalorder %s31, 1
    %p288 = por %p286, %p287
    %p289 = scmp.ne.s32.totalorder %s281, %s284
    %p290 = scmp.eq.s32.totalorder %s31, 0
    %p291 = por %p289, %p290
    %p292 = scmp.ne.s32.totalorder %s281, %s284
    %p293 = scmp.eq.s32.totalorder %s36, 1
    %p294 = por %p292, %p293
    %p295 = scmp.ne.s32.totalorder %s284, %s285
    %p296 = scmp.eq.s32.totalorder %s36, 0
    %p297 = por %p295, %p296
    %p298 = scmp.ne.s32.totalorder %s284, %s285
    %p299 = scmp.eq.s32.totalorder %s37, 1
    %p300 = por %p298, %p299
    %p302 = scmp.ne.s32.totalorder %s285, %s301
    %p303 = scmp.eq.s32.totalorder %s37, 0
    %p304 = por %p302, %p303
    %s305 = ssub.s32 %s31, %s38
    %p306 = scmp.eq.s32.totalorder %s305, 0
    %s308 = sadd.s32 %s307, 1
    %s309 = scalar_select %p306, %s307, %s308
    %p312 = pneg %p306
    %p313 = scmp.eq.s32.totalorder %s31, 1
    %p314 = por %p312, %p313
    %p315 = scmp.ne.s32.totalorder %s307, %s310
    %p316 = scmp.eq.s32.totalorder %s31, 0
    %p317 = por %p315, %p316
    %p318 = scmp.ne.s32.totalorder %s307, %s310
    %p319 = scmp.eq.s32.totalorder %s36, 1
    %p320 = por %p318, %p319
    %p321 = scmp.ne.s32.totalorder %s310, %s311
    %p322 = scmp.eq.s32.totalorder %s36, 0
    %p323 = por %p321, %p322
    %p324 = scmp.ne.s32.totalorder %s310, %s311
    %p325 = scmp.eq.s32.totalorder %s37, 1
    %p326 = por %p324, %p325
    %p328 = scmp.ne.s32.totalorder %s311, %s327
    %p329 = scmp.eq.s32.totalorder %s37, 0
    %p330 = por %p328, %p329
    %s331 = ssub.s32 %s31, %s38
    %p332 = scmp.eq.s32.totalorder %s331, 0
    %s334 = sadd.s32 %s333, 1
    %s335 = scalar_select %p332, %s333, %s334
    %p338 = pneg %p332
    %p339 = scmp.eq.s32.totalorder %s31, 1
    %p340 = por %p338, %p339
    %p341 = scmp.ne.s32.totalorder %s333, %s336
    %p342 = scmp.eq.s32.totalorder %s31, 0
    %p343 = por %p341, %p342
    %p344 = scmp.ne.s32.totalorder %s333, %s336
    %p345 = scmp.eq.s32.totalorder %s36, 1
    %p346 = por %p344, %p345
    %p347 = scmp.ne.s32.totalorder %s336, %s337
    %p348 = scmp.eq.s32.totalorder %s36, 0
    %p349 = por %p347, %p348
    %p350 = scmp.ne.s32.totalorder %s336, %s337
    %p351 = scmp.eq.s32.totalorder %s37, 1
    %p352 = por %p350, %p351
    %p354 = scmp.ne.s32.totalorder %s337, %s353
    %p355 = scmp.eq.s32.totalorder %s37, 0
    %p356 = por %p354, %p355
    %s357 = ssub.s32 %s31, %s38
    %p358 = scmp.eq.s32.totalorder %s357, 0
    %s360 = sadd.s32 %s359, 1
    %s361 = scalar_select %p358, %s359, %s360
    %p364 = pneg %p358
    %p365 = scmp.eq.s32.totalorder %s31, 1
    %p366 = por %p364, %p365
    %p367 = scmp.ne.s32.totalorder %s359, %s362
    %p368 = scmp.eq.s32.totalorder %s31, 0
    %p369 = por %p367, %p368
    %p370 = scmp.ne.s32.totalorder %s359, %s362
    %p371 = scmp.eq.s32.totalorder %s36, 1
    %p372 = por %p370, %p371
    %p373 = scmp.ne.s32.totalorder %s362, %s363
    %p374 = scmp.eq.s32.totalorder %s36, 0
    %p375 = por %p373, %p374
    %p376 = scmp.ne.s32.totalorder %s362, %s363
    %p377 = scmp.eq.s32.totalorder %s37, 1
    %p378 = por %p376, %p377
    %p380 = scmp.ne.s32.totalorder %s363, %s379
    %p381 = scmp.eq.s32.totalorder %s37, 0
    %p382 = por %p380, %p381
    %s383 = ssub.s32 %s31, %s38
    %p384 = scmp.eq.s32.totalorder %s383, 0
    %s386 = sadd.s32 %s385, 1
    %s387 = scalar_select %p384, %s385, %s386
    %p390 = pneg %p384
    %p391 = scmp.eq.s32.totalorder %s31, 1
    %p392 = por %p390, %p391
    %p393 = scmp.ne.s32.totalorder %s385, %s388
    %p394 = scmp.eq.s32.totalorder %s31, 0
    %p395 = por %p393, %p394
    %p396 = scmp.ne.s32.totalorder %s385, %s388
    %p397 = scmp.eq.s32.totalorder %s36, 1
    %p398 = por %p396, %p397
    %p399 = scmp.ne.s32.totalorder %s388, %s389
    %p400 = scmp.eq.s32.totalorder %s36, 0
    %p401 = por %p399, %p400
    %p402 = scmp.ne.s32.totalorder %s388, %s389
    %p403 = scmp.eq.s32.totalorder %s37, 1
    %p404 = por %p402, %p403
    %p406 = scmp.ne.s32.totalorder %s389, %s405
    %p407 = scmp.eq.s32.totalorder %s37, 0
    %p408 = por %p406, %p407
    %s409 = ssub.s32 %s31, %s38
    %p410 = scmp.eq.s32.totalorder %s409, 0
    %s412 = sadd.s32 %s411, 1
    %s413 = scalar_select %p410, %s411, %s412
    %p416 = pneg %p410
    %p417 = scmp.eq.s32.totalorder %s31, 1
    %p418 = por %p416, %p417
    %p419 = scmp.ne.s32.totalorder %s411, %s414
    %p420 = scmp.eq.s32.totalorder %s31, 0
    %p421 = por %p419, %p420
    %p422 = scmp.ne.s32.totalorder %s411, %s414
    %p423 = scmp.eq.s32.totalorder %s36, 1
    %p424 = por %p422, %p423
    %p425 = scmp.ne.s32.totalorder %s414, %s415
    %p426 = scmp.eq.s32.totalorder %s36, 0
    %p427 = por %p425, %p426
    %p428 = scmp.ne.s32.totalorder %s414, %s415
    %p429 = scmp.eq.s32.totalorder %s37, 1
    %p430 = por %p428, %p429
    %p432 = scmp.ne.s32.totalorder %s415, %s431
    %p433 = scmp.eq.s32.totalorder %s37, 0
    %p434 = por %p432, %p433
    %s435 = ssub.s32 %s31, %s38
    %p436 = scmp.eq.s32.totalorder %s435, 0
    %s438 = sadd.s32 %s437, 1
    %s439 = scalar_select %p436, %s437, %s438
    %p442 = pneg %p436
    %p443 = scmp.eq.s32.totalorder %s31, 1
    %p444 = por %p442, %p443
    %p445 = scmp.ne.s32.totalorder %s437, %s440
    %p446 = scmp.eq.s32.totalorder %s31, 0
    %p447 = por %p445, %p446
    %p448 = scmp.ne.s32.totalorder %s437, %s440
    %p449 = scmp.eq.s32.totalorder %s36, 1
    %p450 = por %p448, %p449
    %p451 = scmp.ne.s32.totalorder %s440, %s441
    %p452 = scmp.eq.s32.totalorder %s36, 0
    %p453 = por %p451, %p452
    %p454 = scmp.ne.s32.totalorder %s440, %s441
    %p455 = scmp.eq.s32.totalorder %s37, 1
    %p456 = por %p454, %p455
    %p458 = scmp.ne.s32.totalorder %s441, %s457
    %p459 = scmp.eq.s32.totalorder %s37, 0
    %p460 = por %p458, %p459
    %s461 = ssub.s32 %s31, %s38
    %p462 = scmp.eq.s32.totalorder %s461, 0
    %s464 = sadd.s32 %s463, 1
    %s465 = scalar_select %p462, %s463, %s464
    %p468 = pneg %p462
    %p469 = scmp.eq.s32.totalorder %s31, 1
    %p470 = por %p468, %p469
    %p471 = scmp.ne.s32.totalorder %s463, %s466
    %p472 = scmp.eq.s32.totalorder %s31, 0
    %p473 = por %p471, %p472
    %p474 = scmp.ne.s32.totalorder %s463, %s466
    %p475 = scmp.eq.s32.totalorder %s36, 1
    %p476 = por %p474, %p475
    %p477 = scmp.ne.s32.totalorder %s466, %s467
    %p478 = scmp.eq.s32.totalorder %s36, 0
    %p479 = por %p477, %p478
    %p480 = scmp.ne.s32.totalorder %s466, %s467
    %p481 = scmp.eq.s32.totalorder %s37, 1
    %p482 = por %p480, %p481
    %p484 = scmp.ne.s32.totalorder %s467, %s483
    %p485 = scmp.eq.s32.totalorder %s37, 0
    %p486 = por %p484, %p485
    %s488 = sadd.s32 %s487, 1
    %p491 = scmp.eq.s32.totalorder %s31, 1
    %p492 = scmp.ne.s32.totalorder %s487, %s489
    %p493 = scmp.eq.s32.totalorder %s31, 0
    %p494 = por %p492, %p493
    %p495 = scmp.ne.s32.totalorder %s487, %s489
    %p496 = scmp.eq.s32.totalorder %s36, 1
    %p497 = por %p495, %p496
    %p498 = scmp.ne.s32.totalorder %s489, %s490
    %p499 = scmp.eq.s32.totalorder %s36, 0
    %p500 = por %p498, %p499
    %p501 = scmp.ne.s32.totalorder %s489, %s490
    %p502 = scmp.eq.s32.totalorder %s37, 1
    %p503 = por %p501, %p502
    %p505 = scmp.ne.s32.totalorder %s490, %s504
    %p506 = scmp.eq.s32.totalorder %s37, 0
    %p507 = por %p505, %p506
    %p508 = scmp.le.s32.totalorder 1, %s31
    %p509 = scmp.lt.s32.totalorder %s31, 3
    %p510 = pnand %p508, %p509
    %p511 = pneg %p510
    // Predicated region
    $region9: #{sparse_dist_forward.3} parent=5 // pred_check
      _
    $region10: #{sparse_dist_forward.3} parent=5 // pred_check_branch
      %513 = sbr.rel (%p510) target = $region12
    $region11: #{sparse_dist_forward.3} parent=5 // pred_region
      %s514 = ssub.s32 %s31, 1
      // Predicated region
      $region13: #{sparse_dist_forward.3} parent=11 // pred_check
        %p515 = pneg %p52
      $region14: #{sparse_dist_forward.3} parent=11 // pred_check_branch
        %517 = sbr.rel (%p515) target = $region16
      $region15: #{sparse_dist_forward.3} parent=11 // pred_region
        _
      $region16: #{sparse_dist_forward.3} parent=11 // pred_fallthru
        _
      // Predicated region
      $region17: #{sparse_dist_forward.3} parent=11 // pred_check
        %p518 = pneg %p73
      $region18: #{sparse_dist_forward.3} parent=11 // pred_check_branch
        %520 = sbr.rel (%p518) target = $region20
      $region19: #{sparse_dist_forward.3} parent=11 // pred_region
        _
      $region20: #{sparse_dist_forward.3} parent=11 // pred_fallthru
        _
      // Predicated region
      $region21: #{sparse_dist_forward.3} parent=11 // pred_check
        %p521 = pneg %p94
      $region22: #{sparse_dist_forward.3} parent=11 // pred_check_branch
        %523 = sbr.rel (%p521) target = $region24
      $region23: #{sparse_dist_forward.3} parent=11 // pred_region
        _
      $region24: #{sparse_dist_forward.3} parent=11 // pred_fallthru
        _
      // Predicated region
      $region25: #{sparse_dist_forward.3} parent=11 // pred_check
        %p524 = pneg %p115
      $region26: #{sparse_dist_forward.3} parent=11 // pred_check_branch
        %526 = sbr.rel (%p524) target = $region28
      $region27: #{sparse_dist_forward.3} parent=11 // pred_region
        _
      $region28: #{sparse_dist_forward.3} parent=11 // pred_fallthru
        _
    $region12: #{sparse_dist_forward.3} parent=5 // pred_fallthru
      _
    %p527 = scmp.lt.s32.totalorder %s31, 2
    // Predicated region
    $region29: #{sparse_dist_forward.3} parent=5 // pred_check
      %p528 = pneg %p527
    $region30: #{sparse_dist_forward.3} parent=5 // pred_check_branch
      %530 = sbr.rel (%p528) target = $region32
    $region31: #{sparse_dist_forward.3} parent=5 // pred_region
      // Predicated region
      $region33: #{sparse_dist_forward.3} parent=31 // pred_check
        %p531 = pneg %p135
      $region34: #{sparse_dist_forward.3} parent=31 // pred_check_branch
        %533 = sbr.rel (%p531) target = $region36
      $region35: #{sparse_dist_forward.3} parent=31 // pred_region
        %p534 = scmp.lt.s32.totalorder %s31, 1
        %s535 = scalar_select %p534, %s31, 1
        %s536 = smul.addr %s535, 2
        %s537 = scalar_lea.vmem %s5, %s536
      $region36: #{sparse_dist_forward.3} parent=31 // pred_fallthru
        _
      // Predicated region
      $region37: #{sparse_dist_forward.3} parent=31 // pred_check
        %p538 = pneg %p161
      $region38: #{sparse_dist_forward.3} parent=31 // pred_check_branch
        %540 = sbr.rel (%p538) target = $region40
      $region39: #{sparse_dist_forward.3} parent=31 // pred_region
        %p541 = scmp.lt.s32.totalorder %s31, 1
        %s542 = scalar_select %p541, %s31, 1
        %s543 = smul.addr %s542, 2
        %s544 = scalar_lea.vmem %s6, %s543
      $region40: #{sparse_dist_forward.3} parent=31 // pred_fallthru
        _
      // Predicated region
      $region41: #{sparse_dist_forward.3} parent=31 // pred_check
        %p545 = pneg %p187
      $region42: #{sparse_dist_forward.3} parent=31 // pred_check_branch
        %547 = sbr.rel (%p545) target = $region44
      $region43: #{sparse_dist_forward.3} parent=31 // pred_region
        %p548 = scmp.lt.s32.totalorder %s31, 1
        %s549 = scalar_select %p548, %s31, 1
        %s550 = smul.addr %s549, 16
        %s551 = smul.addr %s550, 4
        %s552 = scalar_lea.vmem %s7, %s551
      $region44: #{sparse_dist_forward.3} parent=31 // pred_fallthru
        _
      // Predicated region
      $region45: #{sparse_dist_forward.3} parent=31 // pred_check
        %p553 = pneg %p213
      $region46: #{sparse_dist_forward.3} parent=31 // pred_check_branch
        %555 = sbr.rel (%p553) target = $region48
      $region47: #{sparse_dist_forward.3} parent=31 // pred_region
        %p556 = scmp.lt.s32.totalorder %s31, 1
        %s557 = scalar_select %p556, %s31, 1
        %s558 = smul.addr %s557, 4
        %s559 = scalar_lea.vmem %s8, %s558
      $region48: #{sparse_dist_forward.3} parent=31 // pred_fallthru
        _
      // Predicated region
      $region49: #{sparse_dist_forward.3} parent=31 // pred_check
        %p560 = pneg %p239
      $region50: #{sparse_dist_forward.3} parent=31 // pred_check_branch
        %562 = sbr.rel (%p560) target = $region52
      $region51: #{sparse_dist_forward.3} parent=31 // pred_region
        %p563 = scmp.lt.s32.totalorder %s31, 1
        %s564 = scalar_select %p563, %s31, 1
        %s565 = smul.addr %s564, 2
        %s566 = scalar_lea.vmem %s9, %s565
      $region52: #{sparse_dist_forward.3} parent=31 // pred_fallthru
        _
      // Predicated region
      $region53: #{sparse_dist_forward.3} parent=31 // pred_check
        %p567 = pneg %p265
      $region54: #{sparse_dist_forward.3} parent=31 // pred_check_branch
        %569 = sbr.rel (%p567) target = $region56
      $region55: #{sparse_dist_forward.3} parent=31 // pred_region
        %p570 = scmp.lt.s32.totalorder %s31, 1
        %s571 = scalar_select %p570, %s31, 1
        %s572 = smul.addr %s571, 2
        %s573 = scalar_lea.vmem %s10, %s572
      $region56: #{sparse_dist_forward.3} parent=31 // pred_fallthru
        _
      // Predicated region
      $region57: #{sparse_dist_forward.3} parent=31 // pred_check
        %p574 = pneg %p291
      $region58: #{sparse_dist_forward.3} parent=31 // pred_check_branch
        %576 = sbr.rel (%p574) target = $region60
      $region59: #{sparse_dist_forward.3} parent=31 // pred_region
        %p577 = scmp.lt.s32.totalorder %s31, 1
        %s578 = scalar_select %p577, %s31, 1
        %s579 = smul.addr %s578, 8
        %s580 = smul.addr %s579, 4
        %s581 = scalar_lea.vmem %s11, %s580
      $region60: #{sparse_dist_forward.3} parent=31 // pred_fallthru
        _
      // Predicated region
      $region61: #{sparse_dist_forward.3} parent=31 // pred_check
        %p582 = pneg %p317
      $region62: #{sparse_dist_forward.3} parent=31 // pred_check_branch
        %584 = sbr.rel (%p582) target = $region64
      $region63: #{sparse_dist_forward.3} parent=31 // pred_region
        %p585 = scmp.lt.s32.totalorder %s31, 1
        %s586 = scalar_select %p585, %s31, 1
        %s587 = smul.addr %s586, 2
        %s588 = scalar_lea.vmem %s12, %s587
      $region64: #{sparse_dist_forward.3} parent=31 // pred_fallthru
        _
      // Predicated region
      $region65: #{sparse_dist_forward.3} parent=31 // pred_check
        %p589 = pneg %p343
      $region66: #{sparse_dist_forward.3} parent=31 // pred_check_branch
        %591 = sbr.rel (%p589) target = $region68
      $region67: #{sparse_dist_forward.3} parent=31 // pred_region
        %p592 = scmp.lt.s32.totalorder %s31, 1
        %s593 = scalar_select %p592, %s31, 1
        %s594 = scalar_lea.vmem %s13, %s593
      $region68: #{sparse_dist_forward.3} parent=31 // pred_fallthru
        _
      // Predicated region
      $region69: #{sparse_dist_forward.3} parent=31 // pred_check
        %p595 = pneg %p369
      $region70: #{sparse_dist_forward.3} parent=31 // pred_check_branch
        %597 = sbr.rel (%p595) target = $region72
      $region71: #{sparse_dist_forward.3} parent=31 // pred_region
        %p598 = scmp.lt.s32.totalorder %s31, 1
        %s599 = scalar_select %p598, %s31, 1
        %s600 = scalar_lea.vmem %s14, %s599
      $region72: #{sparse_dist_forward.3} parent=31 // pred_fallthru
        _
      // Predicated region
      $region73: #{sparse_dist_forward.3} parent=31 // pred_check
        %p601 = pneg %p395
      $region74: #{sparse_dist_forward.3} parent=31 // pred_check_branch
        %603 = sbr.rel (%p601) target = $region76
      $region75: #{sparse_dist_forward.3} parent=31 // pred_region
        %p604 = scmp.lt.s32.totalorder %s31, 1
        %s605 = scalar_select %p604, %s31, 1
        %s606 = smul.addr %s605, 4
        %s607 = smul.addr %s606, 4
        %s608 = scalar_lea.vmem %s15, %s607
      $region76: #{sparse_dist_forward.3} parent=31 // pred_fallthru
        _
      // Predicated region
      $region77: #{sparse_dist_forward.3} parent=31 // pred_check
        %p609 = pneg %p421
      $region78: #{sparse_dist_forward.3} parent=31 // pred_check_branch
        %611 = sbr.rel (%p609) target = $region80
      $region79: #{sparse_dist_forward.3} parent=31 // pred_region
        %p612 = scmp.lt.s32.totalorder %s31, 1
        %s613 = scalar_select %p612, %s31, 1
        %s614 = scalar_lea.vmem %s16, %s613
      $region80: #{sparse_dist_forward.3} parent=31 // pred_fallthru
        _
      // Predicated region
      $region81: #{sparse_dist_forward.3} parent=31 // pred_check
        %p615 = pneg %p447
      $region82: #{sparse_dist_forward.3} parent=31 // pred_check_branch
        %617 = sbr.rel (%p615) target = $region84
      $region83: #{sparse_dist_forward.3} parent=31 // pred_region
        %p618 = scmp.lt.s32.totalorder %s31, 1
        %s619 = scalar_select %p618, %s31, 1
        %s620 = smul.addr %s619, 16
        %s621 = smul.addr %s620, 4
        %s622 = scalar_lea.vmem %s17, %s621
      $region84: #{sparse_dist_forward.3} parent=31 // pred_fallthru
        _
      // Predicated region
      $region85: #{sparse_dist_forward.3} parent=31 // pred_check
        %p623 = pneg %p473
      $region86: #{sparse_dist_forward.3} parent=31 // pred_check_branch
        %625 = sbr.rel (%p623) target = $region88
      $region87: #{sparse_dist_forward.3} parent=31 // pred_region
        %p626 = scmp.lt.s32.totalorder %s31, 1
        %s627 = scalar_select %p626, %s31, 1
        %s628 = scalar_lea.vmem %s18, %s627
      $region88: #{sparse_dist_forward.3} parent=31 // pred_fallthru
        _
    $region32: #{sparse_dist_forward.3} parent=5 // pred_fallthru
      _
    %p629 = scmp.le.s32.totalorder 1, %s31
    %p630 = scmp.lt.s32.totalorder %s31, 3
    %p631 = pnand %p629, %p630
    %p632 = pneg %p631
    // Predicated region
    $region89: #{sparse_dist_forward.3} parent=5 // pred_check
      _
    $region90: #{sparse_dist_forward.3} parent=5 // pred_check_branch
      %634 = sbr.rel (%p631) target = $region92
    $region91: #{sparse_dist_forward.3} parent=5 // pred_region
      %s635 = ssub.s32 %s31, 1
      %p636 = pneg %p52
      %p637 = pneg %p49
      %p638 = pneg %p73
      %p639 = pneg %p70
      %p640 = pneg %p94
      %p641 = pneg %p91
      %p642 = pneg %p115
      %p643 = pneg %p112
      %p644 = scmp.lt.s32.totalorder %s36, 1
      %s645 = scalar_select %p644, %s36, 1
      %s646 = smul.addr %s645, 2
      %s647 = scalar_lea.vmem %s5, %s646
      %p648 = pneg %p141
      %p649 = pneg %p138
      %p650 = scmp.lt.s32.totalorder %s36, 1
      %s651 = scalar_select %p650, %s36, 1
      %s652 = smul.addr %s651, 2
      %s653 = scalar_lea.vmem %s6, %s652
      %p654 = pneg %p167
      %p655 = pneg %p164
      %p656 = scmp.lt.s32.totalorder %s36, 1
      %s657 = scalar_select %p656, %s36, 1
      %s658 = smul.addr %s657, 16
      %s659 = smul.addr %s658, 4
      %s660 = scalar_lea.vmem %s7, %s659
      %p661 = pneg %p193
      %p662 = pneg %p190
      %p663 = scmp.lt.s32.totalorder %s36, 1
      %s664 = scalar_select %p663, %s36, 1
      %s665 = smul.addr %s664, 4
      %s666 = scalar_lea.vmem %s8, %s665
      %p667 = pneg %p219
      %p668 = pneg %p216
      %p669 = scmp.lt.s32.totalorder %s36, 1
      %s670 = scalar_select %p669, %s36, 1
      %s671 = smul.addr %s670, 2
      %s672 = scalar_lea.vmem %s9, %s671
      %p673 = pneg %p245
      %p674 = pneg %p242
      %p675 = scmp.lt.s32.totalorder %s36, 1
      %s676 = scalar_select %p675, %s36, 1
      %s677 = smul.addr %s676, 2
      %s678 = scalar_lea.vmem %s10, %s677
      %p679 = pneg %p271
      %p680 = pneg %p268
      %p681 = scmp.lt.s32.totalorder %s36, 1
      %s682 = scalar_select %p681, %s36, 1
      %s683 = smul.addr %s682, 8
      %s684 = smul.addr %s683, 4
      %s685 = scalar_lea.vmem %s11, %s684
      %p686 = pneg %p297
      %p687 = pneg %p294
      %p688 = scmp.lt.s32.totalorder %s36, 1
      %s689 = scalar_select %p688, %s36, 1
      %s690 = smul.addr %s689, 2
      %s691 = scalar_lea.vmem %s12, %s690
      %p692 = pneg %p323
      %p693 = pneg %p320
      %p694 = scmp.lt.s32.totalorder %s36, 1
      %s695 = scalar_select %p694, %s36, 1
      %s696 = scalar_lea.vmem %s13, %s695
      %p697 = pneg %p349
      %p698 = pneg %p346
      %p699 = scmp.lt.s32.totalorder %s36, 1
      %s700 = scalar_select %p699, %s36, 1
      %s701 = scalar_lea.vmem %s14, %s700
      %p702 = pneg %p375
      %p703 = pneg %p372
      %p704 = scmp.lt.s32.totalorder %s36, 1
      %s705 = scalar_select %p704, %s36, 1
      %s706 = smul.addr %s705, 4
      %s707 = smul.addr %s706, 4
      %s708 = scalar_lea.vmem %s15, %s707
      %p709 = pneg %p401
      %p710 = pneg %p398
      %p711 = scmp.lt.s32.totalorder %s36, 1
      %s712 = scalar_select %p711, %s36, 1
      %s713 = scalar_lea.vmem %s16, %s712
      %p714 = pneg %p427
      %p715 = pneg %p424
      %p716 = scmp.lt.s32.totalorder %s36, 1
      %s717 = scalar_select %p716, %s36, 1
      %s718 = smul.addr %s717, 16
      %s719 = smul.addr %s718, 4
      %s720 = scalar_lea.vmem %s17, %s719
      %p721 = pneg %p453
      %p722 = pneg %p450
      %p723 = scmp.lt.s32.totalorder %s36, 1
      %s724 = scalar_select %p723, %s36, 1
      %s725 = scalar_lea.vmem %s18, %s724
      %p726 = pneg %p479
      %p727 = pneg %p476
      %p728 = pneg %p500
      %p729 = pneg %p497
      %p730 = scmp.lt.s32.totalorder %s36, 1
      %s731 = scalar_select %p730, %s36, 1
      %s732 = smul.addr %s731, 2
      %s733 = scalar_lea.vmem %s5, %s732
      %p734 = scmp.lt.s32.totalorder %s36, 1
      %s735 = scalar_select %p734, %s36, 1
      %s736 = smul.addr %s735, 2
      %s737 = scalar_lea.vmem %s6, %s736
      %p738 = scmp.lt.s32.totalorder %s36, 1
      %s739 = scalar_select %p738, %s36, 1
      %s740 = smul.addr %s739, 16
      %s741 = smul.addr %s740, 4
      %s742 = scalar_lea.vmem %s7, %s741
      %p743 = scmp.lt.s32.totalorder %s36, 1
      %s744 = scalar_select %p743, %s36, 1
      %s745 = smul.addr %s744, 4
      %s746 = scalar_lea.vmem %s8, %s745
      %p747 = scmp.lt.s32.totalorder %s36, 1
      %s748 = scalar_select %p747, %s36, 1
      %s749 = smul.addr %s748, 2
      %s750 = scalar_lea.vmem %s9, %s749
      %p751 = scmp.lt.s32.totalorder %s36, 1
      %s752 = scalar_select %p751, %s36, 1
      %s753 = smul.addr %s752, 2
      %s754 = scalar_lea.vmem %s10, %s753
      %p755 = scmp.lt.s32.totalorder %s36, 1
      %s756 = scalar_select %p755, %s36, 1
      %s757 = smul.addr %s756, 8
      %s758 = smul.addr %s757, 4
      %s759 = scalar_lea.vmem %s11, %s758
      %p760 = scmp.lt.s32.totalorder %s36, 1
      %s761 = scalar_select %p760, %s36, 1
      %s762 = smul.addr %s761, 2
      %s763 = scalar_lea.vmem %s12, %s762
      %p764 = scmp.lt.s32.totalorder %s36, 1
      %s765 = scalar_select %p764, %s36, 1
      %s766 = scalar_lea.vmem %s13, %s765
      %p767 = scmp.lt.s32.totalorder %s36, 1
      %s768 = scalar_select %p767, %s36, 1
      %s769 = scalar_lea.vmem %s14, %s768
      %p770 = scmp.lt.s32.totalorder %s36, 1
      %s771 = scalar_select %p770, %s36, 1
      %s772 = smul.addr %s771, 4
      %s773 = smul.addr %s772, 4
      %s774 = scalar_lea.vmem %s15, %s773
      %p775 = scmp.lt.s32.totalorder %s36, 1
      %s776 = scalar_select %p775, %s36, 1
      %s777 = scalar_lea.vmem %s16, %s776
      %p778 = scmp.lt.s32.totalorder %s36, 1
      %s779 = scalar_select %p778, %s36, 1
      %s780 = smul.addr %s779, 16
      %s781 = smul.addr %s780, 4
      %s782 = scalar_lea.vmem %s17, %s781
      %p783 = scmp.lt.s32.totalorder %s36, 1
      %s784 = scalar_select %p783, %s36, 1
      %s785 = scalar_lea.vmem %s18, %s784
      %p787 = scmp.eq.s32.totalorder %s36, 0
      // Predicated region
      $region93: #{sparse_dist_forward.3} parent=91 // pred_check
        %p788 = pneg %p787
      $region94: #{sparse_dist_forward.3} parent=91 // pred_check_branch
        %790 = sbr.rel (%p788) target = $region96
      $region95: #{sparse_dist_forward.3} parent=91 // pred_region
        %v791 = vld [vmem:[%s2] sm:$0x1]
        %v792 = vmul.f32 %v791, 2.0
        %v793 = vmul.f32 %v792, %v791
        %v794 = vrcp.pop %v793
        %v795 = vmul.f32 1.0, %v794
        %v796 = vld [vmem:[%s1] sm:$0xff]
        %v797 = vld [vmem:[%s1 + $0x8] sm:$0xff]
        %v798 = vld [vmem:[%s1 + $0x10] sm:$0xff]
        %v799 = vld [vmem:[%s1 + $0x18] sm:$0xff]
        %v800 = vmul.f32 %v796, %v796
        %v801 = vmul.f32 %v797, %v797
        %v802 = vmul.f32 %v798, %v798
        %v803 = vmul.f32 %v799, %v799
        %v804 = vsub.f32 0.0, %v800
        %v805 = vsub.f32 0.0, %v801
        %v806 = vsub.f32 0.0, %v802
        %v807 = vsub.f32 0.0, %v803
        %809 = vset.pattern.permute.xlu0 0
        %810 = vperm.xlu0 %809, %v804
        %v811 = vpop.permute.xlu0 %810
        %814 = vset.pattern.permute.xlu0 0
        %815 = vperm.xlu0 %814, %v805
        %v816 = vpop.permute.xlu0 %815
        %819 = vset.pattern.permute.xlu0 0
        %820 = vperm.xlu0 %819, %v806
        %v821 = vpop.permute.xlu0 %820
        %824 = vset.pattern.permute.xlu0 0
        %825 = vperm.xlu0 %824, %v807
        %v826 = vpop.permute.xlu0 %825
        %v829 = vlaneseq
        %v830 = vshrl.u32 %v829, 7
        %v831 = vsub.s32 0, %v830
        %v832 = vrot.slane %v795, %v831
        %v834 = vmul.f32 %v811, %v832
        %v835 = vmul.f32 %v816, %v832
        %v836 = vmul.f32 %v821, %v832
        %v837 = vmul.f32 %v826, %v832
        %v838 = vmul.f32 %v834, 1.442695
        %v839 = vpow.pop %v838
        %v840 = vmul.f32 %v835, 1.442695
        %v841 = vpow.pop %v840
        %v842 = vmul.f32 %v836, 1.442695
        %v843 = vpow.pop %v842
        %v844 = vmul.f32 %v837, 1.442695
        %v845 = vpow.pop %v844
        %vm846 = vcmp.gt.f32.partialorder %v839, 0.1
        %vm847 = vcmp.gt.f32.partialorder %v841, 0.1
        %vm848 = vcmp.gt.f32.partialorder %v843, 0.1
        %vm849 = vcmp.gt.f32.partialorder %v845, 0.1
        %v850 = vsel %vm846, %v839, 0.0
        %v851 = vsel %vm847, %v841, 0.0
        %v852 = vsel %vm848, %v843, 0.0
        %v853 = vsel %vm849, %v845, 0.0
        %vm854 = vcmp.ne.f32.partialorder %v850, %v850
        %vm855 = vcmp.ne.f32.partialorder %v851, %v851
        %vm856 = vcmp.ne.f32.partialorder %v852, %v852
        %vm857 = vcmp.ne.f32.partialorder %v853, %v853
        %v858 = vsel %vm854, 0.0, %v850
        %v859 = vsel %vm855, 0.0, %v851
        %v860 = vsel %vm856, 0.0, %v852
        %v861 = vsel %vm857, 0.0, %v853
        %vm862 = vcmask 261120
        %863 = vst.msk [vmem:[#allocation2] sm:$0xff] %vm862, %v858
        %864 = vst.msk [vmem:[#allocation2 + $0x8] sm:$0xff] %vm862, %v859
        %865 = vst.msk [vmem:[#allocation2 + $0x10] sm:$0xff] %vm862, %v860
        %866 = vst.msk [vmem:[#allocation2 + $0x18] sm:$0xff] %vm862, %v861
        %v867 = vld [vmem:[%s1] sm:$0xff]
        %v868 = vld [vmem:[%s1 + $0x8] sm:$0xff]
        %v869 = vld [vmem:[%s1 + $0x10] sm:$0xff]
        %v870 = vld [vmem:[%s1 + $0x18] sm:$0xff]
        %v871 = vmul.f32 %v867, %v867
        %v872 = vmul.f32 %v868, %v868
        %v873 = vmul.f32 %v869, %v869
        %v874 = vmul.f32 %v870, %v870
        %v875 = vsub.f32 0.0, %v871
        %v876 = vsub.f32 0.0, %v872
        %v877 = vsub.f32 0.0, %v873
        %v878 = vsub.f32 0.0, %v874
        %880 = vset.pattern.permute.xlu0 1
        %881 = vperm.xlu0 %880, %v875
        %v882 = vpop.permute.xlu0 %881
        %885 = vset.pattern.permute.xlu0 1
        %886 = vperm.xlu0 %885, %v876
        %v887 = vpop.permute.xlu0 %886
        %890 = vset.pattern.permute.xlu0 1
        %891 = vperm.xlu0 %890, %v877
        %v892 = vpop.permute.xlu0 %891
        %895 = vset.pattern.permute.xlu0 1
        %896 = vperm.xlu0 %895, %v878
        %v897 = vpop.permute.xlu0 %896
        %v899 = vmul.f32 %v882, %v832
        %v900 = vmul.f32 %v887, %v832
        %v901 = vmul.f32 %v892, %v832
        %v902 = vmul.f32 %v897, %v832
        %v903 = vmul.f32 %v899, 1.442695
        %v904 = vpow.pop %v903
        %v905 = vmul.f32 %v900, 1.442695
        %v906 = vpow.pop %v905
        %v907 = vmul.f32 %v901, 1.442695
        %v908 = vpow.pop %v907
        %v909 = vmul.f32 %v902, 1.442695
        %v910 = vpow.pop %v909
        %vm911 = vcmp.gt.f32.partialorder %v904, 0.1
        %vm912 = vcmp.gt.f32.partialorder %v906, 0.1
        %vm913 = vcmp.gt.f32.partialorder %v908, 0.1
        %vm914 = vcmp.gt.f32.partialorder %v910, 0.1
        %v915 = vsel %vm911, %v904, 0.0
        %v916 = vsel %vm912, %v906, 0.0
        %v917 = vsel %vm913, %v908, 0.0
        %v918 = vsel %vm914, %v910, 0.0
        %vm919 = vcmp.ne.f32.partialorder %v915, %v915
        %vm920 = vcmp.ne.f32.partialorder %v916, %v916
        %vm921 = vcmp.ne.f32.partialorder %v917, %v917
        %vm922 = vcmp.ne.f32.partialorder %v918, %v918
        %v923 = vsel %vm919, 0.0, %v915
        %v924 = vsel %vm920, 0.0, %v916
        %v925 = vsel %vm921, 0.0, %v917
        %v926 = vsel %vm922, 0.0, %v918
        %927 = vst.msk [vmem:[#allocation2 + $0x20] sm:$0xff] %vm862, %v923
        %928 = vst.msk [vmem:[#allocation2 + $0x28] sm:$0xff] %vm862, %v924
        %929 = vst.msk [vmem:[#allocation2 + $0x30] sm:$0xff] %vm862, %v925
        %930 = vst.msk [vmem:[#allocation2 + $0x38] sm:$0xff] %vm862, %v926
        %v931 = vld [vmem:[%s1] sm:$0xff]
        %v932 = vld [vmem:[%s1 + $0x8] sm:$0xff]
        %v933 = vld [vmem:[%s1 + $0x10] sm:$0xff]
        %v934 = vld [vmem:[%s1 + $0x18] sm:$0xff]
        %v935 = vmul.f32 %v931, %v931
        %v936 = vmul.f32 %v932, %v932
        %v937 = vmul.f32 %v933, %v933
        %v938 = vmul.f32 %v934, %v934
        %v939 = vsub.f32 0.0, %v935
        %v940 = vsub.f32 0.0, %v936
        %v941 = vsub.f32 0.0, %v937
        %v942 = vsub.f32 0.0, %v938
        %944 = vset.pattern.permute.xlu0 2
        %945 = vperm.xlu0 %944, %v939
        %v946 = vpop.permute.xlu0 %945
        %949 = vset.pattern.permute.xlu0 2
        %950 = vperm.xlu0 %949, %v940
        %v951 = vpop.permute.xlu0 %950
        %954 = vset.pattern.permute.xlu0 2
        %955 = vperm.xlu0 %954, %v941
        %v956 = vpop.permute.xlu0 %955
        %959 = vset.pattern.permute.xlu0 2
        %960 = vperm.xlu0 %959, %v942
        %v961 = vpop.permute.xlu0 %960
        %v963 = vmul.f32 %v946, %v832
        %v964 = vmul.f32 %v951, %v832
        %v965 = vmul.f32 %v956, %v832
        %v966 = vmul.f32 %v961, %v832
        %v967 = vmul.f32 %v963, 1.442695
        %v968 = vpow.pop %v967
        %v969 = vmul.f32 %v964, 1.442695
        %v970 = vpow.pop %v969
        %v971 = vmul.f32 %v965, 1.442695
        %v972 = vpow.pop %v971
        %v973 = vmul.f32 %v966, 1.442695
        %v974 = vpow.pop %v973
        %vm975 = vcmp.gt.f32.partialorder %v968, 0.1
        %vm976 = vcmp.gt.f32.partialorder %v970, 0.1
        %vm977 = vcmp.gt.f32.partialorder %v972, 0.1
        %vm978 = vcmp.gt.f32.partialorder %v974, 0.1
        %v979 = vsel %vm975, %v968, 0.0
        %v980 = vsel %vm976, %v970, 0.0
        %v981 = vsel %vm977, %v972, 0.0
        %v982 = vsel %vm978, %v974, 0.0
        %vm983 = vcmp.ne.f32.partialorder %v979, %v979
        %vm984 = vcmp.ne.f32.partialorder %v980, %v980
        %vm985 = vcmp.ne.f32.partialorder %v981, %v981
        %vm986 = vcmp.ne.f32.partialorder %v982, %v982
        %v987 = vsel %vm983, 0.0, %v979
        %v988 = vsel %vm984, 0.0, %v980
        %v989 = vsel %vm985, 0.0, %v981
        %v990 = vsel %vm986, 0.0, %v982
        %991 = vst.msk [vmem:[#allocation2 + $0x40] sm:$0xff] %vm862, %v987
        %992 = vst.msk [vmem:[#allocation2 + $0x48] sm:$0xff] %vm862, %v988
        %993 = vst.msk [vmem:[#allocation2 + $0x50] sm:$0xff] %vm862, %v989
        %994 = vst.msk [vmem:[#allocation2 + $0x58] sm:$0xff] %vm862, %v990
        %v995 = vld [vmem:[%s1] sm:$0xff]
        %v996 = vld [vmem:[%s1 + $0x8] sm:$0xff]
        %v997 = vld [vmem:[%s1 + $0x10] sm:$0xff]
        %v998 = vld [vmem:[%s1 + $0x18] sm:$0xff]
        %v999 = vmul.f32 %v995, %v995
        %v1000 = vmul.f32 %v996, %v996
        %v1001 = vmul.f32 %v997, %v997
        %v1002 = vmul.f32 %v998, %v998
        %v1003 = vsub.f32 0.0, %v999
        %v1004 = vsub.f32 0.0, %v1000
        %v1005 = vsub.f32 0.0, %v1001
        %v1006 = vsub.f32 0.0, %v1002
        %1008 = vset.pattern.permute.xlu0 3
        %1009 = vperm.xlu0 %1008, %v1003
        %v1010 = vpop.permute.xlu0 %1009
        %1013 = vset.pattern.permute.xlu0 3
        %1014 = vperm.xlu0 %1013, %v1004
        %v1015 = vpop.permute.xlu0 %1014
        %1018 = vset.pattern.permute.xlu0 3
        %1019 = vperm.xlu0 %1018, %v1005
        %v1020 = vpop.permute.xlu0 %1019
        %1023 = vset.pattern.permute.xlu0 3
        %1024 = vperm.xlu0 %1023, %v1006
        %v1025 = vpop.permute.xlu0 %1024
        %v1027 = vmul.f32 %v1010, %v832
        %v1028 = vmul.f32 %v1015, %v832
        %v1029 = vmul.f32 %v1020, %v832
        %v1030 = vmul.f32 %v1025, %v832
        %v1031 = vmul.f32 %v1027, 1.442695
        %v1032 = vpow.pop %v1031
        %v1033 = vmul.f32 %v1028, 1.442695
        %v1034 = vpow.pop %v1033
        %v1035 = vmul.f32 %v1029, 1.442695
        %v1036 = vpow.pop %v1035
        %v1037 = vmul.f32 %v1030, 1.442695
        %v1038 = vpow.pop %v1037
        %vm1039 = vcmp.gt.f32.partialorder %v1032, 0.1
        %vm1040 = vcmp.gt.f32.partialorder %v1034, 0.1
        %vm1041 = vcmp.gt.f32.partialorder %v1036, 0.1
        %vm1042 = vcmp.gt.f32.partialorder %v1038, 0.1
        %v1043 = vsel %vm1039, %v1032, 0.0
        %v1044 = vsel %vm1040, %v1034, 0.0
        %v1045 = vsel %vm1041, %v1036, 0.0
        %v1046 = vsel %vm1042, %v1038, 0.0
        %vm1047 = vcmp.ne.f32.partialorder %v1043, %v1043
        %vm1048 = vcmp.ne.f32.partialorder %v1044, %v1044
        %vm1049 = vcmp.ne.f32.partialorder %v1045, %v1045
        %vm1050 = vcmp.ne.f32.partialorder %v1046, %v1046
        %v1051 = vsel %vm1047, 0.0, %v1043
        %v1052 = vsel %vm1048, 0.0, %v1044
        %v1053 = vsel %vm1049, 0.0, %v1045
        %v1054 = vsel %vm1050, 0.0, %v1046
        %1055 = vst.msk [vmem:[#allocation2 + $0x60] sm:$0xff] %vm862, %v1051
        %1056 = vst.msk [vmem:[#allocation2 + $0x68] sm:$0xff] %vm862, %v1052
        %1057 = vst.msk [vmem:[#allocation2 + $0x70] sm:$0xff] %vm862, %v1053
        %1058 = vst.msk [vmem:[#allocation2 + $0x78] sm:$0xff] %vm862, %v1054
        %v1059 = vld [vmem:[%s1] sm:$0xff]
        %v1060 = vld [vmem:[%s1 + $0x8] sm:$0xff]
        %v1061 = vld [vmem:[%s1 + $0x10] sm:$0xff]
        %v1062 = vld [vmem:[%s1 + $0x18] sm:$0xff]
        %v1063 = vmul.f32 %v1059, %v1059
        %v1064 = vmul.f32 %v1060, %v1060
        %v1065 = vmul.f32 %v1061, %v1061
        %v1066 = vmul.f32 %v1062, %v1062
        %v1067 = vsub.f32 0.0, %v1063
        %v1068 = vsub.f32 0.0, %v1064
        %v1069 = vsub.f32 0.0, %v1065
        %v1070 = vsub.f32 0.0, %v1066
        %1072 = vset.pattern.permute.xlu0 4
        %1073 = vperm.xlu0 %1072, %v1067
        %v1074 = vpop.permute.xlu0 %1073
        %1077 = vset.pattern.permute.xlu0 4
        %1078 = vperm.xlu0 %1077, %v1068
        %v1079 = vpop.permute.xlu0 %1078
        %1082 = vset.pattern.permute.xlu0 4
        %1083 = vperm.xlu0 %1082, %v1069
        %v1084 = vpop.permute.xlu0 %1083
        %1087 = vset.pattern.permute.xlu0 4
        %1088 = vperm.xlu0 %1087, %v1070
        %v1089 = vpop.permute.xlu0 %1088
        %v1091 = vmul.f32 %v1074, %v832
        %v1092 = vmul.f32 %v1079, %v832
        %v1093 = vmul.f32 %v1084, %v832
        %v1094 = vmul.f32 %v1089, %v832
        %v1095 = vmul.f32 %v1091, 1.442695
        %v1096 = vpow.pop %v1095
        %v1097 = vmul.f32 %v1092, 1.442695
        %v1098 = vpow.pop %v1097
        %v1099 = vmul.f32 %v1093, 1.442695
        %v1100 = vpow.pop %v1099
        %v1101 = vmul.f32 %v1094, 1.442695
        %v1102 = vpow.pop %v1101
        %vm1103 = vcmp.gt.f32.partialorder %v1096, 0.1
        %vm1104 = vcmp.gt.f32.partialorder %v1098, 0.1
        %vm1105 = vcmp.gt.f32.partialorder %v1100, 0.1
        %vm1106 = vcmp.gt.f32.partialorder %v1102, 0.1
        %v1107 = vsel %vm1103, %v1096, 0.0
        %v1108 = vsel %vm1104, %v1098, 0.0
        %v1109 = vsel %vm1105, %v1100, 0.0
        %v1110 = vsel %vm1106, %v1102, 0.0
        %vm1111 = vcmp.ne.f32.partialorder %v1107, %v1107
        %vm1112 = vcmp.ne.f32.partialorder %v1108, %v1108
        %vm1113 = vcmp.ne.f32.partialorder %v1109, %v1109
        %vm1114 = vcmp.ne.f32.partialorder %v1110, %v1110
        %v1115 = vsel %vm1111, 0.0, %v1107
        %v1116 = vsel %vm1112, 0.0, %v1108
        %v1117 = vsel %vm1113, 0.0, %v1109
        %v1118 = vsel %vm1114, 0.0, %v1110
        %1119 = vst.msk [vmem:[#allocation2 + $0x80] sm:$0xff] %vm862, %v1115
        %1120 = vst.msk [vmem:[#allocation2 + $0x88] sm:$0xff] %vm862, %v1116
        %1121 = vst.msk [vmem:[#allocation2 + $0x90] sm:$0xff] %vm862, %v1117
        %1122 = vst.msk [vmem:[#allocation2 + $0x98] sm:$0xff] %vm862, %v1118
        %v1123 = vld [vmem:[%s1] sm:$0xff]
        %v1124 = vld [vmem:[%s1 + $0x8] sm:$0xff]
        %v1125 = vld [vmem:[%s1 + $0x10] sm:$0xff]
        %v1126 = vld [vmem:[%s1 + $0x18] sm:$0xff]
        %v1127 = vmul.f32 %v1123, %v1123
        %v1128 = vmul.f32 %v1124, %v1124
        %v1129 = vmul.f32 %v1125, %v1125
        %v1130 = vmul.f32 %v1126, %v1126
        %v1131 = vsub.f32 0.0, %v1127
        %v1132 = vsub.f32 0.0, %v1128
        %v1133 = vsub.f32 0.0, %v1129
        %v1134 = vsub.f32 0.0, %v1130
        %1136 = vset.pattern.permute.xlu0 5
        %1137 = vperm.xlu0 %1136, %v1131
        %v1138 = vpop.permute.xlu0 %1137
        %1141 = vset.pattern.permute.xlu0 5
        %1142 = vperm.xlu0 %1141, %v1132
        %v1143 = vpop.permute.xlu0 %1142
        %1146 = vset.pattern.permute.xlu0 5
        %1147 = vperm.xlu0 %1146, %v1133
        %v1148 = vpop.permute.xlu0 %1147
        %1151 = vset.pattern.permute.xlu0 5
        %1152 = vperm.xlu0 %1151, %v1134
        %v1153 = vpop.permute.xlu0 %1152
        %v1155 = vmul.f32 %v1138, %v832
        %v1156 = vmul.f32 %v1143, %v832
        %v1157 = vmul.f32 %v1148, %v832
        %v1158 = vmul.f32 %v1153, %v832
        %v1159 = vmul.f32 %v1155, 1.442695
        %v1160 = vpow.pop %v1159
        %v1161 = vmul.f32 %v1156, 1.442695
        %v1162 = vpow.pop %v1161
        %v1163 = vmul.f32 %v1157, 1.442695
        %v1164 = vpow.pop %v1163
        %v1165 = vmul.f32 %v1158, 1.442695
        %v1166 = vpow.pop %v1165
        %vm1167 = vcmp.gt.f32.partialorder %v1160, 0.1
        %vm1168 = vcmp.gt.f32.partialorder %v1162, 0.1
        %vm1169 = vcmp.gt.f32.partialorder %v1164, 0.1
        %vm1170 = vcmp.gt.f32.partialorder %v1166, 0.1
        %v1171 = vsel %vm1167, %v1160, 0.0
        %v1172 = vsel %vm1168, %v1162, 0.0
        %v1173 = vsel %vm1169, %v1164, 0.0
        %v1174 = vsel %vm1170, %v1166, 0.0
        %vm1175 = vcmp.ne.f32.partialorder %v1171, %v1171
        %vm1176 = vcmp.ne.f32.partialorder %v1172, %v1172
        %vm1177 = vcmp.ne.f32.partialorder %v1173, %v1173
        %vm1178 = vcmp.ne.f32.partialorder %v1174, %v1174
        %v1179 = vsel %vm1175, 0.0, %v1171
        %v1180 = vsel %vm1176, 0.0, %v1172
        %v1181 = vsel %vm1177, 0.0, %v1173
        %v1182 = vsel %vm1178, 0.0, %v1174
        %1183 = vst.msk [vmem:[#allocation2 + $0xa0] sm:$0xff] %vm862, %v1179
        %1184 = vst.msk [vmem:[#allocation2 + $0xa8] sm:$0xff] %vm862, %v1180
        %1185 = vst.msk [vmem:[#allocation2 + $0xb0] sm:$0xff] %vm862, %v1181
        %1186 = vst.msk [vmem:[#allocation2 + $0xb8] sm:$0xff] %vm862, %v1182
        %v1187 = vld [vmem:[%s1] sm:$0xff]
        %v1188 = vld [vmem:[%s1 + $0x8] sm:$0xff]
        %v1189 = vld [vmem:[%s1 + $0x10] sm:$0xff]
        %v1190 = vld [vmem:[%s1 + $0x18] sm:$0xff]
        %v1191 = vmul.f32 %v1187, %v1187
        %v1192 = vmul.f32 %v1188, %v1188
        %v1193 = vmul.f32 %v1189, %v1189
        %v1194 = vmul.f32 %v1190, %v1190
        %v1195 = vsub.f32 0.0, %v1191
        %v1196 = vsub.f32 0.0, %v1192
        %v1197 = vsub.f32 0.0, %v1193
        %v1198 = vsub.f32 0.0, %v1194
        %1200 = vset.pattern.permute.xlu0 6
        %1201 = vperm.xlu0 %1200, %v1195
        %v1202 = vpop.permute.xlu0 %1201
        %1205 = vset.pattern.permute.xlu0 6
        %1206 = vperm.xlu0 %1205, %v1196
        %v1207 = vpop.permute.xlu0 %1206
        %1210 = vset.pattern.permute.xlu0 6
        %1211 = vperm.xlu0 %1210, %v1197
        %v1212 = vpop.permute.xlu0 %1211
        %1215 = vset.pattern.permute.xlu0 6
        %1216 = vperm.xlu0 %1215, %v1198
        %v1217 = vpop.permute.xlu0 %1216
        %v1219 = vmul.f32 %v1202, %v832
        %v1220 = vmul.f32 %v1207, %v832
        %v1221 = vmul.f32 %v1212, %v832
        %v1222 = vmul.f32 %v1217, %v832
        %v1223 = vmul.f32 %v1219, 1.442695
        %v1224 = vpow.pop %v1223
        %v1225 = vmul.f32 %v1220, 1.442695
        %v1226 = vpow.pop %v1225
        %v1227 = vmul.f32 %v1221, 1.442695
        %v1228 = vpow.pop %v1227
        %v1229 = vmul.f32 %v1222, 1.442695
        %v1230 = vpow.pop %v1229
        %vm1231 = vcmp.gt.f32.partialorder %v1224, 0.1
        %vm1232 = vcmp.gt.f32.partialorder %v1226, 0.1
        %vm1233 = vcmp.gt.f32.partialorder %v1228, 0.1
        %vm1234 = vcmp.gt.f32.partialorder %v1230, 0.1
        %v1235 = vsel %vm1231, %v1224, 0.0
        %v1236 = vsel %vm1232, %v1226, 0.0
        %v1237 = vsel %vm1233, %v1228, 0.0
        %v1238 = vsel %vm1234, %v1230, 0.0
        %vm1239 = vcmp.ne.f32.partialorder %v1235, %v1235
        %vm1240 = vcmp.ne.f32.partialorder %v1236, %v1236
        %vm1241 = vcmp.ne.f32.partialorder %v1237, %v1237
        %vm1242 = vcmp.ne.f32.partialorder %v1238, %v1238
        %v1243 = vsel %vm1239, 0.0, %v1235
        %v1244 = vsel %vm1240, 0.0, %v1236
        %v1245 = vsel %vm1241, 0.0, %v1237
        %v1246 = vsel %vm1242, 0.0, %v1238
        %1247 = vst.msk [vmem:[#allocation2 + $0xc0] sm:$0xff] %vm862, %v1243
        %1248 = vst.msk [vmem:[#allocation2 + $0xc8] sm:$0xff] %vm862, %v1244
        %1249 = vst.msk [vmem:[#allocation2 + $0xd0] sm:$0xff] %vm862, %v1245
        %1250 = vst.msk [vmem:[#allocation2 + $0xd8] sm:$0xff] %vm862, %v1246
        %v1251 = vld [vmem:[%s1] sm:$0xff]
        %v1252 = vld [vmem:[%s1 + $0x8] sm:$0xff]
        %v1253 = vld [vmem:[%s1 + $0x10] sm:$0xff]
        %v1254 = vld [vmem:[%s1 + $0x18] sm:$0xff]
        %v1255 = vmul.f32 %v1251, %v1251
        %v1256 = vmul.f32 %v1252, %v1252
        %v1257 = vmul.f32 %v1253, %v1253
        %v1258 = vmul.f32 %v1254, %v1254
        %v1259 = vsub.f32 0.0, %v1255
        %v1260 = vsub.f32 0.0, %v1256
        %v1261 = vsub.f32 0.0, %v1257
        %v1262 = vsub.f32 0.0, %v1258
        %1264 = vset.pattern.permute.xlu0 7
        %1265 = vperm.xlu0 %1264, %v1259
        %v1266 = vpop.permute.xlu0 %1265
        %1269 = vset.pattern.permute.xlu0 7
        %1270 = vperm.xlu0 %1269, %v1260
        %v1271 = vpop.permute.xlu0 %1270
        %1274 = vset.pattern.permute.xlu0 7
        %1275 = vperm.xlu0 %1274, %v1261
        %v1276 = vpop.permute.xlu0 %1275
        %1279 = vset.pattern.permute.xlu0 7
        %1280 = vperm.xlu0 %1279, %v1262
        %v1281 = vpop.permute.xlu0 %1280
        %v1283 = vmul.f32 %v1266, %v832
        %v1284 = vmul.f32 %v1271, %v832
        %v1285 = vmul.f32 %v1276, %v832
        %v1286 = vmul.f32 %v1281, %v832
        %v1287 = vmul.f32 %v1283, 1.442695
        %v1288 = vpow.pop %v1287
        %v1289 = vmul.f32 %v1284, 1.442695
        %v1290 = vpow.pop %v1289
        %v1291 = vmul.f32 %v1285, 1.442695
        %v1292 = vpow.pop %v1291
        %v1293 = vmul.f32 %v1286, 1.442695
        %v1294 = vpow.pop %v1293
        %vm1295 = vcmp.gt.f32.partialorder %v1288, 0.1
        %vm1296 = vcmp.gt.f32.partialorder %v1290, 0.1
        %vm1297 = vcmp.gt.f32.partialorder %v1292, 0.1
        %vm1298 = vcmp.gt.f32.partialorder %v1294, 0.1
        %v1299 = vsel %vm1295, %v1288, 0.0
        %v1300 = vsel %vm1296, %v1290, 0.0
        %v1301 = vsel %vm1297, %v1292, 0.0
        %v1302 = vsel %vm1298, %v1294, 0.0
        %vm1303 = vcmp.ne.f32.partialorder %v1299, %v1299
        %vm1304 = vcmp.ne.f32.partialorder %v1300, %v1300
        %vm1305 = vcmp.ne.f32.partialorder %v1301, %v1301
        %vm1306 = vcmp.ne.f32.partialorder %v1302, %v1302
        %v1307 = vsel %vm1303, 0.0, %v1299
        %v1308 = vsel %vm1304, 0.0, %v1300
        %v1309 = vsel %vm1305, 0.0, %v1301
        %v1310 = vsel %vm1306, 0.0, %v1302
        %1311 = vst.msk [vmem:[#allocation2 + $0xe0] sm:$0xff] %vm862, %v1307
        %1312 = vst.msk [vmem:[#allocation2 + $0xe8] sm:$0xff] %vm862, %v1308
        %1313 = vst.msk [vmem:[#allocation2 + $0xf0] sm:$0xff] %vm862, %v1309
        %1314 = vst.msk [vmem:[#allocation2 + $0xf8] sm:$0xff] %vm862, %v1310
      $region96: #{sparse_dist_forward.3} parent=91 // pred_fallthru
        _
      %v1315 = vld [vmem:[#allocation2] sm:$0xff]
      %v1316 = vld [vmem:[#allocation2 + $0x8] sm:$0xff]
      %v1317 = vld [vmem:[#allocation2 + $0x10] sm:$0xff]
      %v1318 = vld [vmem:[#allocation2 + $0x18] sm:$0xff]
      %v1319 = vld [vmem:[#allocation2 + $0x20] sm:$0xff]
      %v1320 = vld [vmem:[#allocation2 + $0x28] sm:$0xff]
      %v1321 = vld [vmem:[#allocation2 + $0x30] sm:$0xff]
      %v1322 = vld [vmem:[#allocation2 + $0x38] sm:$0xff]
      %v1323 = vld [vmem:[#allocation2 + $0x40] sm:$0xff]
      %v1324 = vld [vmem:[#allocation2 + $0x48] sm:$0xff]
      %v1325 = vld [vmem:[#allocation2 + $0x50] sm:$0xff]
      %v1326 = vld [vmem:[#allocation2 + $0x58] sm:$0xff]
      %v1327 = vld [vmem:[#allocation2 + $0x60] sm:$0xff]
      %v1328 = vld [vmem:[#allocation2 + $0x68] sm:$0xff]
      %v1329 = vld [vmem:[#allocation2 + $0x70] sm:$0xff]
      %v1330 = vld [vmem:[#allocation2 + $0x78] sm:$0xff]
      %v1331 = vld [vmem:[#allocation2 + $0x80] sm:$0xff]
      %v1332 = vld [vmem:[#allocation2 + $0x88] sm:$0xff]
      %v1333 = vld [vmem:[#allocation2 + $0x90] sm:$0xff]
      %v1334 = vld [vmem:[#allocation2 + $0x98] sm:$0xff]
      %v1335 = vld [vmem:[#allocation2 + $0xa0] sm:$0xff]
      %v1336 = vld [vmem:[#allocation2 + $0xa8] sm:$0xff]
      %v1337 = vld [vmem:[#allocation2 + $0xb0] sm:$0xff]
      %v1338 = vld [vmem:[#allocation2 + $0xb8] sm:$0xff]
      %v1339 = vld [vmem:[#allocation2 + $0xc0] sm:$0xff]
      %v1340 = vld [vmem:[#allocation2 + $0xc8] sm:$0xff]
      %v1341 = vld [vmem:[#allocation2 + $0xd0] sm:$0xff]
      %v1342 = vld [vmem:[#allocation2 + $0xd8] sm:$0xff]
      %v1343 = vld [vmem:[#allocation2 + $0xe0] sm:$0xff]
      %v1344 = vld [vmem:[#allocation2 + $0xe8] sm:$0xff]
      %v1345 = vld [vmem:[#allocation2 + $0xf0] sm:$0xff]
      %v1346 = vld [vmem:[#allocation2 + $0xf8] sm:$0xff]
      %v1347 = vld [vmem:[%s733] sm:$0x1]
      %v1348 = vld [vmem:[%s737] sm:$0x1]
      %vm1349 = vcmask 261120
      %v1350 = vsel %vm1349, %v1315, 0.0
      %1351 = vadd.xlane.f32.xlu0 %v1350
      %v1352 = vpop.xlane.xlu0 %1351
      %v1353 = vsel %vm1349, %v1316, 0.0
      %1354 = vadd.xlane.f32.xlu0 %v1353
      %v1355 = vpop.xlane.xlu0 %1354
      %v1356 = vsel %vm1349, %v1317, 0.0
      %1357 = vadd.xlane.f32.xlu0 %v1356
      %v1358 = vpop.xlane.xlu0 %1357
      %v1359 = vsel %vm1349, %v1318, 0.0
      %1360 = vadd.xlane.f32.xlu0 %v1359
      %v1361 = vpop.xlane.xlu0 %1360
      %v1362 = vsel %vm1349, %v1319, 0.0
      %1363 = vadd.xlane.f32.xlu0 %v1362
      %v1364 = vpop.xlane.xlu0 %1363
      %v1365 = vsel %vm1349, %v1320, 0.0
      %1366 = vadd.xlane.f32.xlu0 %v1365
      %v1367 = vpop.xlane.xlu0 %1366
      %v1368 = vsel %vm1349, %v1321, 0.0
      %1369 = vadd.xlane.f32.xlu0 %v1368
      %v1370 = vpop.xlane.xlu0 %1369
      %v1371 = vsel %vm1349, %v1322, 0.0
      %1372 = vadd.xlane.f32.xlu0 %v1371
      %v1373 = vpop.xlane.xlu0 %1372
      %v1374 = vsel %vm1349, %v1323, 0.0
      %1375 = vadd.xlane.f32.xlu0 %v1374
      %v1376 = vpop.xlane.xlu0 %1375
      %v1377 = vsel %vm1349, %v1324, 0.0
      %1378 = vadd.xlane.f32.xlu0 %v1377
      %v1379 = vpop.xlane.xlu0 %1378
      %v1380 = vsel %vm1349, %v1325, 0.0
      %1381 = vadd.xlane.f32.xlu0 %v1380
      %v1382 = vpop.xlane.xlu0 %1381
      %v1383 = vsel %vm1349, %v1326, 0.0
      %1384 = vadd.xlane.f32.xlu0 %v1383
      %v1385 = vpop.xlane.xlu0 %1384
      %v1386 = vsel %vm1349, %v1327, 0.0
      %1387 = vadd.xlane.f32.xlu0 %v1386
      %v1388 = vpop.xlane.xlu0 %1387
      %v1389 = vsel %vm1349, %v1328, 0.0
      %1390 = vadd.xlane.f32.xlu0 %v1389
      %v1391 = vpop.xlane.xlu0 %1390
      %v1392 = vsel %vm1349, %v1329, 0.0
      %1393 = vadd.xlane.f32.xlu0 %v1392
      %v1394 = vpop.xlane.xlu0 %1393
      %v1395 = vsel %vm1349, %v1330, 0.0
      %1396 = vadd.xlane.f32.xlu0 %v1395
      %v1397 = vpop.xlane.xlu0 %1396
      %v1398 = vsel %vm1349, %v1331, 0.0
      %1399 = vadd.xlane.f32.xlu0 %v1398
      %v1400 = vpop.xlane.xlu0 %1399
      %v1401 = vsel %vm1349, %v1332, 0.0
      %1402 = vadd.xlane.f32.xlu0 %v1401
      %v1403 = vpop.xlane.xlu0 %1402
      %v1404 = vsel %vm1349, %v1333, 0.0
      %1405 = vadd.xlane.f32.xlu0 %v1404
      %v1406 = vpop.xlane.xlu0 %1405
      %v1407 = vsel %vm1349, %v1334, 0.0
      %1408 = vadd.xlane.f32.xlu0 %v1407
      %v1409 = vpop.xlane.xlu0 %1408
      %v1410 = vsel %vm1349, %v1335, 0.0
      %1411 = vadd.xlane.f32.xlu0 %v1410
      %v1412 = vpop.xlane.xlu0 %1411
      %v1413 = vsel %vm1349, %v1336, 0.0
      %1414 = vadd.xlane.f32.xlu0 %v1413
      %v1415 = vpop.xlane.xlu0 %1414
      %v1416 = vsel %vm1349, %v1337, 0.0
      %1417 = vadd.xlane.f32.xlu0 %v1416
      %v1418 = vpop.xlane.xlu0 %1417
      %v1419 = vsel %vm1349, %v1338, 0.0
      %1420 = vadd.xlane.f32.xlu0 %v1419
      %v1421 = vpop.xlane.xlu0 %1420
      %v1422 = vsel %vm1349, %v1339, 0.0
      %1423 = vadd.xlane.f32.xlu0 %v1422
      %v1424 = vpop.xlane.xlu0 %1423
      %v1425 = vsel %vm1349, %v1340, 0.0
      %1426 = vadd.xlane.f32.xlu0 %v1425
      %v1427 = vpop.xlane.xlu0 %1426
      %v1428 = vsel %vm1349, %v1341, 0.0
      %1429 = vadd.xlane.f32.xlu0 %v1428
      %v1430 = vpop.xlane.xlu0 %1429
      %v1431 = vsel %vm1349, %v1342, 0.0
      %1432 = vadd.xlane.f32.xlu0 %v1431
      %v1433 = vpop.xlane.xlu0 %1432
      %v1434 = vsel %vm1349, %v1343, 0.0
      %1435 = vadd.xlane.f32.xlu0 %v1434
      %v1436 = vpop.xlane.xlu0 %1435
      %v1437 = vsel %vm1349, %v1344, 0.0
      %1438 = vadd.xlane.f32.xlu0 %v1437
      %v1439 = vpop.xlane.xlu0 %1438
      %v1440 = vsel %vm1349, %v1345, 0.0
      %1441 = vadd.xlane.f32.xlu0 %v1440
      %v1442 = vpop.xlane.xlu0 %1441
      %v1443 = vsel %vm1349, %v1346, 0.0
      %1444 = vadd.xlane.f32.xlu0 %v1443
      %v1445 = vpop.xlane.xlu0 %1444
      %v1446 = vrcp.pop 32.0
      %v1447 = vmul.f32 %v1352, %v1446
      %v1448 = vmul.f32 %v1355, %v1446
      %v1449 = vmul.f32 %v1358, %v1446
      %v1450 = vmul.f32 %v1361, %v1446
      %v1451 = vmul.f32 %v1364, %v1446
      %v1452 = vmul.f32 %v1367, %v1446
      %v1453 = vmul.f32 %v1370, %v1446
      %v1454 = vmul.f32 %v1373, %v1446
      %v1455 = vmul.f32 %v1376, %v1446
      %v1456 = vmul.f32 %v1379, %v1446
      %v1457 = vmul.f32 %v1382, %v1446
      %v1458 = vmul.f32 %v1385, %v1446
      %v1459 = vmul.f32 %v1388, %v1446
      %v1460 = vmul.f32 %v1391, %v1446
      %v1461 = vmul.f32 %v1394, %v1446
      %v1462 = vmul.f32 %v1397, %v1446
      %v1463 = vmul.f32 %v1400, %v1446
      %v1464 = vmul.f32 %v1403, %v1446
      %v1465 = vmul.f32 %v1406, %v1446
      %v1466 = vmul.f32 %v1409, %v1446
      %v1467 = vmul.f32 %v1412, %v1446
      %v1468 = vmul.f32 %v1415, %v1446
      %v1469 = vmul.f32 %v1418, %v1446
      %v1470 = vmul.f32 %v1421, %v1446
      %v1471 = vmul.f32 %v1424, %v1446
      %v1472 = vmul.f32 %v1427, %v1446
      %v1473 = vmul.f32 %v1430, %v1446
      %v1474 = vmul.f32 %v1433, %v1446
      %v1475 = vmul.f32 %v1436, %v1446
      %v1476 = vmul.f32 %v1439, %v1446
      %v1477 = vmul.f32 %v1442, %v1446
      %v1478 = vmul.f32 %v1445, %v1446
      %v1479 = vsub.f32 %v1315, %v1447
      %v1480 = vsub.f32 %v1316, %v1448
      %v1481 = vsub.f32 %v1317, %v1449
      %v1482 = vsub.f32 %v1318, %v1450
      %v1483 = vsub.f32 %v1319, %v1451
      %v1484 = vsub.f32 %v1320, %v1452
      %v1485 = vsub.f32 %v1321, %v1453
      %v1486 = vsub.f32 %v1322, %v1454
      %v1487 = vsub.f32 %v1323, %v1455
      %v1488 = vsub.f32 %v1324, %v1456
      %v1489 = vsub.f32 %v1325, %v1457
      %v1490 = vsub.f32 %v1326, %v1458
      %v1491 = vsub.f32 %v1327, %v1459
      %v1492 = vsub.f32 %v1328, %v1460
      %v1493 = vsub.f32 %v1329, %v1461
      %v1494 = vsub.f32 %v1330, %v1462
      %v1495 = vsub.f32 %v1331, %v1463
      %v1496 = vsub.f32 %v1332, %v1464
      %v1497 = vsub.f32 %v1333, %v1465
      %v1498 = vsub.f32 %v1334, %v1466
      %v1499 = vsub.f32 %v1335, %v1467
      %v1500 = vsub.f32 %v1336, %v1468
      %v1501 = vsub.f32 %v1337, %v1469
      %v1502 = vsub.f32 %v1338, %v1470
      %v1503 = vsub.f32 %v1339, %v1471
      %v1504 = vsub.f32 %v1340, %v1472
      %v1505 = vsub.f32 %v1341, %v1473
      %v1506 = vsub.f32 %v1342, %v1474
      %v1507 = vsub.f32 %v1343, %v1475
      %v1508 = vsub.f32 %v1344, %v1476
      %v1509 = vsub.f32 %v1345, %v1477
      %v1510 = vsub.f32 %v1346, %v1478
      %v1511 = vmul.f32 %v1479, %v1479
      %v1512 = vmul.f32 %v1480, %v1480
      %v1513 = vmul.f32 %v1481, %v1481
      %v1514 = vmul.f32 %v1482, %v1482
      %v1515 = vmul.f32 %v1483, %v1483
      %v1516 = vmul.f32 %v1484, %v1484
      %v1517 = vmul.f32 %v1485, %v1485
      %v1518 = vmul.f32 %v1486, %v1486
      %v1519 = vmul.f32 %v1487, %v1487
      %v1520 = vmul.f32 %v1488, %v1488
      %v1521 = vmul.f32 %v1489, %v1489
      %v1522 = vmul.f32 %v1490, %v1490
      %v1523 = vmul.f32 %v1491, %v1491
      %v1524 = vmul.f32 %v1492, %v1492
      %v1525 = vmul.f32 %v1493, %v1493
      %v1526 = vmul.f32 %v1494, %v1494
      %v1527 = vmul.f32 %v1495, %v1495
      %v1528 = vmul.f32 %v1496, %v1496
      %v1529 = vmul.f32 %v1497, %v1497
      %v1530 = vmul.f32 %v1498, %v1498
      %v1531 = vmul.f32 %v1499, %v1499
      %v1532 = vmul.f32 %v1500, %v1500
      %v1533 = vmul.f32 %v1501, %v1501
      %v1534 = vmul.f32 %v1502, %v1502
      %v1535 = vmul.f32 %v1503, %v1503
      %v1536 = vmul.f32 %v1504, %v1504
      %v1537 = vmul.f32 %v1505, %v1505
      %v1538 = vmul.f32 %v1506, %v1506
      %v1539 = vmul.f32 %v1507, %v1507
      %v1540 = vmul.f32 %v1508, %v1508
      %v1541 = vmul.f32 %v1509, %v1509
      %v1542 = vmul.f32 %v1510, %v1510
      %v1543 = vsel %vm1349, %v1511, 0.0
      %1544 = vadd.xlane.f32.xlu0 %v1543
      %v1545 = vpop.xlane.xlu0 %1544
      %v1546 = vsel %vm1349, %v1512, 0.0
      %1547 = vadd.xlane.f32.xlu0 %v1546
      %v1548 = vpop.xlane.xlu0 %1547
      %v1549 = vsel %vm1349, %v1513, 0.0
      %1550 = vadd.xlane.f32.xlu0 %v1549
      %v1551 = vpop.xlane.xlu0 %1550
      %v1552 = vsel %vm1349, %v1514, 0.0
      %1553 = vadd.xlane.f32.xlu0 %v1552
      %v1554 = vpop.xlane.xlu0 %1553
      %v1555 = vsel %vm1349, %v1515, 0.0
      %1556 = vadd.xlane.f32.xlu0 %v1555
      %v1557 = vpop.xlane.xlu0 %1556
      %v1558 = vsel %vm1349, %v1516, 0.0
      %1559 = vadd.xlane.f32.xlu0 %v1558
      %v1560 = vpop.xlane.xlu0 %1559
      %v1561 = vsel %vm1349, %v1517, 0.0
      %1562 = vadd.xlane.f32.xlu0 %v1561
      %v1563 = vpop.xlane.xlu0 %1562
      %v1564 = vsel %vm1349, %v1518, 0.0
      %1565 = vadd.xlane.f32.xlu0 %v1564
      %v1566 = vpop.xlane.xlu0 %1565
      %v1567 = vsel %vm1349, %v1519, 0.0
      %1568 = vadd.xlane.f32.xlu0 %v1567
      %v1569 = vpop.xlane.xlu0 %1568
      %v1570 = vsel %vm1349, %v1520, 0.0
      %1571 = vadd.xlane.f32.xlu0 %v1570
      %v1572 = vpop.xlane.xlu0 %1571
      %v1573 = vsel %vm1349, %v1521, 0.0
      %1574 = vadd.xlane.f32.xlu0 %v1573
      %v1575 = vpop.xlane.xlu0 %1574
      %v1576 = vsel %vm1349, %v1522, 0.0
      %1577 = vadd.xlane.f32.xlu0 %v1576
      %v1578 = vpop.xlane.xlu0 %1577
      %v1579 = vsel %vm1349, %v1523, 0.0
      %1580 = vadd.xlane.f32.xlu0 %v1579
      %v1581 = vpop.xlane.xlu0 %1580
      %v1582 = vsel %vm1349, %v1524, 0.0
      %1583 = vadd.xlane.f32.xlu0 %v1582
      %v1584 = vpop.xlane.xlu0 %1583
      %v1585 = vsel %vm1349, %v1525, 0.0
      %1586 = vadd.xlane.f32.xlu0 %v1585
      %v1587 = vpop.xlane.xlu0 %1586
      %v1588 = vsel %vm1349, %v1526, 0.0
      %1589 = vadd.xlane.f32.xlu0 %v1588
      %v1590 = vpop.xlane.xlu0 %1589
      %v1591 = vsel %vm1349, %v1527, 0.0
      %1592 = vadd.xlane.f32.xlu0 %v1591
      %v1593 = vpop.xlane.xlu0 %1592
      %v1594 = vsel %vm1349, %v1528, 0.0
      %1595 = vadd.xlane.f32.xlu0 %v1594
      %v1596 = vpop.xlane.xlu0 %1595
      %v1597 = vsel %vm1349, %v1529, 0.0
      %1598 = vadd.xlane.f32.xlu0 %v1597
      %v1599 = vpop.xlane.xlu0 %1598
      %v1600 = vsel %vm1349, %v1530, 0.0
      %1601 = vadd.xlane.f32.xlu0 %v1600
      %v1602 = vpop.xlane.xlu0 %1601
      %v1603 = vsel %vm1349, %v1531, 0.0
      %1604 = vadd.xlane.f32.xlu0 %v1603
      %v1605 = vpop.xlane.xlu0 %1604
      %v1606 = vsel %vm1349, %v1532, 0.0
      %1607 = vadd.xlane.f32.xlu0 %v1606
      %v1608 = vpop.xlane.xlu0 %1607
      %v1609 = vsel %vm1349, %v1533, 0.0
      %1610 = vadd.xlane.f32.xlu0 %v1609
      %v1611 = vpop.xlane.xlu0 %1610
      %v1612 = vsel %vm1349, %v1534, 0.0
      %1613 = vadd.xlane.f32.xlu0 %v1612
      %v1614 = vpop.xlane.xlu0 %1613
      %v1615 = vsel %vm1349, %v1535, 0.0
      %1616 = vadd.xlane.f32.xlu0 %v1615
      %v1617 = vpop.xlane.xlu0 %1616
      %v1618 = vsel %vm1349, %v1536, 0.0
      %1619 = vadd.xlane.f32.xlu0 %v1618
      %v1620 = vpop.xlane.xlu0 %1619
      %v1621 = vsel %vm1349, %v1537, 0.0
      %1622 = vadd.xlane.f32.xlu0 %v1621
      %v1623 = vpop.xlane.xlu0 %1622
      %v1624 = vsel %vm1349, %v1538, 0.0
      %1625 = vadd.xlane.f32.xlu0 %v1624
      %v1626 = vpop.xlane.xlu0 %1625
      %v1627 = vsel %vm1349, %v1539, 0.0
      %1628 = vadd.xlane.f32.xlu0 %v1627
      %v1629 = vpop.xlane.xlu0 %1628
      %v1630 = vsel %vm1349, %v1540, 0.0
      %1631 = vadd.xlane.f32.xlu0 %v1630
      %v1632 = vpop.xlane.xlu0 %1631
      %v1633 = vsel %vm1349, %v1541, 0.0
      %1634 = vadd.xlane.f32.xlu0 %v1633
      %v1635 = vpop.xlane.xlu0 %1634
      %v1636 = vsel %vm1349, %v1542, 0.0
      %1637 = vadd.xlane.f32.xlu0 %v1636
      %v1638 = vpop.xlane.xlu0 %1637
      %v1639 = vmul.f32 %v1545, %v1446
      %v1640 = vmul.f32 %v1548, %v1446
      %v1641 = vmul.f32 %v1551, %v1446
      %v1642 = vmul.f32 %v1554, %v1446
      %v1643 = vmul.f32 %v1557, %v1446
      %v1644 = vmul.f32 %v1560, %v1446
      %v1645 = vmul.f32 %v1563, %v1446
      %v1646 = vmul.f32 %v1566, %v1446
      %v1647 = vmul.f32 %v1569, %v1446
      %v1648 = vmul.f32 %v1572, %v1446
      %v1649 = vmul.f32 %v1575, %v1446
      %v1650 = vmul.f32 %v1578, %v1446
      %v1651 = vmul.f32 %v1581, %v1446
      %v1652 = vmul.f32 %v1584, %v1446
      %v1653 = vmul.f32 %v1587, %v1446
      %v1654 = vmul.f32 %v1590, %v1446
      %v1655 = vmul.f32 %v1593, %v1446
      %v1656 = vmul.f32 %v1596, %v1446
      %v1657 = vmul.f32 %v1599, %v1446
      %v1658 = vmul.f32 %v1602, %v1446
      %v1659 = vmul.f32 %v1605, %v1446
      %v1660 = vmul.f32 %v1608, %v1446
      %v1661 = vmul.f32 %v1611, %v1446
      %v1662 = vmul.f32 %v1614, %v1446
      %v1663 = vmul.f32 %v1617, %v1446
      %v1664 = vmul.f32 %v1620, %v1446
      %v1665 = vmul.f32 %v1623, %v1446
      %v1666 = vmul.f32 %v1626, %v1446
      %v1667 = vmul.f32 %v1629, %v1446
      %v1668 = vmul.f32 %v1632, %v1446
      %v1669 = vmul.f32 %v1635, %v1446
      %v1670 = vmul.f32 %v1638, %v1446
      %v1671 = vadd.f32 %v1639, 1e-05
      %v1672 = vadd.f32 %v1640, 1e-05
      %v1673 = vadd.f32 %v1641, 1e-05
      %v1674 = vadd.f32 %v1642, 1e-05
      %v1675 = vadd.f32 %v1643, 1e-05
      %v1676 = vadd.f32 %v1644, 1e-05
      %v1677 = vadd.f32 %v1645, 1e-05
      %v1678 = vadd.f32 %v1646, 1e-05
      %v1679 = vadd.f32 %v1647, 1e-05
      %v1680 = vadd.f32 %v1648, 1e-05
      %v1681 = vadd.f32 %v1649, 1e-05
      %v1682 = vadd.f32 %v1650, 1e-05
      %v1683 = vadd.f32 %v1651, 1e-05
      %v1684 = vadd.f32 %v1652, 1e-05
      %v1685 = vadd.f32 %v1653, 1e-05
      %v1686 = vadd.f32 %v1654, 1e-05
      %v1687 = vadd.f32 %v1655, 1e-05
      %v1688 = vadd.f32 %v1656, 1e-05
      %v1689 = vadd.f32 %v1657, 1e-05
      %v1690 = vadd.f32 %v1658, 1e-05
      %v1691 = vadd.f32 %v1659, 1e-05
      %v1692 = vadd.f32 %v1660, 1e-05
      %v1693 = vadd.f32 %v1661, 1e-05
      %v1694 = vadd.f32 %v1662, 1e-05
      %v1695 = vadd.f32 %v1663, 1e-05
      %v1696 = vadd.f32 %v1664, 1e-05
      %v1697 = vadd.f32 %v1665, 1e-05
      %v1698 = vadd.f32 %v1666, 1e-05
      %v1699 = vadd.f32 %v1667, 1e-05
      %v1700 = vadd.f32 %v1668, 1e-05
      %v1701 = vadd.f32 %v1669, 1e-05
      %v1702 = vadd.f32 %v1670, 1e-05
      %v1703 = vrsqrt.pop %v1671
      %v1704 = vrsqrt.pop %v1672
      %v1705 = vrsqrt.pop %v1673
      %v1706 = vrsqrt.pop %v1674
      %v1707 = vrsqrt.pop %v1675
      %v1708 = vrsqrt.pop %v1676
      %v1709 = vrsqrt.pop %v1677
      %v1710 = vrsqrt.pop %v1678
      %v1711 = vrsqrt.pop %v1679
      %v1712 = vrsqrt.pop %v1680
      %v1713 = vrsqrt.pop %v1681
      %v1714 = vrsqrt.pop %v1682
      %v1715 = vrsqrt.pop %v1683
      %v1716 = vrsqrt.pop %v1684
      %v1717 = vrsqrt.pop %v1685
      %v1718 = vrsqrt.pop %v1686
      %v1719 = vrsqrt.pop %v1687
      %v1720 = vrsqrt.pop %v1688
      %v1721 = vrsqrt.pop %v1689
      %v1722 = vrsqrt.pop %v1690
      %v1723 = vrsqrt.pop %v1691
      %v1724 = vrsqrt.pop %v1692
      %v1725 = vrsqrt.pop %v1693
      %v1726 = vrsqrt.pop %v1694
      %v1727 = vrsqrt.pop %v1695
      %v1728 = vrsqrt.pop %v1696
      %v1729 = vrsqrt.pop %v1697
      %v1730 = vrsqrt.pop %v1698
      %v1731 = vrsqrt.pop %v1699
      %v1732 = vrsqrt.pop %v1700
      %v1733 = vrsqrt.pop %v1701
      %v1734 = vrsqrt.pop %v1702
      %v1735 = vmul.f32 %v1479, %v1703
      %v1736 = vmul.f32 %v1480, %v1704
      %v1737 = vmul.f32 %v1481, %v1705
      %v1738 = vmul.f32 %v1482, %v1706
      %v1739 = vmul.f32 %v1483, %v1707
      %v1740 = vmul.f32 %v1484, %v1708
      %v1741 = vmul.f32 %v1485, %v1709
      %v1742 = vmul.f32 %v1486, %v1710
      %v1743 = vmul.f32 %v1487, %v1711
      %v1744 = vmul.f32 %v1488, %v1712
      %v1745 = vmul.f32 %v1489, %v1713
      %v1746 = vmul.f32 %v1490, %v1714
      %v1747 = vmul.f32 %v1491, %v1715
      %v1748 = vmul.f32 %v1492, %v1716
      %v1749 = vmul.f32 %v1493, %v1717
      %v1750 = vmul.f32 %v1494, %v1718
      %v1751 = vmul.f32 %v1495, %v1719
      %v1752 = vmul.f32 %v1496, %v1720
      %v1753 = vmul.f32 %v1497, %v1721
      %v1754 = vmul.f32 %v1498, %v1722
      %v1755 = vmul.f32 %v1499, %v1723
      %v1756 = vmul.f32 %v1500, %v1724
      %v1757 = vmul.f32 %v1501, %v1725
      %v1758 = vmul.f32 %v1502, %v1726
      %v1759 = vmul.f32 %v1503, %v1727
      %v1760 = vmul.f32 %v1504, %v1728
      %v1761 = vmul.f32 %v1505, %v1729
      %v1762 = vmul.f32 %v1506, %v1730
      %v1763 = vmul.f32 %v1507, %v1731
      %v1764 = vmul.f32 %v1508, %v1732
      %v1765 = vmul.f32 %v1509, %v1733
      %v1766 = vmul.f32 %v1510, %v1734
      %v1768 = vlaneseq
      %v1769 = vshrl.u32 %v1768, 7
      %v1770 = vsub.s32 0, %v1769
      %v1771 = vrot.slane %v1347, %v1770
      %v1773 = vmul.f32 %v1735, %v1771
      %v1774 = vmul.f32 %v1736, %v1771
      %v1775 = vmul.f32 %v1737, %v1771
      %v1776 = vmul.f32 %v1738, %v1771
      %v1777 = vmul.f32 %v1739, %v1771
      %v1778 = vmul.f32 %v1740, %v1771
      %v1779 = vmul.f32 %v1741, %v1771
      %v1780 = vmul.f32 %v1742, %v1771
      %v1781 = vmul.f32 %v1743, %v1771
      %v1782 = vmul.f32 %v1744, %v1771
      %v1783 = vmul.f32 %v1745, %v1771
      %v1784 = vmul.f32 %v1746, %v1771
      %v1785 = vmul.f32 %v1747, %v1771
      %v1786 = vmul.f32 %v1748, %v1771
      %v1787 = vmul.f32 %v1749, %v1771
      %v1788 = vmul.f32 %v1750, %v1771
      %v1789 = vmul.f32 %v1751, %v1771
      %v1790 = vmul.f32 %v1752, %v1771
      %v1791 = vmul.f32 %v1753, %v1771
      %v1792 = vmul.f32 %v1754, %v1771
      %v1793 = vmul.f32 %v1755, %v1771
      %v1794 = vmul.f32 %v1756, %v1771
      %v1795 = vmul.f32 %v1757, %v1771
      %v1796 = vmul.f32 %v1758, %v1771
      %v1797 = vmul.f32 %v1759, %v1771
      %v1798 = vmul.f32 %v1760, %v1771
      %v1799 = vmul.f32 %v1761, %v1771
      %v1800 = vmul.f32 %v1762, %v1771
      %v1801 = vmul.f32 %v1763, %v1771
      %v1802 = vmul.f32 %v1764, %v1771
      %v1803 = vmul.f32 %v1765, %v1771
      %v1804 = vmul.f32 %v1766, %v1771
      %v1806 = vlaneseq
      %v1807 = vshrl.u32 %v1806, 7
      %v1808 = vsub.s32 0, %v1807
      %v1809 = vrot.slane %v1348, %v1808
      %v1811 = vadd.f32 %v1773, %v1809
      %v1812 = vadd.f32 %v1774, %v1809
      %v1813 = vadd.f32 %v1775, %v1809
      %v1814 = vadd.f32 %v1776, %v1809
      %v1815 = vadd.f32 %v1777, %v1809
      %v1816 = vadd.f32 %v1778, %v1809
      %v1817 = vadd.f32 %v1779, %v1809
      %v1818 = vadd.f32 %v1780, %v1809
      %v1819 = vadd.f32 %v1781, %v1809
      %v1820 = vadd.f32 %v1782, %v1809
      %v1821 = vadd.f32 %v1783, %v1809
      %v1822 = vadd.f32 %v1784, %v1809
      %v1823 = vadd.f32 %v1785, %v1809
      %v1824 = vadd.f32 %v1786, %v1809
      %v1825 = vadd.f32 %v1787, %v1809
      %v1826 = vadd.f32 %v1788, %v1809
      %v1827 = vadd.f32 %v1789, %v1809
      %v1828 = vadd.f32 %v1790, %v1809
      %v1829 = vadd.f32 %v1791, %v1809
      %v1830 = vadd.f32 %v1792, %v1809
      %v1831 = vadd.f32 %v1793, %v1809
      %v1832 = vadd.f32 %v1794, %v1809
      %v1833 = vadd.f32 %v1795, %v1809
      %v1834 = vadd.f32 %v1796, %v1809
      %v1835 = vadd.f32 %v1797, %v1809
      %v1836 = vadd.f32 %v1798, %v1809
      %v1837 = vadd.f32 %v1799, %v1809
      %v1838 = vadd.f32 %v1800, %v1809
      %v1839 = vadd.f32 %v1801, %v1809
      %v1840 = vadd.f32 %v1802, %v1809
      %v1841 = vadd.f32 %v1803, %v1809
      %v1842 = vadd.f32 %v1804, %v1809
      %v1843 = vld [vmem:[%s742] sm:$0xff]
      %v1844 = vld [vmem:[%s742 + $0x8] sm:$0xff]
      %v1845 = vld [vmem:[%s742 + $0x10] sm:$0xff]
      %v1846 = vld [vmem:[%s742 + $0x18] sm:$0xff]
      %v1847 = vpack.c.bf16 %v1812, %v1811
      %v1848 = vpack.c.bf16 %v1814, %v1813
      %v1849 = vpack.c.bf16 %v1816, %v1815
      %v1850 = vpack.c.bf16 %v1818, %v1817
      %v1851 = vpack.c.bf16 %v1820, %v1819
      %v1852 = vpack.c.bf16 %v1822, %v1821
      %v1853 = vpack.c.bf16 %v1824, %v1823
      %v1854 = vpack.c.bf16 %v1826, %v1825
      %v1855 = vpack.c.bf16 %v1828, %v1827
      %v1856 = vpack.c.bf16 %v1830, %v1829
      %v1857 = vpack.c.bf16 %v1832, %v1831
      %v1858 = vpack.c.bf16 %v1834, %v1833
      %v1859 = vpack.c.bf16 %v1836, %v1835
      %v1860 = vpack.c.bf16 %v1838, %v1837
      %v1861 = vpack.c.bf16 %v1840, %v1839
      %v1862 = vpack.c.bf16 %v1842, %v1841
      %v1863 = vld [vmem:[%s746] sm:$0x3]
      %v1865 = vlaneseq
      %v1866 = vshrl.u32 %v1865, 7
      %v1867 = vsub.s32 0, %v1866
      %v1868 = vrot.slane %v1863, %v1867
      %v1869 = vlaneseq
      %v1870 = vshrl.u32 %v1869, 7
      %v1871 = vsub.s32 1, %v1870
      %v1872 = vrot.slane %v1863, %v1871
      %v1879 = vunpack.c.l.b16 %v1843
      %v1880 = vunpack.c.h.b16 %v1843
      %v1881 = vunpack.c.l.b16 %v1844
      %v1882 = vunpack.c.h.b16 %v1844
      %v1883 = vunpack.c.l.b16 %v1845
      %v1884 = vunpack.c.h.b16 %v1845
      %v1885 = vunpack.c.l.b16 %v1846
      %v1886 = vunpack.c.h.b16 %v1846
      %v1887 = vpack.c.b16 %v1881, %v1879
      %v1888 = vpack.c.b16 %v1882, %v1880
      %v1889 = vpack.c.b16 %v1885, %v1883
      %v1890 = vpack.c.b16 %v1886, %v1884
      %v1896 = vsel %vm1349, %v1847, 0
      %v1899 = vsel %vm1349, %v1848, 0
      %v1902 = vsel %vm1349, %v1849, 0
      %v1905 = vsel %vm1349, %v1850, 0
      %v1908 = vsel %vm1349, %v1851, 0
      %v1911 = vsel %vm1349, %v1852, 0
      %v1914 = vsel %vm1349, %v1853, 0
      %v1917 = vsel %vm1349, %v1854, 0
      %v1920 = vsel %vm1349, %v1855, 0
      %v1923 = vsel %vm1349, %v1856, 0
      %v1926 = vsel %vm1349, %v1857, 0
      %v1929 = vsel %vm1349, %v1858, 0
      %v1932 = vsel %vm1349, %v1859, 0
      %v1935 = vsel %vm1349, %v1860, 0
      %v1938 = vsel %vm1349, %v1861, 0
      %v1941 = vsel %vm1349, %v1862, 0
      %1943 = vmatprep.subr.bf16.mxu0 0
      %1944 = vmatpush1.bf16.msra.mxu0 0
      %1945 = vmatprep.subr.bf16.mxu0 0
      %1946 = vmatpush1.bf16.msra.mxu0 0
      %1947 = vmatprep.subr.bf16.mxu0 0
      %1948 = vmatpush1.bf16.msra.mxu0 0
      %1949 = vmatprep.subr.bf16.mxu0 0
      %1950 = vmatpush1.bf16.msra.mxu0 0
      %1951 = vmatprep.subr.bf16.mxu0 0
      %1952 = vmatpush1.bf16.msra.mxu0 0
      %1953 = vmatprep.subr.bf16.mxu0 0
      %1954 = vmatpush1.bf16.msra.mxu0 0
      %1955 = vmatprep.subr.bf16.mxu0 %v1890
      %1956 = vmatpush1.bf16.msra.mxu0 %v1889
      %1957 = vmatprep.subr.bf16.mxu0 %v1888
      %1958 = vmatpush1.bf16.msra.mxu0 %v1887
      %1959 = vmatprep.subr.bf16.mxu0 0
      %1960 = vmatpush2.bf16.msra.mxu0 0
      %1961 = vmatprep.subr.bf16.mxu0 0
      %1962 = vmatpush2.bf16.msra.mxu0 0
      %1963 = vmatprep.subr.bf16.mxu0 0
      %1964 = vmatpush2.bf16.msra.mxu0 0
      %1965 = vmatprep.subr.bf16.mxu0 0
      %1966 = vmatpush2.bf16.msra.mxu0 0
      %1967 = vmatprep.subr.bf16.mxu0 0
      %1968 = vmatpush2.bf16.msra.mxu0 0
      %1969 = vmatprep.subr.bf16.mxu0 0
      %1970 = vmatpush2.bf16.msra.mxu0 0
      %1971 = vmatprep.subr.bf16.mxu0 0
      %1972 = vmatpush2.bf16.msra.mxu0 0
      %1973 = vmatprep.subr.bf16.mxu0 0
      %1974 = vmatpush2.bf16.msra.mxu0 0
      %1975 = vmatprep.mubr.bf16.mxu0 0
      %1976 = vmatmul.mubr.bf16.gmra.mxu0 %v1896
      %v1977 = vpop.f32.mrf.mxu0
      %v1978 = vadd.f32 %v1868, %v1977
      %v1979 = vpop.f32.mrf.mxu0
      %v1980 = vadd.f32 %v1872, %v1979
      %v1981 = vpop.f32.mrf.mxu0
      %v1982 = vadd.f32 %v1868, %v1981
      %v1983 = vpop.f32.mrf.mxu0
      %v1984 = vadd.f32 %v1872, %v1983
      %1985 = vmatprep.mubr.bf16.mxu0 0
      %1986 = vmatmul.mubr.bf16.gmra.mxu0 %v1899
      %v1987 = vpop.f32.mrf.mxu0
      %v1988 = vadd.f32 %v1868, %v1987
      %v1989 = vpop.f32.mrf.mxu0
      %v1990 = vadd.f32 %v1872, %v1989
      %v1991 = vpop.f32.mrf.mxu0
      %v1992 = vadd.f32 %v1868, %v1991
      %v1993 = vpop.f32.mrf.mxu0
      %v1994 = vadd.f32 %v1872, %v1993
      %1995 = vmatprep.mubr.bf16.mxu0 0
      %1996 = vmatmul.mubr.bf16.gmra.mxu0 %v1902
      %v1997 = vpop.f32.mrf.mxu0
      %v1998 = vadd.f32 %v1868, %v1997
      %v1999 = vpop.f32.mrf.mxu0
      %v2000 = vadd.f32 %v1872, %v1999
      %v2001 = vpop.f32.mrf.mxu0
      %v2002 = vadd.f32 %v1868, %v2001
      %v2003 = vpop.f32.mrf.mxu0
      %v2004 = vadd.f32 %v1872, %v2003
      %2005 = vmatprep.mubr.bf16.mxu0 0
      %2006 = vmatmul.mubr.bf16.gmra.mxu0 %v1905
      %v2007 = vpop.f32.mrf.mxu0
      %v2008 = vadd.f32 %v1868, %v2007
      %v2009 = vpop.f32.mrf.mxu0
      %v2010 = vadd.f32 %v1872, %v2009
      %v2011 = vpop.f32.mrf.mxu0
      %v2012 = vadd.f32 %v1868, %v2011
      %v2013 = vpop.f32.mrf.mxu0
      %v2014 = vadd.f32 %v1872, %v2013
      %2015 = vmatprep.mubr.bf16.mxu0 0
      %2016 = vmatmul.mubr.bf16.gmra.mxu0 %v1908
      %v2017 = vpop.f32.mrf.mxu0
      %v2018 = vadd.f32 %v1868, %v2017
      %v2019 = vpop.f32.mrf.mxu0
      %v2020 = vadd.f32 %v1872, %v2019
      %v2021 = vpop.f32.mrf.mxu0
      %v2022 = vadd.f32 %v1868, %v2021
      %v2023 = vpop.f32.mrf.mxu0
      %v2024 = vadd.f32 %v1872, %v2023
      %2025 = vmatprep.mubr.bf16.mxu0 0
      %2026 = vmatmul.mubr.bf16.gmra.mxu0 %v1911
      %v2027 = vpop.f32.mrf.mxu0
      %v2028 = vadd.f32 %v1868, %v2027
      %v2029 = vpop.f32.mrf.mxu0
      %v2030 = vadd.f32 %v1872, %v2029
      %v2031 = vpop.f32.mrf.mxu0
      %v2032 = vadd.f32 %v1868, %v2031
      %v2033 = vpop.f32.mrf.mxu0
      %v2034 = vadd.f32 %v1872, %v2033
      %2035 = vmatprep.mubr.bf16.mxu0 0
      %2036 = vmatmul.mubr.bf16.gmra.mxu0 %v1914
      %v2037 = vpop.f32.mrf.mxu0
      %v2038 = vadd.f32 %v1868, %v2037
      %v2039 = vpop.f32.mrf.mxu0
      %v2040 = vadd.f32 %v1872, %v2039
      %v2041 = vpop.f32.mrf.mxu0
      %v2042 = vadd.f32 %v1868, %v2041
      %v2043 = vpop.f32.mrf.mxu0
      %v2044 = vadd.f32 %v1872, %v2043
      %2045 = vmatprep.mubr.bf16.mxu0 0
      %2046 = vmatmul.mubr.bf16.gmra.mxu0 %v1917
      %v2047 = vpop.f32.mrf.mxu0
      %v2048 = vadd.f32 %v1868, %v2047
      %v2049 = vpop.f32.mrf.mxu0
      %v2050 = vadd.f32 %v1872, %v2049
      %v2051 = vpop.f32.mrf.mxu0
      %v2052 = vadd.f32 %v1868, %v2051
      %v2053 = vpop.f32.mrf.mxu0
      %v2054 = vadd.f32 %v1872, %v2053
      %2055 = vmatprep.mubr.bf16.mxu0 0
      %2056 = vmatmul.mubr.bf16.gmra.mxu0 %v1920
      %v2057 = vpop.f32.mrf.mxu0
      %v2058 = vadd.f32 %v1868, %v2057
      %v2059 = vpop.f32.mrf.mxu0
      %v2060 = vadd.f32 %v1872, %v2059
      %v2061 = vpop.f32.mrf.mxu0
      %v2062 = vadd.f32 %v1868, %v2061
      %v2063 = vpop.f32.mrf.mxu0
      %v2064 = vadd.f32 %v1872, %v2063
      %2065 = vmatprep.mubr.bf16.mxu0 0
      %2066 = vmatmul.mubr.bf16.gmra.mxu0 %v1923
      %v2067 = vpop.f32.mrf.mxu0
      %v2068 = vadd.f32 %v1868, %v2067
      %v2069 = vpop.f32.mrf.mxu0
      %v2070 = vadd.f32 %v1872, %v2069
      %v2071 = vpop.f32.mrf.mxu0
      %v2072 = vadd.f32 %v1868, %v2071
      %v2073 = vpop.f32.mrf.mxu0
      %v2074 = vadd.f32 %v1872, %v2073
      %2075 = vmatprep.mubr.bf16.mxu0 0
      %2076 = vmatmul.mubr.bf16.gmra.mxu0 %v1926
      %v2077 = vpop.f32.mrf.mxu0
      %v2078 = vadd.f32 %v1868, %v2077
      %v2079 = vpop.f32.mrf.mxu0
      %v2080 = vadd.f32 %v1872, %v2079
      %v2081 = vpop.f32.mrf.mxu0
      %v2082 = vadd.f32 %v1868, %v2081
      %v2083 = vpop.f32.mrf.mxu0
      %v2084 = vadd.f32 %v1872, %v2083
      %2085 = vmatprep.mubr.bf16.mxu0 0
      %2086 = vmatmul.mubr.bf16.gmra.mxu0 %v1929
      %v2087 = vpop.f32.mrf.mxu0
      %v2088 = vadd.f32 %v1868, %v2087
      %v2089 = vpop.f32.mrf.mxu0
      %v2090 = vadd.f32 %v1872, %v2089
      %v2091 = vpop.f32.mrf.mxu0
      %v2092 = vadd.f32 %v1868, %v2091
      %v2093 = vpop.f32.mrf.mxu0
      %v2094 = vadd.f32 %v1872, %v2093
      %2095 = vmatprep.mubr.bf16.mxu0 0
      %2096 = vmatmul.mubr.bf16.gmra.mxu0 %v1932
      %v2097 = vpop.f32.mrf.mxu0
      %v2098 = vadd.f32 %v1868, %v2097
      %v2099 = vpop.f32.mrf.mxu0
      %v2100 = vadd.f32 %v1872, %v2099
      %v2101 = vpop.f32.mrf.mxu0
      %v2102 = vadd.f32 %v1868, %v2101
      %v2103 = vpop.f32.mrf.mxu0
      %v2104 = vadd.f32 %v1872, %v2103
      %2105 = vmatprep.mubr.bf16.mxu0 0
      %2106 = vmatmul.mubr.bf16.gmra.mxu0 %v1935
      %v2107 = vpop.f32.mrf.mxu0
      %v2108 = vadd.f32 %v1868, %v2107
      %v2109 = vpop.f32.mrf.mxu0
      %v2110 = vadd.f32 %v1872, %v2109
      %v2111 = vpop.f32.mrf.mxu0
      %v2112 = vadd.f32 %v1868, %v2111
      %v2113 = vpop.f32.mrf.mxu0
      %v2114 = vadd.f32 %v1872, %v2113
      %2115 = vmatprep.mubr.bf16.mxu0 0
      %2116 = vmatmul.mubr.bf16.gmra.mxu0 %v1938
      %v2117 = vpop.f32.mrf.mxu0
      %v2118 = vadd.f32 %v1868, %v2117
      %v2119 = vpop.f32.mrf.mxu0
      %v2120 = vadd.f32 %v1872, %v2119
      %v2121 = vpop.f32.mrf.mxu0
      %v2122 = vadd.f32 %v1868, %v2121
      %v2123 = vpop.f32.mrf.mxu0
      %v2124 = vadd.f32 %v1872, %v2123
      %2125 = vmatprep.mubr.bf16.mxu0 0
      %2126 = vmatmul.mubr.bf16.gmra.mxu0 %v1941
      %v2127 = vpop.f32.mrf.mxu0
      %v2128 = vadd.f32 %v1868, %v2127
      %v2129 = vpop.f32.mrf.mxu0
      %v2130 = vadd.f32 %v1872, %v2129
      %v2131 = vpop.f32.mrf.mxu0
      %v2132 = vadd.f32 %v1868, %v2131
      %v2133 = vpop.f32.mrf.mxu0
      %v2134 = vadd.f32 %v1872, %v2133
      %2135 = vdwg.mxu0
      %v2136 = vxor.u32 %v1978, 2147483648
      %v2137 = vxor.u32 %v1982, 2147483648
      %v2138 = vxor.u32 %v1988, 2147483648
      %v2139 = vxor.u32 %v1992, 2147483648
      %v2140 = vxor.u32 %v1998, 2147483648
      %v2141 = vxor.u32 %v2002, 2147483648
      %v2142 = vxor.u32 %v2008, 2147483648
      %v2143 = vxor.u32 %v2012, 2147483648
      %v2144 = vxor.u32 %v2018, 2147483648
      %v2145 = vxor.u32 %v2022, 2147483648
      %v2146 = vxor.u32 %v2028, 2147483648
      %v2147 = vxor.u32 %v2032, 2147483648
      %v2148 = vxor.u32 %v2038, 2147483648
      %v2149 = vxor.u32 %v2042, 2147483648
      %v2150 = vxor.u32 %v2048, 2147483648
      %v2151 = vxor.u32 %v2052, 2147483648
      %v2152 = vxor.u32 %v2058, 2147483648
      %v2153 = vxor.u32 %v2062, 2147483648
      %v2154 = vxor.u32 %v2068, 2147483648
      %v2155 = vxor.u32 %v2072, 2147483648
      %v2156 = vxor.u32 %v2078, 2147483648
      %v2157 = vxor.u32 %v2082, 2147483648
      %v2158 = vxor.u32 %v2088, 2147483648
      %v2159 = vxor.u32 %v2092, 2147483648
      %v2160 = vxor.u32 %v2098, 2147483648
      %v2161 = vxor.u32 %v2102, 2147483648
      %v2162 = vxor.u32 %v2108, 2147483648
      %v2163 = vxor.u32 %v2112, 2147483648
      %v2164 = vxor.u32 %v2118, 2147483648
      %v2165 = vxor.u32 %v2122, 2147483648
      %v2166 = vxor.u32 %v2128, 2147483648
      %v2167 = vxor.u32 %v2132, 2147483648
      %v2168 = vmul.f32 %v2136, 1.442695
      %v2169 = vpow.pop %v2168
      %v2170 = vmul.f32 %v2137, 1.442695
      %v2171 = vpow.pop %v2170
      %v2172 = vmul.f32 %v2138, 1.442695
      %v2173 = vpow.pop %v2172
      %v2174 = vmul.f32 %v2139, 1.442695
      %v2175 = vpow.pop %v2174
      %v2176 = vmul.f32 %v2140, 1.442695
      %v2177 = vpow.pop %v2176
      %v2178 = vmul.f32 %v2141, 1.442695
      %v2179 = vpow.pop %v2178
      %v2180 = vmul.f32 %v2142, 1.442695
      %v2181 = vpow.pop %v2180
      %v2182 = vmul.f32 %v2143, 1.442695
      %v2183 = vpow.pop %v2182
      %v2184 = vmul.f32 %v2144, 1.442695
      %v2185 = vpow.pop %v2184
      %v2186 = vmul.f32 %v2145, 1.442695
      %v2187 = vpow.pop %v2186
      %v2188 = vmul.f32 %v2146, 1.442695
      %v2189 = vpow.pop %v2188
      %v2190 = vmul.f32 %v2147, 1.442695
      %v2191 = vpow.pop %v2190
      %v2192 = vmul.f32 %v2148, 1.442695
      %v2193 = vpow.pop %v2192
      %v2194 = vmul.f32 %v2149, 1.442695
      %v2195 = vpow.pop %v2194
      %v2196 = vmul.f32 %v2150, 1.442695
      %v2197 = vpow.pop %v2196
      %v2198 = vmul.f32 %v2151, 1.442695
      %v2199 = vpow.pop %v2198
      %v2200 = vmul.f32 %v2152, 1.442695
      %v2201 = vpow.pop %v2200
      %v2202 = vmul.f32 %v2153, 1.442695
      %v2203 = vpow.pop %v2202
      %v2204 = vmul.f32 %v2154, 1.442695
      %v2205 = vpow.pop %v2204
      %v2206 = vmul.f32 %v2155, 1.442695
      %v2207 = vpow.pop %v2206
      %v2208 = vmul.f32 %v2156, 1.442695
      %v2209 = vpow.pop %v2208
      %v2210 = vmul.f32 %v2157, 1.442695
      %v2211 = vpow.pop %v2210
      %v2212 = vmul.f32 %v2158, 1.442695
      %v2213 = vpow.pop %v2212
      %v2214 = vmul.f32 %v2159, 1.442695
      %v2215 = vpow.pop %v2214
      %v2216 = vmul.f32 %v2160, 1.442695
      %v2217 = vpow.pop %v2216
      %v2218 = vmul.f32 %v2161, 1.442695
      %v2219 = vpow.pop %v2218
      %v2220 = vmul.f32 %v2162, 1.442695
      %v2221 = vpow.pop %v2220
      %v2222 = vmul.f32 %v2163, 1.442695
      %v2223 = vpow.pop %v2222
      %v2224 = vmul.f32 %v2164, 1.442695
      %v2225 = vpow.pop %v2224
      %v2226 = vmul.f32 %v2165, 1.442695
      %v2227 = vpow.pop %v2226
      %v2228 = vmul.f32 %v2166, 1.442695
      %v2229 = vpow.pop %v2228
      %v2230 = vmul.f32 %v2167, 1.442695
      %v2231 = vpow.pop %v2230
      %v2232 = vadd.f32 %v2169, 1.0
      %v2233 = vadd.f32 %v2171, 1.0
      %v2234 = vadd.f32 %v2173, 1.0
      %v2235 = vadd.f32 %v2175, 1.0
      %v2236 = vadd.f32 %v2177, 1.0
      %v2237 = vadd.f32 %v2179, 1.0
      %v2238 = vadd.f32 %v2181, 1.0
      %v2239 = vadd.f32 %v2183, 1.0
      %v2240 = vadd.f32 %v2185, 1.0
      %v2241 = vadd.f32 %v2187, 1.0
      %v2242 = vadd.f32 %v2189, 1.0
      %v2243 = vadd.f32 %v2191, 1.0
      %v2244 = vadd.f32 %v2193, 1.0
      %v2245 = vadd.f32 %v2195, 1.0
      %v2246 = vadd.f32 %v2197, 1.0
      %v2247 = vadd.f32 %v2199, 1.0
      %v2248 = vadd.f32 %v2201, 1.0
      %v2249 = vadd.f32 %v2203, 1.0
      %v2250 = vadd.f32 %v2205, 1.0
      %v2251 = vadd.f32 %v2207, 1.0
      %v2252 = vadd.f32 %v2209, 1.0
      %v2253 = vadd.f32 %v2211, 1.0
      %v2254 = vadd.f32 %v2213, 1.0
      %v2255 = vadd.f32 %v2215, 1.0
      %v2256 = vadd.f32 %v2217, 1.0
      %v2257 = vadd.f32 %v2219, 1.0
      %v2258 = vadd.f32 %v2221, 1.0
      %v2259 = vadd.f32 %v2223, 1.0
      %v2260 = vadd.f32 %v2225, 1.0
      %v2261 = vadd.f32 %v2227, 1.0
      %v2262 = vadd.f32 %v2229, 1.0
      %v2263 = vadd.f32 %v2231, 1.0
      %v2264 = vrcp.pop %v2232
      %v2265 = vmul.f32 1.0, %v2264
      %v2266 = vrcp.pop %v2233
      %v2267 = vmul.f32 1.0, %v2266
      %v2268 = vrcp.pop %v2234
      %v2269 = vmul.f32 1.0, %v2268
      %v2270 = vrcp.pop %v2235
      %v2271 = vmul.f32 1.0, %v2270
      %v2272 = vrcp.pop %v2236
      %v2273 = vmul.f32 1.0, %v2272
      %v2274 = vrcp.pop %v2237
      %v2275 = vmul.f32 1.0, %v2274
      %v2276 = vrcp.pop %v2238
      %v2277 = vmul.f32 1.0, %v2276
      %v2278 = vrcp.pop %v2239
      %v2279 = vmul.f32 1.0, %v2278
      %v2280 = vrcp.pop %v2240
      %v2281 = vmul.f32 1.0, %v2280
      %v2282 = vrcp.pop %v2241
      %v2283 = vmul.f32 1.0, %v2282
      %v2284 = vrcp.pop %v2242
      %v2285 = vmul.f32 1.0, %v2284
      %v2286 = vrcp.pop %v2243
      %v2287 = vmul.f32 1.0, %v2286
      %v2288 = vrcp.pop %v2244
      %v2289 = vmul.f32 1.0, %v2288
      %v2290 = vrcp.pop %v2245
      %v2291 = vmul.f32 1.0, %v2290
      %v2292 = vrcp.pop %v2246
      %v2293 = vmul.f32 1.0, %v2292
      %v2294 = vrcp.pop %v2247
      %v2295 = vmul.f32 1.0, %v2294
      %v2296 = vrcp.pop %v2248
      %v2297 = vmul.f32 1.0, %v2296
      %v2298 = vrcp.pop %v2249
      %v2299 = vmul.f32 1.0, %v2298
      %v2300 = vrcp.pop %v2250
      %v2301 = vmul.f32 1.0, %v2300
      %v2302 = vrcp.pop %v2251
      %v2303 = vmul.f32 1.0, %v2302
      %v2304 = vrcp.pop %v2252
      %v2305 = vmul.f32 1.0, %v2304
      %v2306 = vrcp.pop %v2253
      %v2307 = vmul.f32 1.0, %v2306
      %v2308 = vrcp.pop %v2254
      %v2309 = vmul.f32 1.0, %v2308
      %v2310 = vrcp.pop %v2255
      %v2311 = vmul.f32 1.0, %v2310
      %v2312 = vrcp.pop %v2256
      %v2313 = vmul.f32 1.0, %v2312
      %v2314 = vrcp.pop %v2257
      %v2315 = vmul.f32 1.0, %v2314
      %v2316 = vrcp.pop %v2258
      %v2317 = vmul.f32 1.0, %v2316
      %v2318 = vrcp.pop %v2259
      %v2319 = vmul.f32 1.0, %v2318
      %v2320 = vrcp.pop %v2260
      %v2321 = vmul.f32 1.0, %v2320
      %v2322 = vrcp.pop %v2261
      %v2323 = vmul.f32 1.0, %v2322
      %v2324 = vrcp.pop %v2262
      %v2325 = vmul.f32 1.0, %v2324
      %v2326 = vrcp.pop %v2263
      %v2327 = vmul.f32 1.0, %v2326
      %2360 = vrot.lane.b32.xlu0 %v1978, 32
      %v2361 = vpop.permute.xlu0 %2360
      %2362 = vrot.lane.b32.xlu0 %v1982, 32
      %v2363 = vpop.permute.xlu0 %2362
      %2364 = vrot.lane.b32.xlu0 %v1988, 32
      %v2365 = vpop.permute.xlu0 %2364
      %2366 = vrot.lane.b32.xlu0 %v1992, 32
      %v2367 = vpop.permute.xlu0 %2366
      %2368 = vrot.lane.b32.xlu0 %v1998, 32
      %v2369 = vpop.permute.xlu0 %2368
      %2370 = vrot.lane.b32.xlu0 %v2002, 32
      %v2371 = vpop.permute.xlu0 %2370
      %2372 = vrot.lane.b32.xlu0 %v2008, 32
      %v2373 = vpop.permute.xlu0 %2372
      %2374 = vrot.lane.b32.xlu0 %v2012, 32
      %v2375 = vpop.permute.xlu0 %2374
      %2376 = vrot.lane.b32.xlu0 %v2018, 32
      %v2377 = vpop.permute.xlu0 %2376
      %2378 = vrot.lane.b32.xlu0 %v2022, 32
      %v2379 = vpop.permute.xlu0 %2378
      %2380 = vrot.lane.b32.xlu0 %v2028, 32
      %v2381 = vpop.permute.xlu0 %2380
      %2382 = vrot.lane.b32.xlu0 %v2032, 32
      %v2383 = vpop.permute.xlu0 %2382
      %2384 = vrot.lane.b32.xlu0 %v2038, 32
      %v2385 = vpop.permute.xlu0 %2384
      %2386 = vrot.lane.b32.xlu0 %v2042, 32
      %v2387 = vpop.permute.xlu0 %2386
      %2388 = vrot.lane.b32.xlu0 %v2048, 32
      %v2389 = vpop.permute.xlu0 %2388
      %2390 = vrot.lane.b32.xlu0 %v2052, 32
      %v2391 = vpop.permute.xlu0 %2390
      %2392 = vrot.lane.b32.xlu0 %v2058, 32
      %v2393 = vpop.permute.xlu0 %2392
      %2394 = vrot.lane.b32.xlu0 %v2062, 32
      %v2395 = vpop.permute.xlu0 %2394
      %2396 = vrot.lane.b32.xlu0 %v2068, 32
      %v2397 = vpop.permute.xlu0 %2396
      %2398 = vrot.lane.b32.xlu0 %v2072, 32
      %v2399 = vpop.permute.xlu0 %2398
      %2400 = vrot.lane.b32.xlu0 %v2078, 32
      %v2401 = vpop.permute.xlu0 %2400
      %2402 = vrot.lane.b32.xlu0 %v2082, 32
      %v2403 = vpop.permute.xlu0 %2402
      %2404 = vrot.lane.b32.xlu0 %v2088, 32
      %v2405 = vpop.permute.xlu0 %2404
      %2406 = vrot.lane.b32.xlu0 %v2092, 32
      %v2407 = vpop.permute.xlu0 %2406
      %2408 = vrot.lane.b32.xlu0 %v2098, 32
      %v2409 = vpop.permute.xlu0 %2408
      %2410 = vrot.lane.b32.xlu0 %v2102, 32
      %v2411 = vpop.permute.xlu0 %2410
      %2412 = vrot.lane.b32.xlu0 %v2108, 32
      %v2413 = vpop.permute.xlu0 %2412
      %2414 = vrot.lane.b32.xlu0 %v2112, 32
      %v2415 = vpop.permute.xlu0 %2414
      %2416 = vrot.lane.b32.xlu0 %v2118, 32
      %v2417 = vpop.permute.xlu0 %2416
      %2418 = vrot.lane.b32.xlu0 %v2122, 32
      %v2419 = vpop.permute.xlu0 %2418
      %2420 = vrot.lane.b32.xlu0 %v2128, 32
      %v2421 = vpop.permute.xlu0 %2420
      %2422 = vrot.lane.b32.xlu0 %v2132, 32
      %v2423 = vpop.permute.xlu0 %2422
      %v2456 = vmul.f32 %v2265, %v2361
      %v2457 = vmul.f32 %v2267, %v2363
      %v2458 = vmul.f32 %v2269, %v2365
      %v2459 = vmul.f32 %v2271, %v2367
      %v2460 = vmul.f32 %v2273, %v2369
      %v2461 = vmul.f32 %v2275, %v2371
      %v2462 = vmul.f32 %v2277, %v2373
      %v2463 = vmul.f32 %v2279, %v2375
      %v2464 = vmul.f32 %v2281, %v2377
      %v2465 = vmul.f32 %v2283, %v2379
      %v2466 = vmul.f32 %v2285, %v2381
      %v2467 = vmul.f32 %v2287, %v2383
      %v2468 = vmul.f32 %v2289, %v2385
      %v2469 = vmul.f32 %v2291, %v2387
      %v2470 = vmul.f32 %v2293, %v2389
      %v2471 = vmul.f32 %v2295, %v2391
      %v2472 = vmul.f32 %v2297, %v2393
      %v2473 = vmul.f32 %v2299, %v2395
      %v2474 = vmul.f32 %v2301, %v2397
      %v2475 = vmul.f32 %v2303, %v2399
      %v2476 = vmul.f32 %v2305, %v2401
      %v2477 = vmul.f32 %v2307, %v2403
      %v2478 = vmul.f32 %v2309, %v2405
      %v2479 = vmul.f32 %v2311, %v2407
      %v2480 = vmul.f32 %v2313, %v2409
      %v2481 = vmul.f32 %v2315, %v2411
      %v2482 = vmul.f32 %v2317, %v2413
      %v2483 = vmul.f32 %v2319, %v2415
      %v2484 = vmul.f32 %v2321, %v2417
      %v2485 = vmul.f32 %v2323, %v2419
      %v2486 = vmul.f32 %v2325, %v2421
      %v2487 = vmul.f32 %v2327, %v2423
      %v2488 = vxor.u32 %v1980, 2147483648
      %v2489 = vxor.u32 %v1984, 2147483648
      %v2490 = vxor.u32 %v1990, 2147483648
      %v2491 = vxor.u32 %v1994, 2147483648
      %v2492 = vxor.u32 %v2000, 2147483648
      %v2493 = vxor.u32 %v2004, 2147483648
      %v2494 = vxor.u32 %v2010, 2147483648
      %v2495 = vxor.u32 %v2014, 2147483648
      %v2496 = vxor.u32 %v2020, 2147483648
      %v2497 = vxor.u32 %v2024, 2147483648
      %v2498 = vxor.u32 %v2030, 2147483648
      %v2499 = vxor.u32 %v2034, 2147483648
      %v2500 = vxor.u32 %v2040, 2147483648
      %v2501 = vxor.u32 %v2044, 2147483648
      %v2502 = vxor.u32 %v2050, 2147483648
      %v2503 = vxor.u32 %v2054, 2147483648
      %v2504 = vxor.u32 %v2060, 2147483648
      %v2505 = vxor.u32 %v2064, 2147483648
      %v2506 = vxor.u32 %v2070, 2147483648
      %v2507 = vxor.u32 %v2074, 2147483648
      %v2508 = vxor.u32 %v2080, 2147483648
      %v2509 = vxor.u32 %v2084, 2147483648
      %v2510 = vxor.u32 %v2090, 2147483648
      %v2511 = vxor.u32 %v2094, 2147483648
      %v2512 = vxor.u32 %v2100, 2147483648
      %v2513 = vxor.u32 %v2104, 2147483648
      %v2514 = vxor.u32 %v2110, 2147483648
      %v2515 = vxor.u32 %v2114, 2147483648
      %v2516 = vxor.u32 %v2120, 2147483648
      %v2517 = vxor.u32 %v2124, 2147483648
      %v2518 = vxor.u32 %v2130, 2147483648
      %v2519 = vxor.u32 %v2134, 2147483648
      %v2520 = vmul.f32 %v2488, 1.442695
      %v2521 = vpow.pop %v2520
      %v2522 = vmul.f32 %v2489, 1.442695
      %v2523 = vpow.pop %v2522
      %v2524 = vmul.f32 %v2490, 1.442695
      %v2525 = vpow.pop %v2524
      %v2526 = vmul.f32 %v2491, 1.442695
      %v2527 = vpow.pop %v2526
      %v2528 = vmul.f32 %v2492, 1.442695
      %v2529 = vpow.pop %v2528
      %v2530 = vmul.f32 %v2493, 1.442695
      %v2531 = vpow.pop %v2530
      %v2532 = vmul.f32 %v2494, 1.442695
      %v2533 = vpow.pop %v2532
      %v2534 = vmul.f32 %v2495, 1.442695
      %v2535 = vpow.pop %v2534
      %v2536 = vmul.f32 %v2496, 1.442695
      %v2537 = vpow.pop %v2536
      %v2538 = vmul.f32 %v2497, 1.442695
      %v2539 = vpow.pop %v2538
      %v2540 = vmul.f32 %v2498, 1.442695
      %v2541 = vpow.pop %v2540
      %v2542 = vmul.f32 %v2499, 1.442695
      %v2543 = vpow.pop %v2542
      %v2544 = vmul.f32 %v2500, 1.442695
      %v2545 = vpow.pop %v2544
      %v2546 = vmul.f32 %v2501, 1.442695
      %v2547 = vpow.pop %v2546
      %v2548 = vmul.f32 %v2502, 1.442695
      %v2549 = vpow.pop %v2548
      %v2550 = vmul.f32 %v2503, 1.442695
      %v2551 = vpow.pop %v2550
      %v2552 = vmul.f32 %v2504, 1.442695
      %v2553 = vpow.pop %v2552
      %v2554 = vmul.f32 %v2505, 1.442695
      %v2555 = vpow.pop %v2554
      %v2556 = vmul.f32 %v2506, 1.442695
      %v2557 = vpow.pop %v2556
      %v2558 = vmul.f32 %v2507, 1.442695
      %v2559 = vpow.pop %v2558
      %v2560 = vmul.f32 %v2508, 1.442695
      %v2561 = vpow.pop %v2560
      %v2562 = vmul.f32 %v2509, 1.442695
      %v2563 = vpow.pop %v2562
      %v2564 = vmul.f32 %v2510, 1.442695
      %v2565 = vpow.pop %v2564
      %v2566 = vmul.f32 %v2511, 1.442695
      %v2567 = vpow.pop %v2566
      %v2568 = vmul.f32 %v2512, 1.442695
      %v2569 = vpow.pop %v2568
      %v2570 = vmul.f32 %v2513, 1.442695
      %v2571 = vpow.pop %v2570
      %v2572 = vmul.f32 %v2514, 1.442695
      %v2573 = vpow.pop %v2572
      %v2574 = vmul.f32 %v2515, 1.442695
      %v2575 = vpow.pop %v2574
      %v2576 = vmul.f32 %v2516, 1.442695
      %v2577 = vpow.pop %v2576
      %v2578 = vmul.f32 %v2517, 1.442695
      %v2579 = vpow.pop %v2578
      %v2580 = vmul.f32 %v2518, 1.442695
      %v2581 = vpow.pop %v2580
      %v2582 = vmul.f32 %v2519, 1.442695
      %v2583 = vpow.pop %v2582
      %v2584 = vadd.f32 %v2521, 1.0
      %v2585 = vadd.f32 %v2523, 1.0
      %v2586 = vadd.f32 %v2525, 1.0
      %v2587 = vadd.f32 %v2527, 1.0
      %v2588 = vadd.f32 %v2529, 1.0
      %v2589 = vadd.f32 %v2531, 1.0
      %v2590 = vadd.f32 %v2533, 1.0
      %v2591 = vadd.f32 %v2535, 1.0
      %v2592 = vadd.f32 %v2537, 1.0
      %v2593 = vadd.f32 %v2539, 1.0
      %v2594 = vadd.f32 %v2541, 1.0
      %v2595 = vadd.f32 %v2543, 1.0
      %v2596 = vadd.f32 %v2545, 1.0
      %v2597 = vadd.f32 %v2547, 1.0
      %v2598 = vadd.f32 %v2549, 1.0
      %v2599 = vadd.f32 %v2551, 1.0
      %v2600 = vadd.f32 %v2553, 1.0
      %v2601 = vadd.f32 %v2555, 1.0
      %v2602 = vadd.f32 %v2557, 1.0
      %v2603 = vadd.f32 %v2559, 1.0
      %v2604 = vadd.f32 %v2561, 1.0
      %v2605 = vadd.f32 %v2563, 1.0
      %v2606 = vadd.f32 %v2565, 1.0
      %v2607 = vadd.f32 %v2567, 1.0
      %v2608 = vadd.f32 %v2569, 1.0
      %v2609 = vadd.f32 %v2571, 1.0
      %v2610 = vadd.f32 %v2573, 1.0
      %v2611 = vadd.f32 %v2575, 1.0
      %v2612 = vadd.f32 %v2577, 1.0
      %v2613 = vadd.f32 %v2579, 1.0
      %v2614 = vadd.f32 %v2581, 1.0
      %v2615 = vadd.f32 %v2583, 1.0
      %v2616 = vrcp.pop %v2584
      %v2617 = vmul.f32 1.0, %v2616
      %v2618 = vrcp.pop %v2585
      %v2619 = vmul.f32 1.0, %v2618
      %v2620 = vrcp.pop %v2586
      %v2621 = vmul.f32 1.0, %v2620
      %v2622 = vrcp.pop %v2587
      %v2623 = vmul.f32 1.0, %v2622
      %v2624 = vrcp.pop %v2588
      %v2625 = vmul.f32 1.0, %v2624
      %v2626 = vrcp.pop %v2589
      %v2627 = vmul.f32 1.0, %v2626
      %v2628 = vrcp.pop %v2590
      %v2629 = vmul.f32 1.0, %v2628
      %v2630 = vrcp.pop %v2591
      %v2631 = vmul.f32 1.0, %v2630
      %v2632 = vrcp.pop %v2592
      %v2633 = vmul.f32 1.0, %v2632
      %v2634 = vrcp.pop %v2593
      %v2635 = vmul.f32 1.0, %v2634
      %v2636 = vrcp.pop %v2594
      %v2637 = vmul.f32 1.0, %v2636
      %v2638 = vrcp.pop %v2595
      %v2639 = vmul.f32 1.0, %v2638
      %v2640 = vrcp.pop %v2596
      %v2641 = vmul.f32 1.0, %v2640
      %v2642 = vrcp.pop %v2597
      %v2643 = vmul.f32 1.0, %v2642
      %v2644 = vrcp.pop %v2598
      %v2645 = vmul.f32 1.0, %v2644
      %v2646 = vrcp.pop %v2599
      %v2647 = vmul.f32 1.0, %v2646
      %v2648 = vrcp.pop %v2600
      %v2649 = vmul.f32 1.0, %v2648
      %v2650 = vrcp.pop %v2601
      %v2651 = vmul.f32 1.0, %v2650
      %v2652 = vrcp.pop %v2602
      %v2653 = vmul.f32 1.0, %v2652
      %v2654 = vrcp.pop %v2603
      %v2655 = vmul.f32 1.0, %v2654
      %v2656 = vrcp.pop %v2604
      %v2657 = vmul.f32 1.0, %v2656
      %v2658 = vrcp.pop %v2605
      %v2659 = vmul.f32 1.0, %v2658
      %v2660 = vrcp.pop %v2606
      %v2661 = vmul.f32 1.0, %v2660
      %v2662 = vrcp.pop %v2607
      %v2663 = vmul.f32 1.0, %v2662
      %v2664 = vrcp.pop %v2608
      %v2665 = vmul.f32 1.0, %v2664
      %v2666 = vrcp.pop %v2609
      %v2667 = vmul.f32 1.0, %v2666
      %v2668 = vrcp.pop %v2610
      %v2669 = vmul.f32 1.0, %v2668
      %v2670 = vrcp.pop %v2611
      %v2671 = vmul.f32 1.0, %v2670
      %v2672 = vrcp.pop %v2612
      %v2673 = vmul.f32 1.0, %v2672
      %v2674 = vrcp.pop %v2613
      %v2675 = vmul.f32 1.0, %v2674
      %v2676 = vrcp.pop %v2614
      %v2677 = vmul.f32 1.0, %v2676
      %v2678 = vrcp.pop %v2615
      %v2679 = vmul.f32 1.0, %v2678
      %2684 = vrot.lane.b32.xlu0 %v2456, 96
      %v2685 = vpop.permute.xlu0 %2684
      %2686 = vrot.lane.b32.xlu0 %v2457, 96
      %v2687 = vpop.permute.xlu0 %2686
      %2688 = vrot.lane.b32.xlu0 %v2458, 96
      %v2689 = vpop.permute.xlu0 %2688
      %2690 = vrot.lane.b32.xlu0 %v2459, 96
      %v2691 = vpop.permute.xlu0 %2690
      %2696 = vst.msk [vmem:[#allocation3] sm:$0xff] %vm1349, %v2685
      %2697 = vst.msk [vmem:[#allocation3 + $0x10] sm:$0xff] %vm1349, %v2687
      %2698 = vst.msk [vmem:[#allocation3 + $0x20] sm:$0xff] %vm1349, %v2689
      %2699 = vst.msk [vmem:[#allocation3 + $0x30] sm:$0xff] %vm1349, %v2691
      %2700 = vrot.lane.b32.xlu0 %v2456, 32
      %v2701 = vpop.permute.xlu0 %2700
      %2702 = vrot.lane.b32.xlu0 %v2457, 32
      %v2703 = vpop.permute.xlu0 %2702
      %2704 = vrot.lane.b32.xlu0 %v2458, 32
      %v2705 = vpop.permute.xlu0 %2704
      %2706 = vrot.lane.b32.xlu0 %v2459, 32
      %v2707 = vpop.permute.xlu0 %2706
      %2712 = vst.msk [vmem:[#allocation4] sm:$0xff] %vm1349, %v2701
      %2713 = vst.msk [vmem:[#allocation4 + $0x10] sm:$0xff] %vm1349, %v2703
      %2714 = vst.msk [vmem:[#allocation4 + $0x20] sm:$0xff] %vm1349, %v2705
      %2715 = vst.msk [vmem:[#allocation4 + $0x30] sm:$0xff] %vm1349, %v2707
      %vm2716 = vcmask 523520
      %2717 = vst.msk [vmem:[#allocation3] sm:$0xff] %vm2716, %v2460
      %2718 = vst.msk [vmem:[#allocation3 + $0x10] sm:$0xff] %vm2716, %v2461
      %2719 = vst.msk [vmem:[#allocation3 + $0x20] sm:$0xff] %vm2716, %v2462
      %2720 = vst.msk [vmem:[#allocation3 + $0x30] sm:$0xff] %vm2716, %v2463
      %2725 = vrot.lane.b32.xlu0 %v2460, 64
      %v2726 = vpop.permute.xlu0 %2725
      %2727 = vrot.lane.b32.xlu0 %v2461, 64
      %v2728 = vpop.permute.xlu0 %2727
      %2729 = vrot.lane.b32.xlu0 %v2462, 64
      %v2730 = vpop.permute.xlu0 %2729
      %2731 = vrot.lane.b32.xlu0 %v2463, 64
      %v2732 = vpop.permute.xlu0 %2731
      %2737 = vst.msk [vmem:[#allocation4] sm:$0xff] %vm2716, %v2726
      %2738 = vst.msk [vmem:[#allocation4 + $0x10] sm:$0xff] %vm2716, %v2728
      %2739 = vst.msk [vmem:[#allocation4 + $0x20] sm:$0xff] %vm2716, %v2730
      %2740 = vst.msk [vmem:[#allocation4 + $0x30] sm:$0xff] %vm2716, %v2732
      %2745 = vrot.lane.b32.xlu0 %v2464, 32
      %v2746 = vpop.permute.xlu0 %2745
      %2747 = vrot.lane.b32.xlu0 %v2465, 32
      %v2748 = vpop.permute.xlu0 %2747
      %2749 = vrot.lane.b32.xlu0 %v2466, 32
      %v2750 = vpop.permute.xlu0 %2749
      %2751 = vrot.lane.b32.xlu0 %v2467, 32
      %v2752 = vpop.permute.xlu0 %2751
      %vm2757 = vcmask 785920
      %2758 = vst.msk [vmem:[#allocation3] sm:$0xff] %vm2757, %v2746
      %2759 = vst.msk [vmem:[#allocation3 + $0x10] sm:$0xff] %vm2757, %v2748
      %2760 = vst.msk [vmem:[#allocation3 + $0x20] sm:$0xff] %vm2757, %v2750
      %2761 = vst.msk [vmem:[#allocation3 + $0x30] sm:$0xff] %vm2757, %v2752
      %2762 = vrot.lane.b32.xlu0 %v2464, 96
      %v2763 = vpop.permute.xlu0 %2762
      %2764 = vrot.lane.b32.xlu0 %v2465, 96
      %v2765 = vpop.permute.xlu0 %2764
      %2766 = vrot.lane.b32.xlu0 %v2466, 96
      %v2767 = vpop.permute.xlu0 %2766
      %2768 = vrot.lane.b32.xlu0 %v2467, 96
      %v2769 = vpop.permute.xlu0 %2768
      %2774 = vst.msk [vmem:[#allocation4] sm:$0xff] %vm2757, %v2763
      %2775 = vst.msk [vmem:[#allocation4 + $0x10] sm:$0xff] %vm2757, %v2765
      %2776 = vst.msk [vmem:[#allocation4 + $0x20] sm:$0xff] %vm2757, %v2767
      %2777 = vst.msk [vmem:[#allocation4 + $0x30] sm:$0xff] %vm2757, %v2769
      %2782 = vrot.lane.b32.xlu0 %v2468, 64
      %v2783 = vpop.permute.xlu0 %2782
      %2784 = vrot.lane.b32.xlu0 %v2469, 64
      %v2785 = vpop.permute.xlu0 %2784
      %2786 = vrot.lane.b32.xlu0 %v2470, 64
      %v2787 = vpop.permute.xlu0 %2786
      %2788 = vrot.lane.b32.xlu0 %v2471, 64
      %v2789 = vpop.permute.xlu0 %2788
      %vm2794 = vcmask 1048320
      %2795 = vst.msk [vmem:[#allocation3] sm:$0xff] %vm2794, %v2783
      %2796 = vst.msk [vmem:[#allocation3 + $0x10] sm:$0xff] %vm2794, %v2785
      %2797 = vst.msk [vmem:[#allocation3 + $0x20] sm:$0xff] %vm2794, %v2787
      %2798 = vst.msk [vmem:[#allocation3 + $0x30] sm:$0xff] %vm2794, %v2789
      %2799 = vst.msk [vmem:[#allocation4] sm:$0xff] %vm2794, %v2468
      %2800 = vst.msk [vmem:[#allocation4 + $0x10] sm:$0xff] %vm2794, %v2469
      %2801 = vst.msk [vmem:[#allocation4 + $0x20] sm:$0xff] %vm2794, %v2470
      %2802 = vst.msk [vmem:[#allocation4 + $0x30] sm:$0xff] %vm2794, %v2471
      %2807 = vrot.lane.b32.xlu0 %v2472, 96
      %v2808 = vpop.permute.xlu0 %2807
      %2809 = vrot.lane.b32.xlu0 %v2473, 96
      %v2810 = vpop.permute.xlu0 %2809
      %2811 = vrot.lane.b32.xlu0 %v2474, 96
      %v2812 = vpop.permute.xlu0 %2811
      %2813 = vrot.lane.b32.xlu0 %v2475, 96
      %v2814 = vpop.permute.xlu0 %2813
      %2819 = vst.msk [vmem:[#allocation3 + $0x8] sm:$0xff] %vm1349, %v2808
      %2820 = vst.msk [vmem:[#allocation3 + $0x18] sm:$0xff] %vm1349, %v2810
      %2821 = vst.msk [vmem:[#allocation3 + $0x28] sm:$0xff] %vm1349, %v2812
      %2822 = vst.msk [vmem:[#allocation3 + $0x38] sm:$0xff] %vm1349, %v2814
      %2823 = vrot.lane.b32.xlu0 %v2472, 32
      %v2824 = vpop.permute.xlu0 %2823
      %2825 = vrot.lane.b32.xlu0 %v2473, 32
      %v2826 = vpop.permute.xlu0 %2825
      %2827 = vrot.lane.b32.xlu0 %v2474, 32
      %v2828 = vpop.permute.xlu0 %2827
      %2829 = vrot.lane.b32.xlu0 %v2475, 32
      %v2830 = vpop.permute.xlu0 %2829
      %2835 = vst.msk [vmem:[#allocation4 + $0x8] sm:$0xff] %vm1349, %v2824
      %2836 = vst.msk [vmem:[#allocation4 + $0x18] sm:$0xff] %vm1349, %v2826
      %2837 = vst.msk [vmem:[#allocation4 + $0x28] sm:$0xff] %vm1349, %v2828
      %2838 = vst.msk [vmem:[#allocation4 + $0x38] sm:$0xff] %vm1349, %v2830
      %2839 = vst.msk [vmem:[#allocation3 + $0x8] sm:$0xff] %vm2716, %v2476
      %2840 = vst.msk [vmem:[#allocation3 + $0x18] sm:$0xff] %vm2716, %v2477
      %2841 = vst.msk [vmem:[#allocation3 + $0x28] sm:$0xff] %vm2716, %v2478
      %2842 = vst.msk [vmem:[#allocation3 + $0x38] sm:$0xff] %vm2716, %v2479
      %2847 = vrot.lane.b32.xlu0 %v2476, 64
      %v2848 = vpop.permute.xlu0 %2847
      %2849 = vrot.lane.b32.xlu0 %v2477, 64
      %v2850 = vpop.permute.xlu0 %2849
      %2851 = vrot.lane.b32.xlu0 %v2478, 64
      %v2852 = vpop.permute.xlu0 %2851
      %2853 = vrot.lane.b32.xlu0 %v2479, 64
      %v2854 = vpop.permute.xlu0 %2853
      %2859 = vst.msk [vmem:[#allocation4 + $0x8] sm:$0xff] %vm2716, %v2848
      %2860 = vst.msk [vmem:[#allocation4 + $0x18] sm:$0xff] %vm2716, %v2850
      %2861 = vst.msk [vmem:[#allocation4 + $0x28] sm:$0xff] %vm2716, %v2852
      %2862 = vst.msk [vmem:[#allocation4 + $0x38] sm:$0xff] %vm2716, %v2854
      %2867 = vrot.lane.b32.xlu0 %v2480, 32
      %v2868 = vpop.permute.xlu0 %2867
      %2869 = vrot.lane.b32.xlu0 %v2481, 32
      %v2870 = vpop.permute.xlu0 %2869
      %2871 = vrot.lane.b32.xlu0 %v2482, 32
      %v2872 = vpop.permute.xlu0 %2871
      %2873 = vrot.lane.b32.xlu0 %v2483, 32
      %v2874 = vpop.permute.xlu0 %2873
      %2879 = vst.msk [vmem:[#allocation3 + $0x8] sm:$0xff] %vm2757, %v2868
      %2880 = vst.msk [vmem:[#allocation3 + $0x18] sm:$0xff] %vm2757, %v2870
      %2881 = vst.msk [vmem:[#allocation3 + $0x28] sm:$0xff] %vm2757, %v2872
      %2882 = vst.msk [vmem:[#allocation3 + $0x38] sm:$0xff] %vm2757, %v2874
      %2883 = vrot.lane.b32.xlu0 %v2480, 96
      %v2884 = vpop.permute.xlu0 %2883
      %2885 = vrot.lane.b32.xlu0 %v2481, 96
      %v2886 = vpop.permute.xlu0 %2885
      %2887 = vrot.lane.b32.xlu0 %v2482, 96
      %v2888 = vpop.permute.xlu0 %2887
      %2889 = vrot.lane.b32.xlu0 %v2483, 96
      %v2890 = vpop.permute.xlu0 %2889
      %2895 = vst.msk [vmem:[#allocation4 + $0x8] sm:$0xff] %vm2757, %v2884
      %2896 = vst.msk [vmem:[#allocation4 + $0x18] sm:$0xff] %vm2757, %v2886
      %2897 = vst.msk [vmem:[#allocation4 + $0x28] sm:$0xff] %vm2757, %v2888
      %2898 = vst.msk [vmem:[#allocation4 + $0x38] sm:$0xff] %vm2757, %v2890
      %2903 = vrot.lane.b32.xlu0 %v2484, 64
      %v2904 = vpop.permute.xlu0 %2903
      %2905 = vrot.lane.b32.xlu0 %v2485, 64
      %v2906 = vpop.permute.xlu0 %2905
      %2907 = vrot.lane.b32.xlu0 %v2486, 64
      %v2908 = vpop.permute.xlu0 %2907
      %2909 = vrot.lane.b32.xlu0 %v2487, 64
      %v2910 = vpop.permute.xlu0 %2909
      %2915 = vst.msk [vmem:[#allocation3 + $0x8] sm:$0xff] %vm2794, %v2904
      %2916 = vst.msk [vmem:[#allocation3 + $0x18] sm:$0xff] %vm2794, %v2906
      %2917 = vst.msk [vmem:[#allocation3 + $0x28] sm:$0xff] %vm2794, %v2908
      %2918 = vst.msk [vmem:[#allocation3 + $0x38] sm:$0xff] %vm2794, %v2910
      %2919 = vst.msk [vmem:[#allocation4 + $0x8] sm:$0xff] %vm2794, %v2484
      %2920 = vst.msk [vmem:[#allocation4 + $0x18] sm:$0xff] %vm2794, %v2485
      %2921 = vst.msk [vmem:[#allocation4 + $0x28] sm:$0xff] %vm2794, %v2486
      %2922 = vst.msk [vmem:[#allocation4 + $0x38] sm:$0xff] %vm2794, %v2487
      loop: start=0, step=1, limit=32
      $region97: #{sparse_dist_forward.3} parent=91 // loop_pre_header
        _
      $region98: #{sparse_dist_forward.3} parent=91 // loop_header
        %s2924 = sphi 0, %s2928
        %p2925 = scmp.ge.s32.totalorder %s2924, 32
      $region99: #{sparse_dist_forward.3} parent=91 // loop_header_branch
        %2927 = sbr.rel (%p2925) target = $region103
      $region100: #{sparse_dist_forward.3} parent=91 // loop_body
        %s2929 = sshra.s32 %s2924, 3
        %s2930 = sand.u32 %s2924, 7
        %s2931 = sshra.s32 %s2924, 3
        %s2932 = sand.u32 %s2924, 7
        %s2933 = smul.u32 %s2929, 2
        %s2934 = smul.u32 %s2933, 8
        %s2935 = sadd.s32 %s2934, %s2932
        %s2936 = scalar_lea.vmem [#allocation3], %s2935
        %v2937 = vld [vmem:[%s2936] ss:$8 sm:$0x3]
        %s2938 = smul.u32 %s2924, 8
        %s2939 = sld [smem:[#allocation7 + %s2938]]
        %s2940 = sshra.s32 %s2939, 3
        %s2941 = sand.u32 %s2939, 7
        %s2942 = sshra.s32 %s2939, 3
        %s2943 = sand.u32 %s2939, 7
        %s2944 = smul.u32 %s2940, 2
        %s2945 = smul.u32 %s2944, 8
        %s2946 = sadd.s32 %s2945, %s2943
        %s2947 = scalar_lea.vmem [#allocation4], %s2946
        %v2948 = vld [vmem:[%s2947] ss:$8 sm:$0x3]
        %v2949 = vmul.f32 %v2937, %v2948
        %2951 = vrot.lane.b32.xlu0 %v2949, 96
        %v2952 = vpop.permute.xlu0 %2951
        %v2954 = vadd.f32 %v2949, %v2952
        %2955 = vrot.lane.b32.xlu0 %v2949, 64
        %v2956 = vpop.permute.xlu0 %2955
        %v2958 = vadd.f32 %v2954, %v2956
        %2959 = vrot.lane.b32.xlu0 %v2949, 32
        %v2960 = vpop.permute.xlu0 %2959
        %v2962 = vadd.f32 %v2958, %v2960
        %v2963 = vrot.slane %v2949, 1
        %v2965 = vadd.f32 %v2962, %v2963
        %v2966 = vrot.slane %v2952, 1
        %v2968 = vadd.f32 %v2965, %v2966
        %v2969 = vrot.slane %v2956, 1
        %v2971 = vadd.f32 %v2968, %v2969
        %v2972 = vrot.slane %v2960, 1
        %v2974 = vadd.f32 %v2971, %v2972
        %s2975 = scalar_lea.vmem [#allocation5], %s2924
        %vm2976 = vcmask 253952
        %2977 = vst.msk [vmem:[%s2975] sm:$0x1] %vm2976, %v2974
        %s2978 = sadd.s32 %s2938, 1
        %s2979 = sld [smem:[#allocation7 + %s2978]]
        %s2980 = sshra.s32 %s2979, 3
        %s2981 = sand.u32 %s2979, 7
        %s2982 = sshra.s32 %s2979, 3
        %s2983 = sand.u32 %s2979, 7
        %s2984 = smul.u32 %s2980, 2
        %s2985 = smul.u32 %s2984, 8
        %s2986 = sadd.s32 %s2985, %s2983
        %s2987 = scalar_lea.vmem [#allocation4], %s2986
        %v2988 = vld [vmem:[%s2987] ss:$8 sm:$0x3]
        %v2989 = vmul.f32 %v2937, %v2988
        %2991 = vrot.lane.b32.xlu0 %v2989, 96
        %v2992 = vpop.permute.xlu0 %2991
        %v2994 = vadd.f32 %v2989, %v2992
        %2995 = vrot.lane.b32.xlu0 %v2989, 64
        %v2996 = vpop.permute.xlu0 %2995
        %v2998 = vadd.f32 %v2994, %v2996
        %2999 = vrot.lane.b32.xlu0 %v2989, 32
        %v3000 = vpop.permute.xlu0 %2999
        %v3002 = vadd.f32 %v2998, %v3000
        %v3003 = vrot.slane %v2989, 1
        %v3005 = vadd.f32 %v3002, %v3003
        %v3006 = vrot.slane %v2992, 1
        %v3008 = vadd.f32 %v3005, %v3006
        %v3009 = vrot.slane %v2996, 1
        %v3011 = vadd.f32 %v3008, %v3009
        %v3012 = vrot.slane %v3000, 1
        %v3014 = vadd.f32 %v3011, %v3012
        %s3015 = sadd.s32 %s2924, 32
        %s3016 = scalar_lea.vmem [#allocation5], %s3015
        %3017 = vst.msk [vmem:[%s3016] sm:$0x1] %vm2976, %v3014
        %s3018 = sadd.s32 %s2938, 2
        %s3019 = sld [smem:[#allocation7 + %s3018]]
        %s3020 = sshra.s32 %s3019, 3
        %s3021 = sand.u32 %s3019, 7
        %s3022 = sshra.s32 %s3019, 3
        %s3023 = sand.u32 %s3019, 7
        %s3024 = smul.u32 %s3020, 2
        %s3025 = smul.u32 %s3024, 8
        %s3026 = sadd.s32 %s3025, %s3023
        %s3027 = scalar_lea.vmem [#allocation4], %s3026
        %v3028 = vld [vmem:[%s3027] ss:$8 sm:$0x3]
        %v3029 = vmul.f32 %v2937, %v3028
        %3031 = vrot.lane.b32.xlu0 %v3029, 96
        %v3032 = vpop.permute.xlu0 %3031
        %v3034 = vadd.f32 %v3029, %v3032
        %3035 = vrot.lane.b32.xlu0 %v3029, 64
        %v3036 = vpop.permute.xlu0 %3035
        %v3038 = vadd.f32 %v3034, %v3036
        %3039 = vrot.lane.b32.xlu0 %v3029, 32
        %v3040 = vpop.permute.xlu0 %3039
        %v3042 = vadd.f32 %v3038, %v3040
        %v3043 = vrot.slane %v3029, 1
        %v3045 = vadd.f32 %v3042, %v3043
        %v3046 = vrot.slane %v3032, 1
        %v3048 = vadd.f32 %v3045, %v3046
        %v3049 = vrot.slane %v3036, 1
        %v3051 = vadd.f32 %v3048, %v3049
        %v3052 = vrot.slane %v3040, 1
        %v3054 = vadd.f32 %v3051, %v3052
        %s3055 = sadd.s32 %s2924, 64
        %s3056 = scalar_lea.vmem [#allocation5], %s3055
        %3057 = vst.msk [vmem:[%s3056] sm:$0x1] %vm2976, %v3054
        %s3058 = sadd.s32 %s2938, 3
        %s3059 = sld [smem:[#allocation7 + %s3058]]
        %s3060 = sshra.s32 %s3059, 3
        %s3061 = sand.u32 %s3059, 7
        %s3062 = sshra.s32 %s3059, 3
        %s3063 = sand.u32 %s3059, 7
        %s3064 = smul.u32 %s3060, 2
        %s3065 = smul.u32 %s3064, 8
        %s3066 = sadd.s32 %s3065, %s3063
        %s3067 = scalar_lea.vmem [#allocation4], %s3066
        %v3068 = vld [vmem:[%s3067] ss:$8 sm:$0x3]
        %v3069 = vmul.f32 %v2937, %v3068
        %3071 = vrot.lane.b32.xlu0 %v3069, 96
        %v3072 = vpop.permute.xlu0 %3071
        %v3074 = vadd.f32 %v3069, %v3072
        %3075 = vrot.lane.b32.xlu0 %v3069, 64
        %v3076 = vpop.permute.xlu0 %3075
        %v3078 = vadd.f32 %v3074, %v3076
        %3079 = vrot.lane.b32.xlu0 %v3069, 32
        %v3080 = vpop.permute.xlu0 %3079
        %v3082 = vadd.f32 %v3078, %v3080
        %v3083 = vrot.slane %v3069, 1
        %v3085 = vadd.f32 %v3082, %v3083
        %v3086 = vrot.slane %v3072, 1
        %v3088 = vadd.f32 %v3085, %v3086
        %v3089 = vrot.slane %v3076, 1
        %v3091 = vadd.f32 %v3088, %v3089
        %v3092 = vrot.slane %v3080, 1
        %v3094 = vadd.f32 %v3091, %v3092
        %s3095 = sadd.s32 %s2924, 96
        %s3096 = scalar_lea.vmem [#allocation5], %s3095
        %3097 = vst.msk [vmem:[%s3096] sm:$0x1] %vm2976, %v3094
        %s3098 = sadd.s32 %s2938, 4
        %s3099 = sld [smem:[#allocation7 + %s3098]]
        %s3100 = sshra.s32 %s3099, 3
        %s3101 = sand.u32 %s3099, 7
        %s3102 = sshra.s32 %s3099, 3
        %s3103 = sand.u32 %s3099, 7
        %s3104 = smul.u32 %s3100, 2
        %s3105 = smul.u32 %s3104, 8
        %s3106 = sadd.s32 %s3105, %s3103
        %s3107 = scalar_lea.vmem [#allocation4], %s3106
        %v3108 = vld [vmem:[%s3107] ss:$8 sm:$0x3]
        %v3109 = vmul.f32 %v2937, %v3108
        %3111 = vrot.lane.b32.xlu0 %v3109, 96
        %v3112 = vpop.permute.xlu0 %3111
        %v3114 = vadd.f32 %v3109, %v3112
        %3115 = vrot.lane.b32.xlu0 %v3109, 64
        %v3116 = vpop.permute.xlu0 %3115
        %v3118 = vadd.f32 %v3114, %v3116
        %3119 = vrot.lane.b32.xlu0 %v3109, 32
        %v3120 = vpop.permute.xlu0 %3119
        %v3122 = vadd.f32 %v3118, %v3120
        %v3123 = vrot.slane %v3109, 1
        %v3125 = vadd.f32 %v3122, %v3123
        %v3126 = vrot.slane %v3112, 1
        %v3128 = vadd.f32 %v3125, %v3126
        %v3129 = vrot.slane %v3116, 1
        %v3131 = vadd.f32 %v3128, %v3129
        %v3132 = vrot.slane %v3120, 1
        %v3134 = vadd.f32 %v3131, %v3132
        %s3135 = sadd.s32 %s2924, 128
        %s3136 = scalar_lea.vmem [#allocation5], %s3135
        %3137 = vst.msk [vmem:[%s3136] sm:$0x1] %vm2976, %v3134
        %s3138 = sadd.s32 %s2938, 5
        %s3139 = sld [smem:[#allocation7 + %s3138]]
        %s3140 = sshra.s32 %s3139, 3
        %s3141 = sand.u32 %s3139, 7
        %s3142 = sshra.s32 %s3139, 3
        %s3143 = sand.u32 %s3139, 7
        %s3144 = smul.u32 %s3140, 2
        %s3145 = smul.u32 %s3144, 8
        %s3146 = sadd.s32 %s3145, %s3143
        %s3147 = scalar_lea.vmem [#allocation4], %s3146
        %v3148 = vld [vmem:[%s3147] ss:$8 sm:$0x3]
        %v3149 = vmul.f32 %v2937, %v3148
        %3151 = vrot.lane.b32.xlu0 %v3149, 96
        %v3152 = vpop.permute.xlu0 %3151
        %v3154 = vadd.f32 %v3149, %v3152
        %3155 = vrot.lane.b32.xlu0 %v3149, 64
        %v3156 = vpop.permute.xlu0 %3155
        %v3158 = vadd.f32 %v3154, %v3156
        %3159 = vrot.lane.b32.xlu0 %v3149, 32
        %v3160 = vpop.permute.xlu0 %3159
        %v3162 = vadd.f32 %v3158, %v3160
        %v3163 = vrot.slane %v3149, 1
        %v3165 = vadd.f32 %v3162, %v3163
        %v3166 = vrot.slane %v3152, 1
        %v3168 = vadd.f32 %v3165, %v3166
        %v3169 = vrot.slane %v3156, 1
        %v3171 = vadd.f32 %v3168, %v3169
        %v3172 = vrot.slane %v3160, 1
        %v3174 = vadd.f32 %v3171, %v3172
        %s3175 = sadd.s32 %s2924, 160
        %s3176 = scalar_lea.vmem [#allocation5], %s3175
        %3177 = vst.msk [vmem:[%s3176] sm:$0x1] %vm2976, %v3174
        %s3178 = sadd.s32 %s2938, 6
        %s3179 = sld [smem:[#allocation7 + %s3178]]
        %s3180 = sshra.s32 %s3179, 3
        %s3181 = sand.u32 %s3179, 7
        %s3182 = sshra.s32 %s3179, 3
        %s3183 = sand.u32 %s3179, 7
        %s3184 = smul.u32 %s3180, 2
        %s3185 = smul.u32 %s3184, 8
        %s3186 = sadd.s32 %s3185, %s3183
        %s3187 = scalar_lea.vmem [#allocation4], %s3186
        %v3188 = vld [vmem:[%s3187] ss:$8 sm:$0x3]
        %v3189 = vmul.f32 %v2937, %v3188
        %3191 = vrot.lane.b32.xlu0 %v3189, 96
        %v3192 = vpop.permute.xlu0 %3191
        %v3194 = vadd.f32 %v3189, %v3192
        %3195 = vrot.lane.b32.xlu0 %v3189, 64
        %v3196 = vpop.permute.xlu0 %3195
        %v3198 = vadd.f32 %v3194, %v3196
        %3199 = vrot.lane.b32.xlu0 %v3189, 32
        %v3200 = vpop.permute.xlu0 %3199
        %v3202 = vadd.f32 %v3198, %v3200
        %v3203 = vrot.slane %v3189, 1
        %v3205 = vadd.f32 %v3202, %v3203
        %v3206 = vrot.slane %v3192, 1
        %v3208 = vadd.f32 %v3205, %v3206
        %v3209 = vrot.slane %v3196, 1
        %v3211 = vadd.f32 %v3208, %v3209
        %v3212 = vrot.slane %v3200, 1
        %v3214 = vadd.f32 %v3211, %v3212
        %s3215 = sadd.s32 %s2924, 192
        %s3216 = scalar_lea.vmem [#allocation5], %s3215
        %3217 = vst.msk [vmem:[%s3216] sm:$0x1] %vm2976, %v3214
        %s3218 = sadd.s32 %s2938, 7
        %s3219 = sld [smem:[#allocation7 + %s3218]]
        %s3220 = sshra.s32 %s3219, 3
        %s3221 = sand.u32 %s3219, 7
        %s3222 = sshra.s32 %s3219, 3
        %s3223 = sand.u32 %s3219, 7
        %s3224 = smul.u32 %s3220, 2
        %s3225 = smul.u32 %s3224, 8
        %s3226 = sadd.s32 %s3225, %s3223
        %s3227 = scalar_lea.vmem [#allocation4], %s3226
        %v3228 = vld [vmem:[%s3227] ss:$8 sm:$0x3]
        %v3229 = vmul.f32 %v2937, %v3228
        %3231 = vrot.lane.b32.xlu0 %v3229, 96
        %v3232 = vpop.permute.xlu0 %3231
        %v3234 = vadd.f32 %v3229, %v3232
        %3235 = vrot.lane.b32.xlu0 %v3229, 64
        %v3236 = vpop.permute.xlu0 %3235
        %v3238 = vadd.f32 %v3234, %v3236
        %3239 = vrot.lane.b32.xlu0 %v3229, 32
        %v3240 = vpop.permute.xlu0 %3239
        %v3242 = vadd.f32 %v3238, %v3240
        %v3243 = vrot.slane %v3229, 1
        %v3245 = vadd.f32 %v3242, %v3243
        %v3246 = vrot.slane %v3232, 1
        %v3248 = vadd.f32 %v3245, %v3246
        %v3249 = vrot.slane %v3236, 1
        %v3251 = vadd.f32 %v3248, %v3249
        %v3252 = vrot.slane %v3240, 1
        %v3254 = vadd.f32 %v3251, %v3252
        %s3255 = sadd.s32 %s2924, 224
        %s3256 = scalar_lea.vmem [#allocation5], %s3255
        %3257 = vst.msk [vmem:[%s3256] sm:$0x1] %vm2976, %v3254
      $region101: #{sparse_dist_forward.3} parent=91 // loop_footer
        %s2928 = sadd.s32 1, %s2924
      $region102: #{sparse_dist_forward.3} parent=91 // loop_footer_branch
        %2923 = sbr.rel target = $region98
      $region103: #{sparse_dist_forward.3} parent=91 // loop_exit
        _
      %v3258 = vld [vmem:[#allocation5] sm:$0xff]
      %v3259 = vld [vmem:[#allocation5 + $0x8] sm:$0xff]
      %v3260 = vld [vmem:[#allocation5 + $0x10] sm:$0xff]
      %v3261 = vld [vmem:[#allocation5 + $0x18] sm:$0xff]
      %v3262 = vld [vmem:[#allocation5 + $0x20] sm:$0xff]
      %v3263 = vld [vmem:[#allocation5 + $0x28] sm:$0xff]
      %v3264 = vld [vmem:[#allocation5 + $0x30] sm:$0xff]
      %v3265 = vld [vmem:[#allocation5 + $0x38] sm:$0xff]
      %v3266 = vld [vmem:[#allocation5 + $0x40] sm:$0xff]
      %v3267 = vld [vmem:[#allocation5 + $0x48] sm:$0xff]
      %v3268 = vld [vmem:[#allocation5 + $0x50] sm:$0xff]
      %v3269 = vld [vmem:[#allocation5 + $0x58] sm:$0xff]
      %v3270 = vld [vmem:[#allocation5 + $0x60] sm:$0xff]
      %v3271 = vld [vmem:[#allocation5 + $0x68] sm:$0xff]
      %v3272 = vld [vmem:[#allocation5 + $0x70] sm:$0xff]
      %v3273 = vld [vmem:[#allocation5 + $0x78] sm:$0xff]
      %v3274 = vld [vmem:[#allocation5 + $0x80] sm:$0xff]
      %v3275 = vld [vmem:[#allocation5 + $0x88] sm:$0xff]
      %v3276 = vld [vmem:[#allocation5 + $0x90] sm:$0xff]
      %v3277 = vld [vmem:[#allocation5 + $0x98] sm:$0xff]
      %v3278 = vld [vmem:[#allocation5 + $0xa0] sm:$0xff]
      %v3279 = vld [vmem:[#allocation5 + $0xa8] sm:$0xff]
      %v3280 = vld [vmem:[#allocation5 + $0xb0] sm:$0xff]
      %v3281 = vld [vmem:[#allocation5 + $0xb8] sm:$0xff]
      %v3282 = vld [vmem:[#allocation5 + $0xc0] sm:$0xff]
      %v3283 = vld [vmem:[#allocation5 + $0xc8] sm:$0xff]
      %v3284 = vld [vmem:[#allocation5 + $0xd0] sm:$0xff]
      %v3285 = vld [vmem:[#allocation5 + $0xd8] sm:$0xff]
      %v3286 = vld [vmem:[#allocation5 + $0xe0] sm:$0xff]
      %v3287 = vld [vmem:[#allocation5 + $0xe8] sm:$0xff]
      %v3288 = vld [vmem:[#allocation5 + $0xf0] sm:$0xff]
      %v3289 = vld [vmem:[#allocation5 + $0xf8] sm:$0xff]
      %v3290 = vld [vmem:[%s750] sm:$0x1]
      %v3291 = vld [vmem:[%s754] sm:$0x1]
      %v3292 = vsel %vm1349, %v3258, 0.0
      %3293 = vadd.xlane.f32.xlu0 %v3292
      %v3294 = vpop.xlane.xlu0 %3293
      %v3295 = vsel %vm1349, %v3259, 0.0
      %3296 = vadd.xlane.f32.xlu0 %v3295
      %v3297 = vpop.xlane.xlu0 %3296
      %v3298 = vsel %vm1349, %v3260, 0.0
      %3299 = vadd.xlane.f32.xlu0 %v3298
      %v3300 = vpop.xlane.xlu0 %3299
      %v3301 = vsel %vm1349, %v3261, 0.0
      %3302 = vadd.xlane.f32.xlu0 %v3301
      %v3303 = vpop.xlane.xlu0 %3302
      %v3304 = vsel %vm1349, %v3262, 0.0
      %3305 = vadd.xlane.f32.xlu0 %v3304
      %v3306 = vpop.xlane.xlu0 %3305
      %v3307 = vsel %vm1349, %v3263, 0.0
      %3308 = vadd.xlane.f32.xlu0 %v3307
      %v3309 = vpop.xlane.xlu0 %3308
      %v3310 = vsel %vm1349, %v3264, 0.0
      %3311 = vadd.xlane.f32.xlu0 %v3310
      %v3312 = vpop.xlane.xlu0 %3311
      %v3313 = vsel %vm1349, %v3265, 0.0
      %3314 = vadd.xlane.f32.xlu0 %v3313
      %v3315 = vpop.xlane.xlu0 %3314
      %v3316 = vsel %vm1349, %v3266, 0.0
      %3317 = vadd.xlane.f32.xlu0 %v3316
      %v3318 = vpop.xlane.xlu0 %3317
      %v3319 = vsel %vm1349, %v3267, 0.0
      %3320 = vadd.xlane.f32.xlu0 %v3319
      %v3321 = vpop.xlane.xlu0 %3320
      %v3322 = vsel %vm1349, %v3268, 0.0
      %3323 = vadd.xlane.f32.xlu0 %v3322
      %v3324 = vpop.xlane.xlu0 %3323
      %v3325 = vsel %vm1349, %v3269, 0.0
      %3326 = vadd.xlane.f32.xlu0 %v3325
      %v3327 = vpop.xlane.xlu0 %3326
      %v3328 = vsel %vm1349, %v3270, 0.0
      %3329 = vadd.xlane.f32.xlu0 %v3328
      %v3330 = vpop.xlane.xlu0 %3329
      %v3331 = vsel %vm1349, %v3271, 0.0
      %3332 = vadd.xlane.f32.xlu0 %v3331
      %v3333 = vpop.xlane.xlu0 %3332
      %v3334 = vsel %vm1349, %v3272, 0.0
      %3335 = vadd.xlane.f32.xlu0 %v3334
      %v3336 = vpop.xlane.xlu0 %3335
      %v3337 = vsel %vm1349, %v3273, 0.0
      %3338 = vadd.xlane.f32.xlu0 %v3337
      %v3339 = vpop.xlane.xlu0 %3338
      %v3340 = vsel %vm1349, %v3274, 0.0
      %3341 = vadd.xlane.f32.xlu0 %v3340
      %v3342 = vpop.xlane.xlu0 %3341
      %v3343 = vsel %vm1349, %v3275, 0.0
      %3344 = vadd.xlane.f32.xlu0 %v3343
      %v3345 = vpop.xlane.xlu0 %3344
      %v3346 = vsel %vm1349, %v3276, 0.0
      %3347 = vadd.xlane.f32.xlu0 %v3346
      %v3348 = vpop.xlane.xlu0 %3347
      %v3349 = vsel %vm1349, %v3277, 0.0
      %3350 = vadd.xlane.f32.xlu0 %v3349
      %v3351 = vpop.xlane.xlu0 %3350
      %v3352 = vsel %vm1349, %v3278, 0.0
      %3353 = vadd.xlane.f32.xlu0 %v3352
      %v3354 = vpop.xlane.xlu0 %3353
      %v3355 = vsel %vm1349, %v3279, 0.0
      %3356 = vadd.xlane.f32.xlu0 %v3355
      %v3357 = vpop.xlane.xlu0 %3356
      %v3358 = vsel %vm1349, %v3280, 0.0
      %3359 = vadd.xlane.f32.xlu0 %v3358
      %v3360 = vpop.xlane.xlu0 %3359
      %v3361 = vsel %vm1349, %v3281, 0.0
      %3362 = vadd.xlane.f32.xlu0 %v3361
      %v3363 = vpop.xlane.xlu0 %3362
      %v3364 = vsel %vm1349, %v3282, 0.0
      %3365 = vadd.xlane.f32.xlu0 %v3364
      %v3366 = vpop.xlane.xlu0 %3365
      %v3367 = vsel %vm1349, %v3283, 0.0
      %3368 = vadd.xlane.f32.xlu0 %v3367
      %v3369 = vpop.xlane.xlu0 %3368
      %v3370 = vsel %vm1349, %v3284, 0.0
      %3371 = vadd.xlane.f32.xlu0 %v3370
      %v3372 = vpop.xlane.xlu0 %3371
      %v3373 = vsel %vm1349, %v3285, 0.0
      %3374 = vadd.xlane.f32.xlu0 %v3373
      %v3375 = vpop.xlane.xlu0 %3374
      %v3376 = vsel %vm1349, %v3286, 0.0
      %3377 = vadd.xlane.f32.xlu0 %v3376
      %v3378 = vpop.xlane.xlu0 %3377
      %v3379 = vsel %vm1349, %v3287, 0.0
      %3380 = vadd.xlane.f32.xlu0 %v3379
      %v3381 = vpop.xlane.xlu0 %3380
      %v3382 = vsel %vm1349, %v3288, 0.0
      %3383 = vadd.xlane.f32.xlu0 %v3382
      %v3384 = vpop.xlane.xlu0 %3383
      %v3385 = vsel %vm1349, %v3289, 0.0
      %3386 = vadd.xlane.f32.xlu0 %v3385
      %v3387 = vpop.xlane.xlu0 %3386
      %v3388 = vmul.f32 %v3294, %v1446
      %v3389 = vmul.f32 %v3297, %v1446
      %v3390 = vmul.f32 %v3300, %v1446
      %v3391 = vmul.f32 %v3303, %v1446
      %v3392 = vmul.f32 %v3306, %v1446
      %v3393 = vmul.f32 %v3309, %v1446
      %v3394 = vmul.f32 %v3312, %v1446
      %v3395 = vmul.f32 %v3315, %v1446
      %v3396 = vmul.f32 %v3318, %v1446
      %v3397 = vmul.f32 %v3321, %v1446
      %v3398 = vmul.f32 %v3324, %v1446
      %v3399 = vmul.f32 %v3327, %v1446
      %v3400 = vmul.f32 %v3330, %v1446
      %v3401 = vmul.f32 %v3333, %v1446
      %v3402 = vmul.f32 %v3336, %v1446
      %v3403 = vmul.f32 %v3339, %v1446
      %v3404 = vmul.f32 %v3342, %v1446
      %v3405 = vmul.f32 %v3345, %v1446
      %v3406 = vmul.f32 %v3348, %v1446
      %v3407 = vmul.f32 %v3351, %v1446
      %v3408 = vmul.f32 %v3354, %v1446
      %v3409 = vmul.f32 %v3357, %v1446
      %v3410 = vmul.f32 %v3360, %v1446
      %v3411 = vmul.f32 %v3363, %v1446
      %v3412 = vmul.f32 %v3366, %v1446
      %v3413 = vmul.f32 %v3369, %v1446
      %v3414 = vmul.f32 %v3372, %v1446
      %v3415 = vmul.f32 %v3375, %v1446
      %v3416 = vmul.f32 %v3378, %v1446
      %v3417 = vmul.f32 %v3381, %v1446
      %v3418 = vmul.f32 %v3384, %v1446
      %v3419 = vmul.f32 %v3387, %v1446
      %v3420 = vsub.f32 %v3258, %v3388
      %v3421 = vsub.f32 %v3259, %v3389
      %v3422 = vsub.f32 %v3260, %v3390
      %v3423 = vsub.f32 %v3261, %v3391
      %v3424 = vsub.f32 %v3262, %v3392
      %v3425 = vsub.f32 %v3263, %v3393
      %v3426 = vsub.f32 %v3264, %v3394
      %v3427 = vsub.f32 %v3265, %v3395
      %v3428 = vsub.f32 %v3266, %v3396
      %v3429 = vsub.f32 %v3267, %v3397
      %v3430 = vsub.f32 %v3268, %v3398
      %v3431 = vsub.f32 %v3269, %v3399
      %v3432 = vsub.f32 %v3270, %v3400
      %v3433 = vsub.f32 %v3271, %v3401
      %v3434 = vsub.f32 %v3272, %v3402
      %v3435 = vsub.f32 %v3273, %v3403
      %v3436 = vsub.f32 %v3274, %v3404
      %v3437 = vsub.f32 %v3275, %v3405
      %v3438 = vsub.f32 %v3276, %v3406
      %v3439 = vsub.f32 %v3277, %v3407
      %v3440 = vsub.f32 %v3278, %v3408
      %v3441 = vsub.f32 %v3279, %v3409
      %v3442 = vsub.f32 %v3280, %v3410
      %v3443 = vsub.f32 %v3281, %v3411
      %v3444 = vsub.f32 %v3282, %v3412
      %v3445 = vsub.f32 %v3283, %v3413
      %v3446 = vsub.f32 %v3284, %v3414
      %v3447 = vsub.f32 %v3285, %v3415
      %v3448 = vsub.f32 %v3286, %v3416
      %v3449 = vsub.f32 %v3287, %v3417
      %v3450 = vsub.f32 %v3288, %v3418
      %v3451 = vsub.f32 %v3289, %v3419
      %v3452 = vmul.f32 %v3420, %v3420
      %v3453 = vmul.f32 %v3421, %v3421
      %v3454 = vmul.f32 %v3422, %v3422
      %v3455 = vmul.f32 %v3423, %v3423
      %v3456 = vmul.f32 %v3424, %v3424
      %v3457 = vmul.f32 %v3425, %v3425
      %v3458 = vmul.f32 %v3426, %v3426
      %v3459 = vmul.f32 %v3427, %v3427
      %v3460 = vmul.f32 %v3428, %v3428
      %v3461 = vmul.f32 %v3429, %v3429
      %v3462 = vmul.f32 %v3430, %v3430
      %v3463 = vmul.f32 %v3431, %v3431
      %v3464 = vmul.f32 %v3432, %v3432
      %v3465 = vmul.f32 %v3433, %v3433
      %v3466 = vmul.f32 %v3434, %v3434
      %v3467 = vmul.f32 %v3435, %v3435
      %v3468 = vmul.f32 %v3436, %v3436
      %v3469 = vmul.f32 %v3437, %v3437
      %v3470 = vmul.f32 %v3438, %v3438
      %v3471 = vmul.f32 %v3439, %v3439
      %v3472 = vmul.f32 %v3440, %v3440
      %v3473 = vmul.f32 %v3441, %v3441
      %v3474 = vmul.f32 %v3442, %v3442
      %v3475 = vmul.f32 %v3443, %v3443
      %v3476 = vmul.f32 %v3444, %v3444
      %v3477 = vmul.f32 %v3445, %v3445
      %v3478 = vmul.f32 %v3446, %v3446
      %v3479 = vmul.f32 %v3447, %v3447
      %v3480 = vmul.f32 %v3448, %v3448
      %v3481 = vmul.f32 %v3449, %v3449
      %v3482 = vmul.f32 %v3450, %v3450
      %v3483 = vmul.f32 %v3451, %v3451
      %v3484 = vsel %vm1349, %v3452, 0.0
      %3485 = vadd.xlane.f32.xlu0 %v3484
      %v3486 = vpop.xlane.xlu0 %3485
      %v3487 = vsel %vm1349, %v3453, 0.0
      %3488 = vadd.xlane.f32.xlu0 %v3487
      %v3489 = vpop.xlane.xlu0 %3488
      %v3490 = vsel %vm1349, %v3454, 0.0
      %3491 = vadd.xlane.f32.xlu0 %v3490
      %v3492 = vpop.xlane.xlu0 %3491
      %v3493 = vsel %vm1349, %v3455, 0.0
      %3494 = vadd.xlane.f32.xlu0 %v3493
      %v3495 = vpop.xlane.xlu0 %3494
      %v3496 = vsel %vm1349, %v3456, 0.0
      %3497 = vadd.xlane.f32.xlu0 %v3496
      %v3498 = vpop.xlane.xlu0 %3497
      %v3499 = vsel %vm1349, %v3457, 0.0
      %3500 = vadd.xlane.f32.xlu0 %v3499
      %v3501 = vpop.xlane.xlu0 %3500
      %v3502 = vsel %vm1349, %v3458, 0.0
      %3503 = vadd.xlane.f32.xlu0 %v3502
      %v3504 = vpop.xlane.xlu0 %3503
      %v3505 = vsel %vm1349, %v3459, 0.0
      %3506 = vadd.xlane.f32.xlu0 %v3505
      %v3507 = vpop.xlane.xlu0 %3506
      %v3508 = vsel %vm1349, %v3460, 0.0
      %3509 = vadd.xlane.f32.xlu0 %v3508
      %v3510 = vpop.xlane.xlu0 %3509
      %v3511 = vsel %vm1349, %v3461, 0.0
      %3512 = vadd.xlane.f32.xlu0 %v3511
      %v3513 = vpop.xlane.xlu0 %3512
      %v3514 = vsel %vm1349, %v3462, 0.0
      %3515 = vadd.xlane.f32.xlu0 %v3514
      %v3516 = vpop.xlane.xlu0 %3515
      %v3517 = vsel %vm1349, %v3463, 0.0
      %3518 = vadd.xlane.f32.xlu0 %v3517
      %v3519 = vpop.xlane.xlu0 %3518
      %v3520 = vsel %vm1349, %v3464, 0.0
      %3521 = vadd.xlane.f32.xlu0 %v3520
      %v3522 = vpop.xlane.xlu0 %3521
      %v3523 = vsel %vm1349, %v3465, 0.0
      %3524 = vadd.xlane.f32.xlu0 %v3523
      %v3525 = vpop.xlane.xlu0 %3524
      %v3526 = vsel %vm1349, %v3466, 0.0
      %3527 = vadd.xlane.f32.xlu0 %v3526
      %v3528 = vpop.xlane.xlu0 %3527
      %v3529 = vsel %vm1349, %v3467, 0.0
      %3530 = vadd.xlane.f32.xlu0 %v3529
      %v3531 = vpop.xlane.xlu0 %3530
      %v3532 = vsel %vm1349, %v3468, 0.0
      %3533 = vadd.xlane.f32.xlu0 %v3532
      %v3534 = vpop.xlane.xlu0 %3533
      %v3535 = vsel %vm1349, %v3469, 0.0
      %3536 = vadd.xlane.f32.xlu0 %v3535
      %v3537 = vpop.xlane.xlu0 %3536
      %v3538 = vsel %vm1349, %v3470, 0.0
      %3539 = vadd.xlane.f32.xlu0 %v3538
      %v3540 = vpop.xlane.xlu0 %3539
      %v3541 = vsel %vm1349, %v3471, 0.0
      %3542 = vadd.xlane.f32.xlu0 %v3541
      %v3543 = vpop.xlane.xlu0 %3542
      %v3544 = vsel %vm1349, %v3472, 0.0
      %3545 = vadd.xlane.f32.xlu0 %v3544
      %v3546 = vpop.xlane.xlu0 %3545
      %v3547 = vsel %vm1349, %v3473, 0.0
      %3548 = vadd.xlane.f32.xlu0 %v3547
      %v3549 = vpop.xlane.xlu0 %3548
      %v3550 = vsel %vm1349, %v3474, 0.0
      %3551 = vadd.xlane.f32.xlu0 %v3550
      %v3552 = vpop.xlane.xlu0 %3551
      %v3553 = vsel %vm1349, %v3475, 0.0
      %3554 = vadd.xlane.f32.xlu0 %v3553
      %v3555 = vpop.xlane.xlu0 %3554
      %v3556 = vsel %vm1349, %v3476, 0.0
      %3557 = vadd.xlane.f32.xlu0 %v3556
      %v3558 = vpop.xlane.xlu0 %3557
      %v3559 = vsel %vm1349, %v3477, 0.0
      %3560 = vadd.xlane.f32.xlu0 %v3559
      %v3561 = vpop.xlane.xlu0 %3560
      %v3562 = vsel %vm1349, %v3478, 0.0
      %3563 = vadd.xlane.f32.xlu0 %v3562
      %v3564 = vpop.xlane.xlu0 %3563
      %v3565 = vsel %vm1349, %v3479, 0.0
      %3566 = vadd.xlane.f32.xlu0 %v3565
      %v3567 = vpop.xlane.xlu0 %3566
      %v3568 = vsel %vm1349, %v3480, 0.0
      %3569 = vadd.xlane.f32.xlu0 %v3568
      %v3570 = vpop.xlane.xlu0 %3569
      %v3571 = vsel %vm1349, %v3481, 0.0
      %3572 = vadd.xlane.f32.xlu0 %v3571
      %v3573 = vpop.xlane.xlu0 %3572
      %v3574 = vsel %vm1349, %v3482, 0.0
      %3575 = vadd.xlane.f32.xlu0 %v3574
      %v3576 = vpop.xlane.xlu0 %3575
      %v3577 = vsel %vm1349, %v3483, 0.0
      %3578 = vadd.xlane.f32.xlu0 %v3577
      %v3579 = vpop.xlane.xlu0 %3578
      %v3580 = vmul.f32 %v3486, %v1446
      %v3581 = vmul.f32 %v3489, %v1446
      %v3582 = vmul.f32 %v3492, %v1446
      %v3583 = vmul.f32 %v3495, %v1446
      %v3584 = vmul.f32 %v3498, %v1446
      %v3585 = vmul.f32 %v3501, %v1446
      %v3586 = vmul.f32 %v3504, %v1446
      %v3587 = vmul.f32 %v3507, %v1446
      %v3588 = vmul.f32 %v3510, %v1446
      %v3589 = vmul.f32 %v3513, %v1446
      %v3590 = vmul.f32 %v3516, %v1446
      %v3591 = vmul.f32 %v3519, %v1446
      %v3592 = vmul.f32 %v3522, %v1446
      %v3593 = vmul.f32 %v3525, %v1446
      %v3594 = vmul.f32 %v3528, %v1446
      %v3595 = vmul.f32 %v3531, %v1446
      %v3596 = vmul.f32 %v3534, %v1446
      %v3597 = vmul.f32 %v3537, %v1446
      %v3598 = vmul.f32 %v3540, %v1446
      %v3599 = vmul.f32 %v3543, %v1446
      %v3600 = vmul.f32 %v3546, %v1446
      %v3601 = vmul.f32 %v3549, %v1446
      %v3602 = vmul.f32 %v3552, %v1446
      %v3603 = vmul.f32 %v3555, %v1446
      %v3604 = vmul.f32 %v3558, %v1446
      %v3605 = vmul.f32 %v3561, %v1446
      %v3606 = vmul.f32 %v3564, %v1446
      %v3607 = vmul.f32 %v3567, %v1446
      %v3608 = vmul.f32 %v3570, %v1446
      %v3609 = vmul.f32 %v3573, %v1446
      %v3610 = vmul.f32 %v3576, %v1446
      %v3611 = vmul.f32 %v3579, %v1446
      %v3612 = vadd.f32 %v3580, 1e-05
      %v3613 = vadd.f32 %v3581, 1e-05
      %v3614 = vadd.f32 %v3582, 1e-05
      %v3615 = vadd.f32 %v3583, 1e-05
      %v3616 = vadd.f32 %v3584, 1e-05
      %v3617 = vadd.f32 %v3585, 1e-05
      %v3618 = vadd.f32 %v3586, 1e-05
      %v3619 = vadd.f32 %v3587, 1e-05
      %v3620 = vadd.f32 %v3588, 1e-05
      %v3621 = vadd.f32 %v3589, 1e-05
      %v3622 = vadd.f32 %v3590, 1e-05
      %v3623 = vadd.f32 %v3591, 1e-05
      %v3624 = vadd.f32 %v3592, 1e-05
      %v3625 = vadd.f32 %v3593, 1e-05
      %v3626 = vadd.f32 %v3594, 1e-05
      %v3627 = vadd.f32 %v3595, 1e-05
      %v3628 = vadd.f32 %v3596, 1e-05
      %v3629 = vadd.f32 %v3597, 1e-05
      %v3630 = vadd.f32 %v3598, 1e-05
      %v3631 = vadd.f32 %v3599, 1e-05
      %v3632 = vadd.f32 %v3600, 1e-05
      %v3633 = vadd.f32 %v3601, 1e-05
      %v3634 = vadd.f32 %v3602, 1e-05
      %v3635 = vadd.f32 %v3603, 1e-05
      %v3636 = vadd.f32 %v3604, 1e-05
      %v3637 = vadd.f32 %v3605, 1e-05
      %v3638 = vadd.f32 %v3606, 1e-05
      %v3639 = vadd.f32 %v3607, 1e-05
      %v3640 = vadd.f32 %v3608, 1e-05
      %v3641 = vadd.f32 %v3609, 1e-05
      %v3642 = vadd.f32 %v3610, 1e-05
      %v3643 = vadd.f32 %v3611, 1e-05
      %v3644 = vrsqrt.pop %v3612
      %v3645 = vrsqrt.pop %v3613
      %v3646 = vrsqrt.pop %v3614
      %v3647 = vrsqrt.pop %v3615
      %v3648 = vrsqrt.pop %v3616
      %v3649 = vrsqrt.pop %v3617
      %v3650 = vrsqrt.pop %v3618
      %v3651 = vrsqrt.pop %v3619
      %v3652 = vrsqrt.pop %v3620
      %v3653 = vrsqrt.pop %v3621
      %v3654 = vrsqrt.pop %v3622
      %v3655 = vrsqrt.pop %v3623
      %v3656 = vrsqrt.pop %v3624
      %v3657 = vrsqrt.pop %v3625
      %v3658 = vrsqrt.pop %v3626
      %v3659 = vrsqrt.pop %v3627
      %v3660 = vrsqrt.pop %v3628
      %v3661 = vrsqrt.pop %v3629
      %v3662 = vrsqrt.pop %v3630
      %v3663 = vrsqrt.pop %v3631
      %v3664 = vrsqrt.pop %v3632
      %v3665 = vrsqrt.pop %v3633
      %v3666 = vrsqrt.pop %v3634
      %v3667 = vrsqrt.pop %v3635
      %v3668 = vrsqrt.pop %v3636
      %v3669 = vrsqrt.pop %v3637
      %v3670 = vrsqrt.pop %v3638
      %v3671 = vrsqrt.pop %v3639
      %v3672 = vrsqrt.pop %v3640
      %v3673 = vrsqrt.pop %v3641
      %v3674 = vrsqrt.pop %v3642
      %v3675 = vrsqrt.pop %v3643
      %v3676 = vmul.f32 %v3420, %v3644
      %v3677 = vmul.f32 %v3421, %v3645
      %v3678 = vmul.f32 %v3422, %v3646
      %v3679 = vmul.f32 %v3423, %v3647
      %v3680 = vmul.f32 %v3424, %v3648
      %v3681 = vmul.f32 %v3425, %v3649
      %v3682 = vmul.f32 %v3426, %v3650
      %v3683 = vmul.f32 %v3427, %v3651
      %v3684 = vmul.f32 %v3428, %v3652
      %v3685 = vmul.f32 %v3429, %v3653
      %v3686 = vmul.f32 %v3430, %v3654
      %v3687 = vmul.f32 %v3431, %v3655
      %v3688 = vmul.f32 %v3432, %v3656
      %v3689 = vmul.f32 %v3433, %v3657
      %v3690 = vmul.f32 %v3434, %v3658
      %v3691 = vmul.f32 %v3435, %v3659
      %v3692 = vmul.f32 %v3436, %v3660
      %v3693 = vmul.f32 %v3437, %v3661
      %v3694 = vmul.f32 %v3438, %v3662
      %v3695 = vmul.f32 %v3439, %v3663
      %v3696 = vmul.f32 %v3440, %v3664
      %v3697 = vmul.f32 %v3441, %v3665
      %v3698 = vmul.f32 %v3442, %v3666
      %v3699 = vmul.f32 %v3443, %v3667
      %v3700 = vmul.f32 %v3444, %v3668
      %v3701 = vmul.f32 %v3445, %v3669
      %v3702 = vmul.f32 %v3446, %v3670
      %v3703 = vmul.f32 %v3447, %v3671
      %v3704 = vmul.f32 %v3448, %v3672
      %v3705 = vmul.f32 %v3449, %v3673
      %v3706 = vmul.f32 %v3450, %v3674
      %v3707 = vmul.f32 %v3451, %v3675
      %v3709 = vlaneseq
      %v3710 = vshrl.u32 %v3709, 7
      %v3711 = vsub.s32 0, %v3710
      %v3712 = vrot.slane %v3290, %v3711
      %v3714 = vmul.f32 %v3676, %v3712
      %v3715 = vmul.f32 %v3677, %v3712
      %v3716 = vmul.f32 %v3678, %v3712
      %v3717 = vmul.f32 %v3679, %v3712
      %v3718 = vmul.f32 %v3680, %v3712
      %v3719 = vmul.f32 %v3681, %v3712
      %v3720 = vmul.f32 %v3682, %v3712
      %v3721 = vmul.f32 %v3683, %v3712
      %v3722 = vmul.f32 %v3684, %v3712
      %v3723 = vmul.f32 %v3685, %v3712
      %v3724 = vmul.f32 %v3686, %v3712
      %v3725 = vmul.f32 %v3687, %v3712
      %v3726 = vmul.f32 %v3688, %v3712
      %v3727 = vmul.f32 %v3689, %v3712
      %v3728 = vmul.f32 %v3690, %v3712
      %v3729 = vmul.f32 %v3691, %v3712
      %v3730 = vmul.f32 %v3692, %v3712
      %v3731 = vmul.f32 %v3693, %v3712
      %v3732 = vmul.f32 %v3694, %v3712
      %v3733 = vmul.f32 %v3695, %v3712
      %v3734 = vmul.f32 %v3696, %v3712
      %v3735 = vmul.f32 %v3697, %v3712
      %v3736 = vmul.f32 %v3698, %v3712
      %v3737 = vmul.f32 %v3699, %v3712
      %v3738 = vmul.f32 %v3700, %v3712
      %v3739 = vmul.f32 %v3701, %v3712
      %v3740 = vmul.f32 %v3702, %v3712
      %v3741 = vmul.f32 %v3703, %v3712
      %v3742 = vmul.f32 %v3704, %v3712
      %v3743 = vmul.f32 %v3705, %v3712
      %v3744 = vmul.f32 %v3706, %v3712
      %v3745 = vmul.f32 %v3707, %v3712
      %v3747 = vlaneseq
      %v3748 = vshrl.u32 %v3747, 7
      %v3749 = vsub.s32 0, %v3748
      %v3750 = vrot.slane %v3291, %v3749
      %v3752 = vadd.f32 %v3714, %v3750
      %v3753 = vadd.f32 %v3715, %v3750
      %v3754 = vadd.f32 %v3716, %v3750
      %v3755 = vadd.f32 %v3717, %v3750
      %v3756 = vadd.f32 %v3718, %v3750
      %v3757 = vadd.f32 %v3719, %v3750
      %v3758 = vadd.f32 %v3720, %v3750
      %v3759 = vadd.f32 %v3721, %v3750
      %v3760 = vadd.f32 %v3722, %v3750
      %v3761 = vadd.f32 %v3723, %v3750
      %v3762 = vadd.f32 %v3724, %v3750
      %v3763 = vadd.f32 %v3725, %v3750
      %v3764 = vadd.f32 %v3726, %v3750
      %v3765 = vadd.f32 %v3727, %v3750
      %v3766 = vadd.f32 %v3728, %v3750
      %v3767 = vadd.f32 %v3729, %v3750
      %v3768 = vadd.f32 %v3730, %v3750
      %v3769 = vadd.f32 %v3731, %v3750
      %v3770 = vadd.f32 %v3732, %v3750
      %v3771 = vadd.f32 %v3733, %v3750
      %v3772 = vadd.f32 %v3734, %v3750
      %v3773 = vadd.f32 %v3735, %v3750
      %v3774 = vadd.f32 %v3736, %v3750
      %v3775 = vadd.f32 %v3737, %v3750
      %v3776 = vadd.f32 %v3738, %v3750
      %v3777 = vadd.f32 %v3739, %v3750
      %v3778 = vadd.f32 %v3740, %v3750
      %v3779 = vadd.f32 %v3741, %v3750
      %v3780 = vadd.f32 %v3742, %v3750
      %v3781 = vadd.f32 %v3743, %v3750
      %v3782 = vadd.f32 %v3744, %v3750
      %v3783 = vadd.f32 %v3745, %v3750
      %v3784 = vld [vmem:[%s759] sm:$0xf]
      %v3785 = vld [vmem:[%s759 + $0x4] sm:$0xf]
      %v3786 = vld [vmem:[%s759 + $0x8] sm:$0xf]
      %v3787 = vld [vmem:[%s759 + $0xc] sm:$0xf]
      %v3788 = vpack.c.bf16 %v3753, %v3752
      %v3789 = vpack.c.bf16 %v3755, %v3754
      %v3790 = vpack.c.bf16 %v3757, %v3756
      %v3791 = vpack.c.bf16 %v3759, %v3758
      %v3792 = vpack.c.bf16 %v3761, %v3760
      %v3793 = vpack.c.bf16 %v3763, %v3762
      %v3794 = vpack.c.bf16 %v3765, %v3764
      %v3795 = vpack.c.bf16 %v3767, %v3766
      %v3796 = vpack.c.bf16 %v3769, %v3768
      %v3797 = vpack.c.bf16 %v3771, %v3770
      %v3798 = vpack.c.bf16 %v3773, %v3772
      %v3799 = vpack.c.bf16 %v3775, %v3774
      %v3800 = vpack.c.bf16 %v3777, %v3776
      %v3801 = vpack.c.bf16 %v3779, %v3778
      %v3802 = vpack.c.bf16 %v3781, %v3780
      %v3803 = vpack.c.bf16 %v3783, %v3782
      %v3804 = vld [vmem:[%s763] sm:$0x1]
      %v3806 = vlaneseq
      %v3807 = vshrl.u32 %v3806, 7
      %v3808 = vsub.s32 0, %v3807
      %v3809 = vrot.slane %v3804, %v3808
      %v3815 = vunpack.c.l.b16 %v3784
      %v3816 = vunpack.c.l.b16 %v3785
      %v3817 = vunpack.c.l.b16 %v3786
      %v3818 = vunpack.c.l.b16 %v3787
      %v3819 = vpack.c.b16 %v3816, %v3815
      %v3820 = vpack.c.b16 %v3818, %v3817
      %v3824 = vsel %vm1349, %v3788, 0
      %v3827 = vsel %vm1349, %v3789, 0
      %v3830 = vsel %vm1349, %v3790, 0
      %v3833 = vsel %vm1349, %v3791, 0
      %v3836 = vsel %vm1349, %v3792, 0
      %v3839 = vsel %vm1349, %v3793, 0
      %v3842 = vsel %vm1349, %v3794, 0
      %v3845 = vsel %vm1349, %v3795, 0
      %v3848 = vsel %vm1349, %v3796, 0
      %v3851 = vsel %vm1349, %v3797, 0
      %v3854 = vsel %vm1349, %v3798, 0
      %v3857 = vsel %vm1349, %v3799, 0
      %v3860 = vsel %vm1349, %v3800, 0
      %v3863 = vsel %vm1349, %v3801, 0
      %v3866 = vsel %vm1349, %v3802, 0
      %v3869 = vsel %vm1349, %v3803, 0
      %3871 = vmatprep.subr.bf16.mxu0 0
      %3872 = vmatpush1.bf16.msra.mxu0 0
      %3873 = vmatprep.subr.bf16.mxu0 0
      %3874 = vmatpush1.bf16.msra.mxu0 0
      %3875 = vmatprep.subr.bf16.mxu0 0
      %3876 = vmatpush1.bf16.msra.mxu0 0
      %3877 = vmatprep.subr.bf16.mxu0 0
      %3878 = vmatpush1.bf16.msra.mxu0 0
      %3879 = vmatprep.subr.bf16.mxu0 0
      %3880 = vmatpush1.bf16.msra.mxu0 0
      %3881 = vmatprep.subr.bf16.mxu0 0
      %3882 = vmatpush1.bf16.msra.mxu0 0
      %3883 = vmatprep.subr.bf16.mxu0 0
      %3884 = vmatpush1.bf16.msra.mxu0 %v3820
      %3885 = vmatprep.subr.bf16.mxu0 0
      %3886 = vmatpush1.bf16.msra.mxu0 %v3819
      %3887 = vmatprep.subr.bf16.mxu0 0
      %3888 = vmatpush2.bf16.msra.mxu0 0
      %3889 = vmatprep.subr.bf16.mxu0 0
      %3890 = vmatpush2.bf16.msra.mxu0 0
      %3891 = vmatprep.subr.bf16.mxu0 0
      %3892 = vmatpush2.bf16.msra.mxu0 0
      %3893 = vmatprep.subr.bf16.mxu0 0
      %3894 = vmatpush2.bf16.msra.mxu0 0
      %3895 = vmatprep.subr.bf16.mxu0 0
      %3896 = vmatpush2.bf16.msra.mxu0 0
      %3897 = vmatprep.subr.bf16.mxu0 0
      %3898 = vmatpush2.bf16.msra.mxu0 0
      %3899 = vmatprep.subr.bf16.mxu0 0
      %3900 = vmatpush2.bf16.msra.mxu0 0
      %3901 = vmatprep.subr.bf16.mxu0 0
      %3902 = vmatpush2.bf16.msra.mxu0 0
      %3903 = vmatprep.mubr.bf16.mxu0 0
      %3904 = vmatmul.mubr.bf16.gmra.mxu0 %v3824
      %v3905 = vpop.f32.mrf.mxu0
      %v3906 = vadd.f32 %v3809, %v3905
      %v3907 = vpop.f32.mrf.mxu0
      %v3908 = vpop.f32.mrf.mxu0
      %v3909 = vadd.f32 %v3809, %v3908
      %v3910 = vpop.f32.mrf.mxu0
      %3911 = vmatprep.mubr.bf16.mxu0 0
      %3912 = vmatmul.mubr.bf16.gmra.mxu0 %v3827
      %v3913 = vpop.f32.mrf.mxu0
      %v3914 = vadd.f32 %v3809, %v3913
      %v3915 = vpop.f32.mrf.mxu0
      %v3916 = vpop.f32.mrf.mxu0
      %v3917 = vadd.f32 %v3809, %v3916
      %v3918 = vpop.f32.mrf.mxu0
      %3919 = vmatprep.mubr.bf16.mxu0 0
      %3920 = vmatmul.mubr.bf16.gmra.mxu0 %v3830
      %v3921 = vpop.f32.mrf.mxu0
      %v3922 = vadd.f32 %v3809, %v3921
      %v3923 = vpop.f32.mrf.mxu0
      %v3924 = vpop.f32.mrf.mxu0
      %v3925 = vadd.f32 %v3809, %v3924
      %v3926 = vpop.f32.mrf.mxu0
      %3927 = vmatprep.mubr.bf16.mxu0 0
      %3928 = vmatmul.mubr.bf16.gmra.mxu0 %v3833
      %v3929 = vpop.f32.mrf.mxu0
      %v3930 = vadd.f32 %v3809, %v3929
      %v3931 = vpop.f32.mrf.mxu0
      %v3932 = vpop.f32.mrf.mxu0
      %v3933 = vadd.f32 %v3809, %v3932
      %v3934 = vpop.f32.mrf.mxu0
      %3935 = vmatprep.mubr.bf16.mxu0 0
      %3936 = vmatmul.mubr.bf16.gmra.mxu0 %v3836
      %v3937 = vpop.f32.mrf.mxu0
      %v3938 = vadd.f32 %v3809, %v3937
      %v3939 = vpop.f32.mrf.mxu0
      %v3940 = vpop.f32.mrf.mxu0
      %v3941 = vadd.f32 %v3809, %v3940
      %v3942 = vpop.f32.mrf.mxu0
      %3943 = vmatprep.mubr.bf16.mxu0 0
      %3944 = vmatmul.mubr.bf16.gmra.mxu0 %v3839
      %v3945 = vpop.f32.mrf.mxu0
      %v3946 = vadd.f32 %v3809, %v3945
      %v3947 = vpop.f32.mrf.mxu0
      %v3948 = vpop.f32.mrf.mxu0
      %v3949 = vadd.f32 %v3809, %v3948
      %v3950 = vpop.f32.mrf.mxu0
      %3951 = vmatprep.mubr.bf16.mxu0 0
      %3952 = vmatmul.mubr.bf16.gmra.mxu0 %v3842
      %v3953 = vpop.f32.mrf.mxu0
      %v3954 = vadd.f32 %v3809, %v3953
      %v3955 = vpop.f32.mrf.mxu0
      %v3956 = vpop.f32.mrf.mxu0
      %v3957 = vadd.f32 %v3809, %v3956
      %v3958 = vpop.f32.mrf.mxu0
      %3959 = vmatprep.mubr.bf16.mxu0 0
      %3960 = vmatmul.mubr.bf16.gmra.mxu0 %v3845
      %v3961 = vpop.f32.mrf.mxu0
      %v3962 = vadd.f32 %v3809, %v3961
      %v3963 = vpop.f32.mrf.mxu0
      %v3964 = vpop.f32.mrf.mxu0
      %v3965 = vadd.f32 %v3809, %v3964
      %v3966 = vpop.f32.mrf.mxu0
      %3967 = vmatprep.mubr.bf16.mxu0 0
      %3968 = vmatmul.mubr.bf16.gmra.mxu0 %v3848
      %v3969 = vpop.f32.mrf.mxu0
      %v3970 = vadd.f32 %v3809, %v3969
      %v3971 = vpop.f32.mrf.mxu0
      %v3972 = vpop.f32.mrf.mxu0
      %v3973 = vadd.f32 %v3809, %v3972
      %v3974 = vpop.f32.mrf.mxu0
      %3975 = vmatprep.mubr.bf16.mxu0 0
      %3976 = vmatmul.mubr.bf16.gmra.mxu0 %v3851
      %v3977 = vpop.f32.mrf.mxu0
      %v3978 = vadd.f32 %v3809, %v3977
      %v3979 = vpop.f32.mrf.mxu0
      %v3980 = vpop.f32.mrf.mxu0
      %v3981 = vadd.f32 %v3809, %v3980
      %v3982 = vpop.f32.mrf.mxu0
      %3983 = vmatprep.mubr.bf16.mxu0 0
      %3984 = vmatmul.mubr.bf16.gmra.mxu0 %v3854
      %v3985 = vpop.f32.mrf.mxu0
      %v3986 = vadd.f32 %v3809, %v3985
      %v3987 = vpop.f32.mrf.mxu0
      %v3988 = vpop.f32.mrf.mxu0
      %v3989 = vadd.f32 %v3809, %v3988
      %v3990 = vpop.f32.mrf.mxu0
      %3991 = vmatprep.mubr.bf16.mxu0 0
      %3992 = vmatmul.mubr.bf16.gmra.mxu0 %v3857
      %v3993 = vpop.f32.mrf.mxu0
      %v3994 = vadd.f32 %v3809, %v3993
      %v3995 = vpop.f32.mrf.mxu0
      %v3996 = vpop.f32.mrf.mxu0
      %v3997 = vadd.f32 %v3809, %v3996
      %v3998 = vpop.f32.mrf.mxu0
      %3999 = vmatprep.mubr.bf16.mxu0 0
      %4000 = vmatmul.mubr.bf16.gmra.mxu0 %v3860
      %v4001 = vpop.f32.mrf.mxu0
      %v4002 = vadd.f32 %v3809, %v4001
      %v4003 = vpop.f32.mrf.mxu0
      %v4004 = vpop.f32.mrf.mxu0
      %v4005 = vadd.f32 %v3809, %v4004
      %v4006 = vpop.f32.mrf.mxu0
      %4007 = vmatprep.mubr.bf16.mxu0 0
      %4008 = vmatmul.mubr.bf16.gmra.mxu0 %v3863
      %v4009 = vpop.f32.mrf.mxu0
      %v4010 = vadd.f32 %v3809, %v4009
      %v4011 = vpop.f32.mrf.mxu0
      %v4012 = vpop.f32.mrf.mxu0
      %v4013 = vadd.f32 %v3809, %v4012
      %v4014 = vpop.f32.mrf.mxu0
      %4015 = vmatprep.mubr.bf16.mxu0 0
      %4016 = vmatmul.mubr.bf16.gmra.mxu0 %v3866
      %v4017 = vpop.f32.mrf.mxu0
      %v4018 = vadd.f32 %v3809, %v4017
      %v4019 = vpop.f32.mrf.mxu0
      %v4020 = vpop.f32.mrf.mxu0
      %v4021 = vadd.f32 %v3809, %v4020
      %v4022 = vpop.f32.mrf.mxu0
      %4023 = vmatprep.mubr.bf16.mxu0 0
      %4024 = vmatmul.mubr.bf16.gmra.mxu0 %v3869
      %v4025 = vpop.f32.mrf.mxu0
      %v4026 = vadd.f32 %v3809, %v4025
      %v4027 = vpop.f32.mrf.mxu0
      %v4028 = vpop.f32.mrf.mxu0
      %v4029 = vadd.f32 %v3809, %v4028
      %v4030 = vpop.f32.mrf.mxu0
      %4031 = vdwg.mxu0
      %v4032 = vmul.f32 %v2617, %v3906
      %v4033 = vmul.f32 %v2619, %v3909
      %v4034 = vmul.f32 %v2621, %v3914
      %v4035 = vmul.f32 %v2623, %v3917
      %v4036 = vmul.f32 %v2625, %v3922
      %v4037 = vmul.f32 %v2627, %v3925
      %v4038 = vmul.f32 %v2629, %v3930
      %v4039 = vmul.f32 %v2631, %v3933
      %v4040 = vmul.f32 %v2633, %v3938
      %v4041 = vmul.f32 %v2635, %v3941
      %v4042 = vmul.f32 %v2637, %v3946
      %v4043 = vmul.f32 %v2639, %v3949
      %v4044 = vmul.f32 %v2641, %v3954
      %v4045 = vmul.f32 %v2643, %v3957
      %v4046 = vmul.f32 %v2645, %v3962
      %v4047 = vmul.f32 %v2647, %v3965
      %v4048 = vmul.f32 %v2649, %v3970
      %v4049 = vmul.f32 %v2651, %v3973
      %v4050 = vmul.f32 %v2653, %v3978
      %v4051 = vmul.f32 %v2655, %v3981
      %v4052 = vmul.f32 %v2657, %v3986
      %v4053 = vmul.f32 %v2659, %v3989
      %v4054 = vmul.f32 %v2661, %v3994
      %v4055 = vmul.f32 %v2663, %v3997
      %v4056 = vmul.f32 %v2665, %v4002
      %v4057 = vmul.f32 %v2667, %v4005
      %v4058 = vmul.f32 %v2669, %v4010
      %v4059 = vmul.f32 %v2671, %v4013
      %v4060 = vmul.f32 %v2673, %v4018
      %v4061 = vmul.f32 %v2675, %v4021
      %v4062 = vmul.f32 %v2677, %v4026
      %v4063 = vmul.f32 %v2679, %v4029
      %v4064 = vadd.f32 %v1315, %v4032
      %v4065 = vadd.f32 %v1316, %v4033
      %v4066 = vadd.f32 %v1317, %v4034
      %v4067 = vadd.f32 %v1318, %v4035
      %v4068 = vadd.f32 %v1319, %v4036
      %v4069 = vadd.f32 %v1320, %v4037
      %v4070 = vadd.f32 %v1321, %v4038
      %v4071 = vadd.f32 %v1322, %v4039
      %v4072 = vadd.f32 %v1323, %v4040
      %v4073 = vadd.f32 %v1324, %v4041
      %v4074 = vadd.f32 %v1325, %v4042
      %v4075 = vadd.f32 %v1326, %v4043
      %v4076 = vadd.f32 %v1327, %v4044
      %v4077 = vadd.f32 %v1328, %v4045
      %v4078 = vadd.f32 %v1329, %v4046
      %v4079 = vadd.f32 %v1330, %v4047
      %v4080 = vadd.f32 %v1331, %v4048
      %v4081 = vadd.f32 %v1332, %v4049
      %v4082 = vadd.f32 %v1333, %v4050
      %v4083 = vadd.f32 %v1334, %v4051
      %v4084 = vadd.f32 %v1335, %v4052
      %v4085 = vadd.f32 %v1336, %v4053
      %v4086 = vadd.f32 %v1337, %v4054
      %v4087 = vadd.f32 %v1338, %v4055
      %v4088 = vadd.f32 %v1339, %v4056
      %v4089 = vadd.f32 %v1340, %v4057
      %v4090 = vadd.f32 %v1341, %v4058
      %v4091 = vadd.f32 %v1342, %v4059
      %v4092 = vadd.f32 %v1343, %v4060
      %v4093 = vadd.f32 %v1344, %v4061
      %v4094 = vadd.f32 %v1345, %v4062
      %v4095 = vadd.f32 %v1346, %v4063
      %4096 = vst.msk [vmem:[#allocation2] sm:$0xff] %vm1349, %v4064
      %4097 = vst.msk [vmem:[#allocation2 + $0x8] sm:$0xff] %vm1349, %v4065
      %4098 = vst.msk [vmem:[#allocation2 + $0x10] sm:$0xff] %vm1349, %v4066
      %4099 = vst.msk [vmem:[#allocation2 + $0x18] sm:$0xff] %vm1349, %v4067
      %4100 = vst.msk [vmem:[#allocation2 + $0x20] sm:$0xff] %vm1349, %v4068
      %4101 = vst.msk [vmem:[#allocation2 + $0x28] sm:$0xff] %vm1349, %v4069
      %4102 = vst.msk [vmem:[#allocation2 + $0x30] sm:$0xff] %vm1349, %v4070
      %4103 = vst.msk [vmem:[#allocation2 + $0x38] sm:$0xff] %vm1349, %v4071
      %4104 = vst.msk [vmem:[#allocation2 + $0x40] sm:$0xff] %vm1349, %v4072
      %4105 = vst.msk [vmem:[#allocation2 + $0x48] sm:$0xff] %vm1349, %v4073
      %4106 = vst.msk [vmem:[#allocation2 + $0x50] sm:$0xff] %vm1349, %v4074
      %4107 = vst.msk [vmem:[#allocation2 + $0x58] sm:$0xff] %vm1349, %v4075
      %4108 = vst.msk [vmem:[#allocation2 + $0x60] sm:$0xff] %vm1349, %v4076
      %4109 = vst.msk [vmem:[#allocation2 + $0x68] sm:$0xff] %vm1349, %v4077
      %4110 = vst.msk [vmem:[#allocation2 + $0x70] sm:$0xff] %vm1349, %v4078
      %4111 = vst.msk [vmem:[#allocation2 + $0x78] sm:$0xff] %vm1349, %v4079
      %4112 = vst.msk [vmem:[#allocation2 + $0x80] sm:$0xff] %vm1349, %v4080
      %4113 = vst.msk [vmem:[#allocation2 + $0x88] sm:$0xff] %vm1349, %v4081
      %4114 = vst.msk [vmem:[#allocation2 + $0x90] sm:$0xff] %vm1349, %v4082
      %4115 = vst.msk [vmem:[#allocation2 + $0x98] sm:$0xff] %vm1349, %v4083
      %4116 = vst.msk [vmem:[#allocation2 + $0xa0] sm:$0xff] %vm1349, %v4084
      %4117 = vst.msk [vmem:[#allocation2 + $0xa8] sm:$0xff] %vm1349, %v4085
      %4118 = vst.msk [vmem:[#allocation2 + $0xb0] sm:$0xff] %vm1349, %v4086
      %4119 = vst.msk [vmem:[#allocation2 + $0xb8] sm:$0xff] %vm1349, %v4087
      %4120 = vst.msk [vmem:[#allocation2 + $0xc0] sm:$0xff] %vm1349, %v4088
      %4121 = vst.msk [vmem:[#allocation2 + $0xc8] sm:$0xff] %vm1349, %v4089
      %4122 = vst.msk [vmem:[#allocation2 + $0xd0] sm:$0xff] %vm1349, %v4090
      %4123 = vst.msk [vmem:[#allocation2 + $0xd8] sm:$0xff] %vm1349, %v4091
      %4124 = vst.msk [vmem:[#allocation2 + $0xe0] sm:$0xff] %vm1349, %v4092
      %4125 = vst.msk [vmem:[#allocation2 + $0xe8] sm:$0xff] %vm1349, %v4093
      %4126 = vst.msk [vmem:[#allocation2 + $0xf0] sm:$0xff] %vm1349, %v4094
      %4127 = vst.msk [vmem:[#allocation2 + $0xf8] sm:$0xff] %vm1349, %v4095
      %v4128 = vld [vmem:[#allocation2] sm:$0xff]
      %v4129 = vld [vmem:[#allocation2 + $0x8] sm:$0xff]
      %v4130 = vld [vmem:[#allocation2 + $0x10] sm:$0xff]
      %v4131 = vld [vmem:[#allocation2 + $0x18] sm:$0xff]
      %v4132 = vld [vmem:[#allocation2 + $0x20] sm:$0xff]
      %v4133 = vld [vmem:[#allocation2 + $0x28] sm:$0xff]
      %v4134 = vld [vmem:[#allocation2 + $0x30] sm:$0xff]
      %v4135 = vld [vmem:[#allocation2 + $0x38] sm:$0xff]
      %v4136 = vld [vmem:[#allocation2 + $0x40] sm:$0xff]
      %v4137 = vld [vmem:[#allocation2 + $0x48] sm:$0xff]
      %v4138 = vld [vmem:[#allocation2 + $0x50] sm:$0xff]
      %v4139 = vld [vmem:[#allocation2 + $0x58] sm:$0xff]
      %v4140 = vld [vmem:[#allocation2 + $0x60] sm:$0xff]
      %v4141 = vld [vmem:[#allocation2 + $0x68] sm:$0xff]
      %v4142 = vld [vmem:[#allocation2 + $0x70] sm:$0xff]
      %v4143 = vld [vmem:[#allocation2 + $0x78] sm:$0xff]
      %v4144 = vld [vmem:[#allocation2 + $0x80] sm:$0xff]
      %v4145 = vld [vmem:[#allocation2 + $0x88] sm:$0xff]
      %v4146 = vld [vmem:[#allocation2 + $0x90] sm:$0xff]
      %v4147 = vld [vmem:[#allocation2 + $0x98] sm:$0xff]
      %v4148 = vld [vmem:[#allocation2 + $0xa0] sm:$0xff]
      %v4149 = vld [vmem:[#allocation2 + $0xa8] sm:$0xff]
      %v4150 = vld [vmem:[#allocation2 + $0xb0] sm:$0xff]
      %v4151 = vld [vmem:[#allocation2 + $0xb8] sm:$0xff]
      %v4152 = vld [vmem:[#allocation2 + $0xc0] sm:$0xff]
      %v4153 = vld [vmem:[#allocation2 + $0xc8] sm:$0xff]
      %v4154 = vld [vmem:[#allocation2 + $0xd0] sm:$0xff]
      %v4155 = vld [vmem:[#allocation2 + $0xd8] sm:$0xff]
      %v4156 = vld [vmem:[#allocation2 + $0xe0] sm:$0xff]
      %v4157 = vld [vmem:[#allocation2 + $0xe8] sm:$0xff]
      %v4158 = vld [vmem:[#allocation2 + $0xf0] sm:$0xff]
      %v4159 = vld [vmem:[#allocation2 + $0xf8] sm:$0xff]
      %s4160 = scalar_lea.vmem %s733, 1
      %v4161 = vld [vmem:[%s4160] sm:$0x1]
      %s4162 = scalar_lea.vmem %s737, 1
      %v4163 = vld [vmem:[%s4162] sm:$0x1]
      %v4164 = vsel %vm1349, %v4128, 0.0
      %4165 = vadd.xlane.f32.xlu0 %v4164
      %v4166 = vpop.xlane.xlu0 %4165
      %v4167 = vsel %vm1349, %v4129, 0.0
      %4168 = vadd.xlane.f32.xlu0 %v4167
      %v4169 = vpop.xlane.xlu0 %4168
      %v4170 = vsel %vm1349, %v4130, 0.0
      %4171 = vadd.xlane.f32.xlu0 %v4170
      %v4172 = vpop.xlane.xlu0 %4171
      %v4173 = vsel %vm1349, %v4131, 0.0
      %4174 = vadd.xlane.f32.xlu0 %v4173
      %v4175 = vpop.xlane.xlu0 %4174
      %v4176 = vsel %vm1349, %v4132, 0.0
      %4177 = vadd.xlane.f32.xlu0 %v4176
      %v4178 = vpop.xlane.xlu0 %4177
      %v4179 = vsel %vm1349, %v4133, 0.0
      %4180 = vadd.xlane.f32.xlu0 %v4179
      %v4181 = vpop.xlane.xlu0 %4180
      %v4182 = vsel %vm1349, %v4134, 0.0
      %4183 = vadd.xlane.f32.xlu0 %v4182
      %v4184 = vpop.xlane.xlu0 %4183
      %v4185 = vsel %vm1349, %v4135, 0.0
      %4186 = vadd.xlane.f32.xlu0 %v4185
      %v4187 = vpop.xlane.xlu0 %4186
      %v4188 = vsel %vm1349, %v4136, 0.0
      %4189 = vadd.xlane.f32.xlu0 %v4188
      %v4190 = vpop.xlane.xlu0 %4189
      %v4191 = vsel %vm1349, %v4137, 0.0
      %4192 = vadd.xlane.f32.xlu0 %v4191
      %v4193 = vpop.xlane.xlu0 %4192
      %v4194 = vsel %vm1349, %v4138, 0.0
      %4195 = vadd.xlane.f32.xlu0 %v4194
      %v4196 = vpop.xlane.xlu0 %4195
      %v4197 = vsel %vm1349, %v4139, 0.0
      %4198 = vadd.xlane.f32.xlu0 %v4197
      %v4199 = vpop.xlane.xlu0 %4198
      %v4200 = vsel %vm1349, %v4140, 0.0
      %4201 = vadd.xlane.f32.xlu0 %v4200
      %v4202 = vpop.xlane.xlu0 %4201
      %v4203 = vsel %vm1349, %v4141, 0.0
      %4204 = vadd.xlane.f32.xlu0 %v4203
      %v4205 = vpop.xlane.xlu0 %4204
      %v4206 = vsel %vm1349, %v4142, 0.0
      %4207 = vadd.xlane.f32.xlu0 %v4206
      %v4208 = vpop.xlane.xlu0 %4207
      %v4209 = vsel %vm1349, %v4143, 0.0
      %4210 = vadd.xlane.f32.xlu0 %v4209
      %v4211 = vpop.xlane.xlu0 %4210
      %v4212 = vsel %vm1349, %v4144, 0.0
      %4213 = vadd.xlane.f32.xlu0 %v4212
      %v4214 = vpop.xlane.xlu0 %4213
      %v4215 = vsel %vm1349, %v4145, 0.0
      %4216 = vadd.xlane.f32.xlu0 %v4215
      %v4217 = vpop.xlane.xlu0 %4216
      %v4218 = vsel %vm1349, %v4146, 0.0
      %4219 = vadd.xlane.f32.xlu0 %v4218
      %v4220 = vpop.xlane.xlu0 %4219
      %v4221 = vsel %vm1349, %v4147, 0.0
      %4222 = vadd.xlane.f32.xlu0 %v4221
      %v4223 = vpop.xlane.xlu0 %4222
      %v4224 = vsel %vm1349, %v4148, 0.0
      %4225 = vadd.xlane.f32.xlu0 %v4224
      %v4226 = vpop.xlane.xlu0 %4225
      %v4227 = vsel %vm1349, %v4149, 0.0
      %4228 = vadd.xlane.f32.xlu0 %v4227
      %v4229 = vpop.xlane.xlu0 %4228
      %v4230 = vsel %vm1349, %v4150, 0.0
      %4231 = vadd.xlane.f32.xlu0 %v4230
      %v4232 = vpop.xlane.xlu0 %4231
      %v4233 = vsel %vm1349, %v4151, 0.0
      %4234 = vadd.xlane.f32.xlu0 %v4233
      %v4235 = vpop.xlane.xlu0 %4234
      %v4236 = vsel %vm1349, %v4152, 0.0
      %4237 = vadd.xlane.f32.xlu0 %v4236
      %v4238 = vpop.xlane.xlu0 %4237
      %v4239 = vsel %vm1349, %v4153, 0.0
      %4240 = vadd.xlane.f32.xlu0 %v4239
      %v4241 = vpop.xlane.xlu0 %4240
      %v4242 = vsel %vm1349, %v4154, 0.0
      %4243 = vadd.xlane.f32.xlu0 %v4242
      %v4244 = vpop.xlane.xlu0 %4243
      %v4245 = vsel %vm1349, %v4155, 0.0
      %4246 = vadd.xlane.f32.xlu0 %v4245
      %v4247 = vpop.xlane.xlu0 %4246
      %v4248 = vsel %vm1349, %v4156, 0.0
      %4249 = vadd.xlane.f32.xlu0 %v4248
      %v4250 = vpop.xlane.xlu0 %4249
      %v4251 = vsel %vm1349, %v4157, 0.0
      %4252 = vadd.xlane.f32.xlu0 %v4251
      %v4253 = vpop.xlane.xlu0 %4252
      %v4254 = vsel %vm1349, %v4158, 0.0
      %4255 = vadd.xlane.f32.xlu0 %v4254
      %v4256 = vpop.xlane.xlu0 %4255
      %v4257 = vsel %vm1349, %v4159, 0.0
      %4258 = vadd.xlane.f32.xlu0 %v4257
      %v4259 = vpop.xlane.xlu0 %4258
      %v4260 = vmul.f32 %v4166, %v1446
      %v4261 = vmul.f32 %v4169, %v1446
      %v4262 = vmul.f32 %v4172, %v1446
      %v4263 = vmul.f32 %v4175, %v1446
      %v4264 = vmul.f32 %v4178, %v1446
      %v4265 = vmul.f32 %v4181, %v1446
      %v4266 = vmul.f32 %v4184, %v1446
      %v4267 = vmul.f32 %v4187, %v1446
      %v4268 = vmul.f32 %v4190, %v1446
      %v4269 = vmul.f32 %v4193, %v1446
      %v4270 = vmul.f32 %v4196, %v1446
      %v4271 = vmul.f32 %v4199, %v1446
      %v4272 = vmul.f32 %v4202, %v1446
      %v4273 = vmul.f32 %v4205, %v1446
      %v4274 = vmul.f32 %v4208, %v1446
      %v4275 = vmul.f32 %v4211, %v1446
      %v4276 = vmul.f32 %v4214, %v1446
      %v4277 = vmul.f32 %v4217, %v1446
      %v4278 = vmul.f32 %v4220, %v1446
      %v4279 = vmul.f32 %v4223, %v1446
      %v4280 = vmul.f32 %v4226, %v1446
      %v4281 = vmul.f32 %v4229, %v1446
      %v4282 = vmul.f32 %v4232, %v1446
      %v4283 = vmul.f32 %v4235, %v1446
      %v4284 = vmul.f32 %v4238, %v1446
      %v4285 = vmul.f32 %v4241, %v1446
      %v4286 = vmul.f32 %v4244, %v1446
      %v4287 = vmul.f32 %v4247, %v1446
      %v4288 = vmul.f32 %v4250, %v1446
      %v4289 = vmul.f32 %v4253, %v1446
      %v4290 = vmul.f32 %v4256, %v1446
      %v4291 = vmul.f32 %v4259, %v1446
      %v4292 = vsub.f32 %v4128, %v4260
      %v4293 = vsub.f32 %v4129, %v4261
      %v4294 = vsub.f32 %v4130, %v4262
      %v4295 = vsub.f32 %v4131, %v4263
      %v4296 = vsub.f32 %v4132, %v4264
      %v4297 = vsub.f32 %v4133, %v4265
      %v4298 = vsub.f32 %v4134, %v4266
      %v4299 = vsub.f32 %v4135, %v4267
      %v4300 = vsub.f32 %v4136, %v4268
      %v4301 = vsub.f32 %v4137, %v4269
      %v4302 = vsub.f32 %v4138, %v4270
      %v4303 = vsub.f32 %v4139, %v4271
      %v4304 = vsub.f32 %v4140, %v4272
      %v4305 = vsub.f32 %v4141, %v4273
      %v4306 = vsub.f32 %v4142, %v4274
      %v4307 = vsub.f32 %v4143, %v4275
      %v4308 = vsub.f32 %v4144, %v4276
      %v4309 = vsub.f32 %v4145, %v4277
      %v4310 = vsub.f32 %v4146, %v4278
      %v4311 = vsub.f32 %v4147, %v4279
      %v4312 = vsub.f32 %v4148, %v4280
      %v4313 = vsub.f32 %v4149, %v4281
      %v4314 = vsub.f32 %v4150, %v4282
      %v4315 = vsub.f32 %v4151, %v4283
      %v4316 = vsub.f32 %v4152, %v4284
      %v4317 = vsub.f32 %v4153, %v4285
      %v4318 = vsub.f32 %v4154, %v4286
      %v4319 = vsub.f32 %v4155, %v4287
      %v4320 = vsub.f32 %v4156, %v4288
      %v4321 = vsub.f32 %v4157, %v4289
      %v4322 = vsub.f32 %v4158, %v4290
      %v4323 = vsub.f32 %v4159, %v4291
      %v4324 = vmul.f32 %v4292, %v4292
      %v4325 = vmul.f32 %v4293, %v4293
      %v4326 = vmul.f32 %v4294, %v4294
      %v4327 = vmul.f32 %v4295, %v4295
      %v4328 = vmul.f32 %v4296, %v4296
      %v4329 = vmul.f32 %v4297, %v4297
      %v4330 = vmul.f32 %v4298, %v4298
      %v4331 = vmul.f32 %v4299, %v4299
      %v4332 = vmul.f32 %v4300, %v4300
      %v4333 = vmul.f32 %v4301, %v4301
      %v4334 = vmul.f32 %v4302, %v4302
      %v4335 = vmul.f32 %v4303, %v4303
      %v4336 = vmul.f32 %v4304, %v4304
      %v4337 = vmul.f32 %v4305, %v4305
      %v4338 = vmul.f32 %v4306, %v4306
      %v4339 = vmul.f32 %v4307, %v4307
      %v4340 = vmul.f32 %v4308, %v4308
      %v4341 = vmul.f32 %v4309, %v4309
      %v4342 = vmul.f32 %v4310, %v4310
      %v4343 = vmul.f32 %v4311, %v4311
      %v4344 = vmul.f32 %v4312, %v4312
      %v4345 = vmul.f32 %v4313, %v4313
      %v4346 = vmul.f32 %v4314, %v4314
      %v4347 = vmul.f32 %v4315, %v4315
      %v4348 = vmul.f32 %v4316, %v4316
      %v4349 = vmul.f32 %v4317, %v4317
      %v4350 = vmul.f32 %v4318, %v4318
      %v4351 = vmul.f32 %v4319, %v4319
      %v4352 = vmul.f32 %v4320, %v4320
      %v4353 = vmul.f32 %v4321, %v4321
      %v4354 = vmul.f32 %v4322, %v4322
      %v4355 = vmul.f32 %v4323, %v4323
      %v4356 = vsel %vm1349, %v4324, 0.0
      %4357 = vadd.xlane.f32.xlu0 %v4356
      %v4358 = vpop.xlane.xlu0 %4357
      %v4359 = vsel %vm1349, %v4325, 0.0
      %4360 = vadd.xlane.f32.xlu0 %v4359
      %v4361 = vpop.xlane.xlu0 %4360
      %v4362 = vsel %vm1349, %v4326, 0.0
      %4363 = vadd.xlane.f32.xlu0 %v4362
      %v4364 = vpop.xlane.xlu0 %4363
      %v4365 = vsel %vm1349, %v4327, 0.0
      %4366 = vadd.xlane.f32.xlu0 %v4365
      %v4367 = vpop.xlane.xlu0 %4366
      %v4368 = vsel %vm1349, %v4328, 0.0
      %4369 = vadd.xlane.f32.xlu0 %v4368
      %v4370 = vpop.xlane.xlu0 %4369
      %v4371 = vsel %vm1349, %v4329, 0.0
      %4372 = vadd.xlane.f32.xlu0 %v4371
      %v4373 = vpop.xlane.xlu0 %4372
      %v4374 = vsel %vm1349, %v4330, 0.0
      %4375 = vadd.xlane.f32.xlu0 %v4374
      %v4376 = vpop.xlane.xlu0 %4375
      %v4377 = vsel %vm1349, %v4331, 0.0
      %4378 = vadd.xlane.f32.xlu0 %v4377
      %v4379 = vpop.xlane.xlu0 %4378
      %v4380 = vsel %vm1349, %v4332, 0.0
      %4381 = vadd.xlane.f32.xlu0 %v4380
      %v4382 = vpop.xlane.xlu0 %4381
      %v4383 = vsel %vm1349, %v4333, 0.0
      %4384 = vadd.xlane.f32.xlu0 %v4383
      %v4385 = vpop.xlane.xlu0 %4384
      %v4386 = vsel %vm1349, %v4334, 0.0
      %4387 = vadd.xlane.f32.xlu0 %v4386
      %v4388 = vpop.xlane.xlu0 %4387
      %v4389 = vsel %vm1349, %v4335, 0.0
      %4390 = vadd.xlane.f32.xlu0 %v4389
      %v4391 = vpop.xlane.xlu0 %4390
      %v4392 = vsel %vm1349, %v4336, 0.0
      %4393 = vadd.xlane.f32.xlu0 %v4392
      %v4394 = vpop.xlane.xlu0 %4393
      %v4395 = vsel %vm1349, %v4337, 0.0
      %4396 = vadd.xlane.f32.xlu0 %v4395
      %v4397 = vpop.xlane.xlu0 %4396
      %v4398 = vsel %vm1349, %v4338, 0.0
      %4399 = vadd.xlane.f32.xlu0 %v4398
      %v4400 = vpop.xlane.xlu0 %4399
      %v4401 = vsel %vm1349, %v4339, 0.0
      %4402 = vadd.xlane.f32.xlu0 %v4401
      %v4403 = vpop.xlane.xlu0 %4402
      %v4404 = vsel %vm1349, %v4340, 0.0
      %4405 = vadd.xlane.f32.xlu0 %v4404
      %v4406 = vpop.xlane.xlu0 %4405
      %v4407 = vsel %vm1349, %v4341, 0.0
      %4408 = vadd.xlane.f32.xlu0 %v4407
      %v4409 = vpop.xlane.xlu0 %4408
      %v4410 = vsel %vm1349, %v4342, 0.0
      %4411 = vadd.xlane.f32.xlu0 %v4410
      %v4412 = vpop.xlane.xlu0 %4411
      %v4413 = vsel %vm1349, %v4343, 0.0
      %4414 = vadd.xlane.f32.xlu0 %v4413
      %v4415 = vpop.xlane.xlu0 %4414
      %v4416 = vsel %vm1349, %v4344, 0.0
      %4417 = vadd.xlane.f32.xlu0 %v4416
      %v4418 = vpop.xlane.xlu0 %4417
      %v4419 = vsel %vm1349, %v4345, 0.0
      %4420 = vadd.xlane.f32.xlu0 %v4419
      %v4421 = vpop.xlane.xlu0 %4420
      %v4422 = vsel %vm1349, %v4346, 0.0
      %4423 = vadd.xlane.f32.xlu0 %v4422
      %v4424 = vpop.xlane.xlu0 %4423
      %v4425 = vsel %vm1349, %v4347, 0.0
      %4426 = vadd.xlane.f32.xlu0 %v4425
      %v4427 = vpop.xlane.xlu0 %4426
      %v4428 = vsel %vm1349, %v4348, 0.0
      %4429 = vadd.xlane.f32.xlu0 %v4428
      %v4430 = vpop.xlane.xlu0 %4429
      %v4431 = vsel %vm1349, %v4349, 0.0
      %4432 = vadd.xlane.f32.xlu0 %v4431
      %v4433 = vpop.xlane.xlu0 %4432
      %v4434 = vsel %vm1349, %v4350, 0.0
      %4435 = vadd.xlane.f32.xlu0 %v4434
      %v4436 = vpop.xlane.xlu0 %4435
      %v4437 = vsel %vm1349, %v4351, 0.0
      %4438 = vadd.xlane.f32.xlu0 %v4437
      %v4439 = vpop.xlane.xlu0 %4438
      %v4440 = vsel %vm1349, %v4352, 0.0
      %4441 = vadd.xlane.f32.xlu0 %v4440
      %v4442 = vpop.xlane.xlu0 %4441
      %v4443 = vsel %vm1349, %v4353, 0.0
      %4444 = vadd.xlane.f32.xlu0 %v4443
      %v4445 = vpop.xlane.xlu0 %4444
      %v4446 = vsel %vm1349, %v4354, 0.0
      %4447 = vadd.xlane.f32.xlu0 %v4446
      %v4448 = vpop.xlane.xlu0 %4447
      %v4449 = vsel %vm1349, %v4355, 0.0
      %4450 = vadd.xlane.f32.xlu0 %v4449
      %v4451 = vpop.xlane.xlu0 %4450
      %v4452 = vmul.f32 %v4358, %v1446
      %v4453 = vmul.f32 %v4361, %v1446
      %v4454 = vmul.f32 %v4364, %v1446
      %v4455 = vmul.f32 %v4367, %v1446
      %v4456 = vmul.f32 %v4370, %v1446
      %v4457 = vmul.f32 %v4373, %v1446
      %v4458 = vmul.f32 %v4376, %v1446
      %v4459 = vmul.f32 %v4379, %v1446
      %v4460 = vmul.f32 %v4382, %v1446
      %v4461 = vmul.f32 %v4385, %v1446
      %v4462 = vmul.f32 %v4388, %v1446
      %v4463 = vmul.f32 %v4391, %v1446
      %v4464 = vmul.f32 %v4394, %v1446
      %v4465 = vmul.f32 %v4397, %v1446
      %v4466 = vmul.f32 %v4400, %v1446
      %v4467 = vmul.f32 %v4403, %v1446
      %v4468 = vmul.f32 %v4406, %v1446
      %v4469 = vmul.f32 %v4409, %v1446
      %v4470 = vmul.f32 %v4412, %v1446
      %v4471 = vmul.f32 %v4415, %v1446
      %v4472 = vmul.f32 %v4418, %v1446
      %v4473 = vmul.f32 %v4421, %v1446
      %v4474 = vmul.f32 %v4424, %v1446
      %v4475 = vmul.f32 %v4427, %v1446
      %v4476 = vmul.f32 %v4430, %v1446
      %v4477 = vmul.f32 %v4433, %v1446
      %v4478 = vmul.f32 %v4436, %v1446
      %v4479 = vmul.f32 %v4439, %v1446
      %v4480 = vmul.f32 %v4442, %v1446
      %v4481 = vmul.f32 %v4445, %v1446
      %v4482 = vmul.f32 %v4448, %v1446
      %v4483 = vmul.f32 %v4451, %v1446
      %v4484 = vadd.f32 %v4452, 1e-05
      %v4485 = vadd.f32 %v4453, 1e-05
      %v4486 = vadd.f32 %v4454, 1e-05
      %v4487 = vadd.f32 %v4455, 1e-05
      %v4488 = vadd.f32 %v4456, 1e-05
      %v4489 = vadd.f32 %v4457, 1e-05
      %v4490 = vadd.f32 %v4458, 1e-05
      %v4491 = vadd.f32 %v4459, 1e-05
      %v4492 = vadd.f32 %v4460, 1e-05
      %v4493 = vadd.f32 %v4461, 1e-05
      %v4494 = vadd.f32 %v4462, 1e-05
      %v4495 = vadd.f32 %v4463, 1e-05
      %v4496 = vadd.f32 %v4464, 1e-05
      %v4497 = vadd.f32 %v4465, 1e-05
      %v4498 = vadd.f32 %v4466, 1e-05
      %v4499 = vadd.f32 %v4467, 1e-05
      %v4500 = vadd.f32 %v4468, 1e-05
      %v4501 = vadd.f32 %v4469, 1e-05
      %v4502 = vadd.f32 %v4470, 1e-05
      %v4503 = vadd.f32 %v4471, 1e-05
      %v4504 = vadd.f32 %v4472, 1e-05
      %v4505 = vadd.f32 %v4473, 1e-05
      %v4506 = vadd.f32 %v4474, 1e-05
      %v4507 = vadd.f32 %v4475, 1e-05
      %v4508 = vadd.f32 %v4476, 1e-05
      %v4509 = vadd.f32 %v4477, 1e-05
      %v4510 = vadd.f32 %v4478, 1e-05
      %v4511 = vadd.f32 %v4479, 1e-05
      %v4512 = vadd.f32 %v4480, 1e-05
      %v4513 = vadd.f32 %v4481, 1e-05
      %v4514 = vadd.f32 %v4482, 1e-05
      %v4515 = vadd.f32 %v4483, 1e-05
      %v4516 = vrsqrt.pop %v4484
      %v4517 = vrsqrt.pop %v4485
      %v4518 = vrsqrt.pop %v4486
      %v4519 = vrsqrt.pop %v4487
      %v4520 = vrsqrt.pop %v4488
      %v4521 = vrsqrt.pop %v4489
      %v4522 = vrsqrt.pop %v4490
      %v4523 = vrsqrt.pop %v4491
      %v4524 = vrsqrt.pop %v4492
      %v4525 = vrsqrt.pop %v4493
      %v4526 = vrsqrt.pop %v4494
      %v4527 = vrsqrt.pop %v4495
      %v4528 = vrsqrt.pop %v4496
      %v4529 = vrsqrt.pop %v4497
      %v4530 = vrsqrt.pop %v4498
      %v4531 = vrsqrt.pop %v4499
      %v4532 = vrsqrt.pop %v4500
      %v4533 = vrsqrt.pop %v4501
      %v4534 = vrsqrt.pop %v4502
      %v4535 = vrsqrt.pop %v4503
      %v4536 = vrsqrt.pop %v4504
      %v4537 = vrsqrt.pop %v4505
      %v4538 = vrsqrt.pop %v4506
      %v4539 = vrsqrt.pop %v4507
      %v4540 = vrsqrt.pop %v4508
      %v4541 = vrsqrt.pop %v4509
      %v4542 = vrsqrt.pop %v4510
      %v4543 = vrsqrt.pop %v4511
      %v4544 = vrsqrt.pop %v4512
      %v4545 = vrsqrt.pop %v4513
      %v4546 = vrsqrt.pop %v4514
      %v4547 = vrsqrt.pop %v4515
      %v4548 = vmul.f32 %v4292, %v4516
      %v4549 = vmul.f32 %v4293, %v4517
      %v4550 = vmul.f32 %v4294, %v4518
      %v4551 = vmul.f32 %v4295, %v4519
      %v4552 = vmul.f32 %v4296, %v4520
      %v4553 = vmul.f32 %v4297, %v4521
      %v4554 = vmul.f32 %v4298, %v4522
      %v4555 = vmul.f32 %v4299, %v4523
      %v4556 = vmul.f32 %v4300, %v4524
      %v4557 = vmul.f32 %v4301, %v4525
      %v4558 = vmul.f32 %v4302, %v4526
      %v4559 = vmul.f32 %v4303, %v4527
      %v4560 = vmul.f32 %v4304, %v4528
      %v4561 = vmul.f32 %v4305, %v4529
      %v4562 = vmul.f32 %v4306, %v4530
      %v4563 = vmul.f32 %v4307, %v4531
      %v4564 = vmul.f32 %v4308, %v4532
      %v4565 = vmul.f32 %v4309, %v4533
      %v4566 = vmul.f32 %v4310, %v4534
      %v4567 = vmul.f32 %v4311, %v4535
      %v4568 = vmul.f32 %v4312, %v4536
      %v4569 = vmul.f32 %v4313, %v4537
      %v4570 = vmul.f32 %v4314, %v4538
      %v4571 = vmul.f32 %v4315, %v4539
      %v4572 = vmul.f32 %v4316, %v4540
      %v4573 = vmul.f32 %v4317, %v4541
      %v4574 = vmul.f32 %v4318, %v4542
      %v4575 = vmul.f32 %v4319, %v4543
      %v4576 = vmul.f32 %v4320, %v4544
      %v4577 = vmul.f32 %v4321, %v4545
      %v4578 = vmul.f32 %v4322, %v4546
      %v4579 = vmul.f32 %v4323, %v4547
      %v4581 = vlaneseq
      %v4582 = vshrl.u32 %v4581, 7
      %v4583 = vsub.s32 0, %v4582
      %v4584 = vrot.slane %v4161, %v4583
      %v4586 = vmul.f32 %v4548, %v4584
      %v4587 = vmul.f32 %v4549, %v4584
      %v4588 = vmul.f32 %v4550, %v4584
      %v4589 = vmul.f32 %v4551, %v4584
      %v4590 = vmul.f32 %v4552, %v4584
      %v4591 = vmul.f32 %v4553, %v4584
      %v4592 = vmul.f32 %v4554, %v4584
      %v4593 = vmul.f32 %v4555, %v4584
      %v4594 = vmul.f32 %v4556, %v4584
      %v4595 = vmul.f32 %v4557, %v4584
      %v4596 = vmul.f32 %v4558, %v4584
      %v4597 = vmul.f32 %v4559, %v4584
      %v4598 = vmul.f32 %v4560, %v4584
      %v4599 = vmul.f32 %v4561, %v4584
      %v4600 = vmul.f32 %v4562, %v4584
      %v4601 = vmul.f32 %v4563, %v4584
      %v4602 = vmul.f32 %v4564, %v4584
      %v4603 = vmul.f32 %v4565, %v4584
      %v4604 = vmul.f32 %v4566, %v4584
      %v4605 = vmul.f32 %v4567, %v4584
      %v4606 = vmul.f32 %v4568, %v4584
      %v4607 = vmul.f32 %v4569, %v4584
      %v4608 = vmul.f32 %v4570, %v4584
      %v4609 = vmul.f32 %v4571, %v4584
      %v4610 = vmul.f32 %v4572, %v4584
      %v4611 = vmul.f32 %v4573, %v4584
      %v4612 = vmul.f32 %v4574, %v4584
      %v4613 = vmul.f32 %v4575, %v4584
      %v4614 = vmul.f32 %v4576, %v4584
      %v4615 = vmul.f32 %v4577, %v4584
      %v4616 = vmul.f32 %v4578, %v4584
      %v4617 = vmul.f32 %v4579, %v4584
      %v4619 = vlaneseq
      %v4620 = vshrl.u32 %v4619, 7
      %v4621 = vsub.s32 0, %v4620
      %v4622 = vrot.slane %v4163, %v4621
      %v4624 = vadd.f32 %v4586, %v4622
      %v4625 = vadd.f32 %v4587, %v4622
      %v4626 = vadd.f32 %v4588, %v4622
      %v4627 = vadd.f32 %v4589, %v4622
      %v4628 = vadd.f32 %v4590, %v4622
      %v4629 = vadd.f32 %v4591, %v4622
      %v4630 = vadd.f32 %v4592, %v4622
      %v4631 = vadd.f32 %v4593, %v4622
      %v4632 = vadd.f32 %v4594, %v4622
      %v4633 = vadd.f32 %v4595, %v4622
      %v4634 = vadd.f32 %v4596, %v4622
      %v4635 = vadd.f32 %v4597, %v4622
      %v4636 = vadd.f32 %v4598, %v4622
      %v4637 = vadd.f32 %v4599, %v4622
      %v4638 = vadd.f32 %v4600, %v4622
      %v4639 = vadd.f32 %v4601, %v4622
      %v4640 = vadd.f32 %v4602, %v4622
      %v4641 = vadd.f32 %v4603, %v4622
      %v4642 = vadd.f32 %v4604, %v4622
      %v4643 = vadd.f32 %v4605, %v4622
      %v4644 = vadd.f32 %v4606, %v4622
      %v4645 = vadd.f32 %v4607, %v4622
      %v4646 = vadd.f32 %v4608, %v4622
      %v4647 = vadd.f32 %v4609, %v4622
      %v4648 = vadd.f32 %v4610, %v4622
      %v4649 = vadd.f32 %v4611, %v4622
      %v4650 = vadd.f32 %v4612, %v4622
      %v4651 = vadd.f32 %v4613, %v4622
      %v4652 = vadd.f32 %v4614, %v4622
      %v4653 = vadd.f32 %v4615, %v4622
      %v4654 = vadd.f32 %v4616, %v4622
      %v4655 = vadd.f32 %v4617, %v4622
      %s4656 = scalar_lea.vmem %s742, 32
      %v4657 = vld [vmem:[%s4656] sm:$0xff]
      %v4658 = vld [vmem:[%s4656 + $0x8] sm:$0xff]
      %v4659 = vld [vmem:[%s4656 + $0x10] sm:$0xff]
      %v4660 = vld [vmem:[%s4656 + $0x18] sm:$0xff]
      %v4661 = vpack.c.bf16 %v4625, %v4624
      %v4662 = vpack.c.bf16 %v4627, %v4626
      %v4663 = vpack.c.bf16 %v4629, %v4628
      %v4664 = vpack.c.bf16 %v4631, %v4630
      %v4665 = vpack.c.bf16 %v4633, %v4632
      %v4666 = vpack.c.bf16 %v4635, %v4634
      %v4667 = vpack.c.bf16 %v4637, %v4636
      %v4668 = vpack.c.bf16 %v4639, %v4638
      %v4669 = vpack.c.bf16 %v4641, %v4640
      %v4670 = vpack.c.bf16 %v4643, %v4642
      %v4671 = vpack.c.bf16 %v4645, %v4644
      %v4672 = vpack.c.bf16 %v4647, %v4646
      %v4673 = vpack.c.bf16 %v4649, %v4648
      %v4674 = vpack.c.bf16 %v4651, %v4650
      %v4675 = vpack.c.bf16 %v4653, %v4652
      %v4676 = vpack.c.bf16 %v4655, %v4654
      %s4677 = scalar_lea.vmem %s746, 2
      %v4678 = vld [vmem:[%s4677] sm:$0x3]
      %v4680 = vlaneseq
      %v4681 = vshrl.u32 %v4680, 7
      %v4682 = vsub.s32 0, %v4681
      %v4683 = vrot.slane %v4678, %v4682
      %v4684 = vlaneseq
      %v4685 = vshrl.u32 %v4684, 7
      %v4686 = vsub.s32 1, %v4685
      %v4687 = vrot.slane %v4678, %v4686
      %v4694 = vunpack.c.l.b16 %v4657
      %v4695 = vunpack.c.h.b16 %v4657
      %v4696 = vunpack.c.l.b16 %v4658
      %v4697 = vunpack.c.h.b16 %v4658
      %v4698 = vunpack.c.l.b16 %v4659
      %v4699 = vunpack.c.h.b16 %v4659
      %v4700 = vunpack.c.l.b16 %v4660
      %v4701 = vunpack.c.h.b16 %v4660
      %v4702 = vpack.c.b16 %v4696, %v4694
      %v4703 = vpack.c.b16 %v4697, %v4695
      %v4704 = vpack.c.b16 %v4700, %v4698
      %v4705 = vpack.c.b16 %v4701, %v4699
      %v4711 = vsel %vm1349, %v4661, 0
      %v4714 = vsel %vm1349, %v4662, 0
      %v4717 = vsel %vm1349, %v4663, 0
      %v4720 = vsel %vm1349, %v4664, 0
      %v4723 = vsel %vm1349, %v4665, 0
      %v4726 = vsel %vm1349, %v4666, 0
      %v4729 = vsel %vm1349, %v4667, 0
      %v4732 = vsel %vm1349, %v4668, 0
      %v4735 = vsel %vm1349, %v4669, 0
      %v4738 = vsel %vm1349, %v4670, 0
      %v4741 = vsel %vm1349, %v4671, 0
      %v4744 = vsel %vm1349, %v4672, 0
      %v4747 = vsel %vm1349, %v4673, 0
      %v4750 = vsel %vm1349, %v4674, 0
      %v4753 = vsel %vm1349, %v4675, 0
      %v4756 = vsel %vm1349, %v4676, 0
      %4758 = vmatprep.subr.bf16.mxu0 0
      %4759 = vmatpush1.bf16.msra.mxu0 0
      %4760 = vmatprep.subr.bf16.mxu0 0
      %4761 = vmatpush1.bf16.msra.mxu0 0
      %4762 = vmatprep.subr.bf16.mxu0 0
      %4763 = vmatpush1.bf16.msra.mxu0 0
      %4764 = vmatprep.subr.bf16.mxu0 0
      %4765 = vmatpush1.bf16.msra.mxu0 0
      %4766 = vmatprep.subr.bf16.mxu0 0
      %4767 = vmatpush1.bf16.msra.mxu0 0
      %4768 = vmatprep.subr.bf16.mxu0 0
      %4769 = vmatpush1.bf16.msra.mxu0 0
      %4770 = vmatprep.subr.bf16.mxu0 %v4705
      %4771 = vmatpush1.bf16.msra.mxu0 %v4704
      %4772 = vmatprep.subr.bf16.mxu0 %v4703
      %4773 = vmatpush1.bf16.msra.mxu0 %v4702
      %4774 = vmatprep.subr.bf16.mxu0 0
      %4775 = vmatpush2.bf16.msra.mxu0 0
      %4776 = vmatprep.subr.bf16.mxu0 0
      %4777 = vmatpush2.bf16.msra.mxu0 0
      %4778 = vmatprep.subr.bf16.mxu0 0
      %4779 = vmatpush2.bf16.msra.mxu0 0
      %4780 = vmatprep.subr.bf16.mxu0 0
      %4781 = vmatpush2.bf16.msra.mxu0 0
      %4782 = vmatprep.subr.bf16.mxu0 0
      %4783 = vmatpush2.bf16.msra.mxu0 0
      %4784 = vmatprep.subr.bf16.mxu0 0
      %4785 = vmatpush2.bf16.msra.mxu0 0
      %4786 = vmatprep.subr.bf16.mxu0 0
      %4787 = vmatpush2.bf16.msra.mxu0 0
      %4788 = vmatprep.subr.bf16.mxu0 0
      %4789 = vmatpush2.bf16.msra.mxu0 0
      %4790 = vmatprep.mubr.bf16.mxu0 0
      %4791 = vmatmul.mubr.bf16.gmra.mxu0 %v4711
      %v4792 = vpop.f32.mrf.mxu0
      %v4793 = vadd.f32 %v4683, %v4792
      %v4794 = vpop.f32.mrf.mxu0
      %v4795 = vadd.f32 %v4687, %v4794
      %v4796 = vpop.f32.mrf.mxu0
      %v4797 = vadd.f32 %v4683, %v4796
      %v4798 = vpop.f32.mrf.mxu0
      %v4799 = vadd.f32 %v4687, %v4798
      %4800 = vmatprep.mubr.bf16.mxu0 0
      %4801 = vmatmul.mubr.bf16.gmra.mxu0 %v4714
      %v4802 = vpop.f32.mrf.mxu0
      %v4803 = vadd.f32 %v4683, %v4802
      %v4804 = vpop.f32.mrf.mxu0
      %v4805 = vadd.f32 %v4687, %v4804
      %v4806 = vpop.f32.mrf.mxu0
      %v4807 = vadd.f32 %v4683, %v4806
      %v4808 = vpop.f32.mrf.mxu0
      %v4809 = vadd.f32 %v4687, %v4808
      %4810 = vmatprep.mubr.bf16.mxu0 0
      %4811 = vmatmul.mubr.bf16.gmra.mxu0 %v4717
      %v4812 = vpop.f32.mrf.mxu0
      %v4813 = vadd.f32 %v4683, %v4812
      %v4814 = vpop.f32.mrf.mxu0
      %v4815 = vadd.f32 %v4687, %v4814
      %v4816 = vpop.f32.mrf.mxu0
      %v4817 = vadd.f32 %v4683, %v4816
      %v4818 = vpop.f32.mrf.mxu0
      %v4819 = vadd.f32 %v4687, %v4818
      %4820 = vmatprep.mubr.bf16.mxu0 0
      %4821 = vmatmul.mubr.bf16.gmra.mxu0 %v4720
      %v4822 = vpop.f32.mrf.mxu0
      %v4823 = vadd.f32 %v4683, %v4822
      %v4824 = vpop.f32.mrf.mxu0
      %v4825 = vadd.f32 %v4687, %v4824
      %v4826 = vpop.f32.mrf.mxu0
      %v4827 = vadd.f32 %v4683, %v4826
      %v4828 = vpop.f32.mrf.mxu0
      %v4829 = vadd.f32 %v4687, %v4828
      %4830 = vmatprep.mubr.bf16.mxu0 0
      %4831 = vmatmul.mubr.bf16.gmra.mxu0 %v4723
      %v4832 = vpop.f32.mrf.mxu0
      %v4833 = vadd.f32 %v4683, %v4832
      %v4834 = vpop.f32.mrf.mxu0
      %v4835 = vadd.f32 %v4687, %v4834
      %v4836 = vpop.f32.mrf.mxu0
      %v4837 = vadd.f32 %v4683, %v4836
      %v4838 = vpop.f32.mrf.mxu0
      %v4839 = vadd.f32 %v4687, %v4838
      %4840 = vmatprep.mubr.bf16.mxu0 0
      %4841 = vmatmul.mubr.bf16.gmra.mxu0 %v4726
      %v4842 = vpop.f32.mrf.mxu0
      %v4843 = vadd.f32 %v4683, %v4842
      %v4844 = vpop.f32.mrf.mxu0
      %v4845 = vadd.f32 %v4687, %v4844
      %v4846 = vpop.f32.mrf.mxu0
      %v4847 = vadd.f32 %v4683, %v4846
      %v4848 = vpop.f32.mrf.mxu0
      %v4849 = vadd.f32 %v4687, %v4848
      %4850 = vmatprep.mubr.bf16.mxu0 0
      %4851 = vmatmul.mubr.bf16.gmra.mxu0 %v4729
      %v4852 = vpop.f32.mrf.mxu0
      %v4853 = vadd.f32 %v4683, %v4852
      %v4854 = vpop.f32.mrf.mxu0
      %v4855 = vadd.f32 %v4687, %v4854
      %v4856 = vpop.f32.mrf.mxu0
      %v4857 = vadd.f32 %v4683, %v4856
      %v4858 = vpop.f32.mrf.mxu0
      %v4859 = vadd.f32 %v4687, %v4858
      %4860 = vmatprep.mubr.bf16.mxu0 0
      %4861 = vmatmul.mubr.bf16.gmra.mxu0 %v4732
      %v4862 = vpop.f32.mrf.mxu0
      %v4863 = vadd.f32 %v4683, %v4862
      %v4864 = vpop.f32.mrf.mxu0
      %v4865 = vadd.f32 %v4687, %v4864
      %v4866 = vpop.f32.mrf.mxu0
      %v4867 = vadd.f32 %v4683, %v4866
      %v4868 = vpop.f32.mrf.mxu0
      %v4869 = vadd.f32 %v4687, %v4868
      %4870 = vmatprep.mubr.bf16.mxu0 0
      %4871 = vmatmul.mubr.bf16.gmra.mxu0 %v4735
      %v4872 = vpop.f32.mrf.mxu0
      %v4873 = vadd.f32 %v4683, %v4872
      %v4874 = vpop.f32.mrf.mxu0
      %v4875 = vadd.f32 %v4687, %v4874
      %v4876 = vpop.f32.mrf.mxu0
      %v4877 = vadd.f32 %v4683, %v4876
      %v4878 = vpop.f32.mrf.mxu0
      %v4879 = vadd.f32 %v4687, %v4878
      %4880 = vmatprep.mubr.bf16.mxu0 0
      %4881 = vmatmul.mubr.bf16.gmra.mxu0 %v4738
      %v4882 = vpop.f32.mrf.mxu0
      %v4883 = vadd.f32 %v4683, %v4882
      %v4884 = vpop.f32.mrf.mxu0
      %v4885 = vadd.f32 %v4687, %v4884
      %v4886 = vpop.f32.mrf.mxu0
      %v4887 = vadd.f32 %v4683, %v4886
      %v4888 = vpop.f32.mrf.mxu0
      %v4889 = vadd.f32 %v4687, %v4888
      %4890 = vmatprep.mubr.bf16.mxu0 0
      %4891 = vmatmul.mubr.bf16.gmra.mxu0 %v4741
      %v4892 = vpop.f32.mrf.mxu0
      %v4893 = vadd.f32 %v4683, %v4892
      %v4894 = vpop.f32.mrf.mxu0
      %v4895 = vadd.f32 %v4687, %v4894
      %v4896 = vpop.f32.mrf.mxu0
      %v4897 = vadd.f32 %v4683, %v4896
      %v4898 = vpop.f32.mrf.mxu0
      %v4899 = vadd.f32 %v4687, %v4898
      %4900 = vmatprep.mubr.bf16.mxu0 0
      %4901 = vmatmul.mubr.bf16.gmra.mxu0 %v4744
      %v4902 = vpop.f32.mrf.mxu0
      %v4903 = vadd.f32 %v4683, %v4902
      %v4904 = vpop.f32.mrf.mxu0
      %v4905 = vadd.f32 %v4687, %v4904
      %v4906 = vpop.f32.mrf.mxu0
      %v4907 = vadd.f32 %v4683, %v4906
      %v4908 = vpop.f32.mrf.mxu0
      %v4909 = vadd.f32 %v4687, %v4908
      %4910 = vmatprep.mubr.bf16.mxu0 0
      %4911 = vmatmul.mubr.bf16.gmra.mxu0 %v4747
      %v4912 = vpop.f32.mrf.mxu0
      %v4913 = vadd.f32 %v4683, %v4912
      %v4914 = vpop.f32.mrf.mxu0
      %v4915 = vadd.f32 %v4687, %v4914
      %v4916 = vpop.f32.mrf.mxu0
      %v4917 = vadd.f32 %v4683, %v4916
      %v4918 = vpop.f32.mrf.mxu0
      %v4919 = vadd.f32 %v4687, %v4918
      %4920 = vmatprep.mubr.bf16.mxu0 0
      %4921 = vmatmul.mubr.bf16.gmra.mxu0 %v4750
      %v4922 = vpop.f32.mrf.mxu0
      %v4923 = vadd.f32 %v4683, %v4922
      %v4924 = vpop.f32.mrf.mxu0
      %v4925 = vadd.f32 %v4687, %v4924
      %v4926 = vpop.f32.mrf.mxu0
      %v4927 = vadd.f32 %v4683, %v4926
      %v4928 = vpop.f32.mrf.mxu0
      %v4929 = vadd.f32 %v4687, %v4928
      %4930 = vmatprep.mubr.bf16.mxu0 0
      %4931 = vmatmul.mubr.bf16.gmra.mxu0 %v4753
      %v4932 = vpop.f32.mrf.mxu0
      %v4933 = vadd.f32 %v4683, %v4932
      %v4934 = vpop.f32.mrf.mxu0
      %v4935 = vadd.f32 %v4687, %v4934
      %v4936 = vpop.f32.mrf.mxu0
      %v4937 = vadd.f32 %v4683, %v4936
      %v4938 = vpop.f32.mrf.mxu0
      %v4939 = vadd.f32 %v4687, %v4938
      %4940 = vmatprep.mubr.bf16.mxu0 0
      %4941 = vmatmul.mubr.bf16.gmra.mxu0 %v4756
      %v4942 = vpop.f32.mrf.mxu0
      %v4943 = vadd.f32 %v4683, %v4942
      %v4944 = vpop.f32.mrf.mxu0
      %v4945 = vadd.f32 %v4687, %v4944
      %v4946 = vpop.f32.mrf.mxu0
      %v4947 = vadd.f32 %v4683, %v4946
      %v4948 = vpop.f32.mrf.mxu0
      %v4949 = vadd.f32 %v4687, %v4948
      %4950 = vdwg.mxu0
      %v4951 = vxor.u32 %v4793, 2147483648
      %v4952 = vxor.u32 %v4797, 2147483648
      %v4953 = vxor.u32 %v4803, 2147483648
      %v4954 = vxor.u32 %v4807, 2147483648
      %v4955 = vxor.u32 %v4813, 2147483648
      %v4956 = vxor.u32 %v4817, 2147483648
      %v4957 = vxor.u32 %v4823, 2147483648
      %v4958 = vxor.u32 %v4827, 2147483648
      %v4959 = vxor.u32 %v4833, 2147483648
      %v4960 = vxor.u32 %v4837, 2147483648
      %v4961 = vxor.u32 %v4843, 2147483648
      %v4962 = vxor.u32 %v4847, 2147483648
      %v4963 = vxor.u32 %v4853, 2147483648
      %v4964 = vxor.u32 %v4857, 2147483648
      %v4965 = vxor.u32 %v4863, 2147483648
      %v4966 = vxor.u32 %v4867, 2147483648
      %v4967 = vxor.u32 %v4873, 2147483648
      %v4968 = vxor.u32 %v4877, 2147483648
      %v4969 = vxor.u32 %v4883, 2147483648
      %v4970 = vxor.u32 %v4887, 2147483648
      %v4971 = vxor.u32 %v4893, 2147483648
      %v4972 = vxor.u32 %v4897, 2147483648
      %v4973 = vxor.u32 %v4903, 2147483648
      %v4974 = vxor.u32 %v4907, 2147483648
      %v4975 = vxor.u32 %v4913, 2147483648
      %v4976 = vxor.u32 %v4917, 2147483648
      %v4977 = vxor.u32 %v4923, 2147483648
      %v4978 = vxor.u32 %v4927, 2147483648
      %v4979 = vxor.u32 %v4933, 2147483648
      %v4980 = vxor.u32 %v4937, 2147483648
      %v4981 = vxor.u32 %v4943, 2147483648
      %v4982 = vxor.u32 %v4947, 2147483648
      %v4983 = vmul.f32 %v4951, 1.442695
      %v4984 = vpow.pop %v4983
      %v4985 = vmul.f32 %v4952, 1.442695
      %v4986 = vpow.pop %v4985
      %v4987 = vmul.f32 %v4953, 1.442695
      %v4988 = vpow.pop %v4987
      %v4989 = vmul.f32 %v4954, 1.442695
      %v4990 = vpow.pop %v4989
      %v4991 = vmul.f32 %v4955, 1.442695
      %v4992 = vpow.pop %v4991
      %v4993 = vmul.f32 %v4956, 1.442695
      %v4994 = vpow.pop %v4993
      %v4995 = vmul.f32 %v4957, 1.442695
      %v4996 = vpow.pop %v4995
      %v4997 = vmul.f32 %v4958, 1.442695
      %v4998 = vpow.pop %v4997
      %v4999 = vmul.f32 %v4959, 1.442695
      %v5000 = vpow.pop %v4999
      %v5001 = vmul.f32 %v4960, 1.442695
      %v5002 = vpow.pop %v5001
      %v5003 = vmul.f32 %v4961, 1.442695
      %v5004 = vpow.pop %v5003
      %v5005 = vmul.f32 %v4962, 1.442695
      %v5006 = vpow.pop %v5005
      %v5007 = vmul.f32 %v4963, 1.442695
      %v5008 = vpow.pop %v5007
      %v5009 = vmul.f32 %v4964, 1.442695
      %v5010 = vpow.pop %v5009
      %v5011 = vmul.f32 %v4965, 1.442695
      %v5012 = vpow.pop %v5011
      %v5013 = vmul.f32 %v4966, 1.442695
      %v5014 = vpow.pop %v5013
      %v5015 = vmul.f32 %v4967, 1.442695
      %v5016 = vpow.pop %v5015
      %v5017 = vmul.f32 %v4968, 1.442695
      %v5018 = vpow.pop %v5017
      %v5019 = vmul.f32 %v4969, 1.442695
      %v5020 = vpow.pop %v5019
      %v5021 = vmul.f32 %v4970, 1.442695
      %v5022 = vpow.pop %v5021
      %v5023 = vmul.f32 %v4971, 1.442695
      %v5024 = vpow.pop %v5023
      %v5025 = vmul.f32 %v4972, 1.442695
      %v5026 = vpow.pop %v5025
      %v5027 = vmul.f32 %v4973, 1.442695
      %v5028 = vpow.pop %v5027
      %v5029 = vmul.f32 %v4974, 1.442695
      %v5030 = vpow.pop %v5029
      %v5031 = vmul.f32 %v4975, 1.442695
      %v5032 = vpow.pop %v5031
      %v5033 = vmul.f32 %v4976, 1.442695
      %v5034 = vpow.pop %v5033
      %v5035 = vmul.f32 %v4977, 1.442695
      %v5036 = vpow.pop %v5035
      %v5037 = vmul.f32 %v4978, 1.442695
      %v5038 = vpow.pop %v5037
      %v5039 = vmul.f32 %v4979, 1.442695
      %v5040 = vpow.pop %v5039
      %v5041 = vmul.f32 %v4980, 1.442695
      %v5042 = vpow.pop %v5041
      %v5043 = vmul.f32 %v4981, 1.442695
      %v5044 = vpow.pop %v5043
      %v5045 = vmul.f32 %v4982, 1.442695
      %v5046 = vpow.pop %v5045
      %v5047 = vadd.f32 %v4984, 1.0
      %v5048 = vadd.f32 %v4986, 1.0
      %v5049 = vadd.f32 %v4988, 1.0
      %v5050 = vadd.f32 %v4990, 1.0
      %v5051 = vadd.f32 %v4992, 1.0
      %v5052 = vadd.f32 %v4994, 1.0
      %v5053 = vadd.f32 %v4996, 1.0
      %v5054 = vadd.f32 %v4998, 1.0
      %v5055 = vadd.f32 %v5000, 1.0
      %v5056 = vadd.f32 %v5002, 1.0
      %v5057 = vadd.f32 %v5004, 1.0
      %v5058 = vadd.f32 %v5006, 1.0
      %v5059 = vadd.f32 %v5008, 1.0
      %v5060 = vadd.f32 %v5010, 1.0
      %v5061 = vadd.f32 %v5012, 1.0
      %v5062 = vadd.f32 %v5014, 1.0
      %v5063 = vadd.f32 %v5016, 1.0
      %v5064 = vadd.f32 %v5018, 1.0
      %v5065 = vadd.f32 %v5020, 1.0
      %v5066 = vadd.f32 %v5022, 1.0
      %v5067 = vadd.f32 %v5024, 1.0
      %v5068 = vadd.f32 %v5026, 1.0
      %v5069 = vadd.f32 %v5028, 1.0
      %v5070 = vadd.f32 %v5030, 1.0
      %v5071 = vadd.f32 %v5032, 1.0
      %v5072 = vadd.f32 %v5034, 1.0
      %v5073 = vadd.f32 %v5036, 1.0
      %v5074 = vadd.f32 %v5038, 1.0
      %v5075 = vadd.f32 %v5040, 1.0
      %v5076 = vadd.f32 %v5042, 1.0
      %v5077 = vadd.f32 %v5044, 1.0
      %v5078 = vadd.f32 %v5046, 1.0
      %v5079 = vrcp.pop %v5047
      %v5080 = vmul.f32 1.0, %v5079
      %v5081 = vrcp.pop %v5048
      %v5082 = vmul.f32 1.0, %v5081
      %v5083 = vrcp.pop %v5049
      %v5084 = vmul.f32 1.0, %v5083
      %v5085 = vrcp.pop %v5050
      %v5086 = vmul.f32 1.0, %v5085
      %v5087 = vrcp.pop %v5051
      %v5088 = vmul.f32 1.0, %v5087
      %v5089 = vrcp.pop %v5052
      %v5090 = vmul.f32 1.0, %v5089
      %v5091 = vrcp.pop %v5053
      %v5092 = vmul.f32 1.0, %v5091
      %v5093 = vrcp.pop %v5054
      %v5094 = vmul.f32 1.0, %v5093
      %v5095 = vrcp.pop %v5055
      %v5096 = vmul.f32 1.0, %v5095
      %v5097 = vrcp.pop %v5056
      %v5098 = vmul.f32 1.0, %v5097
      %v5099 = vrcp.pop %v5057
      %v5100 = vmul.f32 1.0, %v5099
      %v5101 = vrcp.pop %v5058
      %v5102 = vmul.f32 1.0, %v5101
      %v5103 = vrcp.pop %v5059
      %v5104 = vmul.f32 1.0, %v5103
      %v5105 = vrcp.pop %v5060
      %v5106 = vmul.f32 1.0, %v5105
      %v5107 = vrcp.pop %v5061
      %v5108 = vmul.f32 1.0, %v5107
      %v5109 = vrcp.pop %v5062
      %v5110 = vmul.f32 1.0, %v5109
      %v5111 = vrcp.pop %v5063
      %v5112 = vmul.f32 1.0, %v5111
      %v5113 = vrcp.pop %v5064
      %v5114 = vmul.f32 1.0, %v5113
      %v5115 = vrcp.pop %v5065
      %v5116 = vmul.f32 1.0, %v5115
      %v5117 = vrcp.pop %v5066
      %v5118 = vmul.f32 1.0, %v5117
      %v5119 = vrcp.pop %v5067
      %v5120 = vmul.f32 1.0, %v5119
      %v5121 = vrcp.pop %v5068
      %v5122 = vmul.f32 1.0, %v5121
      %v5123 = vrcp.pop %v5069
      %v5124 = vmul.f32 1.0, %v5123
      %v5125 = vrcp.pop %v5070
      %v5126 = vmul.f32 1.0, %v5125
      %v5127 = vrcp.pop %v5071
      %v5128 = vmul.f32 1.0, %v5127
      %v5129 = vrcp.pop %v5072
      %v5130 = vmul.f32 1.0, %v5129
      %v5131 = vrcp.pop %v5073
      %v5132 = vmul.f32 1.0, %v5131
      %v5133 = vrcp.pop %v5074
      %v5134 = vmul.f32 1.0, %v5133
      %v5135 = vrcp.pop %v5075
      %v5136 = vmul.f32 1.0, %v5135
      %v5137 = vrcp.pop %v5076
      %v5138 = vmul.f32 1.0, %v5137
      %v5139 = vrcp.pop %v5077
      %v5140 = vmul.f32 1.0, %v5139
      %v5141 = vrcp.pop %v5078
      %v5142 = vmul.f32 1.0, %v5141
      %5175 = vrot.lane.b32.xlu0 %v4793, 32
      %v5176 = vpop.permute.xlu0 %5175
      %5177 = vrot.lane.b32.xlu0 %v4797, 32
      %v5178 = vpop.permute.xlu0 %5177
      %5179 = vrot.lane.b32.xlu0 %v4803, 32
      %v5180 = vpop.permute.xlu0 %5179
      %5181 = vrot.lane.b32.xlu0 %v4807, 32
      %v5182 = vpop.permute.xlu0 %5181
      %5183 = vrot.lane.b32.xlu0 %v4813, 32
      %v5184 = vpop.permute.xlu0 %5183
      %5185 = vrot.lane.b32.xlu0 %v4817, 32
      %v5186 = vpop.permute.xlu0 %5185
      %5187 = vrot.lane.b32.xlu0 %v4823, 32
      %v5188 = vpop.permute.xlu0 %5187
      %5189 = vrot.lane.b32.xlu0 %v4827, 32
      %v5190 = vpop.permute.xlu0 %5189
      %5191 = vrot.lane.b32.xlu0 %v4833, 32
      %v5192 = vpop.permute.xlu0 %5191
      %5193 = vrot.lane.b32.xlu0 %v4837, 32
      %v5194 = vpop.permute.xlu0 %5193
      %5195 = vrot.lane.b32.xlu0 %v4843, 32
      %v5196 = vpop.permute.xlu0 %5195
      %5197 = vrot.lane.b32.xlu0 %v4847, 32
      %v5198 = vpop.permute.xlu0 %5197
      %5199 = vrot.lane.b32.xlu0 %v4853, 32
      %v5200 = vpop.permute.xlu0 %5199
      %5201 = vrot.lane.b32.xlu0 %v4857, 32
      %v5202 = vpop.permute.xlu0 %5201
      %5203 = vrot.lane.b32.xlu0 %v4863, 32
      %v5204 = vpop.permute.xlu0 %5203
      %5205 = vrot.lane.b32.xlu0 %v4867, 32
      %v5206 = vpop.permute.xlu0 %5205
      %5207 = vrot.lane.b32.xlu0 %v4873, 32
      %v5208 = vpop.permute.xlu0 %5207
      %5209 = vrot.lane.b32.xlu0 %v4877, 32
      %v5210 = vpop.permute.xlu0 %5209
      %5211 = vrot.lane.b32.xlu0 %v4883, 32
      %v5212 = vpop.permute.xlu0 %5211
      %5213 = vrot.lane.b32.xlu0 %v4887, 32
      %v5214 = vpop.permute.xlu0 %5213
      %5215 = vrot.lane.b32.xlu0 %v4893, 32
      %v5216 = vpop.permute.xlu0 %5215
      %5217 = vrot.lane.b32.xlu0 %v4897, 32
      %v5218 = vpop.permute.xlu0 %5217
      %5219 = vrot.lane.b32.xlu0 %v4903, 32
      %v5220 = vpop.permute.xlu0 %5219
      %5221 = vrot.lane.b32.xlu0 %v4907, 32
      %v5222 = vpop.permute.xlu0 %5221
      %5223 = vrot.lane.b32.xlu0 %v4913, 32
      %v5224 = vpop.permute.xlu0 %5223
      %5225 = vrot.lane.b32.xlu0 %v4917, 32
      %v5226 = vpop.permute.xlu0 %5225
      %5227 = vrot.lane.b32.xlu0 %v4923, 32
      %v5228 = vpop.permute.xlu0 %5227
      %5229 = vrot.lane.b32.xlu0 %v4927, 32
      %v5230 = vpop.permute.xlu0 %5229
      %5231 = vrot.lane.b32.xlu0 %v4933, 32
      %v5232 = vpop.permute.xlu0 %5231
      %5233 = vrot.lane.b32.xlu0 %v4937, 32
      %v5234 = vpop.permute.xlu0 %5233
      %5235 = vrot.lane.b32.xlu0 %v4943, 32
      %v5236 = vpop.permute.xlu0 %5235
      %5237 = vrot.lane.b32.xlu0 %v4947, 32
      %v5238 = vpop.permute.xlu0 %5237
      %v5271 = vmul.f32 %v5080, %v5176
      %v5272 = vmul.f32 %v5082, %v5178
      %v5273 = vmul.f32 %v5084, %v5180
      %v5274 = vmul.f32 %v5086, %v5182
      %v5275 = vmul.f32 %v5088, %v5184
      %v5276 = vmul.f32 %v5090, %v5186
      %v5277 = vmul.f32 %v5092, %v5188
      %v5278 = vmul.f32 %v5094, %v5190
      %v5279 = vmul.f32 %v5096, %v5192
      %v5280 = vmul.f32 %v5098, %v5194
      %v5281 = vmul.f32 %v5100, %v5196
      %v5282 = vmul.f32 %v5102, %v5198
      %v5283 = vmul.f32 %v5104, %v5200
      %v5284 = vmul.f32 %v5106, %v5202
      %v5285 = vmul.f32 %v5108, %v5204
      %v5286 = vmul.f32 %v5110, %v5206
      %v5287 = vmul.f32 %v5112, %v5208
      %v5288 = vmul.f32 %v5114, %v5210
      %v5289 = vmul.f32 %v5116, %v5212
      %v5290 = vmul.f32 %v5118, %v5214
      %v5291 = vmul.f32 %v5120, %v5216
      %v5292 = vmul.f32 %v5122, %v5218
      %v5293 = vmul.f32 %v5124, %v5220
      %v5294 = vmul.f32 %v5126, %v5222
      %v5295 = vmul.f32 %v5128, %v5224
      %v5296 = vmul.f32 %v5130, %v5226
      %v5297 = vmul.f32 %v5132, %v5228
      %v5298 = vmul.f32 %v5134, %v5230
      %v5299 = vmul.f32 %v5136, %v5232
      %v5300 = vmul.f32 %v5138, %v5234
      %v5301 = vmul.f32 %v5140, %v5236
      %v5302 = vmul.f32 %v5142, %v5238
      %v5303 = vxor.u32 %v4795, 2147483648
      %v5304 = vxor.u32 %v4799, 2147483648
      %v5305 = vxor.u32 %v4805, 2147483648
      %v5306 = vxor.u32 %v4809, 2147483648
      %v5307 = vxor.u32 %v4815, 2147483648
      %v5308 = vxor.u32 %v4819, 2147483648
      %v5309 = vxor.u32 %v4825, 2147483648
      %v5310 = vxor.u32 %v4829, 2147483648
      %v5311 = vxor.u32 %v4835, 2147483648
      %v5312 = vxor.u32 %v4839, 2147483648
      %v5313 = vxor.u32 %v4845, 2147483648
      %v5314 = vxor.u32 %v4849, 2147483648
      %v5315 = vxor.u32 %v4855, 2147483648
      %v5316 = vxor.u32 %v4859, 2147483648
      %v5317 = vxor.u32 %v4865, 2147483648
      %v5318 = vxor.u32 %v4869, 2147483648
      %v5319 = vxor.u32 %v4875, 2147483648
      %v5320 = vxor.u32 %v4879, 2147483648
      %v5321 = vxor.u32 %v4885, 2147483648
      %v5322 = vxor.u32 %v4889, 2147483648
      %v5323 = vxor.u32 %v4895, 2147483648
      %v5324 = vxor.u32 %v4899, 2147483648
      %v5325 = vxor.u32 %v4905, 2147483648
      %v5326 = vxor.u32 %v4909, 2147483648
      %v5327 = vxor.u32 %v4915, 2147483648
      %v5328 = vxor.u32 %v4919, 2147483648
      %v5329 = vxor.u32 %v4925, 2147483648
      %v5330 = vxor.u32 %v4929, 2147483648
      %v5331 = vxor.u32 %v4935, 2147483648
      %v5332 = vxor.u32 %v4939, 2147483648
      %v5333 = vxor.u32 %v4945, 2147483648
      %v5334 = vxor.u32 %v4949, 2147483648
      %v5335 = vmul.f32 %v5303, 1.442695
      %v5336 = vpow.pop %v5335
      %v5337 = vmul.f32 %v5304, 1.442695
      %v5338 = vpow.pop %v5337
      %v5339 = vmul.f32 %v5305, 1.442695
      %v5340 = vpow.pop %v5339
      %v5341 = vmul.f32 %v5306, 1.442695
      %v5342 = vpow.pop %v5341
      %v5343 = vmul.f32 %v5307, 1.442695
      %v5344 = vpow.pop %v5343
      %v5345 = vmul.f32 %v5308, 1.442695
      %v5346 = vpow.pop %v5345
      %v5347 = vmul.f32 %v5309, 1.442695
      %v5348 = vpow.pop %v5347
      %v5349 = vmul.f32 %v5310, 1.442695
      %v5350 = vpow.pop %v5349
      %v5351 = vmul.f32 %v5311, 1.442695
      %v5352 = vpow.pop %v5351
      %v5353 = vmul.f32 %v5312, 1.442695
      %v5354 = vpow.pop %v5353
      %v5355 = vmul.f32 %v5313, 1.442695
      %v5356 = vpow.pop %v5355
      %v5357 = vmul.f32 %v5314, 1.442695
      %v5358 = vpow.pop %v5357
      %v5359 = vmul.f32 %v5315, 1.442695
      %v5360 = vpow.pop %v5359
      %v5361 = vmul.f32 %v5316, 1.442695
      %v5362 = vpow.pop %v5361
      %v5363 = vmul.f32 %v5317, 1.442695
      %v5364 = vpow.pop %v5363
      %v5365 = vmul.f32 %v5318, 1.442695
      %v5366 = vpow.pop %v5365
      %v5367 = vmul.f32 %v5319, 1.442695
      %v5368 = vpow.pop %v5367
      %v5369 = vmul.f32 %v5320, 1.442695
      %v5370 = vpow.pop %v5369
      %v5371 = vmul.f32 %v5321, 1.442695
      %v5372 = vpow.pop %v5371
      %v5373 = vmul.f32 %v5322, 1.442695
      %v5374 = vpow.pop %v5373
      %v5375 = vmul.f32 %v5323, 1.442695
      %v5376 = vpow.pop %v5375
      %v5377 = vmul.f32 %v5324, 1.442695
      %v5378 = vpow.pop %v5377
      %v5379 = vmul.f32 %v5325, 1.442695
      %v5380 = vpow.pop %v5379
      %v5381 = vmul.f32 %v5326, 1.442695
      %v5382 = vpow.pop %v5381
      %v5383 = vmul.f32 %v5327, 1.442695
      %v5384 = vpow.pop %v5383
      %v5385 = vmul.f32 %v5328, 1.442695
      %v5386 = vpow.pop %v5385
      %v5387 = vmul.f32 %v5329, 1.442695
      %v5388 = vpow.pop %v5387
      %v5389 = vmul.f32 %v5330, 1.442695
      %v5390 = vpow.pop %v5389
      %v5391 = vmul.f32 %v5331, 1.442695
      %v5392 = vpow.pop %v5391
      %v5393 = vmul.f32 %v5332, 1.442695
      %v5394 = vpow.pop %v5393
      %v5395 = vmul.f32 %v5333, 1.442695
      %v5396 = vpow.pop %v5395
      %v5397 = vmul.f32 %v5334, 1.442695
      %v5398 = vpow.pop %v5397
      %v5399 = vadd.f32 %v5336, 1.0
      %v5400 = vadd.f32 %v5338, 1.0
      %v5401 = vadd.f32 %v5340, 1.0
      %v5402 = vadd.f32 %v5342, 1.0
      %v5403 = vadd.f32 %v5344, 1.0
      %v5404 = vadd.f32 %v5346, 1.0
      %v5405 = vadd.f32 %v5348, 1.0
      %v5406 = vadd.f32 %v5350, 1.0
      %v5407 = vadd.f32 %v5352, 1.0
      %v5408 = vadd.f32 %v5354, 1.0
      %v5409 = vadd.f32 %v5356, 1.0
      %v5410 = vadd.f32 %v5358, 1.0
      %v5411 = vadd.f32 %v5360, 1.0
      %v5412 = vadd.f32 %v5362, 1.0
      %v5413 = vadd.f32 %v5364, 1.0
      %v5414 = vadd.f32 %v5366, 1.0
      %v5415 = vadd.f32 %v5368, 1.0
      %v5416 = vadd.f32 %v5370, 1.0
      %v5417 = vadd.f32 %v5372, 1.0
      %v5418 = vadd.f32 %v5374, 1.0
      %v5419 = vadd.f32 %v5376, 1.0
      %v5420 = vadd.f32 %v5378, 1.0
      %v5421 = vadd.f32 %v5380, 1.0
      %v5422 = vadd.f32 %v5382, 1.0
      %v5423 = vadd.f32 %v5384, 1.0
      %v5424 = vadd.f32 %v5386, 1.0
      %v5425 = vadd.f32 %v5388, 1.0
      %v5426 = vadd.f32 %v5390, 1.0
      %v5427 = vadd.f32 %v5392, 1.0
      %v5428 = vadd.f32 %v5394, 1.0
      %v5429 = vadd.f32 %v5396, 1.0
      %v5430 = vadd.f32 %v5398, 1.0
      %v5431 = vrcp.pop %v5399
      %v5432 = vmul.f32 1.0, %v5431
      %v5433 = vrcp.pop %v5400
      %v5434 = vmul.f32 1.0, %v5433
      %v5435 = vrcp.pop %v5401
      %v5436 = vmul.f32 1.0, %v5435
      %v5437 = vrcp.pop %v5402
      %v5438 = vmul.f32 1.0, %v5437
      %v5439 = vrcp.pop %v5403
      %v5440 = vmul.f32 1.0, %v5439
      %v5441 = vrcp.pop %v5404
      %v5442 = vmul.f32 1.0, %v5441
      %v5443 = vrcp.pop %v5405
      %v5444 = vmul.f32 1.0, %v5443
      %v5445 = vrcp.pop %v5406
      %v5446 = vmul.f32 1.0, %v5445
      %v5447 = vrcp.pop %v5407
      %v5448 = vmul.f32 1.0, %v5447
      %v5449 = vrcp.pop %v5408
      %v5450 = vmul.f32 1.0, %v5449
      %v5451 = vrcp.pop %v5409
      %v5452 = vmul.f32 1.0, %v5451
      %v5453 = vrcp.pop %v5410
      %v5454 = vmul.f32 1.0, %v5453
      %v5455 = vrcp.pop %v5411
      %v5456 = vmul.f32 1.0, %v5455
      %v5457 = vrcp.pop %v5412
      %v5458 = vmul.f32 1.0, %v5457
      %v5459 = vrcp.pop %v5413
      %v5460 = vmul.f32 1.0, %v5459
      %v5461 = vrcp.pop %v5414
      %v5462 = vmul.f32 1.0, %v5461
      %v5463 = vrcp.pop %v5415
      %v5464 = vmul.f32 1.0, %v5463
      %v5465 = vrcp.pop %v5416
      %v5466 = vmul.f32 1.0, %v5465
      %v5467 = vrcp.pop %v5417
      %v5468 = vmul.f32 1.0, %v5467
      %v5469 = vrcp.pop %v5418
      %v5470 = vmul.f32 1.0, %v5469
      %v5471 = vrcp.pop %v5419
      %v5472 = vmul.f32 1.0, %v5471
      %v5473 = vrcp.pop %v5420
      %v5474 = vmul.f32 1.0, %v5473
      %v5475 = vrcp.pop %v5421
      %v5476 = vmul.f32 1.0, %v5475
      %v5477 = vrcp.pop %v5422
      %v5478 = vmul.f32 1.0, %v5477
      %v5479 = vrcp.pop %v5423
      %v5480 = vmul.f32 1.0, %v5479
      %v5481 = vrcp.pop %v5424
      %v5482 = vmul.f32 1.0, %v5481
      %v5483 = vrcp.pop %v5425
      %v5484 = vmul.f32 1.0, %v5483
      %v5485 = vrcp.pop %v5426
      %v5486 = vmul.f32 1.0, %v5485
      %v5487 = vrcp.pop %v5427
      %v5488 = vmul.f32 1.0, %v5487
      %v5489 = vrcp.pop %v5428
      %v5490 = vmul.f32 1.0, %v5489
      %v5491 = vrcp.pop %v5429
      %v5492 = vmul.f32 1.0, %v5491
      %v5493 = vrcp.pop %v5430
      %v5494 = vmul.f32 1.0, %v5493
      %5499 = vrot.lane.b32.xlu0 %v5271, 32
      %v5500 = vpop.permute.xlu0 %5499
      %5501 = vrot.lane.b32.xlu0 %v5272, 32
      %v5502 = vpop.permute.xlu0 %5501
      %5503 = vrot.lane.b32.xlu0 %v5273, 32
      %v5504 = vpop.permute.xlu0 %5503
      %5505 = vrot.lane.b32.xlu0 %v5274, 32
      %v5506 = vpop.permute.xlu0 %5505
      %5511 = vst.msk [vmem:[#allocation3] sm:$0xff] %vm1349, %v5500
      %5512 = vst.msk [vmem:[#allocation3 + $0x10] sm:$0xff] %vm1349, %v5502
      %5513 = vst.msk [vmem:[#allocation3 + $0x20] sm:$0xff] %vm1349, %v5504
      %5514 = vst.msk [vmem:[#allocation3 + $0x30] sm:$0xff] %vm1349, %v5506
      %5515 = vrot.lane.b32.xlu0 %v5271, 96
      %v5516 = vpop.permute.xlu0 %5515
      %5517 = vrot.lane.b32.xlu0 %v5272, 96
      %v5518 = vpop.permute.xlu0 %5517
      %5519 = vrot.lane.b32.xlu0 %v5273, 96
      %v5520 = vpop.permute.xlu0 %5519
      %5521 = vrot.lane.b32.xlu0 %v5274, 96
      %v5522 = vpop.permute.xlu0 %5521
      %5527 = vst.msk [vmem:[#allocation4] sm:$0xff] %vm1349, %v5516
      %5528 = vst.msk [vmem:[#allocation4 + $0x10] sm:$0xff] %vm1349, %v5518
      %5529 = vst.msk [vmem:[#allocation4 + $0x20] sm:$0xff] %vm1349, %v5520
      %5530 = vst.msk [vmem:[#allocation4 + $0x30] sm:$0xff] %vm1349, %v5522
      %5535 = vrot.lane.b32.xlu0 %v5275, 64
      %v5536 = vpop.permute.xlu0 %5535
      %5537 = vrot.lane.b32.xlu0 %v5276, 64
      %v5538 = vpop.permute.xlu0 %5537
      %5539 = vrot.lane.b32.xlu0 %v5277, 64
      %v5540 = vpop.permute.xlu0 %5539
      %5541 = vrot.lane.b32.xlu0 %v5278, 64
      %v5542 = vpop.permute.xlu0 %5541
      %5547 = vst.msk [vmem:[#allocation3] sm:$0xff] %vm2716, %v5536
      %5548 = vst.msk [vmem:[#allocation3 + $0x10] sm:$0xff] %vm2716, %v5538
      %5549 = vst.msk [vmem:[#allocation3 + $0x20] sm:$0xff] %vm2716, %v5540
      %5550 = vst.msk [vmem:[#allocation3 + $0x30] sm:$0xff] %vm2716, %v5542
      %5551 = vst.msk [vmem:[#allocation4] sm:$0xff] %vm2716, %v5275
      %5552 = vst.msk [vmem:[#allocation4 + $0x10] sm:$0xff] %vm2716, %v5276
      %5553 = vst.msk [vmem:[#allocation4 + $0x20] sm:$0xff] %vm2716, %v5277
      %5554 = vst.msk [vmem:[#allocation4 + $0x30] sm:$0xff] %vm2716, %v5278
      %5559 = vrot.lane.b32.xlu0 %v5279, 96
      %v5560 = vpop.permute.xlu0 %5559
      %5561 = vrot.lane.b32.xlu0 %v5280, 96
      %v5562 = vpop.permute.xlu0 %5561
      %5563 = vrot.lane.b32.xlu0 %v5281, 96
      %v5564 = vpop.permute.xlu0 %5563
      %5565 = vrot.lane.b32.xlu0 %v5282, 96
      %v5566 = vpop.permute.xlu0 %5565
      %5571 = vst.msk [vmem:[#allocation3] sm:$0xff] %vm2757, %v5560
      %5572 = vst.msk [vmem:[#allocation3 + $0x10] sm:$0xff] %vm2757, %v5562
      %5573 = vst.msk [vmem:[#allocation3 + $0x20] sm:$0xff] %vm2757, %v5564
      %5574 = vst.msk [vmem:[#allocation3 + $0x30] sm:$0xff] %vm2757, %v5566
      %5575 = vrot.lane.b32.xlu0 %v5279, 32
      %v5576 = vpop.permute.xlu0 %5575
      %5577 = vrot.lane.b32.xlu0 %v5280, 32
      %v5578 = vpop.permute.xlu0 %5577
      %5579 = vrot.lane.b32.xlu0 %v5281, 32
      %v5580 = vpop.permute.xlu0 %5579
      %5581 = vrot.lane.b32.xlu0 %v5282, 32
      %v5582 = vpop.permute.xlu0 %5581
      %5587 = vst.msk [vmem:[#allocation4] sm:$0xff] %vm2757, %v5576
      %5588 = vst.msk [vmem:[#allocation4 + $0x10] sm:$0xff] %vm2757, %v5578
      %5589 = vst.msk [vmem:[#allocation4 + $0x20] sm:$0xff] %vm2757, %v5580
      %5590 = vst.msk [vmem:[#allocation4 + $0x30] sm:$0xff] %vm2757, %v5582
      %5591 = vst.msk [vmem:[#allocation3] sm:$0xff] %vm2794, %v5283
      %5592 = vst.msk [vmem:[#allocation3 + $0x10] sm:$0xff] %vm2794, %v5284
      %5593 = vst.msk [vmem:[#allocation3 + $0x20] sm:$0xff] %vm2794, %v5285
      %5594 = vst.msk [vmem:[#allocation3 + $0x30] sm:$0xff] %vm2794, %v5286
      %5599 = vrot.lane.b32.xlu0 %v5283, 64
      %v5600 = vpop.permute.xlu0 %5599
      %5601 = vrot.lane.b32.xlu0 %v5284, 64
      %v5602 = vpop.permute.xlu0 %5601
      %5603 = vrot.lane.b32.xlu0 %v5285, 64
      %v5604 = vpop.permute.xlu0 %5603
      %5605 = vrot.lane.b32.xlu0 %v5286, 64
      %v5606 = vpop.permute.xlu0 %5605
      %5611 = vst.msk [vmem:[#allocation4] sm:$0xff] %vm2794, %v5600
      %5612 = vst.msk [vmem:[#allocation4 + $0x10] sm:$0xff] %vm2794, %v5602
      %5613 = vst.msk [vmem:[#allocation4 + $0x20] sm:$0xff] %vm2794, %v5604
      %5614 = vst.msk [vmem:[#allocation4 + $0x30] sm:$0xff] %vm2794, %v5606
      %5619 = vrot.lane.b32.xlu0 %v5287, 32
      %v5620 = vpop.permute.xlu0 %5619
      %5621 = vrot.lane.b32.xlu0 %v5288, 32
      %v5622 = vpop.permute.xlu0 %5621
      %5623 = vrot.lane.b32.xlu0 %v5289, 32
      %v5624 = vpop.permute.xlu0 %5623
      %5625 = vrot.lane.b32.xlu0 %v5290, 32
      %v5626 = vpop.permute.xlu0 %5625
      %5631 = vst.msk [vmem:[#allocation3 + $0x8] sm:$0xff] %vm1349, %v5620
      %5632 = vst.msk [vmem:[#allocation3 + $0x18] sm:$0xff] %vm1349, %v5622
      %5633 = vst.msk [vmem:[#allocation3 + $0x28] sm:$0xff] %vm1349, %v5624
      %5634 = vst.msk [vmem:[#allocation3 + $0x38] sm:$0xff] %vm1349, %v5626
      %5635 = vrot.lane.b32.xlu0 %v5287, 96
      %v5636 = vpop.permute.xlu0 %5635
      %5637 = vrot.lane.b32.xlu0 %v5288, 96
      %v5638 = vpop.permute.xlu0 %5637
      %5639 = vrot.lane.b32.xlu0 %v5289, 96
      %v5640 = vpop.permute.xlu0 %5639
      %5641 = vrot.lane.b32.xlu0 %v5290, 96
      %v5642 = vpop.permute.xlu0 %5641
      %5647 = vst.msk [vmem:[#allocation4 + $0x8] sm:$0xff] %vm1349, %v5636
      %5648 = vst.msk [vmem:[#allocation4 + $0x18] sm:$0xff] %vm1349, %v5638
      %5649 = vst.msk [vmem:[#allocation4 + $0x28] sm:$0xff] %vm1349, %v5640
      %5650 = vst.msk [vmem:[#allocation4 + $0x38] sm:$0xff] %vm1349, %v5642
      %5655 = vrot.lane.b32.xlu0 %v5291, 64
      %v5656 = vpop.permute.xlu0 %5655
      %5657 = vrot.lane.b32.xlu0 %v5292, 64
      %v5658 = vpop.permute.xlu0 %5657
      %5659 = vrot.lane.b32.xlu0 %v5293, 64
      %v5660 = vpop.permute.xlu0 %5659
      %5661 = vrot.lane.b32.xlu0 %v5294, 64
      %v5662 = vpop.permute.xlu0 %5661
      %5667 = vst.msk [vmem:[#allocation3 + $0x8] sm:$0xff] %vm2716, %v5656
      %5668 = vst.msk [vmem:[#allocation3 + $0x18] sm:$0xff] %vm2716, %v5658
      %5669 = vst.msk [vmem:[#allocation3 + $0x28] sm:$0xff] %vm2716, %v5660
      %5670 = vst.msk [vmem:[#allocation3 + $0x38] sm:$0xff] %vm2716, %v5662
      %5671 = vst.msk [vmem:[#allocation4 + $0x8] sm:$0xff] %vm2716, %v5291
      %5672 = vst.msk [vmem:[#allocation4 + $0x18] sm:$0xff] %vm2716, %v5292
      %5673 = vst.msk [vmem:[#allocation4 + $0x28] sm:$0xff] %vm2716, %v5293
      %5674 = vst.msk [vmem:[#allocation4 + $0x38] sm:$0xff] %vm2716, %v5294
      %5679 = vrot.lane.b32.xlu0 %v5295, 96
      %v5680 = vpop.permute.xlu0 %5679
      %5681 = vrot.lane.b32.xlu0 %v5296, 96
      %v5682 = vpop.permute.xlu0 %5681
      %5683 = vrot.lane.b32.xlu0 %v5297, 96
      %v5684 = vpop.permute.xlu0 %5683
      %5685 = vrot.lane.b32.xlu0 %v5298, 96
      %v5686 = vpop.permute.xlu0 %5685
      %5691 = vst.msk [vmem:[#allocation3 + $0x8] sm:$0xff] %vm2757, %v5680
      %5692 = vst.msk [vmem:[#allocation3 + $0x18] sm:$0xff] %vm2757, %v5682
      %5693 = vst.msk [vmem:[#allocation3 + $0x28] sm:$0xff] %vm2757, %v5684
      %5694 = vst.msk [vmem:[#allocation3 + $0x38] sm:$0xff] %vm2757, %v5686
      %5695 = vrot.lane.b32.xlu0 %v5295, 32
      %v5696 = vpop.permute.xlu0 %5695
      %5697 = vrot.lane.b32.xlu0 %v5296, 32
      %v5698 = vpop.permute.xlu0 %5697
      %5699 = vrot.lane.b32.xlu0 %v5297, 32
      %v5700 = vpop.permute.xlu0 %5699
      %5701 = vrot.lane.b32.xlu0 %v5298, 32
      %v5702 = vpop.permute.xlu0 %5701
      %5707 = vst.msk [vmem:[#allocation4 + $0x8] sm:$0xff] %vm2757, %v5696
      %5708 = vst.msk [vmem:[#allocation4 + $0x18] sm:$0xff] %vm2757, %v5698
      %5709 = vst.msk [vmem:[#allocation4 + $0x28] sm:$0xff] %vm2757, %v5700
      %5710 = vst.msk [vmem:[#allocation4 + $0x38] sm:$0xff] %vm2757, %v5702
      %5711 = vst.msk [vmem:[#allocation3 + $0x8] sm:$0xff] %vm2794, %v5299
      %5712 = vst.msk [vmem:[#allocation3 + $0x18] sm:$0xff] %vm2794, %v5300
      %5713 = vst.msk [vmem:[#allocation3 + $0x28] sm:$0xff] %vm2794, %v5301
      %5714 = vst.msk [vmem:[#allocation3 + $0x38] sm:$0xff] %vm2794, %v5302
      %5719 = vrot.lane.b32.xlu0 %v5299, 64
      %v5720 = vpop.permute.xlu0 %5719
      %5721 = vrot.lane.b32.xlu0 %v5300, 64
      %v5722 = vpop.permute.xlu0 %5721
      %5723 = vrot.lane.b32.xlu0 %v5301, 64
      %v5724 = vpop.permute.xlu0 %5723
      %5725 = vrot.lane.b32.xlu0 %v5302, 64
      %v5726 = vpop.permute.xlu0 %5725
      %5731 = vst.msk [vmem:[#allocation4 + $0x8] sm:$0xff] %vm2794, %v5720
      %5732 = vst.msk [vmem:[#allocation4 + $0x18] sm:$0xff] %vm2794, %v5722
      %5733 = vst.msk [vmem:[#allocation4 + $0x28] sm:$0xff] %vm2794, %v5724
      %5734 = vst.msk [vmem:[#allocation4 + $0x38] sm:$0xff] %vm2794, %v5726
      loop: start=0, step=1, limit=32
      $region104: #{sparse_dist_forward.3} parent=91 // loop_pre_header
        _
      $region105: #{sparse_dist_forward.3} parent=91 // loop_header
        %s5736 = sphi 0, %s5740
        %p5737 = scmp.ge.s32.totalorder %s5736, 32
      $region106: #{sparse_dist_forward.3} parent=91 // loop_header_branch
        %5739 = sbr.rel (%p5737) target = $region110
      $region107: #{sparse_dist_forward.3} parent=91 // loop_body
        %s5741 = sshra.s32 %s5736, 3
        %s5742 = sand.u32 %s5736, 7
        %s5743 = sshra.s32 %s5736, 3
        %s5744 = sand.u32 %s5736, 7
        %s5745 = smul.u32 %s5741, 2
        %s5746 = smul.u32 %s5745, 8
        %s5747 = sadd.s32 %s5746, %s5744
        %s5748 = scalar_lea.vmem [#allocation3], %s5747
        %v5749 = vld [vmem:[%s5748] ss:$8 sm:$0x3]
        %s5750 = smul.u32 %s5736, 8
        %s5751 = sld [smem:[#allocation7 + %s5750]]
        %s5752 = sshra.s32 %s5751, 3
        %s5753 = sand.u32 %s5751, 7
        %s5754 = sshra.s32 %s5751, 3
        %s5755 = sand.u32 %s5751, 7
        %s5756 = smul.u32 %s5752, 2
        %s5757 = smul.u32 %s5756, 8
        %s5758 = sadd.s32 %s5757, %s5755
        %s5759 = scalar_lea.vmem [#allocation4], %s5758
        %v5760 = vld [vmem:[%s5759] ss:$8 sm:$0x3]
        %v5761 = vmul.f32 %v5749, %v5760
        %5763 = vrot.lane.b32.xlu0 %v5761, 96
        %v5764 = vpop.permute.xlu0 %5763
        %v5766 = vadd.f32 %v5761, %v5764
        %5767 = vrot.lane.b32.xlu0 %v5761, 64
        %v5768 = vpop.permute.xlu0 %5767
        %v5770 = vadd.f32 %v5766, %v5768
        %5771 = vrot.lane.b32.xlu0 %v5761, 32
        %v5772 = vpop.permute.xlu0 %5771
        %v5774 = vadd.f32 %v5770, %v5772
        %v5775 = vrot.slane %v5761, 1
        %v5777 = vadd.f32 %v5774, %v5775
        %v5778 = vrot.slane %v5764, 1
        %v5780 = vadd.f32 %v5777, %v5778
        %v5781 = vrot.slane %v5768, 1
        %v5783 = vadd.f32 %v5780, %v5781
        %v5784 = vrot.slane %v5772, 1
        %v5786 = vadd.f32 %v5783, %v5784
        %s5787 = scalar_lea.vmem [#allocation5], %s5736
        %vm5788 = vcmask 253952
        %5789 = vst.msk [vmem:[%s5787] sm:$0x1] %vm5788, %v5786
        %s5790 = sadd.s32 %s5750, 1
        %s5791 = sld [smem:[#allocation7 + %s5790]]
        %s5792 = sshra.s32 %s5791, 3
        %s5793 = sand.u32 %s5791, 7
        %s5794 = sshra.s32 %s5791, 3
        %s5795 = sand.u32 %s5791, 7
        %s5796 = smul.u32 %s5792, 2
        %s5797 = smul.u32 %s5796, 8
        %s5798 = sadd.s32 %s5797, %s5795
        %s5799 = scalar_lea.vmem [#allocation4], %s5798
        %v5800 = vld [vmem:[%s5799] ss:$8 sm:$0x3]
        %v5801 = vmul.f32 %v5749, %v5800
        %5803 = vrot.lane.b32.xlu0 %v5801, 96
        %v5804 = vpop.permute.xlu0 %5803
        %v5806 = vadd.f32 %v5801, %v5804
        %5807 = vrot.lane.b32.xlu0 %v5801, 64
        %v5808 = vpop.permute.xlu0 %5807
        %v5810 = vadd.f32 %v5806, %v5808
        %5811 = vrot.lane.b32.xlu0 %v5801, 32
        %v5812 = vpop.permute.xlu0 %5811
        %v5814 = vadd.f32 %v5810, %v5812
        %v5815 = vrot.slane %v5801, 1
        %v5817 = vadd.f32 %v5814, %v5815
        %v5818 = vrot.slane %v5804, 1
        %v5820 = vadd.f32 %v5817, %v5818
        %v5821 = vrot.slane %v5808, 1
        %v5823 = vadd.f32 %v5820, %v5821
        %v5824 = vrot.slane %v5812, 1
        %v5826 = vadd.f32 %v5823, %v5824
        %s5827 = sadd.s32 %s5736, 32
        %s5828 = scalar_lea.vmem [#allocation5], %s5827
        %5829 = vst.msk [vmem:[%s5828] sm:$0x1] %vm5788, %v5826
        %s5830 = sadd.s32 %s5750, 2
        %s5831 = sld [smem:[#allocation7 + %s5830]]
        %s5832 = sshra.s32 %s5831, 3
        %s5833 = sand.u32 %s5831, 7
        %s5834 = sshra.s32 %s5831, 3
        %s5835 = sand.u32 %s5831, 7
        %s5836 = smul.u32 %s5832, 2
        %s5837 = smul.u32 %s5836, 8
        %s5838 = sadd.s32 %s5837, %s5835
        %s5839 = scalar_lea.vmem [#allocation4], %s5838
        %v5840 = vld [vmem:[%s5839] ss:$8 sm:$0x3]
        %v5841 = vmul.f32 %v5749, %v5840
        %5843 = vrot.lane.b32.xlu0 %v5841, 96
        %v5844 = vpop.permute.xlu0 %5843
        %v5846 = vadd.f32 %v5841, %v5844
        %5847 = vrot.lane.b32.xlu0 %v5841, 64
        %v5848 = vpop.permute.xlu0 %5847
        %v5850 = vadd.f32 %v5846, %v5848
        %5851 = vrot.lane.b32.xlu0 %v5841, 32
        %v5852 = vpop.permute.xlu0 %5851
        %v5854 = vadd.f32 %v5850, %v5852
        %v5855 = vrot.slane %v5841, 1
        %v5857 = vadd.f32 %v5854, %v5855
        %v5858 = vrot.slane %v5844, 1
        %v5860 = vadd.f32 %v5857, %v5858
        %v5861 = vrot.slane %v5848, 1
        %v5863 = vadd.f32 %v5860, %v5861
        %v5864 = vrot.slane %v5852, 1
        %v5866 = vadd.f32 %v5863, %v5864
        %s5867 = sadd.s32 %s5736, 64
        %s5868 = scalar_lea.vmem [#allocation5], %s5867
        %5869 = vst.msk [vmem:[%s5868] sm:$0x1] %vm5788, %v5866
        %s5870 = sadd.s32 %s5750, 3
        %s5871 = sld [smem:[#allocation7 + %s5870]]
        %s5872 = sshra.s32 %s5871, 3
        %s5873 = sand.u32 %s5871, 7
        %s5874 = sshra.s32 %s5871, 3
        %s5875 = sand.u32 %s5871, 7
        %s5876 = smul.u32 %s5872, 2
        %s5877 = smul.u32 %s5876, 8
        %s5878 = sadd.s32 %s5877, %s5875
        %s5879 = scalar_lea.vmem [#allocation4], %s5878
        %v5880 = vld [vmem:[%s5879] ss:$8 sm:$0x3]
        %v5881 = vmul.f32 %v5749, %v5880
        %5883 = vrot.lane.b32.xlu0 %v5881, 96
        %v5884 = vpop.permute.xlu0 %5883
        %v5886 = vadd.f32 %v5881, %v5884
        %5887 = vrot.lane.b32.xlu0 %v5881, 64
        %v5888 = vpop.permute.xlu0 %5887
        %v5890 = vadd.f32 %v5886, %v5888
        %5891 = vrot.lane.b32.xlu0 %v5881, 32
        %v5892 = vpop.permute.xlu0 %5891
        %v5894 = vadd.f32 %v5890, %v5892
        %v5895 = vrot.slane %v5881, 1
        %v5897 = vadd.f32 %v5894, %v5895
        %v5898 = vrot.slane %v5884, 1
        %v5900 = vadd.f32 %v5897, %v5898
        %v5901 = vrot.slane %v5888, 1
        %v5903 = vadd.f32 %v5900, %v5901
        %v5904 = vrot.slane %v5892, 1
        %v5906 = vadd.f32 %v5903, %v5904
        %s5907 = sadd.s32 %s5736, 96
        %s5908 = scalar_lea.vmem [#allocation5], %s5907
        %5909 = vst.msk [vmem:[%s5908] sm:$0x1] %vm5788, %v5906
        %s5910 = sadd.s32 %s5750, 4
        %s5911 = sld [smem:[#allocation7 + %s5910]]
        %s5912 = sshra.s32 %s5911, 3
        %s5913 = sand.u32 %s5911, 7
        %s5914 = sshra.s32 %s5911, 3
        %s5915 = sand.u32 %s5911, 7
        %s5916 = smul.u32 %s5912, 2
        %s5917 = smul.u32 %s5916, 8
        %s5918 = sadd.s32 %s5917, %s5915
        %s5919 = scalar_lea.vmem [#allocation4], %s5918
        %v5920 = vld [vmem:[%s5919] ss:$8 sm:$0x3]
        %v5921 = vmul.f32 %v5749, %v5920
        %5923 = vrot.lane.b32.xlu0 %v5921, 96
        %v5924 = vpop.permute.xlu0 %5923
        %v5926 = vadd.f32 %v5921, %v5924
        %5927 = vrot.lane.b32.xlu0 %v5921, 64
        %v5928 = vpop.permute.xlu0 %5927
        %v5930 = vadd.f32 %v5926, %v5928
        %5931 = vrot.lane.b32.xlu0 %v5921, 32
        %v5932 = vpop.permute.xlu0 %5931
        %v5934 = vadd.f32 %v5930, %v5932
        %v5935 = vrot.slane %v5921, 1
        %v5937 = vadd.f32 %v5934, %v5935
        %v5938 = vrot.slane %v5924, 1
        %v5940 = vadd.f32 %v5937, %v5938
        %v5941 = vrot.slane %v5928, 1
        %v5943 = vadd.f32 %v5940, %v5941
        %v5944 = vrot.slane %v5932, 1
        %v5946 = vadd.f32 %v5943, %v5944
        %s5947 = sadd.s32 %s5736, 128
        %s5948 = scalar_lea.vmem [#allocation5], %s5947
        %5949 = vst.msk [vmem:[%s5948] sm:$0x1] %vm5788, %v5946
        %s5950 = sadd.s32 %s5750, 5
        %s5951 = sld [smem:[#allocation7 + %s5950]]
        %s5952 = sshra.s32 %s5951, 3
        %s5953 = sand.u32 %s5951, 7
        %s5954 = sshra.s32 %s5951, 3
        %s5955 = sand.u32 %s5951, 7
        %s5956 = smul.u32 %s5952, 2
        %s5957 = smul.u32 %s5956, 8
        %s5958 = sadd.s32 %s5957, %s5955
        %s5959 = scalar_lea.vmem [#allocation4], %s5958
        %v5960 = vld [vmem:[%s5959] ss:$8 sm:$0x3]
        %v5961 = vmul.f32 %v5749, %v5960
        %5963 = vrot.lane.b32.xlu0 %v5961, 96
        %v5964 = vpop.permute.xlu0 %5963
        %v5966 = vadd.f32 %v5961, %v5964
        %5967 = vrot.lane.b32.xlu0 %v5961, 64
        %v5968 = vpop.permute.xlu0 %5967
        %v5970 = vadd.f32 %v5966, %v5968
        %5971 = vrot.lane.b32.xlu0 %v5961, 32
        %v5972 = vpop.permute.xlu0 %5971
        %v5974 = vadd.f32 %v5970, %v5972
        %v5975 = vrot.slane %v5961, 1
        %v5977 = vadd.f32 %v5974, %v5975
        %v5978 = vrot.slane %v5964, 1
        %v5980 = vadd.f32 %v5977, %v5978
        %v5981 = vrot.slane %v5968, 1
        %v5983 = vadd.f32 %v5980, %v5981
        %v5984 = vrot.slane %v5972, 1
        %v5986 = vadd.f32 %v5983, %v5984
        %s5987 = sadd.s32 %s5736, 160
        %s5988 = scalar_lea.vmem [#allocation5], %s5987
        %5989 = vst.msk [vmem:[%s5988] sm:$0x1] %vm5788, %v5986
        %s5990 = sadd.s32 %s5750, 6
        %s5991 = sld [smem:[#allocation7 + %s5990]]
        %s5992 = sshra.s32 %s5991, 3
        %s5993 = sand.u32 %s5991, 7
        %s5994 = sshra.s32 %s5991, 3
        %s5995 = sand.u32 %s5991, 7
        %s5996 = smul.u32 %s5992, 2
        %s5997 = smul.u32 %s5996, 8
        %s5998 = sadd.s32 %s5997, %s5995
        %s5999 = scalar_lea.vmem [#allocation4], %s5998
        %v6000 = vld [vmem:[%s5999] ss:$8 sm:$0x3]
        %v6001 = vmul.f32 %v5749, %v6000
        %6003 = vrot.lane.b32.xlu0 %v6001, 96
        %v6004 = vpop.permute.xlu0 %6003
        %v6006 = vadd.f32 %v6001, %v6004
        %6007 = vrot.lane.b32.xlu0 %v6001, 64
        %v6008 = vpop.permute.xlu0 %6007
        %v6010 = vadd.f32 %v6006, %v6008
        %6011 = vrot.lane.b32.xlu0 %v6001, 32
        %v6012 = vpop.permute.xlu0 %6011
        %v6014 = vadd.f32 %v6010, %v6012
        %v6015 = vrot.slane %v6001, 1
        %v6017 = vadd.f32 %v6014, %v6015
        %v6018 = vrot.slane %v6004, 1
        %v6020 = vadd.f32 %v6017, %v6018
        %v6021 = vrot.slane %v6008, 1
        %v6023 = vadd.f32 %v6020, %v6021
        %v6024 = vrot.slane %v6012, 1
        %v6026 = vadd.f32 %v6023, %v6024
        %s6027 = sadd.s32 %s5736, 192
        %s6028 = scalar_lea.vmem [#allocation5], %s6027
        %6029 = vst.msk [vmem:[%s6028] sm:$0x1] %vm5788, %v6026
        %s6030 = sadd.s32 %s5750, 7
        %s6031 = sld [smem:[#allocation7 + %s6030]]
        %s6032 = sshra.s32 %s6031, 3
        %s6033 = sand.u32 %s6031, 7
        %s6034 = sshra.s32 %s6031, 3
        %s6035 = sand.u32 %s6031, 7
        %s6036 = smul.u32 %s6032, 2
        %s6037 = smul.u32 %s6036, 8
        %s6038 = sadd.s32 %s6037, %s6035
        %s6039 = scalar_lea.vmem [#allocation4], %s6038
        %v6040 = vld [vmem:[%s6039] ss:$8 sm:$0x3]
        %v6041 = vmul.f32 %v5749, %v6040
        %6043 = vrot.lane.b32.xlu0 %v6041, 96
        %v6044 = vpop.permute.xlu0 %6043
        %v6046 = vadd.f32 %v6041, %v6044
        %6047 = vrot.lane.b32.xlu0 %v6041, 64
        %v6048 = vpop.permute.xlu0 %6047
        %v6050 = vadd.f32 %v6046, %v6048
        %6051 = vrot.lane.b32.xlu0 %v6041, 32
        %v6052 = vpop.permute.xlu0 %6051
        %v6054 = vadd.f32 %v6050, %v6052
        %v6055 = vrot.slane %v6041, 1
        %v6057 = vadd.f32 %v6054, %v6055
        %v6058 = vrot.slane %v6044, 1
        %v6060 = vadd.f32 %v6057, %v6058
        %v6061 = vrot.slane %v6048, 1
        %v6063 = vadd.f32 %v6060, %v6061
        %v6064 = vrot.slane %v6052, 1
        %v6066 = vadd.f32 %v6063, %v6064
        %s6067 = sadd.s32 %s5736, 224
        %s6068 = scalar_lea.vmem [#allocation5], %s6067
        %6069 = vst.msk [vmem:[%s6068] sm:$0x1] %vm5788, %v6066
      $region108: #{sparse_dist_forward.3} parent=91 // loop_footer
        %s5740 = sadd.s32 1, %s5736
      $region109: #{sparse_dist_forward.3} parent=91 // loop_footer_branch
        %5735 = sbr.rel target = $region105
      $region110: #{sparse_dist_forward.3} parent=91 // loop_exit
        _
      %v6070 = vld [vmem:[#allocation5] sm:$0xff]
      %v6071 = vld [vmem:[#allocation5 + $0x8] sm:$0xff]
      %v6072 = vld [vmem:[#allocation5 + $0x10] sm:$0xff]
      %v6073 = vld [vmem:[#allocation5 + $0x18] sm:$0xff]
      %v6074 = vld [vmem:[#allocation5 + $0x20] sm:$0xff]
      %v6075 = vld [vmem:[#allocation5 + $0x28] sm:$0xff]
      %v6076 = vld [vmem:[#allocation5 + $0x30] sm:$0xff]
      %v6077 = vld [vmem:[#allocation5 + $0x38] sm:$0xff]
      %v6078 = vld [vmem:[#allocation5 + $0x40] sm:$0xff]
      %v6079 = vld [vmem:[#allocation5 + $0x48] sm:$0xff]
      %v6080 = vld [vmem:[#allocation5 + $0x50] sm:$0xff]
      %v6081 = vld [vmem:[#allocation5 + $0x58] sm:$0xff]
      %v6082 = vld [vmem:[#allocation5 + $0x60] sm:$0xff]
      %v6083 = vld [vmem:[#allocation5 + $0x68] sm:$0xff]
      %v6084 = vld [vmem:[#allocation5 + $0x70] sm:$0xff]
      %v6085 = vld [vmem:[#allocation5 + $0x78] sm:$0xff]
      %v6086 = vld [vmem:[#allocation5 + $0x80] sm:$0xff]
      %v6087 = vld [vmem:[#allocation5 + $0x88] sm:$0xff]
      %v6088 = vld [vmem:[#allocation5 + $0x90] sm:$0xff]
      %v6089 = vld [vmem:[#allocation5 + $0x98] sm:$0xff]
      %v6090 = vld [vmem:[#allocation5 + $0xa0] sm:$0xff]
      %v6091 = vld [vmem:[#allocation5 + $0xa8] sm:$0xff]
      %v6092 = vld [vmem:[#allocation5 + $0xb0] sm:$0xff]
      %v6093 = vld [vmem:[#allocation5 + $0xb8] sm:$0xff]
      %v6094 = vld [vmem:[#allocation5 + $0xc0] sm:$0xff]
      %v6095 = vld [vmem:[#allocation5 + $0xc8] sm:$0xff]
      %v6096 = vld [vmem:[#allocation5 + $0xd0] sm:$0xff]
      %v6097 = vld [vmem:[#allocation5 + $0xd8] sm:$0xff]
      %v6098 = vld [vmem:[#allocation5 + $0xe0] sm:$0xff]
      %v6099 = vld [vmem:[#allocation5 + $0xe8] sm:$0xff]
      %v6100 = vld [vmem:[#allocation5 + $0xf0] sm:$0xff]
      %v6101 = vld [vmem:[#allocation5 + $0xf8] sm:$0xff]
      %s6102 = scalar_lea.vmem %s750, 1
      %v6103 = vld [vmem:[%s6102] sm:$0x1]
      %s6104 = scalar_lea.vmem %s754, 1
      %v6105 = vld [vmem:[%s6104] sm:$0x1]
      %v6106 = vsel %vm1349, %v6070, 0.0
      %6107 = vadd.xlane.f32.xlu0 %v6106
      %v6108 = vpop.xlane.xlu0 %6107
      %v6109 = vsel %vm1349, %v6071, 0.0
      %6110 = vadd.xlane.f32.xlu0 %v6109
      %v6111 = vpop.xlane.xlu0 %6110
      %v6112 = vsel %vm1349, %v6072, 0.0
      %6113 = vadd.xlane.f32.xlu0 %v6112
      %v6114 = vpop.xlane.xlu0 %6113
      %v6115 = vsel %vm1349, %v6073, 0.0
      %6116 = vadd.xlane.f32.xlu0 %v6115
      %v6117 = vpop.xlane.xlu0 %6116
      %v6118 = vsel %vm1349, %v6074, 0.0
      %6119 = vadd.xlane.f32.xlu0 %v6118
      %v6120 = vpop.xlane.xlu0 %6119
      %v6121 = vsel %vm1349, %v6075, 0.0
      %6122 = vadd.xlane.f32.xlu0 %v6121
      %v6123 = vpop.xlane.xlu0 %6122
      %v6124 = vsel %vm1349, %v6076, 0.0
      %6125 = vadd.xlane.f32.xlu0 %v6124
      %v6126 = vpop.xlane.xlu0 %6125
      %v6127 = vsel %vm1349, %v6077, 0.0
      %6128 = vadd.xlane.f32.xlu0 %v6127
      %v6129 = vpop.xlane.xlu0 %6128
      %v6130 = vsel %vm1349, %v6078, 0.0
      %6131 = vadd.xlane.f32.xlu0 %v6130
      %v6132 = vpop.xlane.xlu0 %6131
      %v6133 = vsel %vm1349, %v6079, 0.0
      %6134 = vadd.xlane.f32.xlu0 %v6133
      %v6135 = vpop.xlane.xlu0 %6134
      %v6136 = vsel %vm1349, %v6080, 0.0
      %6137 = vadd.xlane.f32.xlu0 %v6136
      %v6138 = vpop.xlane.xlu0 %6137
      %v6139 = vsel %vm1349, %v6081, 0.0
      %6140 = vadd.xlane.f32.xlu0 %v6139
      %v6141 = vpop.xlane.xlu0 %6140
      %v6142 = vsel %vm1349, %v6082, 0.0
      %6143 = vadd.xlane.f32.xlu0 %v6142
      %v6144 = vpop.xlane.xlu0 %6143
      %v6145 = vsel %vm1349, %v6083, 0.0
      %6146 = vadd.xlane.f32.xlu0 %v6145
      %v6147 = vpop.xlane.xlu0 %6146
      %v6148 = vsel %vm1349, %v6084, 0.0
      %6149 = vadd.xlane.f32.xlu0 %v6148
      %v6150 = vpop.xlane.xlu0 %6149
      %v6151 = vsel %vm1349, %v6085, 0.0
      %6152 = vadd.xlane.f32.xlu0 %v6151
      %v6153 = vpop.xlane.xlu0 %6152
      %v6154 = vsel %vm1349, %v6086, 0.0
      %6155 = vadd.xlane.f32.xlu0 %v6154
      %v6156 = vpop.xlane.xlu0 %6155
      %v6157 = vsel %vm1349, %v6087, 0.0
      %6158 = vadd.xlane.f32.xlu0 %v6157
      %v6159 = vpop.xlane.xlu0 %6158
      %v6160 = vsel %vm1349, %v6088, 0.0
      %6161 = vadd.xlane.f32.xlu0 %v6160
      %v6162 = vpop.xlane.xlu0 %6161
      %v6163 = vsel %vm1349, %v6089, 0.0
      %6164 = vadd.xlane.f32.xlu0 %v6163
      %v6165 = vpop.xlane.xlu0 %6164
      %v6166 = vsel %vm1349, %v6090, 0.0
      %6167 = vadd.xlane.f32.xlu0 %v6166
      %v6168 = vpop.xlane.xlu0 %6167
      %v6169 = vsel %vm1349, %v6091, 0.0
      %6170 = vadd.xlane.f32.xlu0 %v6169
      %v6171 = vpop.xlane.xlu0 %6170
      %v6172 = vsel %vm1349, %v6092, 0.0
      %6173 = vadd.xlane.f32.xlu0 %v6172
      %v6174 = vpop.xlane.xlu0 %6173
      %v6175 = vsel %vm1349, %v6093, 0.0
      %6176 = vadd.xlane.f32.xlu0 %v6175
      %v6177 = vpop.xlane.xlu0 %6176
      %v6178 = vsel %vm1349, %v6094, 0.0
      %6179 = vadd.xlane.f32.xlu0 %v6178
      %v6180 = vpop.xlane.xlu0 %6179
      %v6181 = vsel %vm1349, %v6095, 0.0
      %6182 = vadd.xlane.f32.xlu0 %v6181
      %v6183 = vpop.xlane.xlu0 %6182
      %v6184 = vsel %vm1349, %v6096, 0.0
      %6185 = vadd.xlane.f32.xlu0 %v6184
      %v6186 = vpop.xlane.xlu0 %6185
      %v6187 = vsel %vm1349, %v6097, 0.0
      %6188 = vadd.xlane.f32.xlu0 %v6187
      %v6189 = vpop.xlane.xlu0 %6188
      %v6190 = vsel %vm1349, %v6098, 0.0
      %6191 = vadd.xlane.f32.xlu0 %v6190
      %v6192 = vpop.xlane.xlu0 %6191
      %v6193 = vsel %vm1349, %v6099, 0.0
      %6194 = vadd.xlane.f32.xlu0 %v6193
      %v6195 = vpop.xlane.xlu0 %6194
      %v6196 = vsel %vm1349, %v6100, 0.0
      %6197 = vadd.xlane.f32.xlu0 %v6196
      %v6198 = vpop.xlane.xlu0 %6197
      %v6199 = vsel %vm1349, %v6101, 0.0
      %6200 = vadd.xlane.f32.xlu0 %v6199
      %v6201 = vpop.xlane.xlu0 %6200
      %v6202 = vmul.f32 %v6108, %v1446
      %v6203 = vmul.f32 %v6111, %v1446
      %v6204 = vmul.f32 %v6114, %v1446
      %v6205 = vmul.f32 %v6117, %v1446
      %v6206 = vmul.f32 %v6120, %v1446
      %v6207 = vmul.f32 %v6123, %v1446
      %v6208 = vmul.f32 %v6126, %v1446
      %v6209 = vmul.f32 %v6129, %v1446
      %v6210 = vmul.f32 %v6132, %v1446
      %v6211 = vmul.f32 %v6135, %v1446
      %v6212 = vmul.f32 %v6138, %v1446
      %v6213 = vmul.f32 %v6141, %v1446
      %v6214 = vmul.f32 %v6144, %v1446
      %v6215 = vmul.f32 %v6147, %v1446
      %v6216 = vmul.f32 %v6150, %v1446
      %v6217 = vmul.f32 %v6153, %v1446
      %v6218 = vmul.f32 %v6156, %v1446
      %v6219 = vmul.f32 %v6159, %v1446
      %v6220 = vmul.f32 %v6162, %v1446
      %v6221 = vmul.f32 %v6165, %v1446
      %v6222 = vmul.f32 %v6168, %v1446
      %v6223 = vmul.f32 %v6171, %v1446
      %v6224 = vmul.f32 %v6174, %v1446
      %v6225 = vmul.f32 %v6177, %v1446
      %v6226 = vmul.f32 %v6180, %v1446
      %v6227 = vmul.f32 %v6183, %v1446
      %v6228 = vmul.f32 %v6186, %v1446
      %v6229 = vmul.f32 %v6189, %v1446
      %v6230 = vmul.f32 %v6192, %v1446
      %v6231 = vmul.f32 %v6195, %v1446
      %v6232 = vmul.f32 %v6198, %v1446
      %v6233 = vmul.f32 %v6201, %v1446
      %v6234 = vsub.f32 %v6070, %v6202
      %v6235 = vsub.f32 %v6071, %v6203
      %v6236 = vsub.f32 %v6072, %v6204
      %v6237 = vsub.f32 %v6073, %v6205
      %v6238 = vsub.f32 %v6074, %v6206
      %v6239 = vsub.f32 %v6075, %v6207
      %v6240 = vsub.f32 %v6076, %v6208
      %v6241 = vsub.f32 %v6077, %v6209
      %v6242 = vsub.f32 %v6078, %v6210
      %v6243 = vsub.f32 %v6079, %v6211
      %v6244 = vsub.f32 %v6080, %v6212
      %v6245 = vsub.f32 %v6081, %v6213
      %v6246 = vsub.f32 %v6082, %v6214
      %v6247 = vsub.f32 %v6083, %v6215
      %v6248 = vsub.f32 %v6084, %v6216
      %v6249 = vsub.f32 %v6085, %v6217
      %v6250 = vsub.f32 %v6086, %v6218
      %v6251 = vsub.f32 %v6087, %v6219
      %v6252 = vsub.f32 %v6088, %v6220
      %v6253 = vsub.f32 %v6089, %v6221
      %v6254 = vsub.f32 %v6090, %v6222
      %v6255 = vsub.f32 %v6091, %v6223
      %v6256 = vsub.f32 %v6092, %v6224
      %v6257 = vsub.f32 %v6093, %v6225
      %v6258 = vsub.f32 %v6094, %v6226
      %v6259 = vsub.f32 %v6095, %v6227
      %v6260 = vsub.f32 %v6096, %v6228
      %v6261 = vsub.f32 %v6097, %v6229
      %v6262 = vsub.f32 %v6098, %v6230
      %v6263 = vsub.f32 %v6099, %v6231
      %v6264 = vsub.f32 %v6100, %v6232
      %v6265 = vsub.f32 %v6101, %v6233
      %v6266 = vmul.f32 %v6234, %v6234
      %v6267 = vmul.f32 %v6235, %v6235
      %v6268 = vmul.f32 %v6236, %v6236
      %v6269 = vmul.f32 %v6237, %v6237
      %v6270 = vmul.f32 %v6238, %v6238
      %v6271 = vmul.f32 %v6239, %v6239
      %v6272 = vmul.f32 %v6240, %v6240
      %v6273 = vmul.f32 %v6241, %v6241
      %v6274 = vmul.f32 %v6242, %v6242
      %v6275 = vmul.f32 %v6243, %v6243
      %v6276 = vmul.f32 %v6244, %v6244
      %v6277 = vmul.f32 %v6245, %v6245
      %v6278 = vmul.f32 %v6246, %v6246
      %v6279 = vmul.f32 %v6247, %v6247
      %v6280 = vmul.f32 %v6248, %v6248
      %v6281 = vmul.f32 %v6249, %v6249
      %v6282 = vmul.f32 %v6250, %v6250
      %v6283 = vmul.f32 %v6251, %v6251
      %v6284 = vmul.f32 %v6252, %v6252
      %v6285 = vmul.f32 %v6253, %v6253
      %v6286 = vmul.f32 %v6254, %v6254
      %v6287 = vmul.f32 %v6255, %v6255
      %v6288 = vmul.f32 %v6256, %v6256
      %v6289 = vmul.f32 %v6257, %v6257
      %v6290 = vmul.f32 %v6258, %v6258
      %v6291 = vmul.f32 %v6259, %v6259
      %v6292 = vmul.f32 %v6260, %v6260
      %v6293 = vmul.f32 %v6261, %v6261
      %v6294 = vmul.f32 %v6262, %v6262
      %v6295 = vmul.f32 %v6263, %v6263
      %v6296 = vmul.f32 %v6264, %v6264
      %v6297 = vmul.f32 %v6265, %v6265
      %v6298 = vsel %vm1349, %v6266, 0.0
      %6299 = vadd.xlane.f32.xlu0 %v6298
      %v6300 = vpop.xlane.xlu0 %6299
      %v6301 = vsel %vm1349, %v6267, 0.0
      %6302 = vadd.xlane.f32.xlu0 %v6301
      %v6303 = vpop.xlane.xlu0 %6302
      %v6304 = vsel %vm1349, %v6268, 0.0
      %6305 = vadd.xlane.f32.xlu0 %v6304
      %v6306 = vpop.xlane.xlu0 %6305
      %v6307 = vsel %vm1349, %v6269, 0.0
      %6308 = vadd.xlane.f32.xlu0 %v6307
      %v6309 = vpop.xlane.xlu0 %6308
      %v6310 = vsel %vm1349, %v6270, 0.0
      %6311 = vadd.xlane.f32.xlu0 %v6310
      %v6312 = vpop.xlane.xlu0 %6311
      %v6313 = vsel %vm1349, %v6271, 0.0
      %6314 = vadd.xlane.f32.xlu0 %v6313
      %v6315 = vpop.xlane.xlu0 %6314
      %v6316 = vsel %vm1349, %v6272, 0.0
      %6317 = vadd.xlane.f32.xlu0 %v6316
      %v6318 = vpop.xlane.xlu0 %6317
      %v6319 = vsel %vm1349, %v6273, 0.0
      %6320 = vadd.xlane.f32.xlu0 %v6319
      %v6321 = vpop.xlane.xlu0 %6320
      %v6322 = vsel %vm1349, %v6274, 0.0
      %6323 = vadd.xlane.f32.xlu0 %v6322
      %v6324 = vpop.xlane.xlu0 %6323
      %v6325 = vsel %vm1349, %v6275, 0.0
      %6326 = vadd.xlane.f32.xlu0 %v6325
      %v6327 = vpop.xlane.xlu0 %6326
      %v6328 = vsel %vm1349, %v6276, 0.0
      %6329 = vadd.xlane.f32.xlu0 %v6328
      %v6330 = vpop.xlane.xlu0 %6329
      %v6331 = vsel %vm1349, %v6277, 0.0
      %6332 = vadd.xlane.f32.xlu0 %v6331
      %v6333 = vpop.xlane.xlu0 %6332
      %v6334 = vsel %vm1349, %v6278, 0.0
      %6335 = vadd.xlane.f32.xlu0 %v6334
      %v6336 = vpop.xlane.xlu0 %6335
      %v6337 = vsel %vm1349, %v6279, 0.0
      %6338 = vadd.xlane.f32.xlu0 %v6337
      %v6339 = vpop.xlane.xlu0 %6338
      %v6340 = vsel %vm1349, %v6280, 0.0
      %6341 = vadd.xlane.f32.xlu0 %v6340
      %v6342 = vpop.xlane.xlu0 %6341
      %v6343 = vsel %vm1349, %v6281, 0.0
      %6344 = vadd.xlane.f32.xlu0 %v6343
      %v6345 = vpop.xlane.xlu0 %6344
      %v6346 = vsel %vm1349, %v6282, 0.0
      %6347 = vadd.xlane.f32.xlu0 %v6346
      %v6348 = vpop.xlane.xlu0 %6347
      %v6349 = vsel %vm1349, %v6283, 0.0
      %6350 = vadd.xlane.f32.xlu0 %v6349
      %v6351 = vpop.xlane.xlu0 %6350
      %v6352 = vsel %vm1349, %v6284, 0.0
      %6353 = vadd.xlane.f32.xlu0 %v6352
      %v6354 = vpop.xlane.xlu0 %6353
      %v6355 = vsel %vm1349, %v6285, 0.0
      %6356 = vadd.xlane.f32.xlu0 %v6355
      %v6357 = vpop.xlane.xlu0 %6356
      %v6358 = vsel %vm1349, %v6286, 0.0
      %6359 = vadd.xlane.f32.xlu0 %v6358
      %v6360 = vpop.xlane.xlu0 %6359
      %v6361 = vsel %vm1349, %v6287, 0.0
      %6362 = vadd.xlane.f32.xlu0 %v6361
      %v6363 = vpop.xlane.xlu0 %6362
      %v6364 = vsel %vm1349, %v6288, 0.0
      %6365 = vadd.xlane.f32.xlu0 %v6364
      %v6366 = vpop.xlane.xlu0 %6365
      %v6367 = vsel %vm1349, %v6289, 0.0
      %6368 = vadd.xlane.f32.xlu0 %v6367
      %v6369 = vpop.xlane.xlu0 %6368
      %v6370 = vsel %vm1349, %v6290, 0.0
      %6371 = vadd.xlane.f32.xlu0 %v6370
      %v6372 = vpop.xlane.xlu0 %6371
      %v6373 = vsel %vm1349, %v6291, 0.0
      %6374 = vadd.xlane.f32.xlu0 %v6373
      %v6375 = vpop.xlane.xlu0 %6374
      %v6376 = vsel %vm1349, %v6292, 0.0
      %6377 = vadd.xlane.f32.xlu0 %v6376
      %v6378 = vpop.xlane.xlu0 %6377
      %v6379 = vsel %vm1349, %v6293, 0.0
      %6380 = vadd.xlane.f32.xlu0 %v6379
      %v6381 = vpop.xlane.xlu0 %6380
      %v6382 = vsel %vm1349, %v6294, 0.0
      %6383 = vadd.xlane.f32.xlu0 %v6382
      %v6384 = vpop.xlane.xlu0 %6383
      %v6385 = vsel %vm1349, %v6295, 0.0
      %6386 = vadd.xlane.f32.xlu0 %v6385
      %v6387 = vpop.xlane.xlu0 %6386
      %v6388 = vsel %vm1349, %v6296, 0.0
      %6389 = vadd.xlane.f32.xlu0 %v6388
      %v6390 = vpop.xlane.xlu0 %6389
      %v6391 = vsel %vm1349, %v6297, 0.0
      %6392 = vadd.xlane.f32.xlu0 %v6391
      %v6393 = vpop.xlane.xlu0 %6392
      %v6394 = vmul.f32 %v6300, %v1446
      %v6395 = vmul.f32 %v6303, %v1446
      %v6396 = vmul.f32 %v6306, %v1446
      %v6397 = vmul.f32 %v6309, %v1446
      %v6398 = vmul.f32 %v6312, %v1446
      %v6399 = vmul.f32 %v6315, %v1446
      %v6400 = vmul.f32 %v6318, %v1446
      %v6401 = vmul.f32 %v6321, %v1446
      %v6402 = vmul.f32 %v6324, %v1446
      %v6403 = vmul.f32 %v6327, %v1446
      %v6404 = vmul.f32 %v6330, %v1446
      %v6405 = vmul.f32 %v6333, %v1446
      %v6406 = vmul.f32 %v6336, %v1446
      %v6407 = vmul.f32 %v6339, %v1446
      %v6408 = vmul.f32 %v6342, %v1446
      %v6409 = vmul.f32 %v6345, %v1446
      %v6410 = vmul.f32 %v6348, %v1446
      %v6411 = vmul.f32 %v6351, %v1446
      %v6412 = vmul.f32 %v6354, %v1446
      %v6413 = vmul.f32 %v6357, %v1446
      %v6414 = vmul.f32 %v6360, %v1446
      %v6415 = vmul.f32 %v6363, %v1446
      %v6416 = vmul.f32 %v6366, %v1446
      %v6417 = vmul.f32 %v6369, %v1446
      %v6418 = vmul.f32 %v6372, %v1446
      %v6419 = vmul.f32 %v6375, %v1446
      %v6420 = vmul.f32 %v6378, %v1446
      %v6421 = vmul.f32 %v6381, %v1446
      %v6422 = vmul.f32 %v6384, %v1446
      %v6423 = vmul.f32 %v6387, %v1446
      %v6424 = vmul.f32 %v6390, %v1446
      %v6425 = vmul.f32 %v6393, %v1446
      %v6426 = vadd.f32 %v6394, 1e-05
      %v6427 = vadd.f32 %v6395, 1e-05
      %v6428 = vadd.f32 %v6396, 1e-05
      %v6429 = vadd.f32 %v6397, 1e-05
      %v6430 = vadd.f32 %v6398, 1e-05
      %v6431 = vadd.f32 %v6399, 1e-05
      %v6432 = vadd.f32 %v6400, 1e-05
      %v6433 = vadd.f32 %v6401, 1e-05
      %v6434 = vadd.f32 %v6402, 1e-05
      %v6435 = vadd.f32 %v6403, 1e-05
      %v6436 = vadd.f32 %v6404, 1e-05
      %v6437 = vadd.f32 %v6405, 1e-05
      %v6438 = vadd.f32 %v6406, 1e-05
      %v6439 = vadd.f32 %v6407, 1e-05
      %v6440 = vadd.f32 %v6408, 1e-05
      %v6441 = vadd.f32 %v6409, 1e-05
      %v6442 = vadd.f32 %v6410, 1e-05
      %v6443 = vadd.f32 %v6411, 1e-05
      %v6444 = vadd.f32 %v6412, 1e-05
      %v6445 = vadd.f32 %v6413, 1e-05
      %v6446 = vadd.f32 %v6414, 1e-05
      %v6447 = vadd.f32 %v6415, 1e-05
      %v6448 = vadd.f32 %v6416, 1e-05
      %v6449 = vadd.f32 %v6417, 1e-05
      %v6450 = vadd.f32 %v6418, 1e-05
      %v6451 = vadd.f32 %v6419, 1e-05
      %v6452 = vadd.f32 %v6420, 1e-05
      %v6453 = vadd.f32 %v6421, 1e-05
      %v6454 = vadd.f32 %v6422, 1e-05
      %v6455 = vadd.f32 %v6423, 1e-05
      %v6456 = vadd.f32 %v6424, 1e-05
      %v6457 = vadd.f32 %v6425, 1e-05
      %v6458 = vrsqrt.pop %v6426
      %v6459 = vrsqrt.pop %v6427
      %v6460 = vrsqrt.pop %v6428
      %v6461 = vrsqrt.pop %v6429
      %v6462 = vrsqrt.pop %v6430
      %v6463 = vrsqrt.pop %v6431
      %v6464 = vrsqrt.pop %v6432
      %v6465 = vrsqrt.pop %v6433
      %v6466 = vrsqrt.pop %v6434
      %v6467 = vrsqrt.pop %v6435
      %v6468 = vrsqrt.pop %v6436
      %v6469 = vrsqrt.pop %v6437
      %v6470 = vrsqrt.pop %v6438
      %v6471 = vrsqrt.pop %v6439
      %v6472 = vrsqrt.pop %v6440
      %v6473 = vrsqrt.pop %v6441
      %v6474 = vrsqrt.pop %v6442
      %v6475 = vrsqrt.pop %v6443
      %v6476 = vrsqrt.pop %v6444
      %v6477 = vrsqrt.pop %v6445
      %v6478 = vrsqrt.pop %v6446
      %v6479 = vrsqrt.pop %v6447
      %v6480 = vrsqrt.pop %v6448
      %v6481 = vrsqrt.pop %v6449
      %v6482 = vrsqrt.pop %v6450
      %v6483 = vrsqrt.pop %v6451
      %v6484 = vrsqrt.pop %v6452
      %v6485 = vrsqrt.pop %v6453
      %v6486 = vrsqrt.pop %v6454
      %v6487 = vrsqrt.pop %v6455
      %v6488 = vrsqrt.pop %v6456
      %v6489 = vrsqrt.pop %v6457
      %v6490 = vmul.f32 %v6234, %v6458
      %v6491 = vmul.f32 %v6235, %v6459
      %v6492 = vmul.f32 %v6236, %v6460
      %v6493 = vmul.f32 %v6237, %v6461
      %v6494 = vmul.f32 %v6238, %v6462
      %v6495 = vmul.f32 %v6239, %v6463
      %v6496 = vmul.f32 %v6240, %v6464
      %v6497 = vmul.f32 %v6241, %v6465
      %v6498 = vmul.f32 %v6242, %v6466
      %v6499 = vmul.f32 %v6243, %v6467
      %v6500 = vmul.f32 %v6244, %v6468
      %v6501 = vmul.f32 %v6245, %v6469
      %v6502 = vmul.f32 %v6246, %v6470
      %v6503 = vmul.f32 %v6247, %v6471
      %v6504 = vmul.f32 %v6248, %v6472
      %v6505 = vmul.f32 %v6249, %v6473
      %v6506 = vmul.f32 %v6250, %v6474
      %v6507 = vmul.f32 %v6251, %v6475
      %v6508 = vmul.f32 %v6252, %v6476
      %v6509 = vmul.f32 %v6253, %v6477
      %v6510 = vmul.f32 %v6254, %v6478
      %v6511 = vmul.f32 %v6255, %v6479
      %v6512 = vmul.f32 %v6256, %v6480
      %v6513 = vmul.f32 %v6257, %v6481
      %v6514 = vmul.f32 %v6258, %v6482
      %v6515 = vmul.f32 %v6259, %v6483
      %v6516 = vmul.f32 %v6260, %v6484
      %v6517 = vmul.f32 %v6261, %v6485
      %v6518 = vmul.f32 %v6262, %v6486
      %v6519 = vmul.f32 %v6263, %v6487
      %v6520 = vmul.f32 %v6264, %v6488
      %v6521 = vmul.f32 %v6265, %v6489
      %v6523 = vlaneseq
      %v6524 = vshrl.u32 %v6523, 7
      %v6525 = vsub.s32 0, %v6524
      %v6526 = vrot.slane %v6103, %v6525
      %v6528 = vmul.f32 %v6490, %v6526
      %v6529 = vmul.f32 %v6491, %v6526
      %v6530 = vmul.f32 %v6492, %v6526
      %v6531 = vmul.f32 %v6493, %v6526
      %v6532 = vmul.f32 %v6494, %v6526
      %v6533 = vmul.f32 %v6495, %v6526
      %v6534 = vmul.f32 %v6496, %v6526
      %v6535 = vmul.f32 %v6497, %v6526
      %v6536 = vmul.f32 %v6498, %v6526
      %v6537 = vmul.f32 %v6499, %v6526
      %v6538 = vmul.f32 %v6500, %v6526
      %v6539 = vmul.f32 %v6501, %v6526
      %v6540 = vmul.f32 %v6502, %v6526
      %v6541 = vmul.f32 %v6503, %v6526
      %v6542 = vmul.f32 %v6504, %v6526
      %v6543 = vmul.f32 %v6505, %v6526
      %v6544 = vmul.f32 %v6506, %v6526
      %v6545 = vmul.f32 %v6507, %v6526
      %v6546 = vmul.f32 %v6508, %v6526
      %v6547 = vmul.f32 %v6509, %v6526
      %v6548 = vmul.f32 %v6510, %v6526
      %v6549 = vmul.f32 %v6511, %v6526
      %v6550 = vmul.f32 %v6512, %v6526
      %v6551 = vmul.f32 %v6513, %v6526
      %v6552 = vmul.f32 %v6514, %v6526
      %v6553 = vmul.f32 %v6515, %v6526
      %v6554 = vmul.f32 %v6516, %v6526
      %v6555 = vmul.f32 %v6517, %v6526
      %v6556 = vmul.f32 %v6518, %v6526
      %v6557 = vmul.f32 %v6519, %v6526
      %v6558 = vmul.f32 %v6520, %v6526
      %v6559 = vmul.f32 %v6521, %v6526
      %v6561 = vlaneseq
      %v6562 = vshrl.u32 %v6561, 7
      %v6563 = vsub.s32 0, %v6562
      %v6564 = vrot.slane %v6105, %v6563
      %v6566 = vadd.f32 %v6528, %v6564
      %v6567 = vadd.f32 %v6529, %v6564
      %v6568 = vadd.f32 %v6530, %v6564
      %v6569 = vadd.f32 %v6531, %v6564
      %v6570 = vadd.f32 %v6532, %v6564
      %v6571 = vadd.f32 %v6533, %v6564
      %v6572 = vadd.f32 %v6534, %v6564
      %v6573 = vadd.f32 %v6535, %v6564
      %v6574 = vadd.f32 %v6536, %v6564
      %v6575 = vadd.f32 %v6537, %v6564
      %v6576 = vadd.f32 %v6538, %v6564
      %v6577 = vadd.f32 %v6539, %v6564
      %v6578 = vadd.f32 %v6540, %v6564
      %v6579 = vadd.f32 %v6541, %v6564
      %v6580 = vadd.f32 %v6542, %v6564
      %v6581 = vadd.f32 %v6543, %v6564
      %v6582 = vadd.f32 %v6544, %v6564
      %v6583 = vadd.f32 %v6545, %v6564
      %v6584 = vadd.f32 %v6546, %v6564
      %v6585 = vadd.f32 %v6547, %v6564
      %v6586 = vadd.f32 %v6548, %v6564
      %v6587 = vadd.f32 %v6549, %v6564
      %v6588 = vadd.f32 %v6550, %v6564
      %v6589 = vadd.f32 %v6551, %v6564
      %v6590 = vadd.f32 %v6552, %v6564
      %v6591 = vadd.f32 %v6553, %v6564
      %v6592 = vadd.f32 %v6554, %v6564
      %v6593 = vadd.f32 %v6555, %v6564
      %v6594 = vadd.f32 %v6556, %v6564
      %v6595 = vadd.f32 %v6557, %v6564
      %v6596 = vadd.f32 %v6558, %v6564
      %v6597 = vadd.f32 %v6559, %v6564
      %s6598 = scalar_lea.vmem %s759, 16
      %v6599 = vld [vmem:[%s6598] sm:$0xf]
      %v6600 = vld [vmem:[%s6598 + $0x4] sm:$0xf]
      %v6601 = vld [vmem:[%s6598 + $0x8] sm:$0xf]
      %v6602 = vld [vmem:[%s6598 + $0xc] sm:$0xf]
      %v6603 = vpack.c.bf16 %v6567, %v6566
      %v6604 = vpack.c.bf16 %v6569, %v6568
      %v6605 = vpack.c.bf16 %v6571, %v6570
      %v6606 = vpack.c.bf16 %v6573, %v6572
      %v6607 = vpack.c.bf16 %v6575, %v6574
      %v6608 = vpack.c.bf16 %v6577, %v6576
      %v6609 = vpack.c.bf16 %v6579, %v6578
      %v6610 = vpack.c.bf16 %v6581, %v6580
      %v6611 = vpack.c.bf16 %v6583, %v6582
      %v6612 = vpack.c.bf16 %v6585, %v6584
      %v6613 = vpack.c.bf16 %v6587, %v6586
      %v6614 = vpack.c.bf16 %v6589, %v6588
      %v6615 = vpack.c.bf16 %v6591, %v6590
      %v6616 = vpack.c.bf16 %v6593, %v6592
      %v6617 = vpack.c.bf16 %v6595, %v6594
      %v6618 = vpack.c.bf16 %v6597, %v6596
      %s6619 = scalar_lea.vmem %s763, 1
      %v6620 = vld [vmem:[%s6619] sm:$0x1]
      %v6622 = vlaneseq
      %v6623 = vshrl.u32 %v6622, 7
      %v6624 = vsub.s32 0, %v6623
      %v6625 = vrot.slane %v6620, %v6624
      %v6631 = vunpack.c.l.b16 %v6599
      %v6632 = vunpack.c.l.b16 %v6600
      %v6633 = vunpack.c.l.b16 %v6601
      %v6634 = vunpack.c.l.b16 %v6602
      %v6635 = vpack.c.b16 %v6632, %v6631
      %v6636 = vpack.c.b16 %v6634, %v6633
      %v6640 = vsel %vm1349, %v6603, 0
      %v6643 = vsel %vm1349, %v6604, 0
      %v6646 = vsel %vm1349, %v6605, 0
      %v6649 = vsel %vm1349, %v6606, 0
      %v6652 = vsel %vm1349, %v6607, 0
      %v6655 = vsel %vm1349, %v6608, 0
      %v6658 = vsel %vm1349, %v6609, 0
      %v6661 = vsel %vm1349, %v6610, 0
      %v6664 = vsel %vm1349, %v6611, 0
      %v6667 = vsel %vm1349, %v6612, 0
      %v6670 = vsel %vm1349, %v6613, 0
      %v6673 = vsel %vm1349, %v6614, 0
      %v6676 = vsel %vm1349, %v6615, 0
      %v6679 = vsel %vm1349, %v6616, 0
      %v6682 = vsel %vm1349, %v6617, 0
      %v6685 = vsel %vm1349, %v6618, 0
      %6687 = vmatprep.subr.bf16.mxu0 0
      %6688 = vmatpush1.bf16.msra.mxu0 0
      %6689 = vmatprep.subr.bf16.mxu0 0
      %6690 = vmatpush1.bf16.msra.mxu0 0
      %6691 = vmatprep.subr.bf16.mxu0 0
      %6692 = vmatpush1.bf16.msra.mxu0 0
      %6693 = vmatprep.subr.bf16.mxu0 0
      %6694 = vmatpush1.bf16.msra.mxu0 0
      %6695 = vmatprep.subr.bf16.mxu0 0
      %6696 = vmatpush1.bf16.msra.mxu0 0
      %6697 = vmatprep.subr.bf16.mxu0 0
      %6698 = vmatpush1.bf16.msra.mxu0 0
      %6699 = vmatprep.subr.bf16.mxu0 0
      %6700 = vmatpush1.bf16.msra.mxu0 %v6636
      %6701 = vmatprep.subr.bf16.mxu0 0
      %6702 = vmatpush1.bf16.msra.mxu0 %v6635
      %6703 = vmatprep.subr.bf16.mxu0 0
      %6704 = vmatpush2.bf16.msra.mxu0 0
      %6705 = vmatprep.subr.bf16.mxu0 0
      %6706 = vmatpush2.bf16.msra.mxu0 0
      %6707 = vmatprep.subr.bf16.mxu0 0
      %6708 = vmatpush2.bf16.msra.mxu0 0
      %6709 = vmatprep.subr.bf16.mxu0 0
      %6710 = vmatpush2.bf16.msra.mxu0 0
      %6711 = vmatprep.subr.bf16.mxu0 0
      %6712 = vmatpush2.bf16.msra.mxu0 0
      %6713 = vmatprep.subr.bf16.mxu0 0
      %6714 = vmatpush2.bf16.msra.mxu0 0
      %6715 = vmatprep.subr.bf16.mxu0 0
      %6716 = vmatpush2.bf16.msra.mxu0 0
      %6717 = vmatprep.subr.bf16.mxu0 0
      %6718 = vmatpush2.bf16.msra.mxu0 0
      %6719 = vmatprep.mubr.bf16.mxu0 0
      %6720 = vmatmul.mubr.bf16.gmra.mxu0 %v6640
      %v6721 = vpop.f32.mrf.mxu0
      %v6722 = vadd.f32 %v6625, %v6721
      %v6723 = vpop.f32.mrf.mxu0
      %v6724 = vpop.f32.mrf.mxu0
      %v6725 = vadd.f32 %v6625, %v6724
      %v6726 = vpop.f32.mrf.mxu0
      %6727 = vmatprep.mubr.bf16.mxu0 0
      %6728 = vmatmul.mubr.bf16.gmra.mxu0 %v6643
      %v6729 = vpop.f32.mrf.mxu0
      %v6730 = vadd.f32 %v6625, %v6729
      %v6731 = vpop.f32.mrf.mxu0
      %v6732 = vpop.f32.mrf.mxu0
      %v6733 = vadd.f32 %v6625, %v6732
      %v6734 = vpop.f32.mrf.mxu0
      %6735 = vmatprep.mubr.bf16.mxu0 0
      %6736 = vmatmul.mubr.bf16.gmra.mxu0 %v6646
      %v6737 = vpop.f32.mrf.mxu0
      %v6738 = vadd.f32 %v6625, %v6737
      %v6739 = vpop.f32.mrf.mxu0
      %v6740 = vpop.f32.mrf.mxu0
      %v6741 = vadd.f32 %v6625, %v6740
      %v6742 = vpop.f32.mrf.mxu0
      %6743 = vmatprep.mubr.bf16.mxu0 0
      %6744 = vmatmul.mubr.bf16.gmra.mxu0 %v6649
      %v6745 = vpop.f32.mrf.mxu0
      %v6746 = vadd.f32 %v6625, %v6745
      %v6747 = vpop.f32.mrf.mxu0
      %v6748 = vpop.f32.mrf.mxu0
      %v6749 = vadd.f32 %v6625, %v6748
      %v6750 = vpop.f32.mrf.mxu0
      %6751 = vmatprep.mubr.bf16.mxu0 0
      %6752 = vmatmul.mubr.bf16.gmra.mxu0 %v6652
      %v6753 = vpop.f32.mrf.mxu0
      %v6754 = vadd.f32 %v6625, %v6753
      %v6755 = vpop.f32.mrf.mxu0
      %v6756 = vpop.f32.mrf.mxu0
      %v6757 = vadd.f32 %v6625, %v6756
      %v6758 = vpop.f32.mrf.mxu0
      %6759 = vmatprep.mubr.bf16.mxu0 0
      %6760 = vmatmul.mubr.bf16.gmra.mxu0 %v6655
      %v6761 = vpop.f32.mrf.mxu0
      %v6762 = vadd.f32 %v6625, %v6761
      %v6763 = vpop.f32.mrf.mxu0
      %v6764 = vpop.f32.mrf.mxu0
      %v6765 = vadd.f32 %v6625, %v6764
      %v6766 = vpop.f32.mrf.mxu0
      %6767 = vmatprep.mubr.bf16.mxu0 0
      %6768 = vmatmul.mubr.bf16.gmra.mxu0 %v6658
      %v6769 = vpop.f32.mrf.mxu0
      %v6770 = vadd.f32 %v6625, %v6769
      %v6771 = vpop.f32.mrf.mxu0
      %v6772 = vpop.f32.mrf.mxu0
      %v6773 = vadd.f32 %v6625, %v6772
      %v6774 = vpop.f32.mrf.mxu0
      %6775 = vmatprep.mubr.bf16.mxu0 0
      %6776 = vmatmul.mubr.bf16.gmra.mxu0 %v6661
      %v6777 = vpop.f32.mrf.mxu0
      %v6778 = vadd.f32 %v6625, %v6777
      %v6779 = vpop.f32.mrf.mxu0
      %v6780 = vpop.f32.mrf.mxu0
      %v6781 = vadd.f32 %v6625, %v6780
      %v6782 = vpop.f32.mrf.mxu0
      %6783 = vmatprep.mubr.bf16.mxu0 0
      %6784 = vmatmul.mubr.bf16.gmra.mxu0 %v6664
      %v6785 = vpop.f32.mrf.mxu0
      %v6786 = vadd.f32 %v6625, %v6785
      %v6787 = vpop.f32.mrf.mxu0
      %v6788 = vpop.f32.mrf.mxu0
      %v6789 = vadd.f32 %v6625, %v6788
      %v6790 = vpop.f32.mrf.mxu0
      %6791 = vmatprep.mubr.bf16.mxu0 0
      %6792 = vmatmul.mubr.bf16.gmra.mxu0 %v6667
      %v6793 = vpop.f32.mrf.mxu0
      %v6794 = vadd.f32 %v6625, %v6793
      %v6795 = vpop.f32.mrf.mxu0
      %v6796 = vpop.f32.mrf.mxu0
      %v6797 = vadd.f32 %v6625, %v6796
      %v6798 = vpop.f32.mrf.mxu0
      %6799 = vmatprep.mubr.bf16.mxu0 0
      %6800 = vmatmul.mubr.bf16.gmra.mxu0 %v6670
      %v6801 = vpop.f32.mrf.mxu0
      %v6802 = vadd.f32 %v6625, %v6801
      %v6803 = vpop.f32.mrf.mxu0
      %v6804 = vpop.f32.mrf.mxu0
      %v6805 = vadd.f32 %v6625, %v6804
      %v6806 = vpop.f32.mrf.mxu0
      %6807 = vmatprep.mubr.bf16.mxu0 0
      %6808 = vmatmul.mubr.bf16.gmra.mxu0 %v6673
      %v6809 = vpop.f32.mrf.mxu0
      %v6810 = vadd.f32 %v6625, %v6809
      %v6811 = vpop.f32.mrf.mxu0
      %v6812 = vpop.f32.mrf.mxu0
      %v6813 = vadd.f32 %v6625, %v6812
      %v6814 = vpop.f32.mrf.mxu0
      %6815 = vmatprep.mubr.bf16.mxu0 0
      %6816 = vmatmul.mubr.bf16.gmra.mxu0 %v6676
      %v6817 = vpop.f32.mrf.mxu0
      %v6818 = vadd.f32 %v6625, %v6817
      %v6819 = vpop.f32.mrf.mxu0
      %v6820 = vpop.f32.mrf.mxu0
      %v6821 = vadd.f32 %v6625, %v6820
      %v6822 = vpop.f32.mrf.mxu0
      %6823 = vmatprep.mubr.bf16.mxu0 0
      %6824 = vmatmul.mubr.bf16.gmra.mxu0 %v6679
      %v6825 = vpop.f32.mrf.mxu0
      %v6826 = vadd.f32 %v6625, %v6825
      %v6827 = vpop.f32.mrf.mxu0
      %v6828 = vpop.f32.mrf.mxu0
      %v6829 = vadd.f32 %v6625, %v6828
      %v6830 = vpop.f32.mrf.mxu0
      %6831 = vmatprep.mubr.bf16.mxu0 0
      %6832 = vmatmul.mubr.bf16.gmra.mxu0 %v6682
      %v6833 = vpop.f32.mrf.mxu0
      %v6834 = vadd.f32 %v6625, %v6833
      %v6835 = vpop.f32.mrf.mxu0
      %v6836 = vpop.f32.mrf.mxu0
      %v6837 = vadd.f32 %v6625, %v6836
      %v6838 = vpop.f32.mrf.mxu0
      %6839 = vmatprep.mubr.bf16.mxu0 0
      %6840 = vmatmul.mubr.bf16.gmra.mxu0 %v6685
      %v6841 = vpop.f32.mrf.mxu0
      %v6842 = vadd.f32 %v6625, %v6841
      %v6843 = vpop.f32.mrf.mxu0
      %v6844 = vpop.f32.mrf.mxu0
      %v6845 = vadd.f32 %v6625, %v6844
      %v6846 = vpop.f32.mrf.mxu0
      %6847 = vdwg.mxu0
      %v6848 = vmul.f32 %v5432, %v6722
      %v6849 = vmul.f32 %v5434, %v6725
      %v6850 = vmul.f32 %v5436, %v6730
      %v6851 = vmul.f32 %v5438, %v6733
      %v6852 = vmul.f32 %v5440, %v6738
      %v6853 = vmul.f32 %v5442, %v6741
      %v6854 = vmul.f32 %v5444, %v6746
      %v6855 = vmul.f32 %v5446, %v6749
      %v6856 = vmul.f32 %v5448, %v6754
      %v6857 = vmul.f32 %v5450, %v6757
      %v6858 = vmul.f32 %v5452, %v6762
      %v6859 = vmul.f32 %v5454, %v6765
      %v6860 = vmul.f32 %v5456, %v6770
      %v6861 = vmul.f32 %v5458, %v6773
      %v6862 = vmul.f32 %v5460, %v6778
      %v6863 = vmul.f32 %v5462, %v6781
      %v6864 = vmul.f32 %v5464, %v6786
      %v6865 = vmul.f32 %v5466, %v6789
      %v6866 = vmul.f32 %v5468, %v6794
      %v6867 = vmul.f32 %v5470, %v6797
      %v6868 = vmul.f32 %v5472, %v6802
      %v6869 = vmul.f32 %v5474, %v6805
      %v6870 = vmul.f32 %v5476, %v6810
      %v6871 = vmul.f32 %v5478, %v6813
      %v6872 = vmul.f32 %v5480, %v6818
      %v6873 = vmul.f32 %v5482, %v6821
      %v6874 = vmul.f32 %v5484, %v6826
      %v6875 = vmul.f32 %v5486, %v6829
      %v6876 = vmul.f32 %v5488, %v6834
      %v6877 = vmul.f32 %v5490, %v6837
      %v6878 = vmul.f32 %v5492, %v6842
      %v6879 = vmul.f32 %v5494, %v6845
      %v6880 = vadd.f32 %v4128, %v6848
      %v6881 = vadd.f32 %v4129, %v6849
      %v6882 = vadd.f32 %v4130, %v6850
      %v6883 = vadd.f32 %v4131, %v6851
      %v6884 = vadd.f32 %v4132, %v6852
      %v6885 = vadd.f32 %v4133, %v6853
      %v6886 = vadd.f32 %v4134, %v6854
      %v6887 = vadd.f32 %v4135, %v6855
      %v6888 = vadd.f32 %v4136, %v6856
      %v6889 = vadd.f32 %v4137, %v6857
      %v6890 = vadd.f32 %v4138, %v6858
      %v6891 = vadd.f32 %v4139, %v6859
      %v6892 = vadd.f32 %v4140, %v6860
      %v6893 = vadd.f32 %v4141, %v6861
      %v6894 = vadd.f32 %v4142, %v6862
      %v6895 = vadd.f32 %v4143, %v6863
      %v6896 = vadd.f32 %v4144, %v6864
      %v6897 = vadd.f32 %v4145, %v6865
      %v6898 = vadd.f32 %v4146, %v6866
      %v6899 = vadd.f32 %v4147, %v6867
      %v6900 = vadd.f32 %v4148, %v6868
      %v6901 = vadd.f32 %v4149, %v6869
      %v6902 = vadd.f32 %v4150, %v6870
      %v6903 = vadd.f32 %v4151, %v6871
      %v6904 = vadd.f32 %v4152, %v6872
      %v6905 = vadd.f32 %v4153, %v6873
      %v6906 = vadd.f32 %v4154, %v6874
      %v6907 = vadd.f32 %v4155, %v6875
      %v6908 = vadd.f32 %v4156, %v6876
      %v6909 = vadd.f32 %v4157, %v6877
      %v6910 = vadd.f32 %v4158, %v6878
      %v6911 = vadd.f32 %v4159, %v6879
      %6912 = vst.msk [vmem:[#allocation2] sm:$0xff] %vm1349, %v6880
      %6913 = vst.msk [vmem:[#allocation2 + $0x8] sm:$0xff] %vm1349, %v6881
      %6914 = vst.msk [vmem:[#allocation2 + $0x10] sm:$0xff] %vm1349, %v6882
      %6915 = vst.msk [vmem:[#allocation2 + $0x18] sm:$0xff] %vm1349, %v6883
      %6916 = vst.msk [vmem:[#allocation2 + $0x20] sm:$0xff] %vm1349, %v6884
      %6917 = vst.msk [vmem:[#allocation2 + $0x28] sm:$0xff] %vm1349, %v6885
      %6918 = vst.msk [vmem:[#allocation2 + $0x30] sm:$0xff] %vm1349, %v6886
      %6919 = vst.msk [vmem:[#allocation2 + $0x38] sm:$0xff] %vm1349, %v6887
      %6920 = vst.msk [vmem:[#allocation2 + $0x40] sm:$0xff] %vm1349, %v6888
      %6921 = vst.msk [vmem:[#allocation2 + $0x48] sm:$0xff] %vm1349, %v6889
      %6922 = vst.msk [vmem:[#allocation2 + $0x50] sm:$0xff] %vm1349, %v6890
      %6923 = vst.msk [vmem:[#allocation2 + $0x58] sm:$0xff] %vm1349, %v6891
      %6924 = vst.msk [vmem:[#allocation2 + $0x60] sm:$0xff] %vm1349, %v6892
      %6925 = vst.msk [vmem:[#allocation2 + $0x68] sm:$0xff] %vm1349, %v6893
      %6926 = vst.msk [vmem:[#allocation2 + $0x70] sm:$0xff] %vm1349, %v6894
      %6927 = vst.msk [vmem:[#allocation2 + $0x78] sm:$0xff] %vm1349, %v6895
      %6928 = vst.msk [vmem:[#allocation2 + $0x80] sm:$0xff] %vm1349, %v6896
      %6929 = vst.msk [vmem:[#allocation2 + $0x88] sm:$0xff] %vm1349, %v6897
      %6930 = vst.msk [vmem:[#allocation2 + $0x90] sm:$0xff] %vm1349, %v6898
      %6931 = vst.msk [vmem:[#allocation2 + $0x98] sm:$0xff] %vm1349, %v6899
      %6932 = vst.msk [vmem:[#allocation2 + $0xa0] sm:$0xff] %vm1349, %v6900
      %6933 = vst.msk [vmem:[#allocation2 + $0xa8] sm:$0xff] %vm1349, %v6901
      %6934 = vst.msk [vmem:[#allocation2 + $0xb0] sm:$0xff] %vm1349, %v6902
      %6935 = vst.msk [vmem:[#allocation2 + $0xb8] sm:$0xff] %vm1349, %v6903
      %6936 = vst.msk [vmem:[#allocation2 + $0xc0] sm:$0xff] %vm1349, %v6904
      %6937 = vst.msk [vmem:[#allocation2 + $0xc8] sm:$0xff] %vm1349, %v6905
      %6938 = vst.msk [vmem:[#allocation2 + $0xd0] sm:$0xff] %vm1349, %v6906
      %6939 = vst.msk [vmem:[#allocation2 + $0xd8] sm:$0xff] %vm1349, %v6907
      %6940 = vst.msk [vmem:[#allocation2 + $0xe0] sm:$0xff] %vm1349, %v6908
      %6941 = vst.msk [vmem:[#allocation2 + $0xe8] sm:$0xff] %vm1349, %v6909
      %6942 = vst.msk [vmem:[#allocation2 + $0xf0] sm:$0xff] %vm1349, %v6910
      %6943 = vst.msk [vmem:[#allocation2 + $0xf8] sm:$0xff] %vm1349, %v6911
      %v6944 = vld [vmem:[#allocation2] sm:$0xff]
      %v6945 = vld [vmem:[#allocation2 + $0x8] sm:$0xff]
      %v6946 = vld [vmem:[#allocation2 + $0x10] sm:$0xff]
      %v6947 = vld [vmem:[#allocation2 + $0x18] sm:$0xff]
      %v6948 = vld [vmem:[#allocation2 + $0x20] sm:$0xff]
      %v6949 = vld [vmem:[#allocation2 + $0x28] sm:$0xff]
      %v6950 = vld [vmem:[#allocation2 + $0x30] sm:$0xff]
      %v6951 = vld [vmem:[#allocation2 + $0x38] sm:$0xff]
      %v6952 = vld [vmem:[#allocation2 + $0x40] sm:$0xff]
      %v6953 = vld [vmem:[#allocation2 + $0x48] sm:$0xff]
      %v6954 = vld [vmem:[#allocation2 + $0x50] sm:$0xff]
      %v6955 = vld [vmem:[#allocation2 + $0x58] sm:$0xff]
      %v6956 = vld [vmem:[#allocation2 + $0x60] sm:$0xff]
      %v6957 = vld [vmem:[#allocation2 + $0x68] sm:$0xff]
      %v6958 = vld [vmem:[#allocation2 + $0x70] sm:$0xff]
      %v6959 = vld [vmem:[#allocation2 + $0x78] sm:$0xff]
      %v6960 = vld [vmem:[#allocation2 + $0x80] sm:$0xff]
      %v6961 = vld [vmem:[#allocation2 + $0x88] sm:$0xff]
      %v6962 = vld [vmem:[#allocation2 + $0x90] sm:$0xff]
      %v6963 = vld [vmem:[#allocation2 + $0x98] sm:$0xff]
      %v6964 = vld [vmem:[#allocation2 + $0xa0] sm:$0xff]
      %v6965 = vld [vmem:[#allocation2 + $0xa8] sm:$0xff]
      %v6966 = vld [vmem:[#allocation2 + $0xb0] sm:$0xff]
      %v6967 = vld [vmem:[#allocation2 + $0xb8] sm:$0xff]
      %v6968 = vld [vmem:[#allocation2 + $0xc0] sm:$0xff]
      %v6969 = vld [vmem:[#allocation2 + $0xc8] sm:$0xff]
      %v6970 = vld [vmem:[#allocation2 + $0xd0] sm:$0xff]
      %v6971 = vld [vmem:[#allocation2 + $0xd8] sm:$0xff]
      %v6972 = vld [vmem:[#allocation2 + $0xe0] sm:$0xff]
      %v6973 = vld [vmem:[#allocation2 + $0xe8] sm:$0xff]
      %v6974 = vld [vmem:[#allocation2 + $0xf0] sm:$0xff]
      %v6975 = vld [vmem:[#allocation2 + $0xf8] sm:$0xff]
      %v6976 = vld [vmem:[%s766] sm:$0x1]
      %v6977 = vld [vmem:[%s769] sm:$0x1]
      %v6978 = vsel %vm1349, %v6944, 0.0
      %6979 = vadd.xlane.f32.xlu0 %v6978
      %v6980 = vpop.xlane.xlu0 %6979
      %v6981 = vsel %vm1349, %v6945, 0.0
      %6982 = vadd.xlane.f32.xlu0 %v6981
      %v6983 = vpop.xlane.xlu0 %6982
      %v6984 = vsel %vm1349, %v6946, 0.0
      %6985 = vadd.xlane.f32.xlu0 %v6984
      %v6986 = vpop.xlane.xlu0 %6985
      %v6987 = vsel %vm1349, %v6947, 0.0
      %6988 = vadd.xlane.f32.xlu0 %v6987
      %v6989 = vpop.xlane.xlu0 %6988
      %v6990 = vsel %vm1349, %v6948, 0.0
      %6991 = vadd.xlane.f32.xlu0 %v6990
      %v6992 = vpop.xlane.xlu0 %6991
      %v6993 = vsel %vm1349, %v6949, 0.0
      %6994 = vadd.xlane.f32.xlu0 %v6993
      %v6995 = vpop.xlane.xlu0 %6994
      %v6996 = vsel %vm1349, %v6950, 0.0
      %6997 = vadd.xlane.f32.xlu0 %v6996
      %v6998 = vpop.xlane.xlu0 %6997
      %v6999 = vsel %vm1349, %v6951, 0.0
      %7000 = vadd.xlane.f32.xlu0 %v6999
      %v7001 = vpop.xlane.xlu0 %7000
      %v7002 = vsel %vm1349, %v6952, 0.0
      %7003 = vadd.xlane.f32.xlu0 %v7002
      %v7004 = vpop.xlane.xlu0 %7003
      %v7005 = vsel %vm1349, %v6953, 0.0
      %7006 = vadd.xlane.f32.xlu0 %v7005
      %v7007 = vpop.xlane.xlu0 %7006
      %v7008 = vsel %vm1349, %v6954, 0.0
      %7009 = vadd.xlane.f32.xlu0 %v7008
      %v7010 = vpop.xlane.xlu0 %7009
      %v7011 = vsel %vm1349, %v6955, 0.0
      %7012 = vadd.xlane.f32.xlu0 %v7011
      %v7013 = vpop.xlane.xlu0 %7012
      %v7014 = vsel %vm1349, %v6956, 0.0
      %7015 = vadd.xlane.f32.xlu0 %v7014
      %v7016 = vpop.xlane.xlu0 %7015
      %v7017 = vsel %vm1349, %v6957, 0.0
      %7018 = vadd.xlane.f32.xlu0 %v7017
      %v7019 = vpop.xlane.xlu0 %7018
      %v7020 = vsel %vm1349, %v6958, 0.0
      %7021 = vadd.xlane.f32.xlu0 %v7020
      %v7022 = vpop.xlane.xlu0 %7021
      %v7023 = vsel %vm1349, %v6959, 0.0
      %7024 = vadd.xlane.f32.xlu0 %v7023
      %v7025 = vpop.xlane.xlu0 %7024
      %v7026 = vsel %vm1349, %v6960, 0.0
      %7027 = vadd.xlane.f32.xlu0 %v7026
      %v7028 = vpop.xlane.xlu0 %7027
      %v7029 = vsel %vm1349, %v6961, 0.0
      %7030 = vadd.xlane.f32.xlu0 %v7029
      %v7031 = vpop.xlane.xlu0 %7030
      %v7032 = vsel %vm1349, %v6962, 0.0
      %7033 = vadd.xlane.f32.xlu0 %v7032
      %v7034 = vpop.xlane.xlu0 %7033
      %v7035 = vsel %vm1349, %v6963, 0.0
      %7036 = vadd.xlane.f32.xlu0 %v7035
      %v7037 = vpop.xlane.xlu0 %7036
      %v7038 = vsel %vm1349, %v6964, 0.0
      %7039 = vadd.xlane.f32.xlu0 %v7038
      %v7040 = vpop.xlane.xlu0 %7039
      %v7041 = vsel %vm1349, %v6965, 0.0
      %7042 = vadd.xlane.f32.xlu0 %v7041
      %v7043 = vpop.xlane.xlu0 %7042
      %v7044 = vsel %vm1349, %v6966, 0.0
      %7045 = vadd.xlane.f32.xlu0 %v7044
      %v7046 = vpop.xlane.xlu0 %7045
      %v7047 = vsel %vm1349, %v6967, 0.0
      %7048 = vadd.xlane.f32.xlu0 %v7047
      %v7049 = vpop.xlane.xlu0 %7048
      %v7050 = vsel %vm1349, %v6968, 0.0
      %7051 = vadd.xlane.f32.xlu0 %v7050
      %v7052 = vpop.xlane.xlu0 %7051
      %v7053 = vsel %vm1349, %v6969, 0.0
      %7054 = vadd.xlane.f32.xlu0 %v7053
      %v7055 = vpop.xlane.xlu0 %7054
      %v7056 = vsel %vm1349, %v6970, 0.0
      %7057 = vadd.xlane.f32.xlu0 %v7056
      %v7058 = vpop.xlane.xlu0 %7057
      %v7059 = vsel %vm1349, %v6971, 0.0
      %7060 = vadd.xlane.f32.xlu0 %v7059
      %v7061 = vpop.xlane.xlu0 %7060
      %v7062 = vsel %vm1349, %v6972, 0.0
      %7063 = vadd.xlane.f32.xlu0 %v7062
      %v7064 = vpop.xlane.xlu0 %7063
      %v7065 = vsel %vm1349, %v6973, 0.0
      %7066 = vadd.xlane.f32.xlu0 %v7065
      %v7067 = vpop.xlane.xlu0 %7066
      %v7068 = vsel %vm1349, %v6974, 0.0
      %7069 = vadd.xlane.f32.xlu0 %v7068
      %v7070 = vpop.xlane.xlu0 %7069
      %v7071 = vsel %vm1349, %v6975, 0.0
      %7072 = vadd.xlane.f32.xlu0 %v7071
      %v7073 = vpop.xlane.xlu0 %7072
      %v7074 = vmul.f32 %v6980, %v1446
      %v7075 = vmul.f32 %v6983, %v1446
      %v7076 = vmul.f32 %v6986, %v1446
      %v7077 = vmul.f32 %v6989, %v1446
      %v7078 = vmul.f32 %v6992, %v1446
      %v7079 = vmul.f32 %v6995, %v1446
      %v7080 = vmul.f32 %v6998, %v1446
      %v7081 = vmul.f32 %v7001, %v1446
      %v7082 = vmul.f32 %v7004, %v1446
      %v7083 = vmul.f32 %v7007, %v1446
      %v7084 = vmul.f32 %v7010, %v1446
      %v7085 = vmul.f32 %v7013, %v1446
      %v7086 = vmul.f32 %v7016, %v1446
      %v7087 = vmul.f32 %v7019, %v1446
      %v7088 = vmul.f32 %v7022, %v1446
      %v7089 = vmul.f32 %v7025, %v1446
      %v7090 = vmul.f32 %v7028, %v1446
      %v7091 = vmul.f32 %v7031, %v1446
      %v7092 = vmul.f32 %v7034, %v1446
      %v7093 = vmul.f32 %v7037, %v1446
      %v7094 = vmul.f32 %v7040, %v1446
      %v7095 = vmul.f32 %v7043, %v1446
      %v7096 = vmul.f32 %v7046, %v1446
      %v7097 = vmul.f32 %v7049, %v1446
      %v7098 = vmul.f32 %v7052, %v1446
      %v7099 = vmul.f32 %v7055, %v1446
      %v7100 = vmul.f32 %v7058, %v1446
      %v7101 = vmul.f32 %v7061, %v1446
      %v7102 = vmul.f32 %v7064, %v1446
      %v7103 = vmul.f32 %v7067, %v1446
      %v7104 = vmul.f32 %v7070, %v1446
      %v7105 = vmul.f32 %v7073, %v1446
      %v7106 = vsub.f32 %v6944, %v7074
      %v7107 = vsub.f32 %v6945, %v7075
      %v7108 = vsub.f32 %v6946, %v7076
      %v7109 = vsub.f32 %v6947, %v7077
      %v7110 = vsub.f32 %v6948, %v7078
      %v7111 = vsub.f32 %v6949, %v7079
      %v7112 = vsub.f32 %v6950, %v7080
      %v7113 = vsub.f32 %v6951, %v7081
      %v7114 = vsub.f32 %v6952, %v7082
      %v7115 = vsub.f32 %v6953, %v7083
      %v7116 = vsub.f32 %v6954, %v7084
      %v7117 = vsub.f32 %v6955, %v7085
      %v7118 = vsub.f32 %v6956, %v7086
      %v7119 = vsub.f32 %v6957, %v7087
      %v7120 = vsub.f32 %v6958, %v7088
      %v7121 = vsub.f32 %v6959, %v7089
      %v7122 = vsub.f32 %v6960, %v7090
      %v7123 = vsub.f32 %v6961, %v7091
      %v7124 = vsub.f32 %v6962, %v7092
      %v7125 = vsub.f32 %v6963, %v7093
      %v7126 = vsub.f32 %v6964, %v7094
      %v7127 = vsub.f32 %v6965, %v7095
      %v7128 = vsub.f32 %v6966, %v7096
      %v7129 = vsub.f32 %v6967, %v7097
      %v7130 = vsub.f32 %v6968, %v7098
      %v7131 = vsub.f32 %v6969, %v7099
      %v7132 = vsub.f32 %v6970, %v7100
      %v7133 = vsub.f32 %v6971, %v7101
      %v7134 = vsub.f32 %v6972, %v7102
      %v7135 = vsub.f32 %v6973, %v7103
      %v7136 = vsub.f32 %v6974, %v7104
      %v7137 = vsub.f32 %v6975, %v7105
      %v7138 = vmul.f32 %v7106, %v7106
      %v7139 = vmul.f32 %v7107, %v7107
      %v7140 = vmul.f32 %v7108, %v7108
      %v7141 = vmul.f32 %v7109, %v7109
      %v7142 = vmul.f32 %v7110, %v7110
      %v7143 = vmul.f32 %v7111, %v7111
      %v7144 = vmul.f32 %v7112, %v7112
      %v7145 = vmul.f32 %v7113, %v7113
      %v7146 = vmul.f32 %v7114, %v7114
      %v7147 = vmul.f32 %v7115, %v7115
      %v7148 = vmul.f32 %v7116, %v7116
      %v7149 = vmul.f32 %v7117, %v7117
      %v7150 = vmul.f32 %v7118, %v7118
      %v7151 = vmul.f32 %v7119, %v7119
      %v7152 = vmul.f32 %v7120, %v7120
      %v7153 = vmul.f32 %v7121, %v7121
      %v7154 = vmul.f32 %v7122, %v7122
      %v7155 = vmul.f32 %v7123, %v7123
      %v7156 = vmul.f32 %v7124, %v7124
      %v7157 = vmul.f32 %v7125, %v7125
      %v7158 = vmul.f32 %v7126, %v7126
      %v7159 = vmul.f32 %v7127, %v7127
      %v7160 = vmul.f32 %v7128, %v7128
      %v7161 = vmul.f32 %v7129, %v7129
      %v7162 = vmul.f32 %v7130, %v7130
      %v7163 = vmul.f32 %v7131, %v7131
      %v7164 = vmul.f32 %v7132, %v7132
      %v7165 = vmul.f32 %v7133, %v7133
      %v7166 = vmul.f32 %v7134, %v7134
      %v7167 = vmul.f32 %v7135, %v7135
      %v7168 = vmul.f32 %v7136, %v7136
      %v7169 = vmul.f32 %v7137, %v7137
      %v7170 = vsel %vm1349, %v7138, 0.0
      %7171 = vadd.xlane.f32.xlu0 %v7170
      %v7172 = vpop.xlane.xlu0 %7171
      %v7173 = vsel %vm1349, %v7139, 0.0
      %7174 = vadd.xlane.f32.xlu0 %v7173
      %v7175 = vpop.xlane.xlu0 %7174
      %v7176 = vsel %vm1349, %v7140, 0.0
      %7177 = vadd.xlane.f32.xlu0 %v7176
      %v7178 = vpop.xlane.xlu0 %7177
      %v7179 = vsel %vm1349, %v7141, 0.0
      %7180 = vadd.xlane.f32.xlu0 %v7179
      %v7181 = vpop.xlane.xlu0 %7180
      %v7182 = vsel %vm1349, %v7142, 0.0
      %7183 = vadd.xlane.f32.xlu0 %v7182
      %v7184 = vpop.xlane.xlu0 %7183
      %v7185 = vsel %vm1349, %v7143, 0.0
      %7186 = vadd.xlane.f32.xlu0 %v7185
      %v7187 = vpop.xlane.xlu0 %7186
      %v7188 = vsel %vm1349, %v7144, 0.0
      %7189 = vadd.xlane.f32.xlu0 %v7188
      %v7190 = vpop.xlane.xlu0 %7189
      %v7191 = vsel %vm1349, %v7145, 0.0
      %7192 = vadd.xlane.f32.xlu0 %v7191
      %v7193 = vpop.xlane.xlu0 %7192
      %v7194 = vsel %vm1349, %v7146, 0.0
      %7195 = vadd.xlane.f32.xlu0 %v7194
      %v7196 = vpop.xlane.xlu0 %7195
      %v7197 = vsel %vm1349, %v7147, 0.0
      %7198 = vadd.xlane.f32.xlu0 %v7197
      %v7199 = vpop.xlane.xlu0 %7198
      %v7200 = vsel %vm1349, %v7148, 0.0
      %7201 = vadd.xlane.f32.xlu0 %v7200
      %v7202 = vpop.xlane.xlu0 %7201
      %v7203 = vsel %vm1349, %v7149, 0.0
      %7204 = vadd.xlane.f32.xlu0 %v7203
      %v7205 = vpop.xlane.xlu0 %7204
      %v7206 = vsel %vm1349, %v7150, 0.0
      %7207 = vadd.xlane.f32.xlu0 %v7206
      %v7208 = vpop.xlane.xlu0 %7207
      %v7209 = vsel %vm1349, %v7151, 0.0
      %7210 = vadd.xlane.f32.xlu0 %v7209
      %v7211 = vpop.xlane.xlu0 %7210
      %v7212 = vsel %vm1349, %v7152, 0.0
      %7213 = vadd.xlane.f32.xlu0 %v7212
      %v7214 = vpop.xlane.xlu0 %7213
      %v7215 = vsel %vm1349, %v7153, 0.0
      %7216 = vadd.xlane.f32.xlu0 %v7215
      %v7217 = vpop.xlane.xlu0 %7216
      %v7218 = vsel %vm1349, %v7154, 0.0
      %7219 = vadd.xlane.f32.xlu0 %v7218
      %v7220 = vpop.xlane.xlu0 %7219
      %v7221 = vsel %vm1349, %v7155, 0.0
      %7222 = vadd.xlane.f32.xlu0 %v7221
      %v7223 = vpop.xlane.xlu0 %7222
      %v7224 = vsel %vm1349, %v7156, 0.0
      %7225 = vadd.xlane.f32.xlu0 %v7224
      %v7226 = vpop.xlane.xlu0 %7225
      %v7227 = vsel %vm1349, %v7157, 0.0
      %7228 = vadd.xlane.f32.xlu0 %v7227
      %v7229 = vpop.xlane.xlu0 %7228
      %v7230 = vsel %vm1349, %v7158, 0.0
      %7231 = vadd.xlane.f32.xlu0 %v7230
      %v7232 = vpop.xlane.xlu0 %7231
      %v7233 = vsel %vm1349, %v7159, 0.0
      %7234 = vadd.xlane.f32.xlu0 %v7233
      %v7235 = vpop.xlane.xlu0 %7234
      %v7236 = vsel %vm1349, %v7160, 0.0
      %7237 = vadd.xlane.f32.xlu0 %v7236
      %v7238 = vpop.xlane.xlu0 %7237
      %v7239 = vsel %vm1349, %v7161, 0.0
      %7240 = vadd.xlane.f32.xlu0 %v7239
      %v7241 = vpop.xlane.xlu0 %7240
      %v7242 = vsel %vm1349, %v7162, 0.0
      %7243 = vadd.xlane.f32.xlu0 %v7242
      %v7244 = vpop.xlane.xlu0 %7243
      %v7245 = vsel %vm1349, %v7163, 0.0
      %7246 = vadd.xlane.f32.xlu0 %v7245
      %v7247 = vpop.xlane.xlu0 %7246
      %v7248 = vsel %vm1349, %v7164, 0.0
      %7249 = vadd.xlane.f32.xlu0 %v7248
      %v7250 = vpop.xlane.xlu0 %7249
      %v7251 = vsel %vm1349, %v7165, 0.0
      %7252 = vadd.xlane.f32.xlu0 %v7251
      %v7253 = vpop.xlane.xlu0 %7252
      %v7254 = vsel %vm1349, %v7166, 0.0
      %7255 = vadd.xlane.f32.xlu0 %v7254
      %v7256 = vpop.xlane.xlu0 %7255
      %v7257 = vsel %vm1349, %v7167, 0.0
      %7258 = vadd.xlane.f32.xlu0 %v7257
      %v7259 = vpop.xlane.xlu0 %7258
      %v7260 = vsel %vm1349, %v7168, 0.0
      %7261 = vadd.xlane.f32.xlu0 %v7260
      %v7262 = vpop.xlane.xlu0 %7261
      %v7263 = vsel %vm1349, %v7169, 0.0
      %7264 = vadd.xlane.f32.xlu0 %v7263
      %v7265 = vpop.xlane.xlu0 %7264
      %v7266 = vmul.f32 %v7172, %v1446
      %v7267 = vmul.f32 %v7175, %v1446
      %v7268 = vmul.f32 %v7178, %v1446
      %v7269 = vmul.f32 %v7181, %v1446
      %v7270 = vmul.f32 %v7184, %v1446
      %v7271 = vmul.f32 %v7187, %v1446
      %v7272 = vmul.f32 %v7190, %v1446
      %v7273 = vmul.f32 %v7193, %v1446
      %v7274 = vmul.f32 %v7196, %v1446
      %v7275 = vmul.f32 %v7199, %v1446
      %v7276 = vmul.f32 %v7202, %v1446
      %v7277 = vmul.f32 %v7205, %v1446
      %v7278 = vmul.f32 %v7208, %v1446
      %v7279 = vmul.f32 %v7211, %v1446
      %v7280 = vmul.f32 %v7214, %v1446
      %v7281 = vmul.f32 %v7217, %v1446
      %v7282 = vmul.f32 %v7220, %v1446
      %v7283 = vmul.f32 %v7223, %v1446
      %v7284 = vmul.f32 %v7226, %v1446
      %v7285 = vmul.f32 %v7229, %v1446
      %v7286 = vmul.f32 %v7232, %v1446
      %v7287 = vmul.f32 %v7235, %v1446
      %v7288 = vmul.f32 %v7238, %v1446
      %v7289 = vmul.f32 %v7241, %v1446
      %v7290 = vmul.f32 %v7244, %v1446
      %v7291 = vmul.f32 %v7247, %v1446
      %v7292 = vmul.f32 %v7250, %v1446
      %v7293 = vmul.f32 %v7253, %v1446
      %v7294 = vmul.f32 %v7256, %v1446
      %v7295 = vmul.f32 %v7259, %v1446
      %v7296 = vmul.f32 %v7262, %v1446
      %v7297 = vmul.f32 %v7265, %v1446
      %v7298 = vadd.f32 %v7266, 1e-05
      %v7299 = vadd.f32 %v7267, 1e-05
      %v7300 = vadd.f32 %v7268, 1e-05
      %v7301 = vadd.f32 %v7269, 1e-05
      %v7302 = vadd.f32 %v7270, 1e-05
      %v7303 = vadd.f32 %v7271, 1e-05
      %v7304 = vadd.f32 %v7272, 1e-05
      %v7305 = vadd.f32 %v7273, 1e-05
      %v7306 = vadd.f32 %v7274, 1e-05
      %v7307 = vadd.f32 %v7275, 1e-05
      %v7308 = vadd.f32 %v7276, 1e-05
      %v7309 = vadd.f32 %v7277, 1e-05
      %v7310 = vadd.f32 %v7278, 1e-05
      %v7311 = vadd.f32 %v7279, 1e-05
      %v7312 = vadd.f32 %v7280, 1e-05
      %v7313 = vadd.f32 %v7281, 1e-05
      %v7314 = vadd.f32 %v7282, 1e-05
      %v7315 = vadd.f32 %v7283, 1e-05
      %v7316 = vadd.f32 %v7284, 1e-05
      %v7317 = vadd.f32 %v7285, 1e-05
      %v7318 = vadd.f32 %v7286, 1e-05
      %v7319 = vadd.f32 %v7287, 1e-05
      %v7320 = vadd.f32 %v7288, 1e-05
      %v7321 = vadd.f32 %v7289, 1e-05
      %v7322 = vadd.f32 %v7290, 1e-05
      %v7323 = vadd.f32 %v7291, 1e-05
      %v7324 = vadd.f32 %v7292, 1e-05
      %v7325 = vadd.f32 %v7293, 1e-05
      %v7326 = vadd.f32 %v7294, 1e-05
      %v7327 = vadd.f32 %v7295, 1e-05
      %v7328 = vadd.f32 %v7296, 1e-05
      %v7329 = vadd.f32 %v7297, 1e-05
      %v7330 = vrsqrt.pop %v7298
      %v7331 = vrsqrt.pop %v7299
      %v7332 = vrsqrt.pop %v7300
      %v7333 = vrsqrt.pop %v7301
      %v7334 = vrsqrt.pop %v7302
      %v7335 = vrsqrt.pop %v7303
      %v7336 = vrsqrt.pop %v7304
      %v7337 = vrsqrt.pop %v7305
      %v7338 = vrsqrt.pop %v7306
      %v7339 = vrsqrt.pop %v7307
      %v7340 = vrsqrt.pop %v7308
      %v7341 = vrsqrt.pop %v7309
      %v7342 = vrsqrt.pop %v7310
      %v7343 = vrsqrt.pop %v7311
      %v7344 = vrsqrt.pop %v7312
      %v7345 = vrsqrt.pop %v7313
      %v7346 = vrsqrt.pop %v7314
      %v7347 = vrsqrt.pop %v7315
      %v7348 = vrsqrt.pop %v7316
      %v7349 = vrsqrt.pop %v7317
      %v7350 = vrsqrt.pop %v7318
      %v7351 = vrsqrt.pop %v7319
      %v7352 = vrsqrt.pop %v7320
      %v7353 = vrsqrt.pop %v7321
      %v7354 = vrsqrt.pop %v7322
      %v7355 = vrsqrt.pop %v7323
      %v7356 = vrsqrt.pop %v7324
      %v7357 = vrsqrt.pop %v7325
      %v7358 = vrsqrt.pop %v7326
      %v7359 = vrsqrt.pop %v7327
      %v7360 = vrsqrt.pop %v7328
      %v7361 = vrsqrt.pop %v7329
      %v7362 = vmul.f32 %v7106, %v7330
      %v7363 = vmul.f32 %v7107, %v7331
      %v7364 = vmul.f32 %v7108, %v7332
      %v7365 = vmul.f32 %v7109, %v7333
      %v7366 = vmul.f32 %v7110, %v7334
      %v7367 = vmul.f32 %v7111, %v7335
      %v7368 = vmul.f32 %v7112, %v7336
      %v7369 = vmul.f32 %v7113, %v7337
      %v7370 = vmul.f32 %v7114, %v7338
      %v7371 = vmul.f32 %v7115, %v7339
      %v7372 = vmul.f32 %v7116, %v7340
      %v7373 = vmul.f32 %v7117, %v7341
      %v7374 = vmul.f32 %v7118, %v7342
      %v7375 = vmul.f32 %v7119, %v7343
      %v7376 = vmul.f32 %v7120, %v7344
      %v7377 = vmul.f32 %v7121, %v7345
      %v7378 = vmul.f32 %v7122, %v7346
      %v7379 = vmul.f32 %v7123, %v7347
      %v7380 = vmul.f32 %v7124, %v7348
      %v7381 = vmul.f32 %v7125, %v7349
      %v7382 = vmul.f32 %v7126, %v7350
      %v7383 = vmul.f32 %v7127, %v7351
      %v7384 = vmul.f32 %v7128, %v7352
      %v7385 = vmul.f32 %v7129, %v7353
      %v7386 = vmul.f32 %v7130, %v7354
      %v7387 = vmul.f32 %v7131, %v7355
      %v7388 = vmul.f32 %v7132, %v7356
      %v7389 = vmul.f32 %v7133, %v7357
      %v7390 = vmul.f32 %v7134, %v7358
      %v7391 = vmul.f32 %v7135, %v7359
      %v7392 = vmul.f32 %v7136, %v7360
      %v7393 = vmul.f32 %v7137, %v7361
      %v7395 = vlaneseq
      %v7396 = vshrl.u32 %v7395, 7
      %v7397 = vsub.s32 0, %v7396
      %v7398 = vrot.slane %v6976, %v7397
      %v7400 = vmul.f32 %v7362, %v7398
      %v7401 = vmul.f32 %v7363, %v7398
      %v7402 = vmul.f32 %v7364, %v7398
      %v7403 = vmul.f32 %v7365, %v7398
      %v7404 = vmul.f32 %v7366, %v7398
      %v7405 = vmul.f32 %v7367, %v7398
      %v7406 = vmul.f32 %v7368, %v7398
      %v7407 = vmul.f32 %v7369, %v7398
      %v7408 = vmul.f32 %v7370, %v7398
      %v7409 = vmul.f32 %v7371, %v7398
      %v7410 = vmul.f32 %v7372, %v7398
      %v7411 = vmul.f32 %v7373, %v7398
      %v7412 = vmul.f32 %v7374, %v7398
      %v7413 = vmul.f32 %v7375, %v7398
      %v7414 = vmul.f32 %v7376, %v7398
      %v7415 = vmul.f32 %v7377, %v7398
      %v7416 = vmul.f32 %v7378, %v7398
      %v7417 = vmul.f32 %v7379, %v7398
      %v7418 = vmul.f32 %v7380, %v7398
      %v7419 = vmul.f32 %v7381, %v7398
      %v7420 = vmul.f32 %v7382, %v7398
      %v7421 = vmul.f32 %v7383, %v7398
      %v7422 = vmul.f32 %v7384, %v7398
      %v7423 = vmul.f32 %v7385, %v7398
      %v7424 = vmul.f32 %v7386, %v7398
      %v7425 = vmul.f32 %v7387, %v7398
      %v7426 = vmul.f32 %v7388, %v7398
      %v7427 = vmul.f32 %v7389, %v7398
      %v7428 = vmul.f32 %v7390, %v7398
      %v7429 = vmul.f32 %v7391, %v7398
      %v7430 = vmul.f32 %v7392, %v7398
      %v7431 = vmul.f32 %v7393, %v7398
      %v7433 = vlaneseq
      %v7434 = vshrl.u32 %v7433, 7
      %v7435 = vsub.s32 0, %v7434
      %v7436 = vrot.slane %v6977, %v7435
      %v7438 = vadd.f32 %v7400, %v7436
      %v7439 = vadd.f32 %v7401, %v7436
      %v7440 = vadd.f32 %v7402, %v7436
      %v7441 = vadd.f32 %v7403, %v7436
      %v7442 = vadd.f32 %v7404, %v7436
      %v7443 = vadd.f32 %v7405, %v7436
      %v7444 = vadd.f32 %v7406, %v7436
      %v7445 = vadd.f32 %v7407, %v7436
      %v7446 = vadd.f32 %v7408, %v7436
      %v7447 = vadd.f32 %v7409, %v7436
      %v7448 = vadd.f32 %v7410, %v7436
      %v7449 = vadd.f32 %v7411, %v7436
      %v7450 = vadd.f32 %v7412, %v7436
      %v7451 = vadd.f32 %v7413, %v7436
      %v7452 = vadd.f32 %v7414, %v7436
      %v7453 = vadd.f32 %v7415, %v7436
      %v7454 = vadd.f32 %v7416, %v7436
      %v7455 = vadd.f32 %v7417, %v7436
      %v7456 = vadd.f32 %v7418, %v7436
      %v7457 = vadd.f32 %v7419, %v7436
      %v7458 = vadd.f32 %v7420, %v7436
      %v7459 = vadd.f32 %v7421, %v7436
      %v7460 = vadd.f32 %v7422, %v7436
      %v7461 = vadd.f32 %v7423, %v7436
      %v7462 = vadd.f32 %v7424, %v7436
      %v7463 = vadd.f32 %v7425, %v7436
      %v7464 = vadd.f32 %v7426, %v7436
      %v7465 = vadd.f32 %v7427, %v7436
      %v7466 = vadd.f32 %v7428, %v7436
      %v7467 = vadd.f32 %v7429, %v7436
      %v7468 = vadd.f32 %v7430, %v7436
      %v7469 = vadd.f32 %v7431, %v7436
      %v7470 = vld [vmem:[%s774] sm:$0xf]
      %v7471 = vld [vmem:[%s774 + $0x4] sm:$0xf]
      %v7472 = vld [vmem:[%s774 + $0x8] sm:$0xf]
      %v7473 = vld [vmem:[%s774 + $0xc] sm:$0xf]
      %v7474 = vpack.c.bf16 %v7439, %v7438
      %v7475 = vpack.c.bf16 %v7441, %v7440
      %v7476 = vpack.c.bf16 %v7443, %v7442
      %v7477 = vpack.c.bf16 %v7445, %v7444
      %v7478 = vpack.c.bf16 %v7447, %v7446
      %v7479 = vpack.c.bf16 %v7449, %v7448
      %v7480 = vpack.c.bf16 %v7451, %v7450
      %v7481 = vpack.c.bf16 %v7453, %v7452
      %v7482 = vpack.c.bf16 %v7455, %v7454
      %v7483 = vpack.c.bf16 %v7457, %v7456
      %v7484 = vpack.c.bf16 %v7459, %v7458
      %v7485 = vpack.c.bf16 %v7461, %v7460
      %v7486 = vpack.c.bf16 %v7463, %v7462
      %v7487 = vpack.c.bf16 %v7465, %v7464
      %v7488 = vpack.c.bf16 %v7467, %v7466
      %v7489 = vpack.c.bf16 %v7469, %v7468
      %v7490 = vld [vmem:[%s777] sm:$0x1]
      %v7492 = vlaneseq
      %v7493 = vshrl.u32 %v7492, 7
      %v7494 = vsub.s32 0, %v7493
      %v7495 = vrot.slane %v7490, %v7494
      %v7501 = vunpack.c.l.b16 %v7470
      %v7502 = vunpack.c.l.b16 %v7471
      %v7503 = vunpack.c.l.b16 %v7472
      %v7504 = vunpack.c.l.b16 %v7473
      %v7505 = vpack.c.b16 %v7502, %v7501
      %v7506 = vpack.c.b16 %v7504, %v7503
      %v7510 = vsel %vm1349, %v7474, 0
      %v7513 = vsel %vm1349, %v7475, 0
      %v7516 = vsel %vm1349, %v7476, 0
      %v7519 = vsel %vm1349, %v7477, 0
      %v7522 = vsel %vm1349, %v7478, 0
      %v7525 = vsel %vm1349, %v7479, 0
      %v7528 = vsel %vm1349, %v7480, 0
      %v7531 = vsel %vm1349, %v7481, 0
      %v7534 = vsel %vm1349, %v7482, 0
      %v7537 = vsel %vm1349, %v7483, 0
      %v7540 = vsel %vm1349, %v7484, 0
      %v7543 = vsel %vm1349, %v7485, 0
      %v7546 = vsel %vm1349, %v7486, 0
      %v7549 = vsel %vm1349, %v7487, 0
      %v7552 = vsel %vm1349, %v7488, 0
      %v7555 = vsel %vm1349, %v7489, 0
      %7557 = vmatprep.subr.bf16.mxu0 0
      %7558 = vmatpush1.bf16.msra.mxu0 0
      %7559 = vmatprep.subr.bf16.mxu0 0
      %7560 = vmatpush1.bf16.msra.mxu0 0
      %7561 = vmatprep.subr.bf16.mxu0 0
      %7562 = vmatpush1.bf16.msra.mxu0 0
      %7563 = vmatprep.subr.bf16.mxu0 0
      %7564 = vmatpush1.bf16.msra.mxu0 0
      %7565 = vmatprep.subr.bf16.mxu0 0
      %7566 = vmatpush1.bf16.msra.mxu0 0
      %7567 = vmatprep.subr.bf16.mxu0 0
      %7568 = vmatpush1.bf16.msra.mxu0 0
      %7569 = vmatprep.subr.bf16.mxu0 0
      %7570 = vmatpush1.bf16.msra.mxu0 %v7506
      %7571 = vmatprep.subr.bf16.mxu0 0
      %7572 = vmatpush1.bf16.msra.mxu0 %v7505
      %7573 = vmatprep.subr.bf16.mxu0 0
      %7574 = vmatpush2.bf16.msra.mxu0 0
      %7575 = vmatprep.subr.bf16.mxu0 0
      %7576 = vmatpush2.bf16.msra.mxu0 0
      %7577 = vmatprep.subr.bf16.mxu0 0
      %7578 = vmatpush2.bf16.msra.mxu0 0
      %7579 = vmatprep.subr.bf16.mxu0 0
      %7580 = vmatpush2.bf16.msra.mxu0 0
      %7581 = vmatprep.subr.bf16.mxu0 0
      %7582 = vmatpush2.bf16.msra.mxu0 0
      %7583 = vmatprep.subr.bf16.mxu0 0
      %7584 = vmatpush2.bf16.msra.mxu0 0
      %7585 = vmatprep.subr.bf16.mxu0 0
      %7586 = vmatpush2.bf16.msra.mxu0 0
      %7587 = vmatprep.subr.bf16.mxu0 0
      %7588 = vmatpush2.bf16.msra.mxu0 0
      %7589 = vmatprep.mubr.bf16.mxu0 0
      %7590 = vmatmul.mubr.bf16.gmra.mxu0 %v7510
      %v7591 = vpop.f32.mrf.mxu0
      %v7592 = vadd.f32 %v7495, %v7591
      %v7593 = vpop.f32.mrf.mxu0
      %v7594 = vpop.f32.mrf.mxu0
      %v7595 = vadd.f32 %v7495, %v7594
      %v7596 = vpop.f32.mrf.mxu0
      %7597 = vmatprep.mubr.bf16.mxu0 0
      %7598 = vmatmul.mubr.bf16.gmra.mxu0 %v7513
      %v7599 = vpop.f32.mrf.mxu0
      %v7600 = vadd.f32 %v7495, %v7599
      %v7601 = vpop.f32.mrf.mxu0
      %v7602 = vpop.f32.mrf.mxu0
      %v7603 = vadd.f32 %v7495, %v7602
      %v7604 = vpop.f32.mrf.mxu0
      %7605 = vmatprep.mubr.bf16.mxu0 0
      %7606 = vmatmul.mubr.bf16.gmra.mxu0 %v7516
      %v7607 = vpop.f32.mrf.mxu0
      %v7608 = vadd.f32 %v7495, %v7607
      %v7609 = vpop.f32.mrf.mxu0
      %v7610 = vpop.f32.mrf.mxu0
      %v7611 = vadd.f32 %v7495, %v7610
      %v7612 = vpop.f32.mrf.mxu0
      %7613 = vmatprep.mubr.bf16.mxu0 0
      %7614 = vmatmul.mubr.bf16.gmra.mxu0 %v7519
      %v7615 = vpop.f32.mrf.mxu0
      %v7616 = vadd.f32 %v7495, %v7615
      %v7617 = vpop.f32.mrf.mxu0
      %v7618 = vpop.f32.mrf.mxu0
      %v7619 = vadd.f32 %v7495, %v7618
      %v7620 = vpop.f32.mrf.mxu0
      %7621 = vmatprep.mubr.bf16.mxu0 0
      %7622 = vmatmul.mubr.bf16.gmra.mxu0 %v7522
      %v7623 = vpop.f32.mrf.mxu0
      %v7624 = vadd.f32 %v7495, %v7623
      %v7625 = vpop.f32.mrf.mxu0
      %v7626 = vpop.f32.mrf.mxu0
      %v7627 = vadd.f32 %v7495, %v7626
      %v7628 = vpop.f32.mrf.mxu0
      %7629 = vmatprep.mubr.bf16.mxu0 0
      %7630 = vmatmul.mubr.bf16.gmra.mxu0 %v7525
      %v7631 = vpop.f32.mrf.mxu0
      %v7632 = vadd.f32 %v7495, %v7631
      %v7633 = vpop.f32.mrf.mxu0
      %v7634 = vpop.f32.mrf.mxu0
      %v7635 = vadd.f32 %v7495, %v7634
      %v7636 = vpop.f32.mrf.mxu0
      %7637 = vmatprep.mubr.bf16.mxu0 0
      %7638 = vmatmul.mubr.bf16.gmra.mxu0 %v7528
      %v7639 = vpop.f32.mrf.mxu0
      %v7640 = vadd.f32 %v7495, %v7639
      %v7641 = vpop.f32.mrf.mxu0
      %v7642 = vpop.f32.mrf.mxu0
      %v7643 = vadd.f32 %v7495, %v7642
      %v7644 = vpop.f32.mrf.mxu0
      %7645 = vmatprep.mubr.bf16.mxu0 0
      %7646 = vmatmul.mubr.bf16.gmra.mxu0 %v7531
      %v7647 = vpop.f32.mrf.mxu0
      %v7648 = vadd.f32 %v7495, %v7647
      %v7649 = vpop.f32.mrf.mxu0
      %v7650 = vpop.f32.mrf.mxu0
      %v7651 = vadd.f32 %v7495, %v7650
      %v7652 = vpop.f32.mrf.mxu0
      %7653 = vmatprep.mubr.bf16.mxu0 0
      %7654 = vmatmul.mubr.bf16.gmra.mxu0 %v7534
      %v7655 = vpop.f32.mrf.mxu0
      %v7656 = vadd.f32 %v7495, %v7655
      %v7657 = vpop.f32.mrf.mxu0
      %v7658 = vpop.f32.mrf.mxu0
      %v7659 = vadd.f32 %v7495, %v7658
      %v7660 = vpop.f32.mrf.mxu0
      %7661 = vmatprep.mubr.bf16.mxu0 0
      %7662 = vmatmul.mubr.bf16.gmra.mxu0 %v7537
      %v7663 = vpop.f32.mrf.mxu0
      %v7664 = vadd.f32 %v7495, %v7663
      %v7665 = vpop.f32.mrf.mxu0
      %v7666 = vpop.f32.mrf.mxu0
      %v7667 = vadd.f32 %v7495, %v7666
      %v7668 = vpop.f32.mrf.mxu0
      %7669 = vmatprep.mubr.bf16.mxu0 0
      %7670 = vmatmul.mubr.bf16.gmra.mxu0 %v7540
      %v7671 = vpop.f32.mrf.mxu0
      %v7672 = vadd.f32 %v7495, %v7671
      %v7673 = vpop.f32.mrf.mxu0
      %v7674 = vpop.f32.mrf.mxu0
      %v7675 = vadd.f32 %v7495, %v7674
      %v7676 = vpop.f32.mrf.mxu0
      %7677 = vmatprep.mubr.bf16.mxu0 0
      %7678 = vmatmul.mubr.bf16.gmra.mxu0 %v7543
      %v7679 = vpop.f32.mrf.mxu0
      %v7680 = vadd.f32 %v7495, %v7679
      %v7681 = vpop.f32.mrf.mxu0
      %v7682 = vpop.f32.mrf.mxu0
      %v7683 = vadd.f32 %v7495, %v7682
      %v7684 = vpop.f32.mrf.mxu0
      %7685 = vmatprep.mubr.bf16.mxu0 0
      %7686 = vmatmul.mubr.bf16.gmra.mxu0 %v7546
      %v7687 = vpop.f32.mrf.mxu0
      %v7688 = vadd.f32 %v7495, %v7687
      %v7689 = vpop.f32.mrf.mxu0
      %v7690 = vpop.f32.mrf.mxu0
      %v7691 = vadd.f32 %v7495, %v7690
      %v7692 = vpop.f32.mrf.mxu0
      %7693 = vmatprep.mubr.bf16.mxu0 0
      %7694 = vmatmul.mubr.bf16.gmra.mxu0 %v7549
      %v7695 = vpop.f32.mrf.mxu0
      %v7696 = vadd.f32 %v7495, %v7695
      %v7697 = vpop.f32.mrf.mxu0
      %v7698 = vpop.f32.mrf.mxu0
      %v7699 = vadd.f32 %v7495, %v7698
      %v7700 = vpop.f32.mrf.mxu0
      %7701 = vmatprep.mubr.bf16.mxu0 0
      %7702 = vmatmul.mubr.bf16.gmra.mxu0 %v7552
      %v7703 = vpop.f32.mrf.mxu0
      %v7704 = vadd.f32 %v7495, %v7703
      %v7705 = vpop.f32.mrf.mxu0
      %v7706 = vpop.f32.mrf.mxu0
      %v7707 = vadd.f32 %v7495, %v7706
      %v7708 = vpop.f32.mrf.mxu0
      %7709 = vmatprep.mubr.bf16.mxu0 0
      %7710 = vmatmul.mubr.bf16.gmra.mxu0 %v7555
      %v7711 = vpop.f32.mrf.mxu0
      %v7712 = vadd.f32 %v7495, %v7711
      %v7713 = vpop.f32.mrf.mxu0
      %v7714 = vpop.f32.mrf.mxu0
      %v7715 = vadd.f32 %v7495, %v7714
      %v7716 = vpop.f32.mrf.mxu0
      %7717 = vdwg.mxu0
      %v7718 = vmul.f32 %v7592, %v7592
      %v7719 = vmul.f32 %v7595, %v7595
      %v7720 = vmul.f32 %v7600, %v7600
      %v7721 = vmul.f32 %v7603, %v7603
      %v7722 = vmul.f32 %v7608, %v7608
      %v7723 = vmul.f32 %v7611, %v7611
      %v7724 = vmul.f32 %v7616, %v7616
      %v7725 = vmul.f32 %v7619, %v7619
      %v7726 = vmul.f32 %v7624, %v7624
      %v7727 = vmul.f32 %v7627, %v7627
      %v7728 = vmul.f32 %v7632, %v7632
      %v7729 = vmul.f32 %v7635, %v7635
      %v7730 = vmul.f32 %v7640, %v7640
      %v7731 = vmul.f32 %v7643, %v7643
      %v7732 = vmul.f32 %v7648, %v7648
      %v7733 = vmul.f32 %v7651, %v7651
      %v7734 = vmul.f32 %v7656, %v7656
      %v7735 = vmul.f32 %v7659, %v7659
      %v7736 = vmul.f32 %v7664, %v7664
      %v7737 = vmul.f32 %v7667, %v7667
      %v7738 = vmul.f32 %v7672, %v7672
      %v7739 = vmul.f32 %v7675, %v7675
      %v7740 = vmul.f32 %v7680, %v7680
      %v7741 = vmul.f32 %v7683, %v7683
      %v7742 = vmul.f32 %v7688, %v7688
      %v7743 = vmul.f32 %v7691, %v7691
      %v7744 = vmul.f32 %v7696, %v7696
      %v7745 = vmul.f32 %v7699, %v7699
      %v7746 = vmul.f32 %v7704, %v7704
      %v7747 = vmul.f32 %v7707, %v7707
      %v7748 = vmul.f32 %v7712, %v7712
      %v7749 = vmul.f32 %v7715, %v7715
      %v7750 = vmul.f32 %v7592, %v7718
      %v7751 = vmul.f32 %v7595, %v7719
      %v7752 = vmul.f32 %v7600, %v7720
      %v7753 = vmul.f32 %v7603, %v7721
      %v7754 = vmul.f32 %v7608, %v7722
      %v7755 = vmul.f32 %v7611, %v7723
      %v7756 = vmul.f32 %v7616, %v7724
      %v7757 = vmul.f32 %v7619, %v7725
      %v7758 = vmul.f32 %v7624, %v7726
      %v7759 = vmul.f32 %v7627, %v7727
      %v7760 = vmul.f32 %v7632, %v7728
      %v7761 = vmul.f32 %v7635, %v7729
      %v7762 = vmul.f32 %v7640, %v7730
      %v7763 = vmul.f32 %v7643, %v7731
      %v7764 = vmul.f32 %v7648, %v7732
      %v7765 = vmul.f32 %v7651, %v7733
      %v7766 = vmul.f32 %v7656, %v7734
      %v7767 = vmul.f32 %v7659, %v7735
      %v7768 = vmul.f32 %v7664, %v7736
      %v7769 = vmul.f32 %v7667, %v7737
      %v7770 = vmul.f32 %v7672, %v7738
      %v7771 = vmul.f32 %v7675, %v7739
      %v7772 = vmul.f32 %v7680, %v7740
      %v7773 = vmul.f32 %v7683, %v7741
      %v7774 = vmul.f32 %v7688, %v7742
      %v7775 = vmul.f32 %v7691, %v7743
      %v7776 = vmul.f32 %v7696, %v7744
      %v7777 = vmul.f32 %v7699, %v7745
      %v7778 = vmul.f32 %v7704, %v7746
      %v7779 = vmul.f32 %v7707, %v7747
      %v7780 = vmul.f32 %v7712, %v7748
      %v7781 = vmul.f32 %v7715, %v7749
      %v7782 = vmul.f32 %v7750, 0.044715
      %v7783 = vmul.f32 %v7751, 0.044715
      %v7784 = vmul.f32 %v7752, 0.044715
      %v7785 = vmul.f32 %v7753, 0.044715
      %v7786 = vmul.f32 %v7754, 0.044715
      %v7787 = vmul.f32 %v7755, 0.044715
      %v7788 = vmul.f32 %v7756, 0.044715
      %v7789 = vmul.f32 %v7757, 0.044715
      %v7790 = vmul.f32 %v7758, 0.044715
      %v7791 = vmul.f32 %v7759, 0.044715
      %v7792 = vmul.f32 %v7760, 0.044715
      %v7793 = vmul.f32 %v7761, 0.044715
      %v7794 = vmul.f32 %v7762, 0.044715
      %v7795 = vmul.f32 %v7763, 0.044715
      %v7796 = vmul.f32 %v7764, 0.044715
      %v7797 = vmul.f32 %v7765, 0.044715
      %v7798 = vmul.f32 %v7766, 0.044715
      %v7799 = vmul.f32 %v7767, 0.044715
      %v7800 = vmul.f32 %v7768, 0.044715
      %v7801 = vmul.f32 %v7769, 0.044715
      %v7802 = vmul.f32 %v7770, 0.044715
      %v7803 = vmul.f32 %v7771, 0.044715
      %v7804 = vmul.f32 %v7772, 0.044715
      %v7805 = vmul.f32 %v7773, 0.044715
      %v7806 = vmul.f32 %v7774, 0.044715
      %v7807 = vmul.f32 %v7775, 0.044715
      %v7808 = vmul.f32 %v7776, 0.044715
      %v7809 = vmul.f32 %v7777, 0.044715
      %v7810 = vmul.f32 %v7778, 0.044715
      %v7811 = vmul.f32 %v7779, 0.044715
      %v7812 = vmul.f32 %v7780, 0.044715
      %v7813 = vmul.f32 %v7781, 0.044715
      %v7814 = vadd.f32 %v7592, %v7782
      %v7815 = vadd.f32 %v7595, %v7783
      %v7816 = vadd.f32 %v7600, %v7784
      %v7817 = vadd.f32 %v7603, %v7785
      %v7818 = vadd.f32 %v7608, %v7786
      %v7819 = vadd.f32 %v7611, %v7787
      %v7820 = vadd.f32 %v7616, %v7788
      %v7821 = vadd.f32 %v7619, %v7789
      %v7822 = vadd.f32 %v7624, %v7790
      %v7823 = vadd.f32 %v7627, %v7791
      %v7824 = vadd.f32 %v7632, %v7792
      %v7825 = vadd.f32 %v7635, %v7793
      %v7826 = vadd.f32 %v7640, %v7794
      %v7827 = vadd.f32 %v7643, %v7795
      %v7828 = vadd.f32 %v7648, %v7796
      %v7829 = vadd.f32 %v7651, %v7797
      %v7830 = vadd.f32 %v7656, %v7798
      %v7831 = vadd.f32 %v7659, %v7799
      %v7832 = vadd.f32 %v7664, %v7800
      %v7833 = vadd.f32 %v7667, %v7801
      %v7834 = vadd.f32 %v7672, %v7802
      %v7835 = vadd.f32 %v7675, %v7803
      %v7836 = vadd.f32 %v7680, %v7804
      %v7837 = vadd.f32 %v7683, %v7805
      %v7838 = vadd.f32 %v7688, %v7806
      %v7839 = vadd.f32 %v7691, %v7807
      %v7840 = vadd.f32 %v7696, %v7808
      %v7841 = vadd.f32 %v7699, %v7809
      %v7842 = vadd.f32 %v7704, %v7810
      %v7843 = vadd.f32 %v7707, %v7811
      %v7844 = vadd.f32 %v7712, %v7812
      %v7845 = vadd.f32 %v7715, %v7813
      %v7846 = vmul.f32 %v7814, 0.7978846
      %v7847 = vmul.f32 %v7815, 0.7978846
      %v7848 = vmul.f32 %v7816, 0.7978846
      %v7849 = vmul.f32 %v7817, 0.7978846
      %v7850 = vmul.f32 %v7818, 0.7978846
      %v7851 = vmul.f32 %v7819, 0.7978846
      %v7852 = vmul.f32 %v7820, 0.7978846
      %v7853 = vmul.f32 %v7821, 0.7978846
      %v7854 = vmul.f32 %v7822, 0.7978846
      %v7855 = vmul.f32 %v7823, 0.7978846
      %v7856 = vmul.f32 %v7824, 0.7978846
      %v7857 = vmul.f32 %v7825, 0.7978846
      %v7858 = vmul.f32 %v7826, 0.7978846
      %v7859 = vmul.f32 %v7827, 0.7978846
      %v7860 = vmul.f32 %v7828, 0.7978846
      %v7861 = vmul.f32 %v7829, 0.7978846
      %v7862 = vmul.f32 %v7830, 0.7978846
      %v7863 = vmul.f32 %v7831, 0.7978846
      %v7864 = vmul.f32 %v7832, 0.7978846
      %v7865 = vmul.f32 %v7833, 0.7978846
      %v7866 = vmul.f32 %v7834, 0.7978846
      %v7867 = vmul.f32 %v7835, 0.7978846
      %v7868 = vmul.f32 %v7836, 0.7978846
      %v7869 = vmul.f32 %v7837, 0.7978846
      %v7870 = vmul.f32 %v7838, 0.7978846
      %v7871 = vmul.f32 %v7839, 0.7978846
      %v7872 = vmul.f32 %v7840, 0.7978846
      %v7873 = vmul.f32 %v7841, 0.7978846
      %v7874 = vmul.f32 %v7842, 0.7978846
      %v7875 = vmul.f32 %v7843, 0.7978846
      %v7876 = vmul.f32 %v7844, 0.7978846
      %v7877 = vmul.f32 %v7845, 0.7978846
      %v7878 = vtanh.pop %v7846
      %v7879 = vtanh.pop %v7847
      %v7880 = vtanh.pop %v7848
      %v7881 = vtanh.pop %v7849
      %v7882 = vtanh.pop %v7850
      %v7883 = vtanh.pop %v7851
      %v7884 = vtanh.pop %v7852
      %v7885 = vtanh.pop %v7853
      %v7886 = vtanh.pop %v7854
      %v7887 = vtanh.pop %v7855
      %v7888 = vtanh.pop %v7856
      %v7889 = vtanh.pop %v7857
      %v7890 = vtanh.pop %v7858
      %v7891 = vtanh.pop %v7859
      %v7892 = vtanh.pop %v7860
      %v7893 = vtanh.pop %v7861
      %v7894 = vtanh.pop %v7862
      %v7895 = vtanh.pop %v7863
      %v7896 = vtanh.pop %v7864
      %v7897 = vtanh.pop %v7865
      %v7898 = vtanh.pop %v7866
      %v7899 = vtanh.pop %v7867
      %v7900 = vtanh.pop %v7868
      %v7901 = vtanh.pop %v7869
      %v7902 = vtanh.pop %v7870
      %v7903 = vtanh.pop %v7871
      %v7904 = vtanh.pop %v7872
      %v7905 = vtanh.pop %v7873
      %v7906 = vtanh.pop %v7874
      %v7907 = vtanh.pop %v7875
      %v7908 = vtanh.pop %v7876
      %v7909 = vtanh.pop %v7877
      %v7910 = vadd.f32 %v7878, 1.0
      %v7911 = vadd.f32 %v7879, 1.0
      %v7912 = vadd.f32 %v7880, 1.0
      %v7913 = vadd.f32 %v7881, 1.0
      %v7914 = vadd.f32 %v7882, 1.0
      %v7915 = vadd.f32 %v7883, 1.0
      %v7916 = vadd.f32 %v7884, 1.0
      %v7917 = vadd.f32 %v7885, 1.0
      %v7918 = vadd.f32 %v7886, 1.0
      %v7919 = vadd.f32 %v7887, 1.0
      %v7920 = vadd.f32 %v7888, 1.0
      %v7921 = vadd.f32 %v7889, 1.0
      %v7922 = vadd.f32 %v7890, 1.0
      %v7923 = vadd.f32 %v7891, 1.0
      %v7924 = vadd.f32 %v7892, 1.0
      %v7925 = vadd.f32 %v7893, 1.0
      %v7926 = vadd.f32 %v7894, 1.0
      %v7927 = vadd.f32 %v7895, 1.0
      %v7928 = vadd.f32 %v7896, 1.0
      %v7929 = vadd.f32 %v7897, 1.0
      %v7930 = vadd.f32 %v7898, 1.0
      %v7931 = vadd.f32 %v7899, 1.0
      %v7932 = vadd.f32 %v7900, 1.0
      %v7933 = vadd.f32 %v7901, 1.0
      %v7934 = vadd.f32 %v7902, 1.0
      %v7935 = vadd.f32 %v7903, 1.0
      %v7936 = vadd.f32 %v7904, 1.0
      %v7937 = vadd.f32 %v7905, 1.0
      %v7938 = vadd.f32 %v7906, 1.0
      %v7939 = vadd.f32 %v7907, 1.0
      %v7940 = vadd.f32 %v7908, 1.0
      %v7941 = vadd.f32 %v7909, 1.0
      %v7942 = vmul.f32 %v7910, 0.5
      %v7943 = vmul.f32 %v7911, 0.5
      %v7944 = vmul.f32 %v7912, 0.5
      %v7945 = vmul.f32 %v7913, 0.5
      %v7946 = vmul.f32 %v7914, 0.5
      %v7947 = vmul.f32 %v7915, 0.5
      %v7948 = vmul.f32 %v7916, 0.5
      %v7949 = vmul.f32 %v7917, 0.5
      %v7950 = vmul.f32 %v7918, 0.5
      %v7951 = vmul.f32 %v7919, 0.5
      %v7952 = vmul.f32 %v7920, 0.5
      %v7953 = vmul.f32 %v7921, 0.5
      %v7954 = vmul.f32 %v7922, 0.5
      %v7955 = vmul.f32 %v7923, 0.5
      %v7956 = vmul.f32 %v7924, 0.5
      %v7957 = vmul.f32 %v7925, 0.5
      %v7958 = vmul.f32 %v7926, 0.5
      %v7959 = vmul.f32 %v7927, 0.5
      %v7960 = vmul.f32 %v7928, 0.5
      %v7961 = vmul.f32 %v7929, 0.5
      %v7962 = vmul.f32 %v7930, 0.5
      %v7963 = vmul.f32 %v7931, 0.5
      %v7964 = vmul.f32 %v7932, 0.5
      %v7965 = vmul.f32 %v7933, 0.5
      %v7966 = vmul.f32 %v7934, 0.5
      %v7967 = vmul.f32 %v7935, 0.5
      %v7968 = vmul.f32 %v7936, 0.5
      %v7969 = vmul.f32 %v7937, 0.5
      %v7970 = vmul.f32 %v7938, 0.5
      %v7971 = vmul.f32 %v7939, 0.5
      %v7972 = vmul.f32 %v7940, 0.5
      %v7973 = vmul.f32 %v7941, 0.5
      %v7974 = vmul.f32 %v7592, %v7942
      %v7975 = vmul.f32 %v7595, %v7943
      %v7976 = vmul.f32 %v7600, %v7944
      %v7977 = vmul.f32 %v7603, %v7945
      %v7978 = vmul.f32 %v7608, %v7946
      %v7979 = vmul.f32 %v7611, %v7947
      %v7980 = vmul.f32 %v7616, %v7948
      %v7981 = vmul.f32 %v7619, %v7949
      %v7982 = vmul.f32 %v7624, %v7950
      %v7983 = vmul.f32 %v7627, %v7951
      %v7984 = vmul.f32 %v7632, %v7952
      %v7985 = vmul.f32 %v7635, %v7953
      %v7986 = vmul.f32 %v7640, %v7954
      %v7987 = vmul.f32 %v7643, %v7955
      %v7988 = vmul.f32 %v7648, %v7956
      %v7989 = vmul.f32 %v7651, %v7957
      %v7990 = vmul.f32 %v7656, %v7958
      %v7991 = vmul.f32 %v7659, %v7959
      %v7992 = vmul.f32 %v7664, %v7960
      %v7993 = vmul.f32 %v7667, %v7961
      %v7994 = vmul.f32 %v7672, %v7962
      %v7995 = vmul.f32 %v7675, %v7963
      %v7996 = vmul.f32 %v7680, %v7964
      %v7997 = vmul.f32 %v7683, %v7965
      %v7998 = vmul.f32 %v7688, %v7966
      %v7999 = vmul.f32 %v7691, %v7967
      %v8000 = vmul.f32 %v7696, %v7968
      %v8001 = vmul.f32 %v7699, %v7969
      %v8002 = vmul.f32 %v7704, %v7970
      %v8003 = vmul.f32 %v7707, %v7971
      %v8004 = vmul.f32 %v7712, %v7972
      %v8005 = vmul.f32 %v7715, %v7973
      %v8006 = vld [vmem:[%s782] sm:$0xf]
      %v8007 = vld [vmem:[%s782 + $0x4] sm:$0xf]
      %v8008 = vld [vmem:[%s782 + $0x8] sm:$0xf]
      %v8009 = vld [vmem:[%s782 + $0xc] sm:$0xf]
      %v8010 = vld [vmem:[%s782 + $0x10] sm:$0xf]
      %v8011 = vld [vmem:[%s782 + $0x14] sm:$0xf]
      %v8012 = vld [vmem:[%s782 + $0x18] sm:$0xf]
      %v8013 = vld [vmem:[%s782 + $0x1c] sm:$0xf]
      %v8014 = vld [vmem:[%s782 + $0x20] sm:$0xf]
      %v8015 = vld [vmem:[%s782 + $0x24] sm:$0xf]
      %v8016 = vld [vmem:[%s782 + $0x28] sm:$0xf]
      %v8017 = vld [vmem:[%s782 + $0x2c] sm:$0xf]
      %v8018 = vld [vmem:[%s782 + $0x30] sm:$0xf]
      %v8019 = vld [vmem:[%s782 + $0x34] sm:$0xf]
      %v8020 = vld [vmem:[%s782 + $0x38] sm:$0xf]
      %v8021 = vld [vmem:[%s782 + $0x3c] sm:$0xf]
      %v8022 = vpack.c.bf16 %v7975, %v7974
      %v8023 = vpack.c.bf16 %v7977, %v7976
      %v8024 = vpack.c.bf16 %v7979, %v7978
      %v8025 = vpack.c.bf16 %v7981, %v7980
      %v8026 = vpack.c.bf16 %v7983, %v7982
      %v8027 = vpack.c.bf16 %v7985, %v7984
      %v8028 = vpack.c.bf16 %v7987, %v7986
      %v8029 = vpack.c.bf16 %v7989, %v7988
      %v8030 = vpack.c.bf16 %v7991, %v7990
      %v8031 = vpack.c.bf16 %v7993, %v7992
      %v8032 = vpack.c.bf16 %v7995, %v7994
      %v8033 = vpack.c.bf16 %v7997, %v7996
      %v8034 = vpack.c.bf16 %v7999, %v7998
      %v8035 = vpack.c.bf16 %v8001, %v8000
      %v8036 = vpack.c.bf16 %v8003, %v8002
      %v8037 = vpack.c.bf16 %v8005, %v8004
      %v8054 = vunpack.c.l.b16 %v8006
      %v8055 = vunpack.c.l.b16 %v8007
      %v8056 = vunpack.c.l.b16 %v8008
      %v8057 = vunpack.c.l.b16 %v8009
      %v8058 = vunpack.c.l.b16 %v8010
      %v8059 = vunpack.c.l.b16 %v8011
      %v8060 = vunpack.c.l.b16 %v8012
      %v8061 = vunpack.c.l.b16 %v8013
      %v8062 = vunpack.c.l.b16 %v8014
      %v8063 = vunpack.c.l.b16 %v8015
      %v8064 = vunpack.c.l.b16 %v8016
      %v8065 = vunpack.c.l.b16 %v8017
      %v8066 = vunpack.c.l.b16 %v8018
      %v8067 = vunpack.c.l.b16 %v8019
      %v8068 = vunpack.c.l.b16 %v8020
      %v8069 = vunpack.c.l.b16 %v8021
      %v8070 = vpack.c.b16 %v8055, %v8054
      %v8071 = vpack.c.b16 %v8057, %v8056
      %v8072 = vpack.c.b16 %v8059, %v8058
      %v8073 = vpack.c.b16 %v8061, %v8060
      %v8074 = vpack.c.b16 %v8063, %v8062
      %v8075 = vpack.c.b16 %v8065, %v8064
      %v8076 = vpack.c.b16 %v8067, %v8066
      %v8077 = vpack.c.b16 %v8069, %v8068
      %8086 = vmatprep.subr.bf16.mxu0 0
      %8087 = vmatpush1.bf16.msra.mxu0 %v8077
      %8088 = vmatprep.subr.bf16.mxu0 0
      %8089 = vmatpush1.bf16.msra.mxu0 %v8076
      %8090 = vmatprep.subr.bf16.mxu0 0
      %8091 = vmatpush1.bf16.msra.mxu0 %v8075
      %8092 = vmatprep.subr.bf16.mxu0 0
      %8093 = vmatpush1.bf16.msra.mxu0 %v8074
      %8094 = vmatprep.subr.bf16.mxu0 0
      %8095 = vmatpush1.bf16.msra.mxu0 %v8073
      %8096 = vmatprep.subr.bf16.mxu0 0
      %8097 = vmatpush1.bf16.msra.mxu0 %v8072
      %8098 = vmatprep.subr.bf16.mxu0 0
      %8099 = vmatpush1.bf16.msra.mxu0 %v8071
      %8100 = vmatprep.subr.bf16.mxu0 0
      %8101 = vmatpush1.bf16.msra.mxu0 %v8070
      %8102 = vmatprep.subr.bf16.mxu0 0
      %8103 = vmatpush2.bf16.msra.mxu0 0
      %8104 = vmatprep.subr.bf16.mxu0 0
      %8105 = vmatpush2.bf16.msra.mxu0 0
      %8106 = vmatprep.subr.bf16.mxu0 0
      %8107 = vmatpush2.bf16.msra.mxu0 0
      %8108 = vmatprep.subr.bf16.mxu0 0
      %8109 = vmatpush2.bf16.msra.mxu0 0
      %8110 = vmatprep.subr.bf16.mxu0 0
      %8111 = vmatpush2.bf16.msra.mxu0 0
      %8112 = vmatprep.subr.bf16.mxu0 0
      %8113 = vmatpush2.bf16.msra.mxu0 0
      %8114 = vmatprep.subr.bf16.mxu0 0
      %8115 = vmatpush2.bf16.msra.mxu0 0
      %8116 = vmatprep.subr.bf16.mxu0 0
      %8117 = vmatpush2.bf16.msra.mxu0 0
      %8118 = vmatprep.mubr.bf16.mxu0 0
      %8119 = vmatmul.mubr.bf16.gmra.mxu0 %v8022
      %v8120 = vpop.f32.mrf.mxu0
      %v8121 = vadd.f32 0.0, %v8120
      %v8122 = vpop.f32.mrf.mxu0
      %v8123 = vpop.f32.mrf.mxu0
      %v8124 = vadd.f32 0.0, %v8123
      %v8125 = vpop.f32.mrf.mxu0
      %8126 = vmatprep.mubr.bf16.mxu0 0
      %8127 = vmatmul.mubr.bf16.gmra.mxu0 %v8023
      %v8128 = vpop.f32.mrf.mxu0
      %v8129 = vadd.f32 0.0, %v8128
      %v8130 = vpop.f32.mrf.mxu0
      %v8131 = vpop.f32.mrf.mxu0
      %v8132 = vadd.f32 0.0, %v8131
      %v8133 = vpop.f32.mrf.mxu0
      %8134 = vmatprep.mubr.bf16.mxu0 0
      %8135 = vmatmul.mubr.bf16.gmra.mxu0 %v8024
      %v8136 = vpop.f32.mrf.mxu0
      %v8137 = vadd.f32 0.0, %v8136
      %v8138 = vpop.f32.mrf.mxu0
      %v8139 = vpop.f32.mrf.mxu0
      %v8140 = vadd.f32 0.0, %v8139
      %v8141 = vpop.f32.mrf.mxu0
      %8142 = vmatprep.mubr.bf16.mxu0 0
      %8143 = vmatmul.mubr.bf16.gmra.mxu0 %v8025
      %v8144 = vpop.f32.mrf.mxu0
      %v8145 = vadd.f32 0.0, %v8144
      %v8146 = vpop.f32.mrf.mxu0
      %v8147 = vpop.f32.mrf.mxu0
      %v8148 = vadd.f32 0.0, %v8147
      %v8149 = vpop.f32.mrf.mxu0
      %8150 = vmatprep.mubr.bf16.mxu0 0
      %8151 = vmatmul.mubr.bf16.gmra.mxu0 %v8026
      %v8152 = vpop.f32.mrf.mxu0
      %v8153 = vadd.f32 0.0, %v8152
      %v8154 = vpop.f32.mrf.mxu0
      %v8155 = vpop.f32.mrf.mxu0
      %v8156 = vadd.f32 0.0, %v8155
      %v8157 = vpop.f32.mrf.mxu0
      %8158 = vmatprep.mubr.bf16.mxu0 0
      %8159 = vmatmul.mubr.bf16.gmra.mxu0 %v8027
      %v8160 = vpop.f32.mrf.mxu0
      %v8161 = vadd.f32 0.0, %v8160
      %v8162 = vpop.f32.mrf.mxu0
      %v8163 = vpop.f32.mrf.mxu0
      %v8164 = vadd.f32 0.0, %v8163
      %v8165 = vpop.f32.mrf.mxu0
      %8166 = vmatprep.mubr.bf16.mxu0 0
      %8167 = vmatmul.mubr.bf16.gmra.mxu0 %v8028
      %v8168 = vpop.f32.mrf.mxu0
      %v8169 = vadd.f32 0.0, %v8168
      %v8170 = vpop.f32.mrf.mxu0
      %v8171 = vpop.f32.mrf.mxu0
      %v8172 = vadd.f32 0.0, %v8171
      %v8173 = vpop.f32.mrf.mxu0
      %8174 = vmatprep.mubr.bf16.mxu0 0
      %8175 = vmatmul.mubr.bf16.gmra.mxu0 %v8029
      %v8176 = vpop.f32.mrf.mxu0
      %v8177 = vadd.f32 0.0, %v8176
      %v8178 = vpop.f32.mrf.mxu0
      %v8179 = vpop.f32.mrf.mxu0
      %v8180 = vadd.f32 0.0, %v8179
      %v8181 = vpop.f32.mrf.mxu0
      %8182 = vmatprep.mubr.bf16.mxu0 0
      %8183 = vmatmul.mubr.bf16.gmra.mxu0 %v8030
      %v8184 = vpop.f32.mrf.mxu0
      %v8185 = vadd.f32 0.0, %v8184
      %v8186 = vpop.f32.mrf.mxu0
      %v8187 = vpop.f32.mrf.mxu0
      %v8188 = vadd.f32 0.0, %v8187
      %v8189 = vpop.f32.mrf.mxu0
      %8190 = vmatprep.mubr.bf16.mxu0 0
      %8191 = vmatmul.mubr.bf16.gmra.mxu0 %v8031
      %v8192 = vpop.f32.mrf.mxu0
      %v8193 = vadd.f32 0.0, %v8192
      %v8194 = vpop.f32.mrf.mxu0
      %v8195 = vpop.f32.mrf.mxu0
      %v8196 = vadd.f32 0.0, %v8195
      %v8197 = vpop.f32.mrf.mxu0
      %8198 = vmatprep.mubr.bf16.mxu0 0
      %8199 = vmatmul.mubr.bf16.gmra.mxu0 %v8032
      %v8200 = vpop.f32.mrf.mxu0
      %v8201 = vadd.f32 0.0, %v8200
      %v8202 = vpop.f32.mrf.mxu0
      %v8203 = vpop.f32.mrf.mxu0
      %v8204 = vadd.f32 0.0, %v8203
      %v8205 = vpop.f32.mrf.mxu0
      %8206 = vmatprep.mubr.bf16.mxu0 0
      %8207 = vmatmul.mubr.bf16.gmra.mxu0 %v8033
      %v8208 = vpop.f32.mrf.mxu0
      %v8209 = vadd.f32 0.0, %v8208
      %v8210 = vpop.f32.mrf.mxu0
      %v8211 = vpop.f32.mrf.mxu0
      %v8212 = vadd.f32 0.0, %v8211
      %v8213 = vpop.f32.mrf.mxu0
      %8214 = vmatprep.mubr.bf16.mxu0 0
      %8215 = vmatmul.mubr.bf16.gmra.mxu0 %v8034
      %v8216 = vpop.f32.mrf.mxu0
      %v8217 = vadd.f32 0.0, %v8216
      %v8218 = vpop.f32.mrf.mxu0
      %v8219 = vpop.f32.mrf.mxu0
      %v8220 = vadd.f32 0.0, %v8219
      %v8221 = vpop.f32.mrf.mxu0
      %8222 = vmatprep.mubr.bf16.mxu0 0
      %8223 = vmatmul.mubr.bf16.gmra.mxu0 %v8035
      %v8224 = vpop.f32.mrf.mxu0
      %v8225 = vadd.f32 0.0, %v8224
      %v8226 = vpop.f32.mrf.mxu0
      %v8227 = vpop.f32.mrf.mxu0
      %v8228 = vadd.f32 0.0, %v8227
      %v8229 = vpop.f32.mrf.mxu0
      %8230 = vmatprep.mubr.bf16.mxu0 0
      %8231 = vmatmul.mubr.bf16.gmra.mxu0 %v8036
      %v8232 = vpop.f32.mrf.mxu0
      %v8233 = vadd.f32 0.0, %v8232
      %v8234 = vpop.f32.mrf.mxu0
      %v8235 = vpop.f32.mrf.mxu0
      %v8236 = vadd.f32 0.0, %v8235
      %v8237 = vpop.f32.mrf.mxu0
      %8238 = vmatprep.mubr.bf16.mxu0 0
      %8239 = vmatmul.mubr.bf16.gmra.mxu0 %v8037
      %v8240 = vpop.f32.mrf.mxu0
      %v8241 = vadd.f32 0.0, %v8240
      %v8242 = vpop.f32.mrf.mxu0
      %v8243 = vpop.f32.mrf.mxu0
      %v8244 = vadd.f32 0.0, %v8243
      %v8245 = vpop.f32.mrf.mxu0
      %8246 = vdwg.mxu0
      %v8247 = vadd.f32 %v6944, %v8121
      %v8248 = vadd.f32 %v6945, %v8124
      %v8249 = vadd.f32 %v6946, %v8129
      %v8250 = vadd.f32 %v6947, %v8132
      %v8251 = vadd.f32 %v6948, %v8137
      %v8252 = vadd.f32 %v6949, %v8140
      %v8253 = vadd.f32 %v6950, %v8145
      %v8254 = vadd.f32 %v6951, %v8148
      %v8255 = vadd.f32 %v6952, %v8153
      %v8256 = vadd.f32 %v6953, %v8156
      %v8257 = vadd.f32 %v6954, %v8161
      %v8258 = vadd.f32 %v6955, %v8164
      %v8259 = vadd.f32 %v6956, %v8169
      %v8260 = vadd.f32 %v6957, %v8172
      %v8261 = vadd.f32 %v6958, %v8177
      %v8262 = vadd.f32 %v6959, %v8180
      %v8263 = vadd.f32 %v6960, %v8185
      %v8264 = vadd.f32 %v6961, %v8188
      %v8265 = vadd.f32 %v6962, %v8193
      %v8266 = vadd.f32 %v6963, %v8196
      %v8267 = vadd.f32 %v6964, %v8201
      %v8268 = vadd.f32 %v6965, %v8204
      %v8269 = vadd.f32 %v6966, %v8209
      %v8270 = vadd.f32 %v6967, %v8212
      %v8271 = vadd.f32 %v6968, %v8217
      %v8272 = vadd.f32 %v6969, %v8220
      %v8273 = vadd.f32 %v6970, %v8225
      %v8274 = vadd.f32 %v6971, %v8228
      %v8275 = vadd.f32 %v6972, %v8233
      %v8276 = vadd.f32 %v6973, %v8236
      %v8277 = vadd.f32 %v6974, %v8241
      %v8278 = vadd.f32 %v6975, %v8244
      %v8279 = vld [vmem:[%s785] sm:$0x1]
      %v8281 = vlaneseq
      %v8282 = vshrl.u32 %v8281, 7
      %v8283 = vsub.s32 0, %v8282
      %v8284 = vrot.slane %v8279, %v8283
      %v8286 = vadd.f32 %v8247, %v8284
      %v8287 = vadd.f32 %v8248, %v8284
      %v8288 = vadd.f32 %v8249, %v8284
      %v8289 = vadd.f32 %v8250, %v8284
      %v8290 = vadd.f32 %v8251, %v8284
      %v8291 = vadd.f32 %v8252, %v8284
      %v8292 = vadd.f32 %v8253, %v8284
      %v8293 = vadd.f32 %v8254, %v8284
      %v8294 = vadd.f32 %v8255, %v8284
      %v8295 = vadd.f32 %v8256, %v8284
      %v8296 = vadd.f32 %v8257, %v8284
      %v8297 = vadd.f32 %v8258, %v8284
      %v8298 = vadd.f32 %v8259, %v8284
      %v8299 = vadd.f32 %v8260, %v8284
      %v8300 = vadd.f32 %v8261, %v8284
      %v8301 = vadd.f32 %v8262, %v8284
      %v8302 = vadd.f32 %v8263, %v8284
      %v8303 = vadd.f32 %v8264, %v8284
      %v8304 = vadd.f32 %v8265, %v8284
      %v8305 = vadd.f32 %v8266, %v8284
      %v8306 = vadd.f32 %v8267, %v8284
      %v8307 = vadd.f32 %v8268, %v8284
      %v8308 = vadd.f32 %v8269, %v8284
      %v8309 = vadd.f32 %v8270, %v8284
      %v8310 = vadd.f32 %v8271, %v8284
      %v8311 = vadd.f32 %v8272, %v8284
      %v8312 = vadd.f32 %v8273, %v8284
      %v8313 = vadd.f32 %v8274, %v8284
      %v8314 = vadd.f32 %v8275, %v8284
      %v8315 = vadd.f32 %v8276, %v8284
      %v8316 = vadd.f32 %v8277, %v8284
      %v8317 = vadd.f32 %v8278, %v8284
      %8318 = vst.msk [vmem:[#allocation2] sm:$0xff] %vm1349, %v8286
      %8319 = vst.msk [vmem:[#allocation2 + $0x8] sm:$0xff] %vm1349, %v8287
      %8320 = vst.msk [vmem:[#allocation2 + $0x10] sm:$0xff] %vm1349, %v8288
      %8321 = vst.msk [vmem:[#allocation2 + $0x18] sm:$0xff] %vm1349, %v8289
      %8322 = vst.msk [vmem:[#allocation2 + $0x20] sm:$0xff] %vm1349, %v8290
      %8323 = vst.msk [vmem:[#allocation2 + $0x28] sm:$0xff] %vm1349, %v8291
      %8324 = vst.msk [vmem:[#allocation2 + $0x30] sm:$0xff] %vm1349, %v8292
      %8325 = vst.msk [vmem:[#allocation2 + $0x38] sm:$0xff] %vm1349, %v8293
      %8326 = vst.msk [vmem:[#allocation2 + $0x40] sm:$0xff] %vm1349, %v8294
      %8327 = vst.msk [vmem:[#allocation2 + $0x48] sm:$0xff] %vm1349, %v8295
      %8328 = vst.msk [vmem:[#allocation2 + $0x50] sm:$0xff] %vm1349, %v8296
      %8329 = vst.msk [vmem:[#allocation2 + $0x58] sm:$0xff] %vm1349, %v8297
      %8330 = vst.msk [vmem:[#allocation2 + $0x60] sm:$0xff] %vm1349, %v8298
      %8331 = vst.msk [vmem:[#allocation2 + $0x68] sm:$0xff] %vm1349, %v8299
      %8332 = vst.msk [vmem:[#allocation2 + $0x70] sm:$0xff] %vm1349, %v8300
      %8333 = vst.msk [vmem:[#allocation2 + $0x78] sm:$0xff] %vm1349, %v8301
      %8334 = vst.msk [vmem:[#allocation2 + $0x80] sm:$0xff] %vm1349, %v8302
      %8335 = vst.msk [vmem:[#allocation2 + $0x88] sm:$0xff] %vm1349, %v8303
      %8336 = vst.msk [vmem:[#allocation2 + $0x90] sm:$0xff] %vm1349, %v8304
      %8337 = vst.msk [vmem:[#allocation2 + $0x98] sm:$0xff] %vm1349, %v8305
      %8338 = vst.msk [vmem:[#allocation2 + $0xa0] sm:$0xff] %vm1349, %v8306
      %8339 = vst.msk [vmem:[#allocation2 + $0xa8] sm:$0xff] %vm1349, %v8307
      %8340 = vst.msk [vmem:[#allocation2 + $0xb0] sm:$0xff] %vm1349, %v8308
      %8341 = vst.msk [vmem:[#allocation2 + $0xb8] sm:$0xff] %vm1349, %v8309
      %8342 = vst.msk [vmem:[#allocation2 + $0xc0] sm:$0xff] %vm1349, %v8310
      %8343 = vst.msk [vmem:[#allocation2 + $0xc8] sm:$0xff] %vm1349, %v8311
      %8344 = vst.msk [vmem:[#allocation2 + $0xd0] sm:$0xff] %vm1349, %v8312
      %8345 = vst.msk [vmem:[#allocation2 + $0xd8] sm:$0xff] %vm1349, %v8313
      %8346 = vst.msk [vmem:[#allocation2 + $0xe0] sm:$0xff] %vm1349, %v8314
      %8347 = vst.msk [vmem:[#allocation2 + $0xe8] sm:$0xff] %vm1349, %v8315
      %8348 = vst.msk [vmem:[#allocation2 + $0xf0] sm:$0xff] %vm1349, %v8316
      %8349 = vst.msk [vmem:[#allocation2 + $0xf8] sm:$0xff] %vm1349, %v8317
      %p8350 = scmp.eq.s32.totalorder %s36, 1
      // Predicated region
      $region111: #{sparse_dist_forward.3} parent=91 // pred_check
        %p8351 = pneg %p8350
      $region112: #{sparse_dist_forward.3} parent=91 // pred_check_branch
        %8353 = sbr.rel (%p8351) target = $region114
      $region113: #{sparse_dist_forward.3} parent=91 // pred_region
        %v8354 = vld [vmem:[#allocation2] sm:$0xff]
        %v8355 = vld [vmem:[#allocation2 + $0x8] sm:$0xff]
        %v8356 = vld [vmem:[#allocation2 + $0x10] sm:$0xff]
        %v8357 = vld [vmem:[#allocation2 + $0x18] sm:$0xff]
        %v8358 = vld [vmem:[#allocation2 + $0x20] sm:$0xff]
        %v8359 = vld [vmem:[#allocation2 + $0x28] sm:$0xff]
        %v8360 = vld [vmem:[#allocation2 + $0x30] sm:$0xff]
        %v8361 = vld [vmem:[#allocation2 + $0x38] sm:$0xff]
        %v8362 = vld [vmem:[#allocation2 + $0x40] sm:$0xff]
        %v8363 = vld [vmem:[#allocation2 + $0x48] sm:$0xff]
        %v8364 = vld [vmem:[#allocation2 + $0x50] sm:$0xff]
        %v8365 = vld [vmem:[#allocation2 + $0x58] sm:$0xff]
        %v8366 = vld [vmem:[#allocation2 + $0x60] sm:$0xff]
        %v8367 = vld [vmem:[#allocation2 + $0x68] sm:$0xff]
        %v8368 = vld [vmem:[#allocation2 + $0x70] sm:$0xff]
        %v8369 = vld [vmem:[#allocation2 + $0x78] sm:$0xff]
        %v8370 = vld [vmem:[#allocation2 + $0x80] sm:$0xff]
        %v8371 = vld [vmem:[#allocation2 + $0x88] sm:$0xff]
        %v8372 = vld [vmem:[#allocation2 + $0x90] sm:$0xff]
        %v8373 = vld [vmem:[#allocation2 + $0x98] sm:$0xff]
        %v8374 = vld [vmem:[#allocation2 + $0xa0] sm:$0xff]
        %v8375 = vld [vmem:[#allocation2 + $0xa8] sm:$0xff]
        %v8376 = vld [vmem:[#allocation2 + $0xb0] sm:$0xff]
        %v8377 = vld [vmem:[#allocation2 + $0xb8] sm:$0xff]
        %v8378 = vld [vmem:[#allocation2 + $0xc0] sm:$0xff]
        %v8379 = vld [vmem:[#allocation2 + $0xc8] sm:$0xff]
        %v8380 = vld [vmem:[#allocation2 + $0xd0] sm:$0xff]
        %v8381 = vld [vmem:[#allocation2 + $0xd8] sm:$0xff]
        %v8382 = vld [vmem:[#allocation2 + $0xe0] sm:$0xff]
        %v8383 = vld [vmem:[#allocation2 + $0xe8] sm:$0xff]
        %v8384 = vld [vmem:[#allocation2 + $0xf0] sm:$0xff]
        %v8385 = vld [vmem:[#allocation2 + $0xf8] sm:$0xff]
        %v8386 = vld [vmem:[%s3] sm:$0xf]
        %v8387 = vld [vmem:[%s3 + $0x4] sm:$0xf]
        %v8388 = vld [vmem:[%s3 + $0x8] sm:$0xf]
        %v8389 = vld [vmem:[%s3 + $0xc] sm:$0xf]
        %v8390 = vpack.c.bf16 %v8355, %v8354
        %v8391 = vpack.c.bf16 %v8357, %v8356
        %v8392 = vpack.c.bf16 %v8359, %v8358
        %v8393 = vpack.c.bf16 %v8361, %v8360
        %v8394 = vpack.c.bf16 %v8363, %v8362
        %v8395 = vpack.c.bf16 %v8365, %v8364
        %v8396 = vpack.c.bf16 %v8367, %v8366
        %v8397 = vpack.c.bf16 %v8369, %v8368
        %v8398 = vpack.c.bf16 %v8371, %v8370
        %v8399 = vpack.c.bf16 %v8373, %v8372
        %v8400 = vpack.c.bf16 %v8375, %v8374
        %v8401 = vpack.c.bf16 %v8377, %v8376
        %v8402 = vpack.c.bf16 %v8379, %v8378
        %v8403 = vpack.c.bf16 %v8381, %v8380
        %v8404 = vpack.c.bf16 %v8383, %v8382
        %v8405 = vpack.c.bf16 %v8385, %v8384
        %v8406 = vld [vmem:[%s4] sm:$0x1]
        %v8408 = vlaneseq
        %v8409 = vshrl.u32 %v8408, 7
        %v8410 = vsub.s32 0, %v8409
        %v8411 = vrot.slane %v8406, %v8410
        %v8417 = vunpack.c.l.b16 %v8386
        %v8418 = vunpack.c.l.b16 %v8387
        %v8419 = vunpack.c.l.b16 %v8388
        %v8420 = vunpack.c.l.b16 %v8389
        %v8421 = vpack.c.b16 %v8418, %v8417
        %v8422 = vpack.c.b16 %v8420, %v8419
        %v8426 = vsel %vm1349, %v8390, 0
        %v8429 = vsel %vm1349, %v8391, 0
        %v8432 = vsel %vm1349, %v8392, 0
        %v8435 = vsel %vm1349, %v8393, 0
        %v8438 = vsel %vm1349, %v8394, 0
        %v8441 = vsel %vm1349, %v8395, 0
        %v8444 = vsel %vm1349, %v8396, 0
        %v8447 = vsel %vm1349, %v8397, 0
        %v8450 = vsel %vm1349, %v8398, 0
        %v8453 = vsel %vm1349, %v8399, 0
        %v8456 = vsel %vm1349, %v8400, 0
        %v8459 = vsel %vm1349, %v8401, 0
        %v8462 = vsel %vm1349, %v8402, 0
        %v8465 = vsel %vm1349, %v8403, 0
        %v8468 = vsel %vm1349, %v8404, 0
        %v8471 = vsel %vm1349, %v8405, 0
        %8473 = vmatprep.subr.bf16.mxu0 0
        %8474 = vmatpush1.bf16.msra.mxu0 0
        %8475 = vmatprep.subr.bf16.mxu0 0
        %8476 = vmatpush1.bf16.msra.mxu0 0
        %8477 = vmatprep.subr.bf16.mxu0 0
        %8478 = vmatpush1.bf16.msra.mxu0 0
        %8479 = vmatprep.subr.bf16.mxu0 0
        %8480 = vmatpush1.bf16.msra.mxu0 0
        %8481 = vmatprep.subr.bf16.mxu0 0
        %8482 = vmatpush1.bf16.msra.mxu0 0
        %8483 = vmatprep.subr.bf16.mxu0 0
        %8484 = vmatpush1.bf16.msra.mxu0 0
        %8485 = vmatprep.subr.bf16.mxu0 0
        %8486 = vmatpush1.bf16.msra.mxu0 %v8422
        %8487 = vmatprep.subr.bf16.mxu0 0
        %8488 = vmatpush1.bf16.msra.mxu0 %v8421
        %8489 = vmatprep.subr.bf16.mxu0 0
        %8490 = vmatpush2.bf16.msra.mxu0 0
        %8491 = vmatprep.subr.bf16.mxu0 0
        %8492 = vmatpush2.bf16.msra.mxu0 0
        %8493 = vmatprep.subr.bf16.mxu0 0
        %8494 = vmatpush2.bf16.msra.mxu0 0
        %8495 = vmatprep.subr.bf16.mxu0 0
        %8496 = vmatpush2.bf16.msra.mxu0 0
        %8497 = vmatprep.subr.bf16.mxu0 0
        %8498 = vmatpush2.bf16.msra.mxu0 0
        %8499 = vmatprep.subr.bf16.mxu0 0
        %8500 = vmatpush2.bf16.msra.mxu0 0
        %8501 = vmatprep.subr.bf16.mxu0 0
        %8502 = vmatpush2.bf16.msra.mxu0 0
        %8503 = vmatprep.subr.bf16.mxu0 0
        %8504 = vmatpush2.bf16.msra.mxu0 0
        %8505 = vmatprep.mubr.bf16.mxu0 0
        %8506 = vmatmul.mubr.bf16.gmra.mxu0 %v8426
        %v8507 = vpop.f32.mrf.mxu0
        %v8508 = vadd.f32 %v8411, %v8507
        %v8509 = vpop.f32.mrf.mxu0
        %v8510 = vpop.f32.mrf.mxu0
        %v8511 = vadd.f32 %v8411, %v8510
        %v8512 = vpop.f32.mrf.mxu0
        %8513 = vmatprep.mubr.bf16.mxu0 0
        %8514 = vmatmul.mubr.bf16.gmra.mxu0 %v8429
        %v8515 = vpop.f32.mrf.mxu0
        %v8516 = vadd.f32 %v8411, %v8515
        %v8517 = vpop.f32.mrf.mxu0
        %v8518 = vpop.f32.mrf.mxu0
        %v8519 = vadd.f32 %v8411, %v8518
        %v8520 = vpop.f32.mrf.mxu0
        %8521 = vmatprep.mubr.bf16.mxu0 0
        %8522 = vmatmul.mubr.bf16.gmra.mxu0 %v8432
        %v8523 = vpop.f32.mrf.mxu0
        %v8524 = vadd.f32 %v8411, %v8523
        %v8525 = vpop.f32.mrf.mxu0
        %v8526 = vpop.f32.mrf.mxu0
        %v8527 = vadd.f32 %v8411, %v8526
        %v8528 = vpop.f32.mrf.mxu0
        %8529 = vmatprep.mubr.bf16.mxu0 0
        %8530 = vmatmul.mubr.bf16.gmra.mxu0 %v8435
        %v8531 = vpop.f32.mrf.mxu0
        %v8532 = vadd.f32 %v8411, %v8531
        %v8533 = vpop.f32.mrf.mxu0
        %v8534 = vpop.f32.mrf.mxu0
        %v8535 = vadd.f32 %v8411, %v8534
        %v8536 = vpop.f32.mrf.mxu0
        %8537 = vmatprep.mubr.bf16.mxu0 0
        %8538 = vmatmul.mubr.bf16.gmra.mxu0 %v8438
        %v8539 = vpop.f32.mrf.mxu0
        %v8540 = vadd.f32 %v8411, %v8539
        %v8541 = vpop.f32.mrf.mxu0
        %v8542 = vpop.f32.mrf.mxu0
        %v8543 = vadd.f32 %v8411, %v8542
        %v8544 = vpop.f32.mrf.mxu0
        %8545 = vmatprep.mubr.bf16.mxu0 0
        %8546 = vmatmul.mubr.bf16.gmra.mxu0 %v8441
        %v8547 = vpop.f32.mrf.mxu0
        %v8548 = vadd.f32 %v8411, %v8547
        %v8549 = vpop.f32.mrf.mxu0
        %v8550 = vpop.f32.mrf.mxu0
        %v8551 = vadd.f32 %v8411, %v8550
        %v8552 = vpop.f32.mrf.mxu0
        %8553 = vmatprep.mubr.bf16.mxu0 0
        %8554 = vmatmul.mubr.bf16.gmra.mxu0 %v8444
        %v8555 = vpop.f32.mrf.mxu0
        %v8556 = vadd.f32 %v8411, %v8555
        %v8557 = vpop.f32.mrf.mxu0
        %v8558 = vpop.f32.mrf.mxu0
        %v8559 = vadd.f32 %v8411, %v8558
        %v8560 = vpop.f32.mrf.mxu0
        %8561 = vmatprep.mubr.bf16.mxu0 0
        %8562 = vmatmul.mubr.bf16.gmra.mxu0 %v8447
        %v8563 = vpop.f32.mrf.mxu0
        %v8564 = vadd.f32 %v8411, %v8563
        %v8565 = vpop.f32.mrf.mxu0
        %v8566 = vpop.f32.mrf.mxu0
        %v8567 = vadd.f32 %v8411, %v8566
        %v8568 = vpop.f32.mrf.mxu0
        %8569 = vmatprep.mubr.bf16.mxu0 0
        %8570 = vmatmul.mubr.bf16.gmra.mxu0 %v8450
        %v8571 = vpop.f32.mrf.mxu0
        %v8572 = vadd.f32 %v8411, %v8571
        %v8573 = vpop.f32.mrf.mxu0
        %v8574 = vpop.f32.mrf.mxu0
        %v8575 = vadd.f32 %v8411, %v8574
        %v8576 = vpop.f32.mrf.mxu0
        %8577 = vmatprep.mubr.bf16.mxu0 0
        %8578 = vmatmul.mubr.bf16.gmra.mxu0 %v8453
        %v8579 = vpop.f32.mrf.mxu0
        %v8580 = vadd.f32 %v8411, %v8579
        %v8581 = vpop.f32.mrf.mxu0
        %v8582 = vpop.f32.mrf.mxu0
        %v8583 = vadd.f32 %v8411, %v8582
        %v8584 = vpop.f32.mrf.mxu0
        %8585 = vmatprep.mubr.bf16.mxu0 0
        %8586 = vmatmul.mubr.bf16.gmra.mxu0 %v8456
        %v8587 = vpop.f32.mrf.mxu0
        %v8588 = vadd.f32 %v8411, %v8587
        %v8589 = vpop.f32.mrf.mxu0
        %v8590 = vpop.f32.mrf.mxu0
        %v8591 = vadd.f32 %v8411, %v8590
        %v8592 = vpop.f32.mrf.mxu0
        %8593 = vmatprep.mubr.bf16.mxu0 0
        %8594 = vmatmul.mubr.bf16.gmra.mxu0 %v8459
        %v8595 = vpop.f32.mrf.mxu0
        %v8596 = vadd.f32 %v8411, %v8595
        %v8597 = vpop.f32.mrf.mxu0
        %v8598 = vpop.f32.mrf.mxu0
        %v8599 = vadd.f32 %v8411, %v8598
        %v8600 = vpop.f32.mrf.mxu0
        %8601 = vmatprep.mubr.bf16.mxu0 0
        %8602 = vmatmul.mubr.bf16.gmra.mxu0 %v8462
        %v8603 = vpop.f32.mrf.mxu0
        %v8604 = vadd.f32 %v8411, %v8603
        %v8605 = vpop.f32.mrf.mxu0
        %v8606 = vpop.f32.mrf.mxu0
        %v8607 = vadd.f32 %v8411, %v8606
        %v8608 = vpop.f32.mrf.mxu0
        %8609 = vmatprep.mubr.bf16.mxu0 0
        %8610 = vmatmul.mubr.bf16.gmra.mxu0 %v8465
        %v8611 = vpop.f32.mrf.mxu0
        %v8612 = vadd.f32 %v8411, %v8611
        %v8613 = vpop.f32.mrf.mxu0
        %v8614 = vpop.f32.mrf.mxu0
        %v8615 = vadd.f32 %v8411, %v8614
        %v8616 = vpop.f32.mrf.mxu0
        %8617 = vmatprep.mubr.bf16.mxu0 0
        %8618 = vmatmul.mubr.bf16.gmra.mxu0 %v8468
        %v8619 = vpop.f32.mrf.mxu0
        %v8620 = vadd.f32 %v8411, %v8619
        %v8621 = vpop.f32.mrf.mxu0
        %v8622 = vpop.f32.mrf.mxu0
        %v8623 = vadd.f32 %v8411, %v8622
        %v8624 = vpop.f32.mrf.mxu0
        %8625 = vmatprep.mubr.bf16.mxu0 0
        %8626 = vmatmul.mubr.bf16.gmra.mxu0 %v8471
        %v8627 = vpop.f32.mrf.mxu0
        %v8628 = vadd.f32 %v8411, %v8627
        %v8629 = vpop.f32.mrf.mxu0
        %v8630 = vpop.f32.mrf.mxu0
        %v8631 = vadd.f32 %v8411, %v8630
        %v8632 = vpop.f32.mrf.mxu0
        %8633 = vdwg.mxu0
        %8634 = vst [vmem:[%s19] sm:$0xff] %v8508
        %8635 = vst [vmem:[%s19 + $0x8] sm:$0xff] %v8511
        %8636 = vst [vmem:[%s19 + $0x10] sm:$0xff] %v8516
        %8637 = vst [vmem:[%s19 + $0x18] sm:$0xff] %v8519
        %8638 = vst [vmem:[%s19 + $0x20] sm:$0xff] %v8524
        %8639 = vst [vmem:[%s19 + $0x28] sm:$0xff] %v8527
        %8640 = vst [vmem:[%s19 + $0x30] sm:$0xff] %v8532
        %8641 = vst [vmem:[%s19 + $0x38] sm:$0xff] %v8535
        %8642 = vst [vmem:[%s19 + $0x40] sm:$0xff] %v8540
        %8643 = vst [vmem:[%s19 + $0x48] sm:$0xff] %v8543
        %8644 = vst [vmem:[%s19 + $0x50] sm:$0xff] %v8548
        %8645 = vst [vmem:[%s19 + $0x58] sm:$0xff] %v8551
        %8646 = vst [vmem:[%s19 + $0x60] sm:$0xff] %v8556
        %8647 = vst [vmem:[%s19 + $0x68] sm:$0xff] %v8559
        %8648 = vst [vmem:[%s19 + $0x70] sm:$0xff] %v8564
        %8649 = vst [vmem:[%s19 + $0x78] sm:$0xff] %v8567
        %8650 = vst [vmem:[%s19 + $0x80] sm:$0xff] %v8572
        %8651 = vst [vmem:[%s19 + $0x88] sm:$0xff] %v8575
        %8652 = vst [vmem:[%s19 + $0x90] sm:$0xff] %v8580
        %8653 = vst [vmem:[%s19 + $0x98] sm:$0xff] %v8583
        %8654 = vst [vmem:[%s19 + $0xa0] sm:$0xff] %v8588
        %8655 = vst [vmem:[%s19 + $0xa8] sm:$0xff] %v8591
        %8656 = vst [vmem:[%s19 + $0xb0] sm:$0xff] %v8596
        %8657 = vst [vmem:[%s19 + $0xb8] sm:$0xff] %v8599
        %8658 = vst [vmem:[%s19 + $0xc0] sm:$0xff] %v8604
        %8659 = vst [vmem:[%s19 + $0xc8] sm:$0xff] %v8607
        %8660 = vst [vmem:[%s19 + $0xd0] sm:$0xff] %v8612
        %8661 = vst [vmem:[%s19 + $0xd8] sm:$0xff] %v8615
        %8662 = vst [vmem:[%s19 + $0xe0] sm:$0xff] %v8620
        %8663 = vst [vmem:[%s19 + $0xe8] sm:$0xff] %v8623
        %8664 = vst [vmem:[%s19 + $0xf0] sm:$0xff] %v8628
        %8665 = vst [vmem:[%s19 + $0xf8] sm:$0xff] %v8631
      $region114: #{sparse_dist_forward.3} parent=91 // pred_fallthru
        _
      // Predicated region
      $region115: #{sparse_dist_forward.3} parent=91 // pred_check
        %p8666 = pneg %p497
      $region116: #{sparse_dist_forward.3} parent=91 // pred_check_branch
        %8668 = sbr.rel (%p8666) target = $region118
      $region117: #{sparse_dist_forward.3} parent=91 // pred_region
        _
      $region118: #{sparse_dist_forward.3} parent=91 // pred_fallthru
        _
      // Predicated region
      $region119: #{sparse_dist_forward.3} parent=91 // pred_check
        %p8669 = pneg %p497
      $region120: #{sparse_dist_forward.3} parent=91 // pred_check_branch
        %8671 = sbr.rel (%p8669) target = $region122
      $region121: #{sparse_dist_forward.3} parent=91 // pred_region
        _
      $region122: #{sparse_dist_forward.3} parent=91 // pred_fallthru
        _
    $region92: #{sparse_dist_forward.3} parent=5 // pred_fallthru
      _
    %p8672 = scmp.le.s32.totalorder 2, %s31
    // Predicated region
    $region123: #{sparse_dist_forward.3} parent=5 // pred_check
      %p8673 = pneg %p8672
    $region124: #{sparse_dist_forward.3} parent=5 // pred_check_branch
      %8675 = sbr.rel (%p8673) target = $region126
    $region125: #{sparse_dist_forward.3} parent=5 // pred_region
      %s8676 = ssub.s32 %s31, 2
    $region126: #{sparse_dist_forward.3} parent=5 // pred_fallthru
      _
  $region6: #{sparse_dist_forward.3} parent=0 // loop_footer
    %s35 = sadd.s32 1, %s31
  $region7: #{sparse_dist_forward.3} parent=0 // loop_footer_branch
    %30 = sbr.rel target = $region3
  $region8: #{sparse_dist_forward.3} parent=0 // loop_exit
    _

</llo_original>
